<compile_context>
chip_gen: v6e
topology: v6e:2x2x1
jax: 0.10.0
libtpu: 0.0.40
codegen_flags: <defaults>
</compile_context>

<pallas_src>
import functools
import math

import numpy as np
import jax
import jax.numpy as jnp
from jax.experimental import pallas as pl
from jax.experimental.pallas import tpu as pltpu

_BN_EPS = 1e-5


# ----------------------------------------------------------------------------
# Fused kernel
# ----------------------------------------------------------------------------
def _bdot(a, b):
    """Batched matmul over leading (head) dim: (G,m,k) @ (G,k,n) -> (G,m,n)."""
    return jax.lax.dot_general(
        a, b,
        dimension_numbers=(((2,), (1,)), ((0,), (0,))),
        preferred_element_type=jnp.float32)


def _const_index_map(ndim):
    def index_map(t):
        return (0,) * ndim
    return index_map


def _make_fused_kernel(B, H, W, chans):
    HW = H * W
    n_layers = len(chans) - 1            # 7 conv layers
    outplanes = chans[-1]
    # 3x3 neighbourhood offsets in flattened (i*W + j) pixel coordinates,
    # ordered (ki, kj) row-major to match the conv weight column layout.
    shifts = [(ki - 1) * W + (kj - 1) for ki in range(3) for kj in range(3)]

    def kernel(*refs):
        s_ref, g_ref, masks_ref = refs[0], refs[1], refs[2]
        p = 3
        conv_w = refs[p:p + n_layers]; p += n_layers
        bn_g = refs[p:p + n_layers]; p += n_layers
        bn_b = refs[p:p + n_layers]; p += n_layers
        (wg_ref, bg_ref, wp_ref, bp_ref,
         wihr_ref, wihz_ref, wihn_ref,
         whhr_ref, whhz_ref, whhn_ref,
         bihr_ref, bihz_ref, bihn_ref,
         bhhr_ref, bhhz_ref, bhhn_ref,
         we_ref, be_ref) = refs[p:p + 18]
        p += 18
        out_ref = refs[p]
        h_ref = refs[p + 1]

        t = pl.program_id(0)

        @pl.when(t == 0)
        def _():
            h_ref[...] = jnp.zeros_like(h_ref)

        masks = masks_ref[...]                        # (9, B*H*W)
        x = s_ref[...].astype(jnp.float32)            # (Cin, B*H*W)

        # ---- conv trunk: 7 x (3x3 conv -> BN(train mode) -> ReLU) ----------
        for l in range(n_layers):
            parts = []
            for k, s in enumerate(shifts):
                xs = x if s == 0 else jnp.roll(x, -s, axis=1)   # value at n+s
                parts.append(xs * masks[k:k + 1, :])            # zero OOB taps
            patches = jnp.concatenate(parts, axis=0)            # (9*Cin, N)
            y = jnp.dot(conv_w[l][...], patches,
                        preferred_element_type=jnp.float32)     # (Cout, N)
            mean = jnp.mean(y, axis=1, keepdims=True)
            var = jnp.mean(jnp.square(y - mean), axis=1, keepdims=True)
            y = (y - mean) * jax.lax.rsqrt(var + _BN_EPS)
            y = y * bn_g[l][...] + bn_b[l][...]
            x = jnp.maximum(y, 0.0)

        # ---- flatten to torch .view order: x_s[b, c*HW + hw] = x[c, b*HW+hw]
        x_s = jnp.concatenate(
            [jnp.concatenate(
                [x[c:c + 1, b * HW:(b + 1) * HW] for b in range(B)], axis=0)
             for c in range(outplanes)],
            axis=1)                                              # (B, C*HW)

        # ---- linear_g + ReLU ------------------------------------------------
        x_g = jnp.dot(g_ref[...], wg_ref[...],
                      preferred_element_type=jnp.float32) + bg_ref[...]
        x_g = jnp.maximum(x_g, 0.0)                              # (B, out_vec)

        xcat = jnp.concatenate([x_s, x_g], axis=1)               # (B, feat)
        xcat6 = jnp.broadcast_to(xcat[None], (6,) + xcat.shape)  # (6, B, feat)

        # ---- 6 heads, batched over the head dim -----------------------------
        xp = jnp.maximum(_bdot(xcat6, wp_ref[...]) + bp_ref[...], 0.0)

        h = h_ref[...]                                           # (6, B, Hr)
        r = jax.nn.sigmoid(_bdot(xp, wihr_ref[...]) + bihr_ref[...]
                           + _bdot(h, whhr_ref[...]) + bhhr_ref[...])
        z = jax.nn.sigmoid(_bdot(xp, wihz_ref[...]) + bihz_ref[...]
                           + _bdot(h, whhz_ref[...]) + bhhz_ref[...])
        ng = jnp.tanh(_bdot(xp, wihn_ref[...]) + bihn_ref[...]
                      + r * (_bdot(h, whhn_ref[...]) + bhhn_ref[...]))
        h_new = (1.0 - z) * ng + z * h
        h_ref[...] = h_new

        e = jnp.maximum(_bdot(h_new, we_ref[...]) + be_ref[...], 0.0)  # (6,B,D)

        # LogSoftmax(dim=-1).exp() == softmax over the last dim.
        m = jnp.max(e, axis=-1, keepdims=True)
        ex = jnp.exp(e - m)
        probas = ex / jnp.sum(ex, axis=-1, keepdims=True)
        out_ref[...] = probas.astype(out_ref.dtype)              # (6, B, D)

    return kernel


# ----------------------------------------------------------------------------
# Forward wrapper (one pallas_call for the whole sequence)
# ----------------------------------------------------------------------------
def cnn_gru_net_forward(params, states_G, states_S, require_init, *,
                        inplanes, midplanes, outplanes, in_vector, out_vector,
                        in_rnn, out_rnn, outdense):
    """Mirrors CNNGRUNet_7_1.forward.  Returns list of (B, 6, outdense)."""
    del require_init  # no-op: forward() always restarts the hidden state at 0
    seq, B, Cin, H, W = states_S.shape
    assert Cin == inplanes and outdense == H * W
    HW = H * W
    N = B * HW
    chans = [inplanes] + [midplanes] * 6 + [outplanes]

    # Layout prep (once, outside the kernel):
    # (seq, B, C, H, W) -> (seq, C, B*H*W): lane-dense pixel axis last.
    s_in = jnp.transpose(states_S, (0, 2, 1, 3, 4)).reshape(seq, Cin, N)
    g_in = states_G.astype(jnp.float32)

    # Validity masks for the 9 lane shifts of a padded 3x3 conv (shared by all
    # layers and all timesteps; passed once as a resident input).
    hw = np.arange(N) % HW
    pi, pj = hw // W, hw % W
    mrows = []
    for ki in range(3):
        for kj in range(3):
            di, dj = ki - 1, kj - 1
            ok = (pi + di >= 0) & (pi + di < H) & (pj + dj >= 0) & (pj + dj < W)
            mrows.append(ok.astype(np.float32))
    masks = jnp.asarray(np.stack(mrows))                          # (9, N)

    flat_params = [masks]
    flat_params += [params[f"conv{l}_w"] for l in range(1, 8)]
    flat_params += [params[f"bn{l}_g"] for l in range(1, 8)]
    flat_params += [params[f"bn{l}_b"] for l in range(1, 8)]
    flat_params += [params["lin_g_w"], params["lin_g_b"],
                    params["pre_fc_w"], params["pre_fc_b"],
                    params["gru_wih_r"], params["gru_wih_z"], params["gru_wih_n"],
                    params["gru_whh_r"], params["gru_whh_z"], params["gru_whh_n"],
                    params["gru_bih_r"], params["gru_bih_z"], params["gru_bih_n"],
                    params["gru_bhh_r"], params["gru_bhh_z"], params["gru_bhh_n"],
                    params["end_fc_w"], params["end_fc_b"]]

    in_specs = [
        pl.BlockSpec((None, Cin, N), lambda t: (t, 0, 0)),          # states_S[t]
        pl.BlockSpec((None, B, in_vector), lambda t: (t, 0, 0)),    # states_G[t]
    ]
    in_specs += [pl.BlockSpec(w.shape, _const_index_map(w.ndim))    # resident
                 for w in flat_params]

    kernel = _make_fused_kernel(B, H, W, chans)

    grid_spec = pltpu.PrefetchScalarGridSpec(
        num_scalar_prefetch=0,
        grid=(seq,),
        in_specs=in_specs,
        out_specs=pl.BlockSpec((None, 6, B, outdense),
                               lambda t: (t, 0, 0, 0)),
        scratch_shapes=[pltpu.VMEM((6, B, out_rnn), jnp.float32)],  # hidden h
    )

    out = pl.pallas_call(
        kernel,
        out_shape=jax.ShapeDtypeStruct((seq, 6, B, outdense), jnp.float32),
        grid_spec=grid_spec,
        compiler_params=pltpu.CompilerParams(
            dimension_semantics=("arbitrary",)),     # sequential: GRU recurrence
    )(s_in, g_in, *flat_params)

    # (seq, 6, B, D) -> list of (B, 6, D)  (== torch.stack(x_list, dim=1))
    out = jnp.transpose(out, (0, 2, 1, 3))
    return [out[t] for t in range(seq)]


# ----------------------------------------------------------------------------
# Parameter init (random, PyTorch-layout-compatible packing)
# ----------------------------------------------------------------------------
def init_params(key, inplanes, midplanes, outplanes, in_vector, out_vector,
                in_rnn, out_rnn, outdense):
    params = {}
    keys = iter(jax.random.split(key, 64))

    def nrm(shape, scale):
        return scale * jax.random.normal(next(keys), shape, jnp.float32)

    chans = [inplanes] + [midplanes] * 6 + [outplanes]
    for l in range(1, 8):
        cin, cout = chans[l - 1], chans[l]
        w = nrm((cout, cin, 3, 3), 1.0 / math.sqrt(9 * cin))
        # (Cout,Cin,3,3) -> (Cout,3,3,Cin) -> (Cout, 9*Cin): column order
        # (ki, kj, ci) matches the kernel's masked-shift patch stacking.
        params[f"conv{l}_w"] = jnp.transpose(w, (0, 2, 3, 1)).reshape(cout, 9 * cin)
        params[f"bn{l}_g"] = jnp.ones((cout, 1), jnp.float32)
        params[f"bn{l}_b"] = jnp.zeros((cout, 1), jnp.float32)

    params["lin_g_w"] = nrm((in_vector, out_vector), 1.0 / math.sqrt(in_vector))
    params["lin_g_b"] = nrm((1, out_vector), 1.0 / math.sqrt(in_vector))

    feat = outplanes * outdense + out_vector
    s_fc = 1.0 / math.sqrt(feat)
    s_rnn = 1.0 / math.sqrt(out_rnn)
    # 6 heads stacked along a leading head dim; GRU weights split per gate so
    # the kernel never lane-slices a 3H-wide gate tensor.
    params["pre_fc_w"] = nrm((6, feat, in_rnn), s_fc)
    params["pre_fc_b"] = nrm((6, 1, in_rnn), s_fc)
    for gate in ("r", "z", "n"):
        params[f"gru_wih_{gate}"] = nrm((6, in_rnn, out_rnn), s_rnn)
        params[f"gru_whh_{gate}"] = nrm((6, out_rnn, out_rnn), s_rnn)
        params[f"gru_bih_{gate}"] = nrm((6, 1, out_rnn), s_rnn)
        params[f"gru_bhh_{gate}"] = nrm((6, 1, out_rnn), s_rnn)
    params["end_fc_w"] = nrm((6, out_rnn, outdense), s_rnn)
    params["end_fc_b"] = nrm((6, 1, outdense), s_rnn)
    return params


# ----------------------------------------------------------------------------
# Pure-JAX reference (for an in-script correctness check)
# ----------------------------------------------------------------------------
def _reference_forward(params, states_G, states_S, *, chans, out_rnn):
    seq, B, _, H, W = states_S.shape
    HW = H * W
    outplanes = chans[-1]
    h = jnp.zeros((6, B, out_rnn), jnp.float32)
    outs = []
    for t in range(seq):
        x = states_S[t]
        for l in range(1, 8):
            cin, cout = chans[l - 1], chans[l]
            w = params[f"conv{l}_w"].reshape(cout, 3, 3, cin).transpose(0, 3, 1, 2)
            x = jax.lax.conv_general_dilated(
                x, w, window_strides=(1, 1), padding=((1, 1), (1, 1)),
                dimension_numbers=("NCHW", "OIHW", "NCHW"))
            mean = jnp.mean(x, axis=(0, 2, 3), keepdims=True)
            var = jnp.mean(jnp.square(x - mean), axis=(0, 2, 3), keepdims=True)
            g = params[f"bn{l}_g"].reshape(1, cout, 1, 1)
            b = params[f"bn{l}_b"].reshape(1, cout, 1, 1)
            x = jnp.maximum((x - mean) * jax.lax.rsqrt(var + _BN_EPS) * g + b, 0.0)
        x_s = x.reshape(B, outplanes * HW)
        x_g = jnp.maximum(states_G[t] @ params["lin_g_w"] + params["lin_g_b"], 0.0)
        xcat = jnp.concatenate([x_s, x_g], axis=1)
        xp = jnp.maximum(
            jnp.einsum("bf,hfk->hbk", xcat, params["pre_fc_w"]) + params["pre_fc_b"], 0.0)
        r = jax.nn.sigmoid(
            jnp.einsum("hbk,hko->hbo", xp, params["gru_wih_r"]) + params["gru_bih_r"]
            + jnp.einsum("hbo,hop->hbp", h, params["gru_whh_r"]) + params["gru_bhh_r"])
        z = jax.nn.sigmoid(
            jnp.einsum("hbk,hko->hbo", xp, params["gru_wih_z"]) + params["gru_bih_z"]
            + jnp.einsum("hbo,hop->hbp", h, params["gru_whh_z"]) + params["gru_bhh_z"])
        ng = jnp.tanh(
            jnp.einsum("hbk,hko->hbo", xp, params["gru_wih_n"]) + params["gru_bih_n"]
            + r * (jnp.einsum("hbo,hop->hbp", h, params["gru_whh_n"]) + params["gru_bhh_n"]))
        h = (1.0 - z) * ng + z * h
        e = jnp.maximum(
            jnp.einsum("hbo,hod->hbd", h, params["end_fc_w"]) + params["end_fc_b"], 0.0)
        pr = jax.nn.softmax(e, axis=-1)
        outs.append(jnp.transpose(pr, (1, 0, 2)))
    return outs


# ----------------------------------------------------------------------------
# Example run
# ----------------------------------------------------------------------------
if __name__ == "__main__":
    inplanes, midplanes, outplanes = 4, 8, 4
    H = W = 8
    outdense = H * W          # plane_length must equal H*W for the .view()
    in_vector, out_vector = 16, 8
    in_rnn, out_rnn = 32, 32
    seq, batch = 8, 2
    chans = [inplanes] + [midplanes] * 6 + [outplanes]

    key = jax.random.PRNGKey(0)
    k_p, k_s, k_g = jax.random.split(key, 3)
    params = init_params(k_p, inplanes, midplanes, outplanes, in_vector,
                         out_vector, in_rnn, out_rnn, outdense)

    states_S = jax.random.normal(k_s, (seq, batch, inplanes, H, W), jnp.float32)
    states_G = jax.random.normal(k_g, (seq, batch, in_vector), jnp.float32)
    require_init = [False] * batch

    fwd = jax.jit(functools.partial(
        cnn_gru_net_forward,
        inplanes=inplanes, midplanes=midplanes, outplanes=outplanes,
        in_vector=in_vector, out_vector=out_vector,
        in_rnn=in_rnn, out_rnn=out_rnn, outdense=outdense))
    values = fwd(params, states_G, states_S, require_init)
    values = jax.block_until_ready(values)

    # Structural checks.
    assert len(values) == seq
    assert all(v.shape == (batch, 6, outdense) for v in values)
    assert all(bool(jnp.all(jnp.isfinite(v))) for v in values)
    assert bool(jnp.allclose(jnp.sum(values[0], axis=-1), 1.0, atol=1e-5))

    # Numerical check against a pure-JAX reference of the same forward graph.
    ref_fn = jax.jit(functools.partial(_reference_forward, chans=chans,
                                       out_rnn=out_rnn))
    ref_values = jax.block_until_ready(ref_fn(params, states_G, states_S))
    for v, r in zip(values, ref_values):
        np.testing.assert_allclose(np.asarray(v), np.asarray(r),
                                   atol=5e-3, rtol=0)

    print("KERNEL_OK")
</pallas_src>

<mosaic_0001>
module attributes {stable_mosaic.version = 11 : i64} {
  func.func @kernel(%arg0: i32, %arg1: memref<1x4x128xf32, #tpu.memory_space<vmem>>, %arg2: memref<1x2x16xf32, #tpu.memory_space<vmem>>, %arg3: memref<9x128xf32, #tpu.memory_space<vmem>>, %arg4: memref<8x36xf32, #tpu.memory_space<vmem>>, %arg5: memref<8x72xf32, #tpu.memory_space<vmem>>, %arg6: memref<8x72xf32, #tpu.memory_space<vmem>>, %arg7: memref<8x72xf32, #tpu.memory_space<vmem>>, %arg8: memref<8x72xf32, #tpu.memory_space<vmem>>, %arg9: memref<8x72xf32, #tpu.memory_space<vmem>>, %arg10: memref<4x72xf32, #tpu.memory_space<vmem>>, %arg11: memref<8x1xf32, #tpu.memory_space<vmem>>, %arg12: memref<8x1xf32, #tpu.memory_space<vmem>>, %arg13: memref<8x1xf32, #tpu.memory_space<vmem>>, %arg14: memref<8x1xf32, #tpu.memory_space<vmem>>, %arg15: memref<8x1xf32, #tpu.memory_space<vmem>>, %arg16: memref<8x1xf32, #tpu.memory_space<vmem>>, %arg17: memref<4x1xf32, #tpu.memory_space<vmem>>, %arg18: memref<8x1xf32, #tpu.memory_space<vmem>>, %arg19: memref<8x1xf32, #tpu.memory_space<vmem>>, %arg20: memref<8x1xf32, #tpu.memory_space<vmem>>, %arg21: memref<8x1xf32, #tpu.memory_space<vmem>>, %arg22: memref<8x1xf32, #tpu.memory_space<vmem>>, %arg23: memref<8x1xf32, #tpu.memory_space<vmem>>, %arg24: memref<4x1xf32, #tpu.memory_space<vmem>>, %arg25: memref<16x8xf32, #tpu.memory_space<vmem>>, %arg26: memref<1x8xf32, #tpu.memory_space<vmem>>, %arg27: memref<6x264x32xf32, #tpu.memory_space<vmem>>, %arg28: memref<6x1x32xf32, #tpu.memory_space<vmem>>, %arg29: memref<6x32x32xf32, #tpu.memory_space<vmem>>, %arg30: memref<6x32x32xf32, #tpu.memory_space<vmem>>, %arg31: memref<6x32x32xf32, #tpu.memory_space<vmem>>, %arg32: memref<6x32x32xf32, #tpu.memory_space<vmem>>, %arg33: memref<6x32x32xf32, #tpu.memory_space<vmem>>, %arg34: memref<6x32x32xf32, #tpu.memory_space<vmem>>, %arg35: memref<6x1x32xf32, #tpu.memory_space<vmem>>, %arg36: memref<6x1x32xf32, #tpu.memory_space<vmem>>, %arg37: memref<6x1x32xf32, #tpu.memory_space<vmem>>, %arg38: memref<6x1x32xf32, #tpu.memory_space<vmem>>, %arg39: memref<6x1x32xf32, #tpu.memory_space<vmem>>, %arg40: memref<6x1x32xf32, #tpu.memory_space<vmem>>, %arg41: memref<6x32x64xf32, #tpu.memory_space<vmem>>, %arg42: memref<6x1x64xf32, #tpu.memory_space<vmem>>, %arg43: memref<1x6x2x64xf32, #tpu.memory_space<vmem>>, %arg44: memref<6x2x32xf32, #tpu.memory_space<vmem>>) attributes {dimension_semantics = [#tpu.dimension_semantics<arbitrary>], iteration_bounds = array<i64: 8>, scalar_prefetch = 0 : i64, scratch_operands = 1 : i64, tpu.core_type = #tpu.core_type<tc>, window_params = [{transform_indices = @transform_0, window_bounds = array<i64: 1, 4, 128>}, {transform_indices = @transform_1, window_bounds = array<i64: 1, 2, 16>}, {pipeline_mode = #tpu.pipeline_mode<synchronous>, transform_indices = @transform_2, window_bounds = array<i64: 9, 128>}, {pipeline_mode = #tpu.pipeline_mode<synchronous>, transform_indices = @transform_3, window_bounds = array<i64: 8, 36>}, {pipeline_mode = #tpu.pipeline_mode<synchronous>, transform_indices = @transform_4, window_bounds = array<i64: 8, 72>}, {pipeline_mode = #tpu.pipeline_mode<synchronous>, transform_indices = @transform_5, window_bounds = array<i64: 8, 72>}, {pipeline_mode = #tpu.pipeline_mode<synchronous>, transform_indices = @transform_6, window_bounds = array<i64: 8, 72>}, {pipeline_mode = #tpu.pipeline_mode<synchronous>, transform_indices = @transform_7, window_bounds = array<i64: 8, 72>}, {pipeline_mode = #tpu.pipeline_mode<synchronous>, transform_indices = @transform_8, window_bounds = array<i64: 8, 72>}, {pipeline_mode = #tpu.pipeline_mode<synchronous>, transform_indices = @transform_9, window_bounds = array<i64: 4, 72>}, {pipeline_mode = #tpu.pipeline_mode<synchronous>, transform_indices = @transform_10, window_bounds = array<i64: 8, 1>}, {pipeline_mode = #tpu.pipeline_mode<synchronous>, transform_indices = @transform_11, window_bounds = array<i64: 8, 1>}, {pipeline_mode = #tpu.pipeline_mode<synchronous>, transform_indices = @transform_12, window_bounds = array<i64: 8, 1>}, {pipeline_mode = #tpu.pipeline_mode<synchronous>, transform_indices = @transform_13, window_bounds = array<i64: 8, 1>}, {pipeline_mode = #tpu.pipeline_mode<synchronous>, transform_indices = @transform_14, window_bounds = array<i64: 8, 1>}, {pipeline_mode = #tpu.pipeline_mode<synchronous>, transform_indices = @transform_15, window_bounds = array<i64: 8, 1>}, {pipeline_mode = #tpu.pipeline_mode<synchronous>, transform_indices = @transform_16, window_bounds = array<i64: 4, 1>}, {pipeline_mode = #tpu.pipeline_mode<synchronous>, transform_indices = @transform_17, window_bounds = array<i64: 8, 1>}, {pipeline_mode = #tpu.pipeline_mode<synchronous>, transform_indices = @transform_18, window_bounds = array<i64: 8, 1>}, {pipeline_mode = #tpu.pipeline_mode<synchronous>, transform_indices = @transform_19, window_bounds = array<i64: 8, 1>}, {pipeline_mode = #tpu.pipeline_mode<synchronous>, transform_indices = @transform_20, window_bounds = array<i64: 8, 1>}, {pipeline_mode = #tpu.pipeline_mode<synchronous>, transform_indices = @transform_21, window_bounds = array<i64: 8, 1>}, {pipeline_mode = #tpu.pipeline_mode<synchronous>, transform_indices = @transform_22, window_bounds = array<i64: 8, 1>}, {pipeline_mode = #tpu.pipeline_mode<synchronous>, transform_indices = @transform_23, window_bounds = array<i64: 4, 1>}, {pipeline_mode = #tpu.pipeline_mode<synchronous>, transform_indices = @transform_24, window_bounds = array<i64: 16, 8>}, {pipeline_mode = #tpu.pipeline_mode<synchronous>, transform_indices = @transform_25, window_bounds = array<i64: 1, 8>}, {pipeline_mode = #tpu.pipeline_mode<synchronous>, transform_indices = @transform_26, window_bounds = array<i64: 6, 264, 32>}, {pipeline_mode = #tpu.pipeline_mode<synchronous>, transform_indices = @transform_27, window_bounds = array<i64: 6, 1, 32>}, {pipeline_mode = #tpu.pipeline_mode<synchronous>, transform_indices = @transform_28, window_bounds = array<i64: 6, 32, 32>}, {pipeline_mode = #tpu.pipeline_mode<synchronous>, transform_indices = @transform_29, window_bounds = array<i64: 6, 32, 32>}, {pipeline_mode = #tpu.pipeline_mode<synchronous>, transform_indices = @transform_30, window_bounds = array<i64: 6, 32, 32>}, {pipeline_mode = #tpu.pipeline_mode<synchronous>, transform_indices = @transform_31, window_bounds = array<i64: 6, 32, 32>}, {pipeline_mode = #tpu.pipeline_mode<synchronous>, transform_indices = @transform_32, window_bounds = array<i64: 6, 32, 32>}, {pipeline_mode = #tpu.pipeline_mode<synchronous>, transform_indices = @transform_33, window_bounds = array<i64: 6, 32, 32>}, {pipeline_mode = #tpu.pipeline_mode<synchronous>, transform_indices = @transform_34, window_bounds = array<i64: 6, 1, 32>}, {pipeline_mode = #tpu.pipeline_mode<synchronous>, transform_indices = @transform_35, window_bounds = array<i64: 6, 1, 32>}, {pipeline_mode = #tpu.pipeline_mode<synchronous>, transform_indices = @transform_36, window_bounds = array<i64: 6, 1, 32>}, {pipeline_mode = #tpu.pipeline_mode<synchronous>, transform_indices = @transform_37, window_bounds = array<i64: 6, 1, 32>}, {pipeline_mode = #tpu.pipeline_mode<synchronous>, transform_indices = @transform_38, window_bounds = array<i64: 6, 1, 32>}, {pipeline_mode = #tpu.pipeline_mode<synchronous>, transform_indices = @transform_39, window_bounds = array<i64: 6, 1, 32>}, {pipeline_mode = #tpu.pipeline_mode<synchronous>, transform_indices = @transform_40, window_bounds = array<i64: 6, 32, 64>}, {pipeline_mode = #tpu.pipeline_mode<synchronous>, transform_indices = @transform_41, window_bounds = array<i64: 6, 1, 64>}, {transform_indices = @transform_42, window_bounds = array<i64: 1, 6, 2, 64>}]} {
    %c0_i32 = arith.constant 0 : i32
    %0 = arith.cmpi eq, %arg0, %c0_i32 : i32
    %1 = arith.extui %0 : i1 to i32
    %c0_i32_0 = arith.constant 0 : i32
    %2 = arith.cmpi ne, %1, %c0_i32_0 : i32
    scf.if %2 {
      %cst_177 = arith.constant 0.000000e+00 : f32
      %670 = vector.broadcast %cst_177 : f32 to vector<6x2x32xf32>
      %c0_178 = arith.constant 0 : index
      %c0_179 = arith.constant 0 : index
      %c0_180 = arith.constant 0 : index
      %671 = vector.load %arg44[%c0_178, %c0_179, %c0_180] : memref<6x2x32xf32, #tpu.memory_space<vmem>>, vector<6x2x32xf32>
      tpu.vector_store %arg44[%c0_178, %c0_179, %c0_180], %670 {strides = array<i32>} : memref<6x2x32xf32, #tpu.memory_space<vmem>>, vector<6x2x32xf32>,
    } else {
    }
    %c0 = arith.constant 0 : index
    %c0_1 = arith.constant 0 : index
    %3 = vector.load %arg3[%c0, %c0_1] : memref<9x128xf32, #tpu.memory_space<vmem>>, vector<9x128xf32>
    %c0_2 = arith.constant 0 : index
    %c0_3 = arith.constant 0 : index
    %c0_4 = arith.constant 0 : index
    %4 = vector.load %arg1[%c0_2, %c0_3, %c0_4] : memref<1x4x128xf32, #tpu.memory_space<vmem>>, vector<1x4x128xf32>
    %5 = vector.shape_cast %4 : vector<1x4x128xf32> to vector<4x128xf32>
    %6 = vector.extract_strided_slice %5 {offsets = [0, 119], sizes = [4, 9], strides = [1, 1]} : vector<4x128xf32> to vector<4x9xf32>
    %7 = vector.extract_strided_slice %5 {offsets = [0, 0], sizes = [4, 119], strides = [1, 1]} : vector<4x128xf32> to vector<4x119xf32>
    %8 = tpu.concatenate %6, %7 in 1 : vector<4x9xf32>, vector<4x119xf32> -> vector<4x128xf32>
    %9 = vector.extract_strided_slice %3 {offsets = [0, 0], sizes = [1, 128], strides = [1, 1]} : vector<9x128xf32> to vector<1x128xf32>
    %10 = vector.broadcast %9 : vector<1x128xf32> to vector<4x128xf32>
    %11 = arith.mulf %8, %10 : vector<4x128xf32>
    %12 = vector.extract_strided_slice %5 {offsets = [0, 120], sizes = [4, 8], strides = [1, 1]} : vector<4x128xf32> to vector<4x8xf32>
    %13 = vector.extract_strided_slice %5 {offsets = [0, 0], sizes = [4, 120], strides = [1, 1]} : vector<4x128xf32> to vector<4x120xf32>
    %14 = tpu.concatenate %12, %13 in 1 : vector<4x8xf32>, vector<4x120xf32> -> vector<4x128xf32>
    %15 = vector.extract_strided_slice %3 {offsets = [1, 0], sizes = [1, 128], strides = [1, 1]} : vector<9x128xf32> to vector<1x128xf32>
    %16 = vector.broadcast %15 : vector<1x128xf32> to vector<4x128xf32>
    %17 = arith.mulf %14, %16 : vector<4x128xf32>
    %18 = vector.extract_strided_slice %5 {offsets = [0, 121], sizes = [4, 7], strides = [1, 1]} : vector<4x128xf32> to vector<4x7xf32>
    %19 = vector.extract_strided_slice %5 {offsets = [0, 0], sizes = [4, 121], strides = [1, 1]} : vector<4x128xf32> to vector<4x121xf32>
    %20 = tpu.concatenate %18, %19 in 1 : vector<4x7xf32>, vector<4x121xf32> -> vector<4x128xf32>
    %21 = vector.extract_strided_slice %3 {offsets = [2, 0], sizes = [1, 128], strides = [1, 1]} : vector<9x128xf32> to vector<1x128xf32>
    %22 = vector.broadcast %21 : vector<1x128xf32> to vector<4x128xf32>
    %23 = arith.mulf %20, %22 : vector<4x128xf32>
    %24 = vector.extract_strided_slice %5 {offsets = [0, 127], sizes = [4, 1], strides = [1, 1]} : vector<4x128xf32> to vector<4x1xf32>
    %25 = vector.extract_strided_slice %5 {offsets = [0, 0], sizes = [4, 127], strides = [1, 1]} : vector<4x128xf32> to vector<4x127xf32>
    %26 = tpu.concatenate %24, %25 in 1 : vector<4x1xf32>, vector<4x127xf32> -> vector<4x128xf32>
    %27 = vector.extract_strided_slice %3 {offsets = [3, 0], sizes = [1, 128], strides = [1, 1]} : vector<9x128xf32> to vector<1x128xf32>
    %28 = vector.broadcast %27 : vector<1x128xf32> to vector<4x128xf32>
    %29 = arith.mulf %26, %28 : vector<4x128xf32>
    %30 = vector.extract_strided_slice %3 {offsets = [4, 0], sizes = [1, 128], strides = [1, 1]} : vector<9x128xf32> to vector<1x128xf32>
    %31 = vector.broadcast %30 : vector<1x128xf32> to vector<4x128xf32>
    %32 = arith.mulf %5, %31 : vector<4x128xf32>
    %33 = vector.extract_strided_slice %5 {offsets = [0, 1], sizes = [4, 127], strides = [1, 1]} : vector<4x128xf32> to vector<4x127xf32>
    %34 = vector.extract_strided_slice %5 {offsets = [0, 0], sizes = [4, 1], strides = [1, 1]} : vector<4x128xf32> to vector<4x1xf32>
    %35 = tpu.concatenate %33, %34 in 1 : vector<4x127xf32>, vector<4x1xf32> -> vector<4x128xf32>
    %36 = vector.extract_strided_slice %3 {offsets = [5, 0], sizes = [1, 128], strides = [1, 1]} : vector<9x128xf32> to vector<1x128xf32>
    %37 = vector.broadcast %36 : vector<1x128xf32> to vector<4x128xf32>
    %38 = arith.mulf %35, %37 : vector<4x128xf32>
    %39 = vector.extract_strided_slice %5 {offsets = [0, 7], sizes = [4, 121], strides = [1, 1]} : vector<4x128xf32> to vector<4x121xf32>
    %40 = vector.extract_strided_slice %5 {offsets = [0, 0], sizes = [4, 7], strides = [1, 1]} : vector<4x128xf32> to vector<4x7xf32>
    %41 = tpu.concatenate %39, %40 in 1 : vector<4x121xf32>, vector<4x7xf32> -> vector<4x128xf32>
    %42 = vector.extract_strided_slice %3 {offsets = [6, 0], sizes = [1, 128], strides = [1, 1]} : vector<9x128xf32> to vector<1x128xf32>
    %43 = vector.broadcast %42 : vector<1x128xf32> to vector<4x128xf32>
    %44 = arith.mulf %41, %43 : vector<4x128xf32>
    %45 = vector.extract_strided_slice %5 {offsets = [0, 8], sizes = [4, 120], strides = [1, 1]} : vector<4x128xf32> to vector<4x120xf32>
    %46 = vector.extract_strided_slice %5 {offsets = [0, 0], sizes = [4, 8], strides = [1, 1]} : vector<4x128xf32> to vector<4x8xf32>
    %47 = tpu.concatenate %45, %46 in 1 : vector<4x120xf32>, vector<4x8xf32> -> vector<4x128xf32>
    %48 = vector.extract_strided_slice %3 {offsets = [7, 0], sizes = [1, 128], strides = [1, 1]} : vector<9x128xf32> to vector<1x128xf32>
    %49 = vector.broadcast %48 : vector<1x128xf32> to vector<4x128xf32>
    %50 = arith.mulf %47, %49 : vector<4x128xf32>
    %51 = vector.extract_strided_slice %5 {offsets = [0, 9], sizes = [4, 119], strides = [1, 1]} : vector<4x128xf32> to vector<4x119xf32>
    %52 = vector.extract_strided_slice %5 {offsets = [0, 0], sizes = [4, 9], strides = [1, 1]} : vector<4x128xf32> to vector<4x9xf32>
    %53 = tpu.concatenate %51, %52 in 1 : vector<4x119xf32>, vector<4x9xf32> -> vector<4x128xf32>
    %54 = vector.extract_strided_slice %3 {offsets = [8, 0], sizes = [1, 128], strides = [1, 1]} : vector<9x128xf32> to vector<1x128xf32>
    %55 = vector.broadcast %54 : vector<1x128xf32> to vector<4x128xf32>
    %56 = arith.mulf %53, %55 : vector<4x128xf32>
    %57 = tpu.concatenate %11, %17, %23, %29, %32, %38, %44, %50, %56 in 0 : vector<4x128xf32>, vector<4x128xf32>, vector<4x128xf32>, vector<4x128xf32>, vector<4x128xf32>, vector<4x128xf32>, vector<4x128xf32>, vector<4x128xf32>, vector<4x128xf32> -> vector<36x128xf32>
    %c0_5 = arith.constant 0 : index
    %c0_6 = arith.constant 0 : index
    %58 = vector.load %arg4[%c0_5, %c0_6] : memref<8x36xf32, #tpu.memory_space<vmem>>, vector<8x36xf32>
    %cst = arith.constant dense<0.000000e+00> : vector<8x128xf32>
    %59 = tpu.matmul %58, %57, %cst {dimension_numbers = #tpu.dot_dimension_numbers<[1], [0], [0], [1], [0, 0, 1, 1], [], []>} : vector<8x36xf32>, vector<36x128xf32>, vector<8x128xf32> -> vector<8x128xf32>
    %cst_7 = arith.constant dense<0.000000e+00> : vector<8xf32>
    %60 = vector.multi_reduction <add>, %59, %cst_7 [1] : vector<8x128xf32> to vector<8xf32>
    %61 = vector.shape_cast %60 : vector<8xf32> to vector<8x1xf32>
    %cst_8 = arith.constant 1.280000e+02 : f32
    %62 = vector.broadcast %cst_8 : f32 to vector<8x1xf32>
    %63 = arith.divf %61, %62 : vector<8x1xf32>
    %64 = vector.broadcast %63 : vector<8x1xf32> to vector<8x128xf32>
    %65 = arith.subf %59, %64 : vector<8x128xf32>
    %66 = arith.mulf %65, %65 : vector<8x128xf32>
    %cst_9 = arith.constant dense<0.000000e+00> : vector<8xf32>
    %67 = vector.multi_reduction <add>, %66, %cst_9 [1] : vector<8x128xf32> to vector<8xf32>
    %68 = vector.shape_cast %67 : vector<8xf32> to vector<8x1xf32>
    %cst_10 = arith.constant 1.280000e+02 : f32
    %69 = vector.broadcast %cst_10 : f32 to vector<8x1xf32>
    %70 = arith.divf %68, %69 : vector<8x1xf32>
    %71 = vector.broadcast %63 : vector<8x1xf32> to vector<8x128xf32>
    %72 = arith.subf %59, %71 : vector<8x128xf32>
    %cst_11 = arith.constant 9.99999974E-6 : f32
    %73 = vector.broadcast %cst_11 : f32 to vector<8x1xf32>
    %74 = arith.addf %70, %73 : vector<8x1xf32>
    %75 = math.rsqrt %74 : vector<8x1xf32>
    %76 = vector.broadcast %75 : vector<8x1xf32> to vector<8x128xf32>
    %77 = arith.mulf %72, %76 : vector<8x128xf32>
    %c0_12 = arith.constant 0 : index
    %c0_13 = arith.constant 0 : index
    %78 = vector.load %arg11[%c0_12, %c0_13] : memref<8x1xf32, #tpu.memory_space<vmem>>, vector<8x1xf32>
    %79 = vector.broadcast %78 : vector<8x1xf32> to vector<8x128xf32>
    %80 = arith.mulf %77, %79 : vector<8x128xf32>
    %c0_14 = arith.constant 0 : index
    %c0_15 = arith.constant 0 : index
    %81 = vector.load %arg18[%c0_14, %c0_15] : memref<8x1xf32, #tpu.memory_space<vmem>>, vector<8x1xf32>
    %82 = vector.broadcast %81 : vector<8x1xf32> to vector<8x128xf32>
    %83 = arith.addf %80, %82 : vector<8x128xf32>
    %cst_16 = arith.constant 0.000000e+00 : f32
    %84 = vector.broadcast %cst_16 : f32 to vector<8x128xf32>
    %85 = arith.maximumf %83, %84 : vector<8x128xf32>
    %86 = vector.extract_strided_slice %85 {offsets = [0, 119], sizes = [8, 9], strides = [1, 1]} : vector<8x128xf32> to vector<8x9xf32>
    %87 = vector.extract_strided_slice %85 {offsets = [0, 0], sizes = [8, 119], strides = [1, 1]} : vector<8x128xf32> to vector<8x119xf32>
    %88 = tpu.concatenate %86, %87 in 1 : vector<8x9xf32>, vector<8x119xf32> -> vector<8x128xf32>
    %89 = vector.extract_strided_slice %3 {offsets = [0, 0], sizes = [1, 128], strides = [1, 1]} : vector<9x128xf32> to vector<1x128xf32>
    %90 = vector.broadcast %89 : vector<1x128xf32> to vector<8x128xf32>
    %91 = arith.mulf %88, %90 : vector<8x128xf32>
    %92 = vector.extract_strided_slice %85 {offsets = [0, 120], sizes = [8, 8], strides = [1, 1]} : vector<8x128xf32> to vector<8x8xf32>
    %93 = vector.extract_strided_slice %85 {offsets = [0, 0], sizes = [8, 120], strides = [1, 1]} : vector<8x128xf32> to vector<8x120xf32>
    %94 = tpu.concatenate %92, %93 in 1 : vector<8x8xf32>, vector<8x120xf32> -> vector<8x128xf32>
    %95 = vector.extract_strided_slice %3 {offsets = [1, 0], sizes = [1, 128], strides = [1, 1]} : vector<9x128xf32> to vector<1x128xf32>
    %96 = vector.broadcast %95 : vector<1x128xf32> to vector<8x128xf32>
    %97 = arith.mulf %94, %96 : vector<8x128xf32>
    %98 = vector.extract_strided_slice %85 {offsets = [0, 121], sizes = [8, 7], strides = [1, 1]} : vector<8x128xf32> to vector<8x7xf32>
    %99 = vector.extract_strided_slice %85 {offsets = [0, 0], sizes = [8, 121], strides = [1, 1]} : vector<8x128xf32> to vector<8x121xf32>
    %100 = tpu.concatenate %98, %99 in 1 : vector<8x7xf32>, vector<8x121xf32> -> vector<8x128xf32>
    %101 = vector.extract_strided_slice %3 {offsets = [2, 0], sizes = [1, 128], strides = [1, 1]} : vector<9x128xf32> to vector<1x128xf32>
    %102 = vector.broadcast %101 : vector<1x128xf32> to vector<8x128xf32>
    %103 = arith.mulf %100, %102 : vector<8x128xf32>
    %104 = vector.extract_strided_slice %85 {offsets = [0, 127], sizes = [8, 1], strides = [1, 1]} : vector<8x128xf32> to vector<8x1xf32>
    %105 = vector.extract_strided_slice %85 {offsets = [0, 0], sizes = [8, 127], strides = [1, 1]} : vector<8x128xf32> to vector<8x127xf32>
    %106 = tpu.concatenate %104, %105 in 1 : vector<8x1xf32>, vector<8x127xf32> -> vector<8x128xf32>
    %107 = vector.extract_strided_slice %3 {offsets = [3, 0], sizes = [1, 128], strides = [1, 1]} : vector<9x128xf32> to vector<1x128xf32>
    %108 = vector.broadcast %107 : vector<1x128xf32> to vector<8x128xf32>
    %109 = arith.mulf %106, %108 : vector<8x128xf32>
    %110 = vector.extract_strided_slice %3 {offsets = [4, 0], sizes = [1, 128], strides = [1, 1]} : vector<9x128xf32> to vector<1x128xf32>
    %111 = vector.broadcast %110 : vector<1x128xf32> to vector<8x128xf32>
    %112 = arith.mulf %85, %111 : vector<8x128xf32>
    %113 = vector.extract_strided_slice %85 {offsets = [0, 1], sizes = [8, 127], strides = [1, 1]} : vector<8x128xf32> to vector<8x127xf32>
    %114 = vector.extract_strided_slice %85 {offsets = [0, 0], sizes = [8, 1], strides = [1, 1]} : vector<8x128xf32> to vector<8x1xf32>
    %115 = tpu.concatenate %113, %114 in 1 : vector<8x127xf32>, vector<8x1xf32> -> vector<8x128xf32>
    %116 = vector.extract_strided_slice %3 {offsets = [5, 0], sizes = [1, 128], strides = [1, 1]} : vector<9x128xf32> to vector<1x128xf32>
    %117 = vector.broadcast %116 : vector<1x128xf32> to vector<8x128xf32>
    %118 = arith.mulf %115, %117 : vector<8x128xf32>
    %119 = vector.extract_strided_slice %85 {offsets = [0, 7], sizes = [8, 121], strides = [1, 1]} : vector<8x128xf32> to vector<8x121xf32>
    %120 = vector.extract_strided_slice %85 {offsets = [0, 0], sizes = [8, 7], strides = [1, 1]} : vector<8x128xf32> to vector<8x7xf32>
    %121 = tpu.concatenate %119, %120 in 1 : vector<8x121xf32>, vector<8x7xf32> -> vector<8x128xf32>
    %122 = vector.extract_strided_slice %3 {offsets = [6, 0], sizes = [1, 128], strides = [1, 1]} : vector<9x128xf32> to vector<1x128xf32>
    %123 = vector.broadcast %122 : vector<1x128xf32> to vector<8x128xf32>
    %124 = arith.mulf %121, %123 : vector<8x128xf32>
    %125 = vector.extract_strided_slice %85 {offsets = [0, 8], sizes = [8, 120], strides = [1, 1]} : vector<8x128xf32> to vector<8x120xf32>
    %126 = vector.extract_strided_slice %85 {offsets = [0, 0], sizes = [8, 8], strides = [1, 1]} : vector<8x128xf32> to vector<8x8xf32>
    %127 = tpu.concatenate %125, %126 in 1 : vector<8x120xf32>, vector<8x8xf32> -> vector<8x128xf32>
    %128 = vector.extract_strided_slice %3 {offsets = [7, 0], sizes = [1, 128], strides = [1, 1]} : vector<9x128xf32> to vector<1x128xf32>
    %129 = vector.broadcast %128 : vector<1x128xf32> to vector<8x128xf32>
    %130 = arith.mulf %127, %129 : vector<8x128xf32>
    %131 = vector.extract_strided_slice %85 {offsets = [0, 9], sizes = [8, 119], strides = [1, 1]} : vector<8x128xf32> to vector<8x119xf32>
    %132 = vector.extract_strided_slice %85 {offsets = [0, 0], sizes = [8, 9], strides = [1, 1]} : vector<8x128xf32> to vector<8x9xf32>
    %133 = tpu.concatenate %131, %132 in 1 : vector<8x119xf32>, vector<8x9xf32> -> vector<8x128xf32>
    %134 = vector.extract_strided_slice %3 {offsets = [8, 0], sizes = [1, 128], strides = [1, 1]} : vector<9x128xf32> to vector<1x128xf32>
    %135 = vector.broadcast %134 : vector<1x128xf32> to vector<8x128xf32>
    %136 = arith.mulf %133, %135 : vector<8x128xf32>
    %137 = tpu.concatenate %91, %97, %103, %109, %112, %118, %124, %130, %136 in 0 : vector<8x128xf32>, vector<8x128xf32>, vector<8x128xf32>, vector<8x128xf32>, vector<8x128xf32>, vector<8x128xf32>, vector<8x128xf32>, vector<8x128xf32>, vector<8x128xf32> -> vector<72x128xf32>
    %c0_17 = arith.constant 0 : index
    %c0_18 = arith.constant 0 : index
    %138 = vector.load %arg5[%c0_17, %c0_18] : memref<8x72xf32, #tpu.memory_space<vmem>>, vector<8x72xf32>
    %cst_19 = arith.constant dense<0.000000e+00> : vector<8x128xf32>
    %139 = tpu.matmul %138, %137, %cst_19 {dimension_numbers = #tpu.dot_dimension_numbers<[1], [0], [0], [1], [0, 0, 1, 1], [], []>} : vector<8x72xf32>, vector<72x128xf32>, vector<8x128xf32> -> vector<8x128xf32>
    %cst_20 = arith.constant dense<0.000000e+00> : vector<8xf32>
    %140 = vector.multi_reduction <add>, %139, %cst_20 [1] : vector<8x128xf32> to vector<8xf32>
    %141 = vector.shape_cast %140 : vector<8xf32> to vector<8x1xf32>
    %cst_21 = arith.constant 1.280000e+02 : f32
    %142 = vector.broadcast %cst_21 : f32 to vector<8x1xf32>
    %143 = arith.divf %141, %142 : vector<8x1xf32>
    %144 = vector.broadcast %143 : vector<8x1xf32> to vector<8x128xf32>
    %145 = arith.subf %139, %144 : vector<8x128xf32>
    %146 = arith.mulf %145, %145 : vector<8x128xf32>
    %cst_22 = arith.constant dense<0.000000e+00> : vector<8xf32>
    %147 = vector.multi_reduction <add>, %146, %cst_22 [1] : vector<8x128xf32> to vector<8xf32>
    %148 = vector.shape_cast %147 : vector<8xf32> to vector<8x1xf32>
    %cst_23 = arith.constant 1.280000e+02 : f32
    %149 = vector.broadcast %cst_23 : f32 to vector<8x1xf32>
    %150 = arith.divf %148, %149 : vector<8x1xf32>
    %151 = vector.broadcast %143 : vector<8x1xf32> to vector<8x128xf32>
    %152 = arith.subf %139, %151 : vector<8x128xf32>
    %cst_24 = arith.constant 9.99999974E-6 : f32
    %153 = vector.broadcast %cst_24 : f32 to vector<8x1xf32>
    %154 = arith.addf %150, %153 : vector<8x1xf32>
    %155 = math.rsqrt %154 : vector<8x1xf32>
    %156 = vector.broadcast %155 : vector<8x1xf32> to vector<8x128xf32>
    %157 = arith.mulf %152, %156 : vector<8x128xf32>
    %c0_25 = arith.constant 0 : index
    %c0_26 = arith.constant 0 : index
    %158 = vector.load %arg12[%c0_25, %c0_26] : memref<8x1xf32, #tpu.memory_space<vmem>>, vector<8x1xf32>
    %159 = vector.broadcast %158 : vector<8x1xf32> to vector<8x128xf32>
    %160 = arith.mulf %157, %159 : vector<8x128xf32>
    %c0_27 = arith.constant 0 : index
    %c0_28 = arith.constant 0 : index
    %161 = vector.load %arg19[%c0_27, %c0_28] : memref<8x1xf32, #tpu.memory_space<vmem>>, vector<8x1xf32>
    %162 = vector.broadcast %161 : vector<8x1xf32> to vector<8x128xf32>
    %163 = arith.addf %160, %162 : vector<8x128xf32>
    %cst_29 = arith.constant 0.000000e+00 : f32
    %164 = vector.broadcast %cst_29 : f32 to vector<8x128xf32>
    %165 = arith.maximumf %163, %164 : vector<8x128xf32>
    %166 = vector.extract_strided_slice %165 {offsets = [0, 119], sizes = [8, 9], strides = [1, 1]} : vector<8x128xf32> to vector<8x9xf32>
    %167 = vector.extract_strided_slice %165 {offsets = [0, 0], sizes = [8, 119], strides = [1, 1]} : vector<8x128xf32> to vector<8x119xf32>
    %168 = tpu.concatenate %166, %167 in 1 : vector<8x9xf32>, vector<8x119xf32> -> vector<8x128xf32>
    %169 = vector.extract_strided_slice %3 {offsets = [0, 0], sizes = [1, 128], strides = [1, 1]} : vector<9x128xf32> to vector<1x128xf32>
    %170 = vector.broadcast %169 : vector<1x128xf32> to vector<8x128xf32>
    %171 = arith.mulf %168, %170 : vector<8x128xf32>
    %172 = vector.extract_strided_slice %165 {offsets = [0, 120], sizes = [8, 8], strides = [1, 1]} : vector<8x128xf32> to vector<8x8xf32>
    %173 = vector.extract_strided_slice %165 {offsets = [0, 0], sizes = [8, 120], strides = [1, 1]} : vector<8x128xf32> to vector<8x120xf32>
    %174 = tpu.concatenate %172, %173 in 1 : vector<8x8xf32>, vector<8x120xf32> -> vector<8x128xf32>
    %175 = vector.extract_strided_slice %3 {offsets = [1, 0], sizes = [1, 128], strides = [1, 1]} : vector<9x128xf32> to vector<1x128xf32>
    %176 = vector.broadcast %175 : vector<1x128xf32> to vector<8x128xf32>
    %177 = arith.mulf %174, %176 : vector<8x128xf32>
    %178 = vector.extract_strided_slice %165 {offsets = [0, 121], sizes = [8, 7], strides = [1, 1]} : vector<8x128xf32> to vector<8x7xf32>
    %179 = vector.extract_strided_slice %165 {offsets = [0, 0], sizes = [8, 121], strides = [1, 1]} : vector<8x128xf32> to vector<8x121xf32>
    %180 = tpu.concatenate %178, %179 in 1 : vector<8x7xf32>, vector<8x121xf32> -> vector<8x128xf32>
    %181 = vector.extract_strided_slice %3 {offsets = [2, 0], sizes = [1, 128], strides = [1, 1]} : vector<9x128xf32> to vector<1x128xf32>
    %182 = vector.broadcast %181 : vector<1x128xf32> to vector<8x128xf32>
    %183 = arith.mulf %180, %182 : vector<8x128xf32>
    %184 = vector.extract_strided_slice %165 {offsets = [0, 127], sizes = [8, 1], strides = [1, 1]} : vector<8x128xf32> to vector<8x1xf32>
    %185 = vector.extract_strided_slice %165 {offsets = [0, 0], sizes = [8, 127], strides = [1, 1]} : vector<8x128xf32> to vector<8x127xf32>
    %186 = tpu.concatenate %184, %185 in 1 : vector<8x1xf32>, vector<8x127xf32> -> vector<8x128xf32>
    %187 = vector.extract_strided_slice %3 {offsets = [3, 0], sizes = [1, 128], strides = [1, 1]} : vector<9x128xf32> to vector<1x128xf32>
    %188 = vector.broadcast %187 : vector<1x128xf32> to vector<8x128xf32>
    %189 = arith.mulf %186, %188 : vector<8x128xf32>
    %190 = vector.extract_strided_slice %3 {offsets = [4, 0], sizes = [1, 128], strides = [1, 1]} : vector<9x128xf32> to vector<1x128xf32>
    %191 = vector.broadcast %190 : vector<1x128xf32> to vector<8x128xf32>
    %192 = arith.mulf %165, %191 : vector<8x128xf32>
    %193 = vector.extract_strided_slice %165 {offsets = [0, 1], sizes = [8, 127], strides = [1, 1]} : vector<8x128xf32> to vector<8x127xf32>
    %194 = vector.extract_strided_slice %165 {offsets = [0, 0], sizes = [8, 1], strides = [1, 1]} : vector<8x128xf32> to vector<8x1xf32>
    %195 = tpu.concatenate %193, %194 in 1 : vector<8x127xf32>, vector<8x1xf32> -> vector<8x128xf32>
    %196 = vector.extract_strided_slice %3 {offsets = [5, 0], sizes = [1, 128], strides = [1, 1]} : vector<9x128xf32> to vector<1x128xf32>
    %197 = vector.broadcast %196 : vector<1x128xf32> to vector<8x128xf32>
    %198 = arith.mulf %195, %197 : vector<8x128xf32>
    %199 = vector.extract_strided_slice %165 {offsets = [0, 7], sizes = [8, 121], strides = [1, 1]} : vector<8x128xf32> to vector<8x121xf32>
    %200 = vector.extract_strided_slice %165 {offsets = [0, 0], sizes = [8, 7], strides = [1, 1]} : vector<8x128xf32> to vector<8x7xf32>
    %201 = tpu.concatenate %199, %200 in 1 : vector<8x121xf32>, vector<8x7xf32> -> vector<8x128xf32>
    %202 = vector.extract_strided_slice %3 {offsets = [6, 0], sizes = [1, 128], strides = [1, 1]} : vector<9x128xf32> to vector<1x128xf32>
    %203 = vector.broadcast %202 : vector<1x128xf32> to vector<8x128xf32>
    %204 = arith.mulf %201, %203 : vector<8x128xf32>
    %205 = vector.extract_strided_slice %165 {offsets = [0, 8], sizes = [8, 120], strides = [1, 1]} : vector<8x128xf32> to vector<8x120xf32>
    %206 = vector.extract_strided_slice %165 {offsets = [0, 0], sizes = [8, 8], strides = [1, 1]} : vector<8x128xf32> to vector<8x8xf32>
    %207 = tpu.concatenate %205, %206 in 1 : vector<8x120xf32>, vector<8x8xf32> -> vector<8x128xf32>
    %208 = vector.extract_strided_slice %3 {offsets = [7, 0], sizes = [1, 128], strides = [1, 1]} : vector<9x128xf32> to vector<1x128xf32>
    %209 = vector.broadcast %208 : vector<1x128xf32> to vector<8x128xf32>
    %210 = arith.mulf %207, %209 : vector<8x128xf32>
    %211 = vector.extract_strided_slice %165 {offsets = [0, 9], sizes = [8, 119], strides = [1, 1]} : vector<8x128xf32> to vector<8x119xf32>
    %212 = vector.extract_strided_slice %165 {offsets = [0, 0], sizes = [8, 9], strides = [1, 1]} : vector<8x128xf32> to vector<8x9xf32>
    %213 = tpu.concatenate %211, %212 in 1 : vector<8x119xf32>, vector<8x9xf32> -> vector<8x128xf32>
    %214 = vector.extract_strided_slice %3 {offsets = [8, 0], sizes = [1, 128], strides = [1, 1]} : vector<9x128xf32> to vector<1x128xf32>
    %215 = vector.broadcast %214 : vector<1x128xf32> to vector<8x128xf32>
    %216 = arith.mulf %213, %215 : vector<8x128xf32>
    %217 = tpu.concatenate %171, %177, %183, %189, %192, %198, %204, %210, %216 in 0 : vector<8x128xf32>, vector<8x128xf32>, vector<8x128xf32>, vector<8x128xf32>, vector<8x128xf32>, vector<8x128xf32>, vector<8x128xf32>, vector<8x128xf32>, vector<8x128xf32> -> vector<72x128xf32>
    %c0_30 = arith.constant 0 : index
    %c0_31 = arith.constant 0 : index
    %218 = vector.load %arg6[%c0_30, %c0_31] : memref<8x72xf32, #tpu.memory_space<vmem>>, vector<8x72xf32>
    %cst_32 = arith.constant dense<0.000000e+00> : vector<8x128xf32>
    %219 = tpu.matmul %218, %217, %cst_32 {dimension_numbers = #tpu.dot_dimension_numbers<[1], [0], [0], [1], [0, 0, 1, 1], [], []>} : vector<8x72xf32>, vector<72x128xf32>, vector<8x128xf32> -> vector<8x128xf32>
    %cst_33 = arith.constant dense<0.000000e+00> : vector<8xf32>
    %220 = vector.multi_reduction <add>, %219, %cst_33 [1] : vector<8x128xf32> to vector<8xf32>
    %221 = vector.shape_cast %220 : vector<8xf32> to vector<8x1xf32>
    %cst_34 = arith.constant 1.280000e+02 : f32
    %222 = vector.broadcast %cst_34 : f32 to vector<8x1xf32>
    %223 = arith.divf %221, %222 : vector<8x1xf32>
    %224 = vector.broadcast %223 : vector<8x1xf32> to vector<8x128xf32>
    %225 = arith.subf %219, %224 : vector<8x128xf32>
    %226 = arith.mulf %225, %225 : vector<8x128xf32>
    %cst_35 = arith.constant dense<0.000000e+00> : vector<8xf32>
    %227 = vector.multi_reduction <add>, %226, %cst_35 [1] : vector<8x128xf32> to vector<8xf32>
    %228 = vector.shape_cast %227 : vector<8xf32> to vector<8x1xf32>
    %cst_36 = arith.constant 1.280000e+02 : f32
    %229 = vector.broadcast %cst_36 : f32 to vector<8x1xf32>
    %230 = arith.divf %228, %229 : vector<8x1xf32>
    %231 = vector.broadcast %223 : vector<8x1xf32> to vector<8x128xf32>
    %232 = arith.subf %219, %231 : vector<8x128xf32>
    %cst_37 = arith.constant 9.99999974E-6 : f32
    %233 = vector.broadcast %cst_37 : f32 to vector<8x1xf32>
    %234 = arith.addf %230, %233 : vector<8x1xf32>
    %235 = math.rsqrt %234 : vector<8x1xf32>
    %236 = vector.broadcast %235 : vector<8x1xf32> to vector<8x128xf32>
    %237 = arith.mulf %232, %236 : vector<8x128xf32>
    %c0_38 = arith.constant 0 : index
    %c0_39 = arith.constant 0 : index
    %238 = vector.load %arg13[%c0_38, %c0_39] : memref<8x1xf32, #tpu.memory_space<vmem>>, vector<8x1xf32>
    %239 = vector.broadcast %238 : vector<8x1xf32> to vector<8x128xf32>
    %240 = arith.mulf %237, %239 : vector<8x128xf32>
    %c0_40 = arith.constant 0 : index
    %c0_41 = arith.constant 0 : index
    %241 = vector.load %arg20[%c0_40, %c0_41] : memref<8x1xf32, #tpu.memory_space<vmem>>, vector<8x1xf32>
    %242 = vector.broadcast %241 : vector<8x1xf32> to vector<8x128xf32>
    %243 = arith.addf %240, %242 : vector<8x128xf32>
    %cst_42 = arith.constant 0.000000e+00 : f32
    %244 = vector.broadcast %cst_42 : f32 to vector<8x128xf32>
    %245 = arith.maximumf %243, %244 : vector<8x128xf32>
    %246 = vector.extract_strided_slice %245 {offsets = [0, 119], sizes = [8, 9], strides = [1, 1]} : vector<8x128xf32> to vector<8x9xf32>
    %247 = vector.extract_strided_slice %245 {offsets = [0, 0], sizes = [8, 119], strides = [1, 1]} : vector<8x128xf32> to vector<8x119xf32>
    %248 = tpu.concatenate %246, %247 in 1 : vector<8x9xf32>, vector<8x119xf32> -> vector<8x128xf32>
    %249 = vector.extract_strided_slice %3 {offsets = [0, 0], sizes = [1, 128], strides = [1, 1]} : vector<9x128xf32> to vector<1x128xf32>
    %250 = vector.broadcast %249 : vector<1x128xf32> to vector<8x128xf32>
    %251 = arith.mulf %248, %250 : vector<8x128xf32>
    %252 = vector.extract_strided_slice %245 {offsets = [0, 120], sizes = [8, 8], strides = [1, 1]} : vector<8x128xf32> to vector<8x8xf32>
    %253 = vector.extract_strided_slice %245 {offsets = [0, 0], sizes = [8, 120], strides = [1, 1]} : vector<8x128xf32> to vector<8x120xf32>
    %254 = tpu.concatenate %252, %253 in 1 : vector<8x8xf32>, vector<8x120xf32> -> vector<8x128xf32>
    %255 = vector.extract_strided_slice %3 {offsets = [1, 0], sizes = [1, 128], strides = [1, 1]} : vector<9x128xf32> to vector<1x128xf32>
    %256 = vector.broadcast %255 : vector<1x128xf32> to vector<8x128xf32>
    %257 = arith.mulf %254, %256 : vector<8x128xf32>
    %258 = vector.extract_strided_slice %245 {offsets = [0, 121], sizes = [8, 7], strides = [1, 1]} : vector<8x128xf32> to vector<8x7xf32>
    %259 = vector.extract_strided_slice %245 {offsets = [0, 0], sizes = [8, 121], strides = [1, 1]} : vector<8x128xf32> to vector<8x121xf32>
    %260 = tpu.concatenate %258, %259 in 1 : vector<8x7xf32>, vector<8x121xf32> -> vector<8x128xf32>
    %261 = vector.extract_strided_slice %3 {offsets = [2, 0], sizes = [1, 128], strides = [1, 1]} : vector<9x128xf32> to vector<1x128xf32>
    %262 = vector.broadcast %261 : vector<1x128xf32> to vector<8x128xf32>
    %263 = arith.mulf %260, %262 : vector<8x128xf32>
    %264 = vector.extract_strided_slice %245 {offsets = [0, 127], sizes = [8, 1], strides = [1, 1]} : vector<8x128xf32> to vector<8x1xf32>
    %265 = vector.extract_strided_slice %245 {offsets = [0, 0], sizes = [8, 127], strides = [1, 1]} : vector<8x128xf32> to vector<8x127xf32>
    %266 = tpu.concatenate %264, %265 in 1 : vector<8x1xf32>, vector<8x127xf32> -> vector<8x128xf32>
    %267 = vector.extract_strided_slice %3 {offsets = [3, 0], sizes = [1, 128], strides = [1, 1]} : vector<9x128xf32> to vector<1x128xf32>
    %268 = vector.broadcast %267 : vector<1x128xf32> to vector<8x128xf32>
    %269 = arith.mulf %266, %268 : vector<8x128xf32>
    %270 = vector.extract_strided_slice %3 {offsets = [4, 0], sizes = [1, 128], strides = [1, 1]} : vector<9x128xf32> to vector<1x128xf32>
    %271 = vector.broadcast %270 : vector<1x128xf32> to vector<8x128xf32>
    %272 = arith.mulf %245, %271 : vector<8x128xf32>
    %273 = vector.extract_strided_slice %245 {offsets = [0, 1], sizes = [8, 127], strides = [1, 1]} : vector<8x128xf32> to vector<8x127xf32>
    %274 = vector.extract_strided_slice %245 {offsets = [0, 0], sizes = [8, 1], strides = [1, 1]} : vector<8x128xf32> to vector<8x1xf32>
    %275 = tpu.concatenate %273, %274 in 1 : vector<8x127xf32>, vector<8x1xf32> -> vector<8x128xf32>
    %276 = vector.extract_strided_slice %3 {offsets = [5, 0], sizes = [1, 128], strides = [1, 1]} : vector<9x128xf32> to vector<1x128xf32>
    %277 = vector.broadcast %276 : vector<1x128xf32> to vector<8x128xf32>
    %278 = arith.mulf %275, %277 : vector<8x128xf32>
    %279 = vector.extract_strided_slice %245 {offsets = [0, 7], sizes = [8, 121], strides = [1, 1]} : vector<8x128xf32> to vector<8x121xf32>
    %280 = vector.extract_strided_slice %245 {offsets = [0, 0], sizes = [8, 7], strides = [1, 1]} : vector<8x128xf32> to vector<8x7xf32>
    %281 = tpu.concatenate %279, %280 in 1 : vector<8x121xf32>, vector<8x7xf32> -> vector<8x128xf32>
    %282 = vector.extract_strided_slice %3 {offsets = [6, 0], sizes = [1, 128], strides = [1, 1]} : vector<9x128xf32> to vector<1x128xf32>
    %283 = vector.broadcast %282 : vector<1x128xf32> to vector<8x128xf32>
    %284 = arith.mulf %281, %283 : vector<8x128xf32>
    %285 = vector.extract_strided_slice %245 {offsets = [0, 8], sizes = [8, 120], strides = [1, 1]} : vector<8x128xf32> to vector<8x120xf32>
    %286 = vector.extract_strided_slice %245 {offsets = [0, 0], sizes = [8, 8], strides = [1, 1]} : vector<8x128xf32> to vector<8x8xf32>
    %287 = tpu.concatenate %285, %286 in 1 : vector<8x120xf32>, vector<8x8xf32> -> vector<8x128xf32>
    %288 = vector.extract_strided_slice %3 {offsets = [7, 0], sizes = [1, 128], strides = [1, 1]} : vector<9x128xf32> to vector<1x128xf32>
    %289 = vector.broadcast %288 : vector<1x128xf32> to vector<8x128xf32>
    %290 = arith.mulf %287, %289 : vector<8x128xf32>
    %291 = vector.extract_strided_slice %245 {offsets = [0, 9], sizes = [8, 119], strides = [1, 1]} : vector<8x128xf32> to vector<8x119xf32>
    %292 = vector.extract_strided_slice %245 {offsets = [0, 0], sizes = [8, 9], strides = [1, 1]} : vector<8x128xf32> to vector<8x9xf32>
    %293 = tpu.concatenate %291, %292 in 1 : vector<8x119xf32>, vector<8x9xf32> -> vector<8x128xf32>
    %294 = vector.extract_strided_slice %3 {offsets = [8, 0], sizes = [1, 128], strides = [1, 1]} : vector<9x128xf32> to vector<1x128xf32>
    %295 = vector.broadcast %294 : vector<1x128xf32> to vector<8x128xf32>
    %296 = arith.mulf %293, %295 : vector<8x128xf32>
    %297 = tpu.concatenate %251, %257, %263, %269, %272, %278, %284, %290, %296 in 0 : vector<8x128xf32>, vector<8x128xf32>, vector<8x128xf32>, vector<8x128xf32>, vector<8x128xf32>, vector<8x128xf32>, vector<8x128xf32>, vector<8x128xf32>, vector<8x128xf32> -> vector<72x128xf32>
    %c0_43 = arith.constant 0 : index
    %c0_44 = arith.constant 0 : index
    %298 = vector.load %arg7[%c0_43, %c0_44] : memref<8x72xf32, #tpu.memory_space<vmem>>, vector<8x72xf32>
    %cst_45 = arith.constant dense<0.000000e+00> : vector<8x128xf32>
    %299 = tpu.matmul %298, %297, %cst_45 {dimension_numbers = #tpu.dot_dimension_numbers<[1], [0], [0], [1], [0, 0, 1, 1], [], []>} : vector<8x72xf32>, vector<72x128xf32>, vector<8x128xf32> -> vector<8x128xf32>
    %cst_46 = arith.constant dense<0.000000e+00> : vector<8xf32>
    %300 = vector.multi_reduction <add>, %299, %cst_46 [1] : vector<8x128xf32> to vector<8xf32>
    %301 = vector.shape_cast %300 : vector<8xf32> to vector<8x1xf32>
    %cst_47 = arith.constant 1.280000e+02 : f32
    %302 = vector.broadcast %cst_47 : f32 to vector<8x1xf32>
    %303 = arith.divf %301, %302 : vector<8x1xf32>
    %304 = vector.broadcast %303 : vector<8x1xf32> to vector<8x128xf32>
    %305 = arith.subf %299, %304 : vector<8x128xf32>
    %306 = arith.mulf %305, %305 : vector<8x128xf32>
    %cst_48 = arith.constant dense<0.000000e+00> : vector<8xf32>
    %307 = vector.multi_reduction <add>, %306, %cst_48 [1] : vector<8x128xf32> to vector<8xf32>
    %308 = vector.shape_cast %307 : vector<8xf32> to vector<8x1xf32>
    %cst_49 = arith.constant 1.280000e+02 : f32
    %309 = vector.broadcast %cst_49 : f32 to vector<8x1xf32>
    %310 = arith.divf %308, %309 : vector<8x1xf32>
    %311 = vector.broadcast %303 : vector<8x1xf32> to vector<8x128xf32>
    %312 = arith.subf %299, %311 : vector<8x128xf32>
    %cst_50 = arith.constant 9.99999974E-6 : f32
    %313 = vector.broadcast %cst_50 : f32 to vector<8x1xf32>
    %314 = arith.addf %310, %313 : vector<8x1xf32>
    %315 = math.rsqrt %314 : vector<8x1xf32>
    %316 = vector.broadcast %315 : vector<8x1xf32> to vector<8x128xf32>
    %317 = arith.mulf %312, %316 : vector<8x128xf32>
    %c0_51 = arith.constant 0 : index
    %c0_52 = arith.constant 0 : index
    %318 = vector.load %arg14[%c0_51, %c0_52] : memref<8x1xf32, #tpu.memory_space<vmem>>, vector<8x1xf32>
    %319 = vector.broadcast %318 : vector<8x1xf32> to vector<8x128xf32>
    %320 = arith.mulf %317, %319 : vector<8x128xf32>
    %c0_53 = arith.constant 0 : index
    %c0_54 = arith.constant 0 : index
    %321 = vector.load %arg21[%c0_53, %c0_54] : memref<8x1xf32, #tpu.memory_space<vmem>>, vector<8x1xf32>
    %322 = vector.broadcast %321 : vector<8x1xf32> to vector<8x128xf32>
    %323 = arith.addf %320, %322 : vector<8x128xf32>
    %cst_55 = arith.constant 0.000000e+00 : f32
    %324 = vector.broadcast %cst_55 : f32 to vector<8x128xf32>
    %325 = arith.maximumf %323, %324 : vector<8x128xf32>
    %326 = vector.extract_strided_slice %325 {offsets = [0, 119], sizes = [8, 9], strides = [1, 1]} : vector<8x128xf32> to vector<8x9xf32>
    %327 = vector.extract_strided_slice %325 {offsets = [0, 0], sizes = [8, 119], strides = [1, 1]} : vector<8x128xf32> to vector<8x119xf32>
    %328 = tpu.concatenate %326, %327 in 1 : vector<8x9xf32>, vector<8x119xf32> -> vector<8x128xf32>
    %329 = vector.extract_strided_slice %3 {offsets = [0, 0], sizes = [1, 128], strides = [1, 1]} : vector<9x128xf32> to vector<1x128xf32>
    %330 = vector.broadcast %329 : vector<1x128xf32> to vector<8x128xf32>
    %331 = arith.mulf %328, %330 : vector<8x128xf32>
    %332 = vector.extract_strided_slice %325 {offsets = [0, 120], sizes = [8, 8], strides = [1, 1]} : vector<8x128xf32> to vector<8x8xf32>
    %333 = vector.extract_strided_slice %325 {offsets = [0, 0], sizes = [8, 120], strides = [1, 1]} : vector<8x128xf32> to vector<8x120xf32>
    %334 = tpu.concatenate %332, %333 in 1 : vector<8x8xf32>, vector<8x120xf32> -> vector<8x128xf32>
    %335 = vector.extract_strided_slice %3 {offsets = [1, 0], sizes = [1, 128], strides = [1, 1]} : vector<9x128xf32> to vector<1x128xf32>
    %336 = vector.broadcast %335 : vector<1x128xf32> to vector<8x128xf32>
    %337 = arith.mulf %334, %336 : vector<8x128xf32>
    %338 = vector.extract_strided_slice %325 {offsets = [0, 121], sizes = [8, 7], strides = [1, 1]} : vector<8x128xf32> to vector<8x7xf32>
    %339 = vector.extract_strided_slice %325 {offsets = [0, 0], sizes = [8, 121], strides = [1, 1]} : vector<8x128xf32> to vector<8x121xf32>
    %340 = tpu.concatenate %338, %339 in 1 : vector<8x7xf32>, vector<8x121xf32> -> vector<8x128xf32>
    %341 = vector.extract_strided_slice %3 {offsets = [2, 0], sizes = [1, 128], strides = [1, 1]} : vector<9x128xf32> to vector<1x128xf32>
    %342 = vector.broadcast %341 : vector<1x128xf32> to vector<8x128xf32>
    %343 = arith.mulf %340, %342 : vector<8x128xf32>
    %344 = vector.extract_strided_slice %325 {offsets = [0, 127], sizes = [8, 1], strides = [1, 1]} : vector<8x128xf32> to vector<8x1xf32>
    %345 = vector.extract_strided_slice %325 {offsets = [0, 0], sizes = [8, 127], strides = [1, 1]} : vector<8x128xf32> to vector<8x127xf32>
    %346 = tpu.concatenate %344, %345 in 1 : vector<8x1xf32>, vector<8x127xf32> -> vector<8x128xf32>
    %347 = vector.extract_strided_slice %3 {offsets = [3, 0], sizes = [1, 128], strides = [1, 1]} : vector<9x128xf32> to vector<1x128xf32>
    %348 = vector.broadcast %347 : vector<1x128xf32> to vector<8x128xf32>
    %349 = arith.mulf %346, %348 : vector<8x128xf32>
    %350 = vector.extract_strided_slice %3 {offsets = [4, 0], sizes = [1, 128], strides = [1, 1]} : vector<9x128xf32> to vector<1x128xf32>
    %351 = vector.broadcast %350 : vector<1x128xf32> to vector<8x128xf32>
    %352 = arith.mulf %325, %351 : vector<8x128xf32>
    %353 = vector.extract_strided_slice %325 {offsets = [0, 1], sizes = [8, 127], strides = [1, 1]} : vector<8x128xf32> to vector<8x127xf32>
    %354 = vector.extract_strided_slice %325 {offsets = [0, 0], sizes = [8, 1], strides = [1, 1]} : vector<8x128xf32> to vector<8x1xf32>
    %355 = tpu.concatenate %353, %354 in 1 : vector<8x127xf32>, vector<8x1xf32> -> vector<8x128xf32>
    %356 = vector.extract_strided_slice %3 {offsets = [5, 0], sizes = [1, 128], strides = [1, 1]} : vector<9x128xf32> to vector<1x128xf32>
    %357 = vector.broadcast %356 : vector<1x128xf32> to vector<8x128xf32>
    %358 = arith.mulf %355, %357 : vector<8x128xf32>
    %359 = vector.extract_strided_slice %325 {offsets = [0, 7], sizes = [8, 121], strides = [1, 1]} : vector<8x128xf32> to vector<8x121xf32>
    %360 = vector.extract_strided_slice %325 {offsets = [0, 0], sizes = [8, 7], strides = [1, 1]} : vector<8x128xf32> to vector<8x7xf32>
    %361 = tpu.concatenate %359, %360 in 1 : vector<8x121xf32>, vector<8x7xf32> -> vector<8x128xf32>
    %362 = vector.extract_strided_slice %3 {offsets = [6, 0], sizes = [1, 128], strides = [1, 1]} : vector<9x128xf32> to vector<1x128xf32>
    %363 = vector.broadcast %362 : vector<1x128xf32> to vector<8x128xf32>
    %364 = arith.mulf %361, %363 : vector<8x128xf32>
    %365 = vector.extract_strided_slice %325 {offsets = [0, 8], sizes = [8, 120], strides = [1, 1]} : vector<8x128xf32> to vector<8x120xf32>
    %366 = vector.extract_strided_slice %325 {offsets = [0, 0], sizes = [8, 8], strides = [1, 1]} : vector<8x128xf32> to vector<8x8xf32>
    %367 = tpu.concatenate %365, %366 in 1 : vector<8x120xf32>, vector<8x8xf32> -> vector<8x128xf32>
    %368 = vector.extract_strided_slice %3 {offsets = [7, 0], sizes = [1, 128], strides = [1, 1]} : vector<9x128xf32> to vector<1x128xf32>
    %369 = vector.broadcast %368 : vector<1x128xf32> to vector<8x128xf32>
    %370 = arith.mulf %367, %369 : vector<8x128xf32>
    %371 = vector.extract_strided_slice %325 {offsets = [0, 9], sizes = [8, 119], strides = [1, 1]} : vector<8x128xf32> to vector<8x119xf32>
    %372 = vector.extract_strided_slice %325 {offsets = [0, 0], sizes = [8, 9], strides = [1, 1]} : vector<8x128xf32> to vector<8x9xf32>
    %373 = tpu.concatenate %371, %372 in 1 : vector<8x119xf32>, vector<8x9xf32> -> vector<8x128xf32>
    %374 = vector.extract_strided_slice %3 {offsets = [8, 0], sizes = [1, 128], strides = [1, 1]} : vector<9x128xf32> to vector<1x128xf32>
    %375 = vector.broadcast %374 : vector<1x128xf32> to vector<8x128xf32>
    %376 = arith.mulf %373, %375 : vector<8x128xf32>
    %377 = tpu.concatenate %331, %337, %343, %349, %352, %358, %364, %370, %376 in 0 : vector<8x128xf32>, vector<8x128xf32>, vector<8x128xf32>, vector<8x128xf32>, vector<8x128xf32>, vector<8x128xf32>, vector<8x128xf32>, vector<8x128xf32>, vector<8x128xf32> -> vector<72x128xf32>
    %c0_56 = arith.constant 0 : index
    %c0_57 = arith.constant 0 : index
    %378 = vector.load %arg8[%c0_56, %c0_57] : memref<8x72xf32, #tpu.memory_space<vmem>>, vector<8x72xf32>
    %cst_58 = arith.constant dense<0.000000e+00> : vector<8x128xf32>
    %379 = tpu.matmul %378, %377, %cst_58 {dimension_numbers = #tpu.dot_dimension_numbers<[1], [0], [0], [1], [0, 0, 1, 1], [], []>} : vector<8x72xf32>, vector<72x128xf32>, vector<8x128xf32> -> vector<8x128xf32>
    %cst_59 = arith.constant dense<0.000000e+00> : vector<8xf32>
    %380 = vector.multi_reduction <add>, %379, %cst_59 [1] : vector<8x128xf32> to vector<8xf32>
    %381 = vector.shape_cast %380 : vector<8xf32> to vector<8x1xf32>
    %cst_60 = arith.constant 1.280000e+02 : f32
    %382 = vector.broadcast %cst_60 : f32 to vector<8x1xf32>
    %383 = arith.divf %381, %382 : vector<8x1xf32>
    %384 = vector.broadcast %383 : vector<8x1xf32> to vector<8x128xf32>
    %385 = arith.subf %379, %384 : vector<8x128xf32>
    %386 = arith.mulf %385, %385 : vector<8x128xf32>
    %cst_61 = arith.constant dense<0.000000e+00> : vector<8xf32>
    %387 = vector.multi_reduction <add>, %386, %cst_61 [1] : vector<8x128xf32> to vector<8xf32>
    %388 = vector.shape_cast %387 : vector<8xf32> to vector<8x1xf32>
    %cst_62 = arith.constant 1.280000e+02 : f32
    %389 = vector.broadcast %cst_62 : f32 to vector<8x1xf32>
    %390 = arith.divf %388, %389 : vector<8x1xf32>
    %391 = vector.broadcast %383 : vector<8x1xf32> to vector<8x128xf32>
    %392 = arith.subf %379, %391 : vector<8x128xf32>
    %cst_63 = arith.constant 9.99999974E-6 : f32
    %393 = vector.broadcast %cst_63 : f32 to vector<8x1xf32>
    %394 = arith.addf %390, %393 : vector<8x1xf32>
    %395 = math.rsqrt %394 : vector<8x1xf32>
    %396 = vector.broadcast %395 : vector<8x1xf32> to vector<8x128xf32>
    %397 = arith.mulf %392, %396 : vector<8x128xf32>
    %c0_64 = arith.constant 0 : index
    %c0_65 = arith.constant 0 : index
    %398 = vector.load %arg15[%c0_64, %c0_65] : memref<8x1xf32, #tpu.memory_space<vmem>>, vector<8x1xf32>
    %399 = vector.broadcast %398 : vector<8x1xf32> to vector<8x128xf32>
    %400 = arith.mulf %397, %399 : vector<8x128xf32>
    %c0_66 = arith.constant 0 : index
    %c0_67 = arith.constant 0 : index
    %401 = vector.load %arg22[%c0_66, %c0_67] : memref<8x1xf32, #tpu.memory_space<vmem>>, vector<8x1xf32>
    %402 = vector.broadcast %401 : vector<8x1xf32> to vector<8x128xf32>
    %403 = arith.addf %400, %402 : vector<8x128xf32>
    %cst_68 = arith.constant 0.000000e+00 : f32
    %404 = vector.broadcast %cst_68 : f32 to vector<8x128xf32>
    %405 = arith.maximumf %403, %404 : vector<8x128xf32>
    %406 = vector.extract_strided_slice %405 {offsets = [0, 119], sizes = [8, 9], strides = [1, 1]} : vector<8x128xf32> to vector<8x9xf32>
    %407 = vector.extract_strided_slice %405 {offsets = [0, 0], sizes = [8, 119], strides = [1, 1]} : vector<8x128xf32> to vector<8x119xf32>
    %408 = tpu.concatenate %406, %407 in 1 : vector<8x9xf32>, vector<8x119xf32> -> vector<8x128xf32>
    %409 = vector.extract_strided_slice %3 {offsets = [0, 0], sizes = [1, 128], strides = [1, 1]} : vector<9x128xf32> to vector<1x128xf32>
    %410 = vector.broadcast %409 : vector<1x128xf32> to vector<8x128xf32>
    %411 = arith.mulf %408, %410 : vector<8x128xf32>
    %412 = vector.extract_strided_slice %405 {offsets = [0, 120], sizes = [8, 8], strides = [1, 1]} : vector<8x128xf32> to vector<8x8xf32>
    %413 = vector.extract_strided_slice %405 {offsets = [0, 0], sizes = [8, 120], strides = [1, 1]} : vector<8x128xf32> to vector<8x120xf32>
    %414 = tpu.concatenate %412, %413 in 1 : vector<8x8xf32>, vector<8x120xf32> -> vector<8x128xf32>
    %415 = vector.extract_strided_slice %3 {offsets = [1, 0], sizes = [1, 128], strides = [1, 1]} : vector<9x128xf32> to vector<1x128xf32>
    %416 = vector.broadcast %415 : vector<1x128xf32> to vector<8x128xf32>
    %417 = arith.mulf %414, %416 : vector<8x128xf32>
    %418 = vector.extract_strided_slice %405 {offsets = [0, 121], sizes = [8, 7], strides = [1, 1]} : vector<8x128xf32> to vector<8x7xf32>
    %419 = vector.extract_strided_slice %405 {offsets = [0, 0], sizes = [8, 121], strides = [1, 1]} : vector<8x128xf32> to vector<8x121xf32>
    %420 = tpu.concatenate %418, %419 in 1 : vector<8x7xf32>, vector<8x121xf32> -> vector<8x128xf32>
    %421 = vector.extract_strided_slice %3 {offsets = [2, 0], sizes = [1, 128], strides = [1, 1]} : vector<9x128xf32> to vector<1x128xf32>
    %422 = vector.broadcast %421 : vector<1x128xf32> to vector<8x128xf32>
    %423 = arith.mulf %420, %422 : vector<8x128xf32>
    %424 = vector.extract_strided_slice %405 {offsets = [0, 127], sizes = [8, 1], strides = [1, 1]} : vector<8x128xf32> to vector<8x1xf32>
    %425 = vector.extract_strided_slice %405 {offsets = [0, 0], sizes = [8, 127], strides = [1, 1]} : vector<8x128xf32> to vector<8x127xf32>
    %426 = tpu.concatenate %424, %425 in 1 : vector<8x1xf32>, vector<8x127xf32> -> vector<8x128xf32>
    %427 = vector.extract_strided_slice %3 {offsets = [3, 0], sizes = [1, 128], strides = [1, 1]} : vector<9x128xf32> to vector<1x128xf32>
    %428 = vector.broadcast %427 : vector<1x128xf32> to vector<8x128xf32>
    %429 = arith.mulf %426, %428 : vector<8x128xf32>
    %430 = vector.extract_strided_slice %3 {offsets = [4, 0], sizes = [1, 128], strides = [1, 1]} : vector<9x128xf32> to vector<1x128xf32>
    %431 = vector.broadcast %430 : vector<1x128xf32> to vector<8x128xf32>
    %432 = arith.mulf %405, %431 : vector<8x128xf32>
    %433 = vector.extract_strided_slice %405 {offsets = [0, 1], sizes = [8, 127], strides = [1, 1]} : vector<8x128xf32> to vector<8x127xf32>
    %434 = vector.extract_strided_slice %405 {offsets = [0, 0], sizes = [8, 1], strides = [1, 1]} : vector<8x128xf32> to vector<8x1xf32>
    %435 = tpu.concatenate %433, %434 in 1 : vector<8x127xf32>, vector<8x1xf32> -> vector<8x128xf32>
    %436 = vector.extract_strided_slice %3 {offsets = [5, 0], sizes = [1, 128], strides = [1, 1]} : vector<9x128xf32> to vector<1x128xf32>
    %437 = vector.broadcast %436 : vector<1x128xf32> to vector<8x128xf32>
    %438 = arith.mulf %435, %437 : vector<8x128xf32>
    %439 = vector.extract_strided_slice %405 {offsets = [0, 7], sizes = [8, 121], strides = [1, 1]} : vector<8x128xf32> to vector<8x121xf32>
    %440 = vector.extract_strided_slice %405 {offsets = [0, 0], sizes = [8, 7], strides = [1, 1]} : vector<8x128xf32> to vector<8x7xf32>
    %441 = tpu.concatenate %439, %440 in 1 : vector<8x121xf32>, vector<8x7xf32> -> vector<8x128xf32>
    %442 = vector.extract_strided_slice %3 {offsets = [6, 0], sizes = [1, 128], strides = [1, 1]} : vector<9x128xf32> to vector<1x128xf32>
    %443 = vector.broadcast %442 : vector<1x128xf32> to vector<8x128xf32>
    %444 = arith.mulf %441, %443 : vector<8x128xf32>
    %445 = vector.extract_strided_slice %405 {offsets = [0, 8], sizes = [8, 120], strides = [1, 1]} : vector<8x128xf32> to vector<8x120xf32>
    %446 = vector.extract_strided_slice %405 {offsets = [0, 0], sizes = [8, 8], strides = [1, 1]} : vector<8x128xf32> to vector<8x8xf32>
    %447 = tpu.concatenate %445, %446 in 1 : vector<8x120xf32>, vector<8x8xf32> -> vector<8x128xf32>
    %448 = vector.extract_strided_slice %3 {offsets = [7, 0], sizes = [1, 128], strides = [1, 1]} : vector<9x128xf32> to vector<1x128xf32>
    %449 = vector.broadcast %448 : vector<1x128xf32> to vector<8x128xf32>
    %450 = arith.mulf %447, %449 : vector<8x128xf32>
    %451 = vector.extract_strided_slice %405 {offsets = [0, 9], sizes = [8, 119], strides = [1, 1]} : vector<8x128xf32> to vector<8x119xf32>
    %452 = vector.extract_strided_slice %405 {offsets = [0, 0], sizes = [8, 9], strides = [1, 1]} : vector<8x128xf32> to vector<8x9xf32>
    %453 = tpu.concatenate %451, %452 in 1 : vector<8x119xf32>, vector<8x9xf32> -> vector<8x128xf32>
    %454 = vector.extract_strided_slice %3 {offsets = [8, 0], sizes = [1, 128], strides = [1, 1]} : vector<9x128xf32> to vector<1x128xf32>
    %455 = vector.broadcast %454 : vector<1x128xf32> to vector<8x128xf32>
    %456 = arith.mulf %453, %455 : vector<8x128xf32>
    %457 = tpu.concatenate %411, %417, %423, %429, %432, %438, %444, %450, %456 in 0 : vector<8x128xf32>, vector<8x128xf32>, vector<8x128xf32>, vector<8x128xf32>, vector<8x128xf32>, vector<8x128xf32>, vector<8x128xf32>, vector<8x128xf32>, vector<8x128xf32> -> vector<72x128xf32>
    %c0_69 = arith.constant 0 : index
    %c0_70 = arith.constant 0 : index
    %458 = vector.load %arg9[%c0_69, %c0_70] : memref<8x72xf32, #tpu.memory_space<vmem>>, vector<8x72xf32>
    %cst_71 = arith.constant dense<0.000000e+00> : vector<8x128xf32>
    %459 = tpu.matmul %458, %457, %cst_71 {dimension_numbers = #tpu.dot_dimension_numbers<[1], [0], [0], [1], [0, 0, 1, 1], [], []>} : vector<8x72xf32>, vector<72x128xf32>, vector<8x128xf32> -> vector<8x128xf32>
    %cst_72 = arith.constant dense<0.000000e+00> : vector<8xf32>
    %460 = vector.multi_reduction <add>, %459, %cst_72 [1] : vector<8x128xf32> to vector<8xf32>
    %461 = vector.shape_cast %460 : vector<8xf32> to vector<8x1xf32>
    %cst_73 = arith.constant 1.280000e+02 : f32
    %462 = vector.broadcast %cst_73 : f32 to vector<8x1xf32>
    %463 = arith.divf %461, %462 : vector<8x1xf32>
    %464 = vector.broadcast %463 : vector<8x1xf32> to vector<8x128xf32>
    %465 = arith.subf %459, %464 : vector<8x128xf32>
    %466 = arith.mulf %465, %465 : vector<8x128xf32>
    %cst_74 = arith.constant dense<0.000000e+00> : vector<8xf32>
    %467 = vector.multi_reduction <add>, %466, %cst_74 [1] : vector<8x128xf32> to vector<8xf32>
    %468 = vector.shape_cast %467 : vector<8xf32> to vector<8x1xf32>
    %cst_75 = arith.constant 1.280000e+02 : f32
    %469 = vector.broadcast %cst_75 : f32 to vector<8x1xf32>
    %470 = arith.divf %468, %469 : vector<8x1xf32>
    %471 = vector.broadcast %463 : vector<8x1xf32> to vector<8x128xf32>
    %472 = arith.subf %459, %471 : vector<8x128xf32>
    %cst_76 = arith.constant 9.99999974E-6 : f32
    %473 = vector.broadcast %cst_76 : f32 to vector<8x1xf32>
    %474 = arith.addf %470, %473 : vector<8x1xf32>
    %475 = math.rsqrt %474 : vector<8x1xf32>
    %476 = vector.broadcast %475 : vector<8x1xf32> to vector<8x128xf32>
    %477 = arith.mulf %472, %476 : vector<8x128xf32>
    %c0_77 = arith.constant 0 : index
    %c0_78 = arith.constant 0 : index
    %478 = vector.load %arg16[%c0_77, %c0_78] : memref<8x1xf32, #tpu.memory_space<vmem>>, vector<8x1xf32>
    %479 = vector.broadcast %478 : vector<8x1xf32> to vector<8x128xf32>
    %480 = arith.mulf %477, %479 : vector<8x128xf32>
    %c0_79 = arith.constant 0 : index
    %c0_80 = arith.constant 0 : index
    %481 = vector.load %arg23[%c0_79, %c0_80] : memref<8x1xf32, #tpu.memory_space<vmem>>, vector<8x1xf32>
    %482 = vector.broadcast %481 : vector<8x1xf32> to vector<8x128xf32>
    %483 = arith.addf %480, %482 : vector<8x128xf32>
    %cst_81 = arith.constant 0.000000e+00 : f32
    %484 = vector.broadcast %cst_81 : f32 to vector<8x128xf32>
    %485 = arith.maximumf %483, %484 : vector<8x128xf32>
    %486 = vector.extract_strided_slice %485 {offsets = [0, 119], sizes = [8, 9], strides = [1, 1]} : vector<8x128xf32> to vector<8x9xf32>
    %487 = vector.extract_strided_slice %485 {offsets = [0, 0], sizes = [8, 119], strides = [1, 1]} : vector<8x128xf32> to vector<8x119xf32>
    %488 = tpu.concatenate %486, %487 in 1 : vector<8x9xf32>, vector<8x119xf32> -> vector<8x128xf32>
    %489 = vector.extract_strided_slice %3 {offsets = [0, 0], sizes = [1, 128], strides = [1, 1]} : vector<9x128xf32> to vector<1x128xf32>
    %490 = vector.broadcast %489 : vector<1x128xf32> to vector<8x128xf32>
    %491 = arith.mulf %488, %490 : vector<8x128xf32>
    %492 = vector.extract_strided_slice %485 {offsets = [0, 120], sizes = [8, 8], strides = [1, 1]} : vector<8x128xf32> to vector<8x8xf32>
    %493 = vector.extract_strided_slice %485 {offsets = [0, 0], sizes = [8, 120], strides = [1, 1]} : vector<8x128xf32> to vector<8x120xf32>
    %494 = tpu.concatenate %492, %493 in 1 : vector<8x8xf32>, vector<8x120xf32> -> vector<8x128xf32>
    %495 = vector.extract_strided_slice %3 {offsets = [1, 0], sizes = [1, 128], strides = [1, 1]} : vector<9x128xf32> to vector<1x128xf32>
    %496 = vector.broadcast %495 : vector<1x128xf32> to vector<8x128xf32>
    %497 = arith.mulf %494, %496 : vector<8x128xf32>
    %498 = vector.extract_strided_slice %485 {offsets = [0, 121], sizes = [8, 7], strides = [1, 1]} : vector<8x128xf32> to vector<8x7xf32>
    %499 = vector.extract_strided_slice %485 {offsets = [0, 0], sizes = [8, 121], strides = [1, 1]} : vector<8x128xf32> to vector<8x121xf32>
    %500 = tpu.concatenate %498, %499 in 1 : vector<8x7xf32>, vector<8x121xf32> -> vector<8x128xf32>
    %501 = vector.extract_strided_slice %3 {offsets = [2, 0], sizes = [1, 128], strides = [1, 1]} : vector<9x128xf32> to vector<1x128xf32>
    %502 = vector.broadcast %501 : vector<1x128xf32> to vector<8x128xf32>
    %503 = arith.mulf %500, %502 : vector<8x128xf32>
    %504 = vector.extract_strided_slice %485 {offsets = [0, 127], sizes = [8, 1], strides = [1, 1]} : vector<8x128xf32> to vector<8x1xf32>
    %505 = vector.extract_strided_slice %485 {offsets = [0, 0], sizes = [8, 127], strides = [1, 1]} : vector<8x128xf32> to vector<8x127xf32>
    %506 = tpu.concatenate %504, %505 in 1 : vector<8x1xf32>, vector<8x127xf32> -> vector<8x128xf32>
    %507 = vector.extract_strided_slice %3 {offsets = [3, 0], sizes = [1, 128], strides = [1, 1]} : vector<9x128xf32> to vector<1x128xf32>
    %508 = vector.broadcast %507 : vector<1x128xf32> to vector<8x128xf32>
    %509 = arith.mulf %506, %508 : vector<8x128xf32>
    %510 = vector.extract_strided_slice %3 {offsets = [4, 0], sizes = [1, 128], strides = [1, 1]} : vector<9x128xf32> to vector<1x128xf32>
    %511 = vector.broadcast %510 : vector<1x128xf32> to vector<8x128xf32>
    %512 = arith.mulf %485, %511 : vector<8x128xf32>
    %513 = vector.extract_strided_slice %485 {offsets = [0, 1], sizes = [8, 127], strides = [1, 1]} : vector<8x128xf32> to vector<8x127xf32>
    %514 = vector.extract_strided_slice %485 {offsets = [0, 0], sizes = [8, 1], strides = [1, 1]} : vector<8x128xf32> to vector<8x1xf32>
    %515 = tpu.concatenate %513, %514 in 1 : vector<8x127xf32>, vector<8x1xf32> -> vector<8x128xf32>
    %516 = vector.extract_strided_slice %3 {offsets = [5, 0], sizes = [1, 128], strides = [1, 1]} : vector<9x128xf32> to vector<1x128xf32>
    %517 = vector.broadcast %516 : vector<1x128xf32> to vector<8x128xf32>
    %518 = arith.mulf %515, %517 : vector<8x128xf32>
    %519 = vector.extract_strided_slice %485 {offsets = [0, 7], sizes = [8, 121], strides = [1, 1]} : vector<8x128xf32> to vector<8x121xf32>
    %520 = vector.extract_strided_slice %485 {offsets = [0, 0], sizes = [8, 7], strides = [1, 1]} : vector<8x128xf32> to vector<8x7xf32>
    %521 = tpu.concatenate %519, %520 in 1 : vector<8x121xf32>, vector<8x7xf32> -> vector<8x128xf32>
    %522 = vector.extract_strided_slice %3 {offsets = [6, 0], sizes = [1, 128], strides = [1, 1]} : vector<9x128xf32> to vector<1x128xf32>
    %523 = vector.broadcast %522 : vector<1x128xf32> to vector<8x128xf32>
    %524 = arith.mulf %521, %523 : vector<8x128xf32>
    %525 = vector.extract_strided_slice %485 {offsets = [0, 8], sizes = [8, 120], strides = [1, 1]} : vector<8x128xf32> to vector<8x120xf32>
    %526 = vector.extract_strided_slice %485 {offsets = [0, 0], sizes = [8, 8], strides = [1, 1]} : vector<8x128xf32> to vector<8x8xf32>
    %527 = tpu.concatenate %525, %526 in 1 : vector<8x120xf32>, vector<8x8xf32> -> vector<8x128xf32>
    %528 = vector.extract_strided_slice %3 {offsets = [7, 0], sizes = [1, 128], strides = [1, 1]} : vector<9x128xf32> to vector<1x128xf32>
    %529 = vector.broadcast %528 : vector<1x128xf32> to vector<8x128xf32>
    %530 = arith.mulf %527, %529 : vector<8x128xf32>
    %531 = vector.extract_strided_slice %485 {offsets = [0, 9], sizes = [8, 119], strides = [1, 1]} : vector<8x128xf32> to vector<8x119xf32>
    %532 = vector.extract_strided_slice %485 {offsets = [0, 0], sizes = [8, 9], strides = [1, 1]} : vector<8x128xf32> to vector<8x9xf32>
    %533 = tpu.concatenate %531, %532 in 1 : vector<8x119xf32>, vector<8x9xf32> -> vector<8x128xf32>
    %534 = vector.extract_strided_slice %3 {offsets = [8, 0], sizes = [1, 128], strides = [1, 1]} : vector<9x128xf32> to vector<1x128xf32>
    %535 = vector.broadcast %534 : vector<1x128xf32> to vector<8x128xf32>
    %536 = arith.mulf %533, %535 : vector<8x128xf32>
    %537 = tpu.concatenate %491, %497, %503, %509, %512, %518, %524, %530, %536 in 0 : vector<8x128xf32>, vector<8x128xf32>, vector<8x128xf32>, vector<8x128xf32>, vector<8x128xf32>, vector<8x128xf32>, vector<8x128xf32>, vector<8x128xf32>, vector<8x128xf32> -> vector<72x128xf32>
    %c0_82 = arith.constant 0 : index
    %c0_83 = arith.constant 0 : index
    %538 = vector.load %arg10[%c0_82, %c0_83] : memref<4x72xf32, #tpu.memory_space<vmem>>, vector<4x72xf32>
    %cst_84 = arith.constant dense<0.000000e+00> : vector<4x128xf32>
    %539 = tpu.matmul %538, %537, %cst_84 {dimension_numbers = #tpu.dot_dimension_numbers<[1], [0], [0], [1], [0, 0, 1, 1], [], []>} : vector<4x72xf32>, vector<72x128xf32>, vector<4x128xf32> -> vector<4x128xf32>
    %cst_85 = arith.constant dense<0.000000e+00> : vector<4xf32>
    %540 = vector.multi_reduction <add>, %539, %cst_85 [1] : vector<4x128xf32> to vector<4xf32>
    %541 = vector.shape_cast %540 : vector<4xf32> to vector<4x1xf32>
    %cst_86 = arith.constant 1.280000e+02 : f32
    %542 = vector.broadcast %cst_86 : f32 to vector<4x1xf32>
    %543 = arith.divf %541, %542 : vector<4x1xf32>
    %544 = vector.broadcast %543 : vector<4x1xf32> to vector<4x128xf32>
    %545 = arith.subf %539, %544 : vector<4x128xf32>
    %546 = arith.mulf %545, %545 : vector<4x128xf32>
    %cst_87 = arith.constant dense<0.000000e+00> : vector<4xf32>
    %547 = vector.multi_reduction <add>, %546, %cst_87 [1] : vector<4x128xf32> to vector<4xf32>
    %548 = vector.shape_cast %547 : vector<4xf32> to vector<4x1xf32>
    %cst_88 = arith.constant 1.280000e+02 : f32
    %549 = vector.broadcast %cst_88 : f32 to vector<4x1xf32>
    %550 = arith.divf %548, %549 : vector<4x1xf32>
    %551 = vector.broadcast %543 : vector<4x1xf32> to vector<4x128xf32>
    %552 = arith.subf %539, %551 : vector<4x128xf32>
    %cst_89 = arith.constant 9.99999974E-6 : f32
    %553 = vector.broadcast %cst_89 : f32 to vector<4x1xf32>
    %554 = arith.addf %550, %553 : vector<4x1xf32>
    %555 = math.rsqrt %554 : vector<4x1xf32>
    %556 = vector.broadcast %555 : vector<4x1xf32> to vector<4x128xf32>
    %557 = arith.mulf %552, %556 : vector<4x128xf32>
    %c0_90 = arith.constant 0 : index
    %c0_91 = arith.constant 0 : index
    %558 = vector.load %arg17[%c0_90, %c0_91] : memref<4x1xf32, #tpu.memory_space<vmem>>, vector<4x1xf32>
    %559 = vector.broadcast %558 : vector<4x1xf32> to vector<4x128xf32>
    %560 = arith.mulf %557, %559 : vector<4x128xf32>
    %c0_92 = arith.constant 0 : index
    %c0_93 = arith.constant 0 : index
    %561 = vector.load %arg24[%c0_92, %c0_93] : memref<4x1xf32, #tpu.memory_space<vmem>>, vector<4x1xf32>
    %562 = vector.broadcast %561 : vector<4x1xf32> to vector<4x128xf32>
    %563 = arith.addf %560, %562 : vector<4x128xf32>
    %cst_94 = arith.constant 0.000000e+00 : f32
    %564 = vector.broadcast %cst_94 : f32 to vector<4x128xf32>
    %565 = arith.maximumf %563, %564 : vector<4x128xf32>
    %566 = vector.extract_strided_slice %565 {offsets = [0, 0], sizes = [1, 64], strides = [1, 1]} : vector<4x128xf32> to vector<1x64xf32>
    %567 = vector.extract_strided_slice %565 {offsets = [0, 64], sizes = [1, 64], strides = [1, 1]} : vector<4x128xf32> to vector<1x64xf32>
    %568 = tpu.concatenate %566, %567 in 0 : vector<1x64xf32>, vector<1x64xf32> -> vector<2x64xf32>
    %569 = vector.extract_strided_slice %565 {offsets = [1, 0], sizes = [1, 64], strides = [1, 1]} : vector<4x128xf32> to vector<1x64xf32>
    %570 = vector.extract_strided_slice %565 {offsets = [1, 64], sizes = [1, 64], strides = [1, 1]} : vector<4x128xf32> to vector<1x64xf32>
    %571 = tpu.concatenate %569, %570 in 0 : vector<1x64xf32>, vector<1x64xf32> -> vector<2x64xf32>
    %572 = vector.extract_strided_slice %565 {offsets = [2, 0], sizes = [1, 64], strides = [1, 1]} : vector<4x128xf32> to vector<1x64xf32>
    %573 = vector.extract_strided_slice %565 {offsets = [2, 64], sizes = [1, 64], strides = [1, 1]} : vector<4x128xf32> to vector<1x64xf32>
    %574 = tpu.concatenate %572, %573 in 0 : vector<1x64xf32>, vector<1x64xf32> -> vector<2x64xf32>
    %575 = vector.extract_strided_slice %565 {offsets = [3, 0], sizes = [1, 64], strides = [1, 1]} : vector<4x128xf32> to vector<1x64xf32>
    %576 = vector.extract_strided_slice %565 {offsets = [3, 64], sizes = [1, 64], strides = [1, 1]} : vector<4x128xf32> to vector<1x64xf32>
    %577 = tpu.concatenate %575, %576 in 0 : vector<1x64xf32>, vector<1x64xf32> -> vector<2x64xf32>
    %578 = tpu.concatenate %568, %571, %574, %577 in 1 : vector<2x64xf32>, vector<2x64xf32>, vector<2x64xf32>, vector<2x64xf32> -> vector<2x256xf32>
    %c0_95 = arith.constant 0 : index
    %c0_96 = arith.constant 0 : index
    %c0_97 = arith.constant 0 : index
    %579 = vector.load %arg2[%c0_95, %c0_96, %c0_97] : memref<1x2x16xf32, #tpu.memory_space<vmem>>, vector<1x2x16xf32>
    %580 = vector.shape_cast %579 : vector<1x2x16xf32> to vector<2x16xf32>
    %c0_98 = arith.constant 0 : index
    %c0_99 = arith.constant 0 : index
    %581 = vector.load %arg25[%c0_98, %c0_99] : memref<16x8xf32, #tpu.memory_space<vmem>>, vector<16x8xf32>
    %cst_100 = arith.constant dense<0.000000e+00> : vector<2x8xf32>
    %582 = tpu.matmul %580, %581, %cst_100 {dimension_numbers = #tpu.dot_dimension_numbers<[1], [0], [0], [1], [0, 0, 1, 1], [], []>} : vector<2x16xf32>, vector<16x8xf32>, vector<2x8xf32> -> vector<2x8xf32>
    %c0_101 = arith.constant 0 : index
    %c0_102 = arith.constant 0 : index
    %583 = vector.load %arg26[%c0_101, %c0_102] : memref<1x8xf32, #tpu.memory_space<vmem>>, vector<1x8xf32>
    %584 = vector.broadcast %583 : vector<1x8xf32> to vector<2x8xf32>
    %585 = arith.addf %582, %584 : vector<2x8xf32>
    %cst_103 = arith.constant 0.000000e+00 : f32
    %586 = vector.broadcast %cst_103 : f32 to vector<2x8xf32>
    %587 = arith.maximumf %585, %586 : vector<2x8xf32>
    %588 = tpu.concatenate %578, %587 in 1 : vector<2x256xf32>, vector<2x8xf32> -> vector<2x264xf32>
    %589 = vector.shape_cast %588 : vector<2x264xf32> to vector<1x2x264xf32>
    %590 = vector.shape_cast %589 : vector<1x2x264xf32> to vector<1x2x264xf32>
    %591 = vector.broadcast %590 : vector<1x2x264xf32> to vector<6x2x264xf32>
    %c0_104 = arith.constant 0 : index
    %c0_105 = arith.constant 0 : index
    %c0_106 = arith.constant 0 : index
    %592 = vector.load %arg27[%c0_104, %c0_105, %c0_106] : memref<6x264x32xf32, #tpu.memory_space<vmem>>, vector<6x264x32xf32>
    %cst_107 = arith.constant dense<0.000000e+00> : vector<6x2x32xf32>
    %593 = tpu.matmul %591, %592, %cst_107 {dimension_numbers = #tpu.dot_dimension_numbers<[2], [1], [1], [2], [0, 0, 0, 1, 1, 2], [0], [0]>} : vector<6x2x264xf32>, vector<6x264x32xf32>, vector<6x2x32xf32> -> vector<6x2x32xf32>
    %c0_108 = arith.constant 0 : index
    %c0_109 = arith.constant 0 : index
    %c0_110 = arith.constant 0 : index
    %594 = vector.load %arg28[%c0_108, %c0_109, %c0_110] : memref<6x1x32xf32, #tpu.memory_space<vmem>>, vector<6x1x32xf32>
    %595 = vector.broadcast %594 : vector<6x1x32xf32> to vector<6x2x32xf32>
    %596 = arith.addf %593, %595 : vector<6x2x32xf32>
    %cst_111 = arith.constant 0.000000e+00 : f32
    %597 = vector.broadcast %cst_111 : f32 to vector<6x2x32xf32>
    %598 = arith.maximumf %596, %597 : vector<6x2x32xf32>
    %c0_112 = arith.constant 0 : index
    %c0_113 = arith.constant 0 : index
    %c0_114 = arith.constant 0 : index
    %599 = vector.load %arg44[%c0_112, %c0_113, %c0_114] : memref<6x2x32xf32, #tpu.memory_space<vmem>>, vector<6x2x32xf32>
    %c0_115 = arith.constant 0 : index
    %c0_116 = arith.constant 0 : index
    %c0_117 = arith.constant 0 : index
    %600 = vector.load %arg29[%c0_115, %c0_116, %c0_117] : memref<6x32x32xf32, #tpu.memory_space<vmem>>, vector<6x32x32xf32>
    %cst_118 = arith.constant dense<0.000000e+00> : vector<6x2x32xf32>
    %601 = tpu.matmul %598, %600, %cst_118 {dimension_numbers = #tpu.dot_dimension_numbers<[2], [1], [1], [2], [0, 0, 0, 1, 1, 2], [0], [0]>} : vector<6x2x32xf32>, vector<6x32x32xf32>, vector<6x2x32xf32> -> vector<6x2x32xf32>
    %c0_119 = arith.constant 0 : index
    %c0_120 = arith.constant 0 : index
    %c0_121 = arith.constant 0 : index
    %602 = vector.load %arg35[%c0_119, %c0_120, %c0_121] : memref<6x1x32xf32, #tpu.memory_space<vmem>>, vector<6x1x32xf32>
    %603 = vector.broadcast %602 : vector<6x1x32xf32> to vector<6x2x32xf32>
    %604 = arith.addf %601, %603 : vector<6x2x32xf32>
    %c0_122 = arith.constant 0 : index
    %c0_123 = arith.constant 0 : index
    %c0_124 = arith.constant 0 : index
    %605 = vector.load %arg32[%c0_122, %c0_123, %c0_124] : memref<6x32x32xf32, #tpu.memory_space<vmem>>, vector<6x32x32xf32>
    %cst_125 = arith.constant dense<0.000000e+00> : vector<6x2x32xf32>
    %606 = tpu.matmul %599, %605, %cst_125 {dimension_numbers = #tpu.dot_dimension_numbers<[2], [1], [1], [2], [0, 0, 0, 1, 1, 2], [0], [0]>} : vector<6x2x32xf32>, vector<6x32x32xf32>, vector<6x2x32xf32> -> vector<6x2x32xf32>
    %607 = arith.addf %604, %606 : vector<6x2x32xf32>
    %c0_126 = arith.constant 0 : index
    %c0_127 = arith.constant 0 : index
    %c0_128 = arith.constant 0 : index
    %608 = vector.load %arg38[%c0_126, %c0_127, %c0_128] : memref<6x1x32xf32, #tpu.memory_space<vmem>>, vector<6x1x32xf32>
    %609 = vector.broadcast %608 : vector<6x1x32xf32> to vector<6x2x32xf32>
    %610 = arith.addf %607, %609 : vector<6x2x32xf32>
    %611 = arith.negf %610 : vector<6x2x32xf32>
    %612 = math.exp %611 : vector<6x2x32xf32>
    %cst_129 = arith.constant 1.000000e+00 : f32
    %613 = vector.broadcast %cst_129 : f32 to vector<6x2x32xf32>
    %614 = arith.addf %613, %612 : vector<6x2x32xf32>
    %615 = arith.divf %613, %614 : vector<6x2x32xf32>
    %c0_130 = arith.constant 0 : index
    %c0_131 = arith.constant 0 : index
    %c0_132 = arith.constant 0 : index
    %616 = vector.load %arg30[%c0_130, %c0_131, %c0_132] : memref<6x32x32xf32, #tpu.memory_space<vmem>>, vector<6x32x32xf32>
    %cst_133 = arith.constant dense<0.000000e+00> : vector<6x2x32xf32>
    %617 = tpu.matmul %598, %616, %cst_133 {dimension_numbers = #tpu.dot_dimension_numbers<[2], [1], [1], [2], [0, 0, 0, 1, 1, 2], [0], [0]>} : vector<6x2x32xf32>, vector<6x32x32xf32>, vector<6x2x32xf32> -> vector<6x2x32xf32>
    %c0_134 = arith.constant 0 : index
    %c0_135 = arith.constant 0 : index
    %c0_136 = arith.constant 0 : index
    %618 = vector.load %arg36[%c0_134, %c0_135, %c0_136] : memref<6x1x32xf32, #tpu.memory_space<vmem>>, vector<6x1x32xf32>
    %619 = vector.broadcast %618 : vector<6x1x32xf32> to vector<6x2x32xf32>
    %620 = arith.addf %617, %619 : vector<6x2x32xf32>
    %c0_137 = arith.constant 0 : index
    %c0_138 = arith.constant 0 : index
    %c0_139 = arith.constant 0 : index
    %621 = vector.load %arg33[%c0_137, %c0_138, %c0_139] : memref<6x32x32xf32, #tpu.memory_space<vmem>>, vector<6x32x32xf32>
    %cst_140 = arith.constant dense<0.000000e+00> : vector<6x2x32xf32>
    %622 = tpu.matmul %599, %621, %cst_140 {dimension_numbers = #tpu.dot_dimension_numbers<[2], [1], [1], [2], [0, 0, 0, 1, 1, 2], [0], [0]>} : vector<6x2x32xf32>, vector<6x32x32xf32>, vector<6x2x32xf32> -> vector<6x2x32xf32>
    %623 = arith.addf %620, %622 : vector<6x2x32xf32>
    %c0_141 = arith.constant 0 : index
    %c0_142 = arith.constant 0 : index
    %c0_143 = arith.constant 0 : index
    %624 = vector.load %arg39[%c0_141, %c0_142, %c0_143] : memref<6x1x32xf32, #tpu.memory_space<vmem>>, vector<6x1x32xf32>
    %625 = vector.broadcast %624 : vector<6x1x32xf32> to vector<6x2x32xf32>
    %626 = arith.addf %623, %625 : vector<6x2x32xf32>
    %627 = arith.negf %626 : vector<6x2x32xf32>
    %628 = math.exp %627 : vector<6x2x32xf32>
    %cst_144 = arith.constant 1.000000e+00 : f32
    %629 = vector.broadcast %cst_144 : f32 to vector<6x2x32xf32>
    %630 = arith.addf %629, %628 : vector<6x2x32xf32>
    %631 = arith.divf %629, %630 : vector<6x2x32xf32>
    %c0_145 = arith.constant 0 : index
    %c0_146 = arith.constant 0 : index
    %c0_147 = arith.constant 0 : index
    %632 = vector.load %arg31[%c0_145, %c0_146, %c0_147] : memref<6x32x32xf32, #tpu.memory_space<vmem>>, vector<6x32x32xf32>
    %cst_148 = arith.constant dense<0.000000e+00> : vector<6x2x32xf32>
    %633 = tpu.matmul %598, %632, %cst_148 {dimension_numbers = #tpu.dot_dimension_numbers<[2], [1], [1], [2], [0, 0, 0, 1, 1, 2], [0], [0]>} : vector<6x2x32xf32>, vector<6x32x32xf32>, vector<6x2x32xf32> -> vector<6x2x32xf32>
    %c0_149 = arith.constant 0 : index
    %c0_150 = arith.constant 0 : index
    %c0_151 = arith.constant 0 : index
    %634 = vector.load %arg37[%c0_149, %c0_150, %c0_151] : memref<6x1x32xf32, #tpu.memory_space<vmem>>, vector<6x1x32xf32>
    %635 = vector.broadcast %634 : vector<6x1x32xf32> to vector<6x2x32xf32>
    %636 = arith.addf %633, %635 : vector<6x2x32xf32>
    %c0_152 = arith.constant 0 : index
    %c0_153 = arith.constant 0 : index
    %c0_154 = arith.constant 0 : index
    %637 = vector.load %arg34[%c0_152, %c0_153, %c0_154] : memref<6x32x32xf32, #tpu.memory_space<vmem>>, vector<6x32x32xf32>
    %cst_155 = arith.constant dense<0.000000e+00> : vector<6x2x32xf32>
    %638 = tpu.matmul %599, %637, %cst_155 {dimension_numbers = #tpu.dot_dimension_numbers<[2], [1], [1], [2], [0, 0, 0, 1, 1, 2], [0], [0]>} : vector<6x2x32xf32>, vector<6x32x32xf32>, vector<6x2x32xf32> -> vector<6x2x32xf32>
    %c0_156 = arith.constant 0 : index
    %c0_157 = arith.constant 0 : index
    %c0_158 = arith.constant 0 : index
    %639 = vector.load %arg40[%c0_156, %c0_157, %c0_158] : memref<6x1x32xf32, #tpu.memory_space<vmem>>, vector<6x1x32xf32>
    %640 = vector.broadcast %639 : vector<6x1x32xf32> to vector<6x2x32xf32>
    %641 = arith.addf %638, %640 : vector<6x2x32xf32>
    %642 = arith.mulf %615, %641 : vector<6x2x32xf32>
    %643 = arith.addf %636, %642 : vector<6x2x32xf32>
    %644 = math.tanh %643 : vector<6x2x32xf32>
    %cst_159 = arith.constant 1.000000e+00 : f32
    %645 = vector.broadcast %cst_159 : f32 to vector<6x2x32xf32>
    %646 = arith.subf %645, %631 : vector<6x2x32xf32>
    %647 = arith.mulf %646, %644 : vector<6x2x32xf32>
    %648 = arith.mulf %631, %599 : vector<6x2x32xf32>
    %649 = arith.addf %647, %648 : vector<6x2x32xf32>
    %c0_160 = arith.constant 0 : index
    %c0_161 = arith.constant 0 : index
    %c0_162 = arith.constant 0 : index
    %650 = vector.load %arg44[%c0_160, %c0_161, %c0_162] : memref<6x2x32xf32, #tpu.memory_space<vmem>>, vector<6x2x32xf32>
    tpu.vector_store %arg44[%c0_160, %c0_161, %c0_162], %649 {strides = array<i32>} : memref<6x2x32xf32, #tpu.memory_space<vmem>>, vector<6x2x32xf32>,
    %c0_163 = arith.constant 0 : index
    %c0_164 = arith.constant 0 : index
    %c0_165 = arith.constant 0 : index
    %651 = vector.load %arg41[%c0_163, %c0_164, %c0_165] : memref<6x32x64xf32, #tpu.memory_space<vmem>>, vector<6x32x64xf32>
    %cst_166 = arith.constant dense<0.000000e+00> : vector<6x2x64xf32>
    %652 = tpu.matmul %649, %651, %cst_166 {dimension_numbers = #tpu.dot_dimension_numbers<[2], [1], [1], [2], [0, 0, 0, 1, 1, 2], [0], [0]>} : vector<6x2x32xf32>, vector<6x32x64xf32>, vector<6x2x64xf32> -> vector<6x2x64xf32>
    %c0_167 = arith.constant 0 : index
    %c0_168 = arith.constant 0 : index
    %c0_169 = arith.constant 0 : index
    %653 = vector.load %arg42[%c0_167, %c0_168, %c0_169] : memref<6x1x64xf32, #tpu.memory_space<vmem>>, vector<6x1x64xf32>
    %654 = vector.broadcast %653 : vector<6x1x64xf32> to vector<6x2x64xf32>
    %655 = arith.addf %652, %654 : vector<6x2x64xf32>
    %cst_170 = arith.constant 0.000000e+00 : f32
    %656 = vector.broadcast %cst_170 : f32 to vector<6x2x64xf32>
    %657 = arith.maximumf %655, %656 : vector<6x2x64xf32>
    %cst_171 = arith.constant dense<0xFF800000> : vector<6x2xf32>
    %658 = vector.multi_reduction <maximumf>, %657, %cst_171 [2] : vector<6x2x64xf32> to vector<6x2xf32>
    %659 = vector.shape_cast %658 : vector<6x2xf32> to vector<6x2x1xf32>
    %660 = vector.broadcast %659 : vector<6x2x1xf32> to vector<6x2x64xf32>
    %661 = arith.subf %657, %660 : vector<6x2x64xf32>
    %662 = math.exp %661 : vector<6x2x64xf32>
    %cst_172 = arith.constant dense<0.000000e+00> : vector<6x2xf32>
    %663 = vector.multi_reduction <add>, %662, %cst_172 [2] : vector<6x2x64xf32> to vector<6x2xf32>
    %664 = vector.shape_cast %663 : vector<6x2xf32> to vector<6x2x1xf32>
    %665 = vector.broadcast %664 : vector<6x2x1xf32> to vector<6x2x64xf32>
    %666 = arith.divf %662, %665 : vector<6x2x64xf32>
    %c0_173 = arith.constant 0 : index
    %c0_174 = arith.constant 0 : index
    %c0_175 = arith.constant 0 : index
    %c0_176 = arith.constant 0 : index
    %667 = vector.load %arg43[%c0_173, %c0_174, %c0_175, %c0_176] : memref<1x6x2x64xf32, #tpu.memory_space<vmem>>, vector<1x6x2x64xf32>
    %668 = vector.shape_cast %667 : vector<1x6x2x64xf32> to vector<6x2x64xf32>
    %669 = vector.shape_cast %666 : vector<6x2x64xf32> to vector<1x6x2x64xf32>
    tpu.vector_store %arg43[%c0_173, %c0_174, %c0_175, %c0_176], %669 {strides = array<i32>} : memref<1x6x2x64xf32, #tpu.memory_space<vmem>>, vector<1x6x2x64xf32>,
    return
  }
  func.func @transform_0(%arg0: i32) -> (i32, i32, i32) {
    %c0_i32 = arith.constant 0 : i32
    %c0_i32_0 = arith.constant 0 : i32
    %c0_i32_1 = arith.constant 0 : i32
    return %arg0, %c0_i32, %c0_i32_0 : i32, i32, i32
  }
  func.func @transform_1(%arg0: i32) -> (i32, i32, i32) {
    %c0_i32 = arith.constant 0 : i32
    %c0_i32_0 = arith.constant 0 : i32
    %c0_i32_1 = arith.constant 0 : i32
    return %arg0, %c0_i32, %c0_i32_0 : i32, i32, i32
  }
  func.func @transform_2(%arg0: i32) -> (i32, i32) {
    %c0_i32 = arith.constant 0 : i32
    %c0_i32_0 = arith.constant 0 : i32
    %c0_i32_1 = arith.constant 0 : i32
    return %c0_i32, %c0_i32_0 : i32, i32
  }
  func.func @transform_3(%arg0: i32) -> (i32, i32) {
    %c0_i32 = arith.constant 0 : i32
    %c0_i32_0 = arith.constant 0 : i32
    %c0_i32_1 = arith.constant 0 : i32
    return %c0_i32, %c0_i32_0 : i32, i32
  }
  func.func @transform_4(%arg0: i32) -> (i32, i32) {
    %c0_i32 = arith.constant 0 : i32
    %c0_i32_0 = arith.constant 0 : i32
    %c0_i32_1 = arith.constant 0 : i32
    return %c0_i32, %c0_i32_0 : i32, i32
  }
  func.func @transform_5(%arg0: i32) -> (i32, i32) {
    %c0_i32 = arith.constant 0 : i32
    %c0_i32_0 = arith.constant 0 : i32
    %c0_i32_1 = arith.constant 0 : i32
    return %c0_i32, %c0_i32_0 : i32, i32
  }
  func.func @transform_6(%arg0: i32) -> (i32, i32) {
    %c0_i32 = arith.constant 0 : i32
    %c0_i32_0 = arith.constant 0 : i32
    %c0_i32_1 = arith.constant 0 : i32
    return %c0_i32, %c0_i32_0 : i32, i32
  }
  func.func @transform_7(%arg0: i32) -> (i32, i32) {
    %c0_i32 = arith.constant 0 : i32
    %c0_i32_0 = arith.constant 0 : i32
    %c0_i32_1 = arith.constant 0 : i32
    return %c0_i32, %c0_i32_0 : i32, i32
  }
  func.func @transform_8(%arg0: i32) -> (i32, i32) {
    %c0_i32 = arith.constant 0 : i32
    %c0_i32_0 = arith.constant 0 : i32
    %c0_i32_1 = arith.constant 0 : i32
    return %c0_i32, %c0_i32_0 : i32, i32
  }
  func.func @transform_9(%arg0: i32) -> (i32, i32) {
    %c0_i32 = arith.constant 0 : i32
    %c0_i32_0 = arith.constant 0 : i32
    %c0_i32_1 = arith.constant 0 : i32
    return %c0_i32, %c0_i32_0 : i32, i32
  }
  func.func @transform_10(%arg0: i32) -> (i32, i32) {
    %c0_i32 = arith.constant 0 : i32
    %c0_i32_0 = arith.constant 0 : i32
    %c0_i32_1 = arith.constant 0 : i32
    return %c0_i32, %c0_i32_0 : i32, i32
  }
  func.func @transform_11(%arg0: i32) -> (i32, i32) {
    %c0_i32 = arith.constant 0 : i32
    %c0_i32_0 = arith.constant 0 : i32
    %c0_i32_1 = arith.constant 0 : i32
    return %c0_i32, %c0_i32_0 : i32, i32
  }
  func.func @transform_12(%arg0: i32) -> (i32, i32) {
    %c0_i32 = arith.constant 0 : i32
    %c0_i32_0 = arith.constant 0 : i32
    %c0_i32_1 = arith.constant 0 : i32
    return %c0_i32, %c0_i32_0 : i32, i32
  }
  func.func @transform_13(%arg0: i32) -> (i32, i32) {
    %c0_i32 = arith.constant 0 : i32
    %c0_i32_0 = arith.constant 0 : i32
    %c0_i32_1 = arith.constant 0 : i32
    return %c0_i32, %c0_i32_0 : i32, i32
  }
  func.func @transform_14(%arg0: i32) -> (i32, i32) {
    %c0_i32 = arith.constant 0 : i32
    %c0_i32_0 = arith.constant 0 : i32
    %c0_i32_1 = arith.constant 0 : i32
    return %c0_i32, %c0_i32_0 : i32, i32
  }
  func.func @transform_15(%arg0: i32) -> (i32, i32) {
    %c0_i32 = arith.constant 0 : i32
    %c0_i32_0 = arith.constant 0 : i32
    %c0_i32_1 = arith.constant 0 : i32
    return %c0_i32, %c0_i32_0 : i32, i32
  }
  func.func @transform_16(%arg0: i32) -> (i32, i32) {
    %c0_i32 = arith.constant 0 : i32
    %c0_i32_0 = arith.constant 0 : i32
    %c0_i32_1 = arith.constant 0 : i32
    return %c0_i32, %c0_i32_0 : i32, i32
  }
  func.func @transform_17(%arg0: i32) -> (i32, i32) {
    %c0_i32 = arith.constant 0 : i32
    %c0_i32_0 = arith.constant 0 : i32
    %c0_i32_1 = arith.constant 0 : i32
    return %c0_i32, %c0_i32_0 : i32, i32
  }
  func.func @transform_18(%arg0: i32) -> (i32, i32) {
    %c0_i32 = arith.constant 0 : i32
    %c0_i32_0 = arith.constant 0 : i32
    %c0_i32_1 = arith.constant 0 : i32
    return %c0_i32, %c0_i32_0 : i32, i32
  }
  func.func @transform_19(%arg0: i32) -> (i32, i32) {
    %c0_i32 = arith.constant 0 : i32
    %c0_i32_0 = arith.constant 0 : i32
    %c0_i32_1 = arith.constant 0 : i32
    return %c0_i32, %c0_i32_0 : i32, i32
  }
  func.func @transform_20(%arg0: i32) -> (i32, i32) {
    %c0_i32 = arith.constant 0 : i32
    %c0_i32_0 = arith.constant 0 : i32
    %c0_i32_1 = arith.constant 0 : i32
    return %c0_i32, %c0_i32_0 : i32, i32
  }
  func.func @transform_21(%arg0: i32) -> (i32, i32) {
    %c0_i32 = arith.constant 0 : i32
    %c0_i32_0 = arith.constant 0 : i32
    %c0_i32_1 = arith.constant 0 : i32
    return %c0_i32, %c0_i32_0 : i32, i32
  }
  func.func @transform_22(%arg0: i32) -> (i32, i32) {
    %c0_i32 = arith.constant 0 : i32
    %c0_i32_0 = arith.constant 0 : i32
    %c0_i32_1 = arith.constant 0 : i32
    return %c0_i32, %c0_i32_0 : i32, i32
  }
  func.func @transform_23(%arg0: i32) -> (i32, i32) {
    %c0_i32 = arith.constant 0 : i32
    %c0_i32_0 = arith.constant 0 : i32
    %c0_i32_1 = arith.constant 0 : i32
    return %c0_i32, %c0_i32_0 : i32, i32
  }
  func.func @transform_24(%arg0: i32) -> (i32, i32) {
    %c0_i32 = arith.constant 0 : i32
    %c0_i32_0 = arith.constant 0 : i32
    %c0_i32_1 = arith.constant 0 : i32
    return %c0_i32, %c0_i32_0 : i32, i32
  }
  func.func @transform_25(%arg0: i32) -> (i32, i32) {
    %c0_i32 = arith.constant 0 : i32
    %c0_i32_0 = arith.constant 0 : i32
    %c0_i32_1 = arith.constant 0 : i32
    return %c0_i32, %c0_i32_0 : i32, i32
  }
  func.func @transform_26(%arg0: i32) -> (i32, i32, i32) {
    %c0_i32 = arith.constant 0 : i32
    %c0_i32_0 = arith.constant 0 : i32
    %c0_i32_1 = arith.constant 0 : i32
    %c0_i32_2 = arith.constant 0 : i32
    return %c0_i32, %c0_i32_0, %c0_i32_1 : i32, i32, i32
  }
  func.func @transform_27(%arg0: i32) -> (i32, i32, i32) {
    %c0_i32 = arith.constant 0 : i32
    %c0_i32_0 = arith.constant 0 : i32
    %c0_i32_1 = arith.constant 0 : i32
    %c0_i32_2 = arith.constant 0 : i32
    return %c0_i32, %c0_i32_0, %c0_i32_1 : i32, i32, i32
  }
  func.func @transform_28(%arg0: i32) -> (i32, i32, i32) {
    %c0_i32 = arith.constant 0 : i32
    %c0_i32_0 = arith.constant 0 : i32
    %c0_i32_1 = arith.constant 0 : i32
    %c0_i32_2 = arith.constant 0 : i32
    return %c0_i32, %c0_i32_0, %c0_i32_1 : i32, i32, i32
  }
  func.func @transform_29(%arg0: i32) -> (i32, i32, i32) {
    %c0_i32 = arith.constant 0 : i32
    %c0_i32_0 = arith.constant 0 : i32
    %c0_i32_1 = arith.constant 0 : i32
    %c0_i32_2 = arith.constant 0 : i32
    return %c0_i32, %c0_i32_0, %c0_i32_1 : i32, i32, i32
  }
  func.func @transform_30(%arg0: i32) -> (i32, i32, i32) {
    %c0_i32 = arith.constant 0 : i32
    %c0_i32_0 = arith.constant 0 : i32
    %c0_i32_1 = arith.constant 0 : i32
    %c0_i32_2 = arith.constant 0 : i32
    return %c0_i32, %c0_i32_0, %c0_i32_1 : i32, i32, i32
  }
  func.func @transform_31(%arg0: i32) -> (i32, i32, i32) {
    %c0_i32 = arith.constant 0 : i32
    %c0_i32_0 = arith.constant 0 : i32
    %c0_i32_1 = arith.constant 0 : i32
    %c0_i32_2 = arith.constant 0 : i32
    return %c0_i32, %c0_i32_0, %c0_i32_1 : i32, i32, i32
  }
  func.func @transform_32(%arg0: i32) -> (i32, i32, i32) {
    %c0_i32 = arith.constant 0 : i32
    %c0_i32_0 = arith.constant 0 : i32
    %c0_i32_1 = arith.constant 0 : i32
    %c0_i32_2 = arith.constant 0 : i32
    return %c0_i32, %c0_i32_0, %c0_i32_1 : i32, i32, i32
  }
  func.func @transform_33(%arg0: i32) -> (i32, i32, i32) {
    %c0_i32 = arith.constant 0 : i32
    %c0_i32_0 = arith.constant 0 : i32
    %c0_i32_1 = arith.constant 0 : i32
    %c0_i32_2 = arith.constant 0 : i32
    return %c0_i32, %c0_i32_0, %c0_i32_1 : i32, i32, i32
  }
  func.func @transform_34(%arg0: i32) -> (i32, i32, i32) {
    %c0_i32 = arith.constant 0 : i32
    %c0_i32_0 = arith.constant 0 : i32
    %c0_i32_1 = arith.constant 0 : i32
    %c0_i32_2 = arith.constant 0 : i32
    return %c0_i32, %c0_i32_0, %c0_i32_1 : i32, i32, i32
  }
  func.func @transform_35(%arg0: i32) -> (i32, i32, i32) {
    %c0_i32 = arith.constant 0 : i32
    %c0_i32_0 = arith.constant 0 : i32
    %c0_i32_1 = arith.constant 0 : i32
    %c0_i32_2 = arith.constant 0 : i32
    return %c0_i32, %c0_i32_0, %c0_i32_1 : i32, i32, i32
  }
  func.func @transform_36(%arg0: i32) -> (i32, i32, i32) {
    %c0_i32 = arith.constant 0 : i32
    %c0_i32_0 = arith.constant 0 : i32
    %c0_i32_1 = arith.constant 0 : i32
    %c0_i32_2 = arith.constant 0 : i32
    return %c0_i32, %c0_i32_0, %c0_i32_1 : i32, i32, i32
  }
  func.func @transform_37(%arg0: i32) -> (i32, i32, i32) {
    %c0_i32 = arith.constant 0 : i32
    %c0_i32_0 = arith.constant 0 : i32
    %c0_i32_1 = arith.constant 0 : i32
    %c0_i32_2 = arith.constant 0 : i32
    return %c0_i32, %c0_i32_0, %c0_i32_1 : i32, i32, i32
  }
  func.func @transform_38(%arg0: i32) -> (i32, i32, i32) {
    %c0_i32 = arith.constant 0 : i32
    %c0_i32_0 = arith.constant 0 : i32
    %c0_i32_1 = arith.constant 0 : i32
    %c0_i32_2 = arith.constant 0 : i32
    return %c0_i32, %c0_i32_0, %c0_i32_1 : i32, i32, i32
  }
  func.func @transform_39(%arg0: i32) -> (i32, i32, i32) {
    %c0_i32 = arith.constant 0 : i32
    %c0_i32_0 = arith.constant 0 : i32
    %c0_i32_1 = arith.constant 0 : i32
    %c0_i32_2 = arith.constant 0 : i32
    return %c0_i32, %c0_i32_0, %c0_i32_1 : i32, i32, i32
  }
  func.func @transform_40(%arg0: i32) -> (i32, i32, i32) {
    %c0_i32 = arith.constant 0 : i32
    %c0_i32_0 = arith.constant 0 : i32
    %c0_i32_1 = arith.constant 0 : i32
    %c0_i32_2 = arith.constant 0 : i32
    return %c0_i32, %c0_i32_0, %c0_i32_1 : i32, i32, i32
  }
  func.func @transform_41(%arg0: i32) -> (i32, i32, i32) {
    %c0_i32 = arith.constant 0 : i32
    %c0_i32_0 = arith.constant 0 : i32
    %c0_i32_1 = arith.constant 0 : i32
    %c0_i32_2 = arith.constant 0 : i32
    return %c0_i32, %c0_i32_0, %c0_i32_1 : i32, i32, i32
  }
  func.func @transform_42(%arg0: i32) -> (i32, i32, i32, i32) {
    %c0_i32 = arith.constant 0 : i32
    %c0_i32_0 = arith.constant 0 : i32
    %c0_i32_1 = arith.constant 0 : i32
    %c0_i32_2 = arith.constant 0 : i32
    return %arg0, %c0_i32, %c0_i32_0, %c0_i32_1 : i32, i32, i32, i32
  }
}

</mosaic_0001>

<llo_original>
// kernel: cnn_gru_net_forward.1
$region0: #{cnn_gru_net_forward.1}
  #allocation0 [shape = 'u32[]', space=smem, size = 0x4, offset = 0x4, fixed_abs, tag = 'smem constant byte address 0x4 - core index']
  #allocation1 [shape = 'u32[144,128]{1,0:T(1,128)}', space=vmem, size = 0x12000, scoped, tag = 'internal scratch']
  #allocation2 [shape = 'f32[6,2,32]{2,1,0:T(2,128)}', space=vmem, size = 0x1800, scoped, tag = 'scratch operand']
  %s0 = inlined_call_operand.smem [shape: u32[43], index: -1, kind: input, shape index: {}]
  %s1 = sld [smem:[%s0]]
  %s2 = scalar_lea.smem %s0, 1
  %s3 = sld [smem:[%s2]]
  %s4 = scalar_lea.smem %s0, 2
  %s5 = sld [smem:[%s4]]
  %s6 = scalar_lea.smem %s0, 3
  %s7 = sld [smem:[%s6]]
  %s8 = scalar_lea.smem %s0, 4
  %s9 = sld [smem:[%s8]]
  %s10 = scalar_lea.smem %s0, 5
  %s11 = sld [smem:[%s10]]
  %s12 = scalar_lea.smem %s0, 6
  %s13 = sld [smem:[%s12]]
  %s14 = scalar_lea.smem %s0, 7
  %s15 = sld [smem:[%s14]]
  %s16 = scalar_lea.smem %s0, 8
  %s17 = sld [smem:[%s16]]
  %s18 = scalar_lea.smem %s0, 9
  %s19 = sld [smem:[%s18]]
  %s20 = scalar_lea.smem %s0, 10
  %s21 = sld [smem:[%s20]]
  %s22 = scalar_lea.smem %s0, 11
  %s23 = sld [smem:[%s22]]
  %s24 = scalar_lea.smem %s0, 12
  %s25 = sld [smem:[%s24]]
  %s26 = scalar_lea.smem %s0, 13
  %s27 = sld [smem:[%s26]]
  %s28 = scalar_lea.smem %s0, 14
  %s29 = sld [smem:[%s28]]
  %s30 = scalar_lea.smem %s0, 15
  %s31 = sld [smem:[%s30]]
  %s32 = scalar_lea.smem %s0, 16
  %s33 = sld [smem:[%s32]]
  %s34 = scalar_lea.smem %s0, 17
  %s35 = sld [smem:[%s34]]
  %s36 = scalar_lea.smem %s0, 18
  %s37 = sld [smem:[%s36]]
  %s38 = scalar_lea.smem %s0, 19
  %s39 = sld [smem:[%s38]]
  %s40 = scalar_lea.smem %s0, 20
  %s41 = sld [smem:[%s40]]
  %s42 = scalar_lea.smem %s0, 21
  %s43 = sld [smem:[%s42]]
  %s44 = scalar_lea.smem %s0, 22
  %s45 = sld [smem:[%s44]]
  %s46 = scalar_lea.smem %s0, 23
  %s47 = sld [smem:[%s46]]
  %s48 = scalar_lea.smem %s0, 24
  %s49 = sld [smem:[%s48]]
  %s50 = scalar_lea.smem %s0, 25
  %s51 = sld [smem:[%s50]]
  %s52 = scalar_lea.smem %s0, 26
  %s53 = sld [smem:[%s52]]
  %s54 = scalar_lea.smem %s0, 27
  %s55 = sld [smem:[%s54]]
  %s56 = scalar_lea.smem %s0, 28
  %s57 = sld [smem:[%s56]]
  %s58 = scalar_lea.smem %s0, 29
  %s59 = sld [smem:[%s58]]
  %s60 = scalar_lea.smem %s0, 30
  %s61 = sld [smem:[%s60]]
  %s62 = scalar_lea.smem %s0, 31
  %s63 = sld [smem:[%s62]]
  %s64 = scalar_lea.smem %s0, 32
  %s65 = sld [smem:[%s64]]
  %s66 = scalar_lea.smem %s0, 33
  %s67 = sld [smem:[%s66]]
  %s68 = scalar_lea.smem %s0, 34
  %s69 = sld [smem:[%s68]]
  %s70 = scalar_lea.smem %s0, 35
  %s71 = sld [smem:[%s70]]
  %s72 = scalar_lea.smem %s0, 36
  %s73 = sld [smem:[%s72]]
  %s74 = scalar_lea.smem %s0, 37
  %s75 = sld [smem:[%s74]]
  %s76 = scalar_lea.smem %s0, 38
  %s77 = sld [smem:[%s76]]
  %s78 = scalar_lea.smem %s0, 39
  %s79 = sld [smem:[%s78]]
  %s80 = scalar_lea.smem %s0, 40
  %s81 = sld [smem:[%s80]]
  %s82 = scalar_lea.smem %s0, 41
  %s83 = sld [smem:[%s82]]
  %s84 = scalar_lea.smem %s0, 42
  %s85 = sld [smem:[%s84]]
  %s86 = sld [smem:[#allocation0]]
  $region205: #{cnn_gru_net_forward.1} parent=0
    _
  %s88 = ssub.s32 1, %s86
  %s89 = scalar_select 0, %s88, %s86
  loop: start=0, step=1, limit=10
  $region2: #{cnn_gru_net_forward.1} parent=0 // loop_pre_header
    _
  $region3: #{cnn_gru_net_forward.1} parent=0 // loop_header
    %s91 = sphi 0, %s95
    %p92 = scmp.ge.s32.totalorder %s91, 10
    %s101 = sphi 0, %s103
    %s104 = sphi 0, %s101
    %s105 = sphi 0, %s104
    %s121 = sphi 0, %s105
    %s127 = sphi 0, %s129
    %s130 = sphi 0, %s127
    %s131 = sphi 0, %s130
    %s147 = sphi 0, %s131
    %s151 = sphi 0, %s151
    %s153 = sphi 0, %s151
    %s154 = sphi 0, %s153
    %s168 = sphi 0, %s154
    %s172 = sphi 0, %s172
    %s174 = sphi 0, %s172
    %s175 = sphi 0, %s174
    %s189 = sphi 0, %s175
    %s193 = sphi 0, %s193
    %s195 = sphi 0, %s193
    %s196 = sphi 0, %s195
    %s210 = sphi 0, %s196
    %s214 = sphi 0, %s214
    %s216 = sphi 0, %s214
    %s217 = sphi 0, %s216
    %s231 = sphi 0, %s217
    %s235 = sphi 0, %s235
    %s237 = sphi 0, %s235
    %s238 = sphi 0, %s237
    %s252 = sphi 0, %s238
    %s256 = sphi 0, %s256
    %s258 = sphi 0, %s256
    %s259 = sphi 0, %s258
    %s273 = sphi 0, %s259
    %s277 = sphi 0, %s277
    %s279 = sphi 0, %s277
    %s280 = sphi 0, %s279
    %s294 = sphi 0, %s280
    %s298 = sphi 0, %s298
    %s300 = sphi 0, %s298
    %s301 = sphi 0, %s300
    %s315 = sphi 0, %s301
    %s319 = sphi 0, %s319
    %s321 = sphi 0, %s319
    %s322 = sphi 0, %s321
    %s336 = sphi 0, %s322
    %s340 = sphi 0, %s340
    %s342 = sphi 0, %s340
    %s343 = sphi 0, %s342
    %s357 = sphi 0, %s343
    %s361 = sphi 0, %s361
    %s363 = sphi 0, %s361
    %s364 = sphi 0, %s363
    %s378 = sphi 0, %s364
    %s382 = sphi 0, %s382
    %s384 = sphi 0, %s382
    %s385 = sphi 0, %s384
    %s399 = sphi 0, %s385
    %s403 = sphi 0, %s403
    %s405 = sphi 0, %s403
    %s406 = sphi 0, %s405
    %s420 = sphi 0, %s406
    %s424 = sphi 0, %s424
    %s426 = sphi 0, %s424
    %s427 = sphi 0, %s426
    %s441 = sphi 0, %s427
    %s445 = sphi 0, %s445
    %s447 = sphi 0, %s445
    %s448 = sphi 0, %s447
    %s462 = sphi 0, %s448
    %s466 = sphi 0, %s466
    %s468 = sphi 0, %s466
    %s469 = sphi 0, %s468
    %s483 = sphi 0, %s469
    %s487 = sphi 0, %s487
    %s489 = sphi 0, %s487
    %s490 = sphi 0, %s489
    %s504 = sphi 0, %s490
    %s508 = sphi 0, %s508
    %s510 = sphi 0, %s508
    %s511 = sphi 0, %s510
    %s525 = sphi 0, %s511
    %s529 = sphi 0, %s529
    %s531 = sphi 0, %s529
    %s532 = sphi 0, %s531
    %s546 = sphi 0, %s532
    %s550 = sphi 0, %s550
    %s552 = sphi 0, %s550
    %s553 = sphi 0, %s552
    %s567 = sphi 0, %s553
    %s571 = sphi 0, %s571
    %s573 = sphi 0, %s571
    %s574 = sphi 0, %s573
    %s588 = sphi 0, %s574
    %s592 = sphi 0, %s592
    %s594 = sphi 0, %s592
    %s595 = sphi 0, %s594
    %s609 = sphi 0, %s595
    %s613 = sphi 0, %s613
    %s615 = sphi 0, %s613
    %s616 = sphi 0, %s615
    %s630 = sphi 0, %s616
    %s634 = sphi 0, %s634
    %s636 = sphi 0, %s634
    %s637 = sphi 0, %s636
    %s651 = sphi 0, %s637
    %s655 = sphi 0, %s655
    %s657 = sphi 0, %s655
    %s658 = sphi 0, %s657
    %s672 = sphi 0, %s658
    %s676 = sphi 0, %s676
    %s678 = sphi 0, %s676
    %s679 = sphi 0, %s678
    %s693 = sphi 0, %s679
    %s697 = sphi 0, %s697
    %s699 = sphi 0, %s697
    %s700 = sphi 0, %s699
    %s714 = sphi 0, %s700
    %s718 = sphi 0, %s718
    %s720 = sphi 0, %s718
    %s721 = sphi 0, %s720
    %s735 = sphi 0, %s721
    %s739 = sphi 0, %s739
    %s741 = sphi 0, %s739
    %s742 = sphi 0, %s741
    %s756 = sphi 0, %s742
    %s760 = sphi 0, %s760
    %s762 = sphi 0, %s760
    %s763 = sphi 0, %s762
    %s777 = sphi 0, %s763
    %s781 = sphi 0, %s781
    %s783 = sphi 0, %s781
    %s784 = sphi 0, %s783
    %s798 = sphi 0, %s784
    %s802 = sphi 0, %s802
    %s804 = sphi 0, %s802
    %s805 = sphi 0, %s804
    %s819 = sphi 0, %s805
    %s823 = sphi 0, %s823
    %s825 = sphi 0, %s823
    %s826 = sphi 0, %s825
    %s840 = sphi 0, %s826
    %s844 = sphi 0, %s844
    %s846 = sphi 0, %s844
    %s847 = sphi 0, %s846
    %s861 = sphi 0, %s847
    %s865 = sphi 0, %s865
    %s867 = sphi 0, %s865
    %s868 = sphi 0, %s867
    %s882 = sphi 0, %s868
    %s886 = sphi 0, %s886
    %s888 = sphi 0, %s886
    %s889 = sphi 0, %s888
    %s903 = sphi 0, %s889
    %s907 = sphi 0, %s907
    %s909 = sphi 0, %s907
    %s910 = sphi 0, %s909
    %s924 = sphi 0, %s910
    %s928 = sphi 0, %s928
    %s930 = sphi 0, %s928
    %s931 = sphi 0, %s930
    %s945 = sphi 0, %s931
    %s949 = sphi 0, %s949
    %s951 = sphi 0, %s949
    %s952 = sphi 0, %s951
    %s966 = sphi 0, %s952
    %s970 = sphi 0, %s970
    %s972 = sphi 0, %s970
    %s973 = sphi 0, %s972
    %s987 = sphi 0, %s973
    %s993 = sphi 0, %s995
    %s996 = sphi 0, %s993
    %s997 = sphi 0, %s996
    %s1013 = sphi 0, %s997
  $region4: #{cnn_gru_net_forward.1} parent=0 // loop_header_branch
    %94 = sbr.rel (%p92) target = $region8
  $region5: #{cnn_gru_net_forward.1} parent=0 // loop_body
    %s96 = ssub.s32 %s91, 1
    %s97 = ssub.s32 %s91, 2
    %s98 = sadd.s32 %s91, 1
    %s99 = ssub.s32 %s91, %s98
    %p100 = scmp.eq.s32.totalorder %s99, 0
    %s102 = sadd.s32 %s101, 1
    %s103 = scalar_select %p100, %s101, %s102
    %p106 = pneg %p100
    %p107 = scmp.eq.s32.totalorder %s91, 7
    %p108 = por %p106, %p107
    %p109 = scmp.ne.s32.totalorder %s101, %s104
    %p110 = scmp.eq.s32.totalorder %s91, 0
    %p111 = por %p109, %p110
    %p112 = scmp.ne.s32.totalorder %s101, %s104
    %p113 = scmp.eq.s32.totalorder %s96, 7
    %p114 = por %p112, %p113
    %p115 = scmp.ne.s32.totalorder %s104, %s105
    %p116 = scmp.eq.s32.totalorder %s96, 0
    %p117 = por %p115, %p116
    %p118 = scmp.ne.s32.totalorder %s104, %s105
    %p119 = scmp.eq.s32.totalorder %s97, 7
    %p120 = por %p118, %p119
    %p122 = scmp.ne.s32.totalorder %s105, %s121
    %p123 = scmp.eq.s32.totalorder %s97, 0
    %p124 = por %p122, %p123
    %s125 = ssub.s32 %s91, %s98
    %p126 = scmp.eq.s32.totalorder %s125, 0
    %s128 = sadd.s32 %s127, 1
    %s129 = scalar_select %p126, %s127, %s128
    %p132 = pneg %p126
    %p133 = scmp.eq.s32.totalorder %s91, 7
    %p134 = por %p132, %p133
    %p135 = scmp.ne.s32.totalorder %s127, %s130
    %p136 = scmp.eq.s32.totalorder %s91, 0
    %p137 = por %p135, %p136
    %p138 = scmp.ne.s32.totalorder %s127, %s130
    %p139 = scmp.eq.s32.totalorder %s96, 7
    %p140 = por %p138, %p139
    %p141 = scmp.ne.s32.totalorder %s130, %s131
    %p142 = scmp.eq.s32.totalorder %s96, 0
    %p143 = por %p141, %p142
    %p144 = scmp.ne.s32.totalorder %s130, %s131
    %p145 = scmp.eq.s32.totalorder %s97, 7
    %p146 = por %p144, %p145
    %p148 = scmp.ne.s32.totalorder %s131, %s147
    %p149 = scmp.eq.s32.totalorder %s97, 0
    %p150 = por %p148, %p149
    %s152 = sadd.s32 %s151, 1
    %p155 = scmp.eq.s32.totalorder %s91, 7
    %p156 = scmp.ne.s32.totalorder %s151, %s153
    %p157 = scmp.eq.s32.totalorder %s91, 0
    %p158 = por %p156, %p157
    %p159 = scmp.ne.s32.totalorder %s151, %s153
    %p160 = scmp.eq.s32.totalorder %s96, 7
    %p161 = por %p159, %p160
    %p162 = scmp.ne.s32.totalorder %s153, %s154
    %p163 = scmp.eq.s32.totalorder %s96, 0
    %p164 = por %p162, %p163
    %p165 = scmp.ne.s32.totalorder %s153, %s154
    %p166 = scmp.eq.s32.totalorder %s97, 7
    %p167 = por %p165, %p166
    %p169 = scmp.ne.s32.totalorder %s154, %s168
    %p170 = scmp.eq.s32.totalorder %s97, 0
    %p171 = por %p169, %p170
    %s173 = sadd.s32 %s172, 1
    %p176 = scmp.eq.s32.totalorder %s91, 7
    %p177 = scmp.ne.s32.totalorder %s172, %s174
    %p178 = scmp.eq.s32.totalorder %s91, 0
    %p179 = por %p177, %p178
    %p180 = scmp.ne.s32.totalorder %s172, %s174
    %p181 = scmp.eq.s32.totalorder %s96, 7
    %p182 = por %p180, %p181
    %p183 = scmp.ne.s32.totalorder %s174, %s175
    %p184 = scmp.eq.s32.totalorder %s96, 0
    %p185 = por %p183, %p184
    %p186 = scmp.ne.s32.totalorder %s174, %s175
    %p187 = scmp.eq.s32.totalorder %s97, 7
    %p188 = por %p186, %p187
    %p190 = scmp.ne.s32.totalorder %s175, %s189
    %p191 = scmp.eq.s32.totalorder %s97, 0
    %p192 = por %p190, %p191
    %s194 = sadd.s32 %s193, 1
    %p197 = scmp.eq.s32.totalorder %s91, 7
    %p198 = scmp.ne.s32.totalorder %s193, %s195
    %p199 = scmp.eq.s32.totalorder %s91, 0
    %p200 = por %p198, %p199
    %p201 = scmp.ne.s32.totalorder %s193, %s195
    %p202 = scmp.eq.s32.totalorder %s96, 7
    %p203 = por %p201, %p202
    %p204 = scmp.ne.s32.totalorder %s195, %s196
    %p205 = scmp.eq.s32.totalorder %s96, 0
    %p206 = por %p204, %p205
    %p207 = scmp.ne.s32.totalorder %s195, %s196
    %p208 = scmp.eq.s32.totalorder %s97, 7
    %p209 = por %p207, %p208
    %p211 = scmp.ne.s32.totalorder %s196, %s210
    %p212 = scmp.eq.s32.totalorder %s97, 0
    %p213 = por %p211, %p212
    %s215 = sadd.s32 %s214, 1
    %p218 = scmp.eq.s32.totalorder %s91, 7
    %p219 = scmp.ne.s32.totalorder %s214, %s216
    %p220 = scmp.eq.s32.totalorder %s91, 0
    %p221 = por %p219, %p220
    %p222 = scmp.ne.s32.totalorder %s214, %s216
    %p223 = scmp.eq.s32.totalorder %s96, 7
    %p224 = por %p222, %p223
    %p225 = scmp.ne.s32.totalorder %s216, %s217
    %p226 = scmp.eq.s32.totalorder %s96, 0
    %p227 = por %p225, %p226
    %p228 = scmp.ne.s32.totalorder %s216, %s217
    %p229 = scmp.eq.s32.totalorder %s97, 7
    %p230 = por %p228, %p229
    %p232 = scmp.ne.s32.totalorder %s217, %s231
    %p233 = scmp.eq.s32.totalorder %s97, 0
    %p234 = por %p232, %p233
    %s236 = sadd.s32 %s235, 1
    %p239 = scmp.eq.s32.totalorder %s91, 7
    %p240 = scmp.ne.s32.totalorder %s235, %s237
    %p241 = scmp.eq.s32.totalorder %s91, 0
    %p242 = por %p240, %p241
    %p243 = scmp.ne.s32.totalorder %s235, %s237
    %p244 = scmp.eq.s32.totalorder %s96, 7
    %p245 = por %p243, %p244
    %p246 = scmp.ne.s32.totalorder %s237, %s238
    %p247 = scmp.eq.s32.totalorder %s96, 0
    %p248 = por %p246, %p247
    %p249 = scmp.ne.s32.totalorder %s237, %s238
    %p250 = scmp.eq.s32.totalorder %s97, 7
    %p251 = por %p249, %p250
    %p253 = scmp.ne.s32.totalorder %s238, %s252
    %p254 = scmp.eq.s32.totalorder %s97, 0
    %p255 = por %p253, %p254
    %s257 = sadd.s32 %s256, 1
    %p260 = scmp.eq.s32.totalorder %s91, 7
    %p261 = scmp.ne.s32.totalorder %s256, %s258
    %p262 = scmp.eq.s32.totalorder %s91, 0
    %p263 = por %p261, %p262
    %p264 = scmp.ne.s32.totalorder %s256, %s258
    %p265 = scmp.eq.s32.totalorder %s96, 7
    %p266 = por %p264, %p265
    %p267 = scmp.ne.s32.totalorder %s258, %s259
    %p268 = scmp.eq.s32.totalorder %s96, 0
    %p269 = por %p267, %p268
    %p270 = scmp.ne.s32.totalorder %s258, %s259
    %p271 = scmp.eq.s32.totalorder %s97, 7
    %p272 = por %p270, %p271
    %p274 = scmp.ne.s32.totalorder %s259, %s273
    %p275 = scmp.eq.s32.totalorder %s97, 0
    %p276 = por %p274, %p275
    %s278 = sadd.s32 %s277, 1
    %p281 = scmp.eq.s32.totalorder %s91, 7
    %p282 = scmp.ne.s32.totalorder %s277, %s279
    %p283 = scmp.eq.s32.totalorder %s91, 0
    %p284 = por %p282, %p283
    %p285 = scmp.ne.s32.totalorder %s277, %s279
    %p286 = scmp.eq.s32.totalorder %s96, 7
    %p287 = por %p285, %p286
    %p288 = scmp.ne.s32.totalorder %s279, %s280
    %p289 = scmp.eq.s32.totalorder %s96, 0
    %p290 = por %p288, %p289
    %p291 = scmp.ne.s32.totalorder %s279, %s280
    %p292 = scmp.eq.s32.totalorder %s97, 7
    %p293 = por %p291, %p292
    %p295 = scmp.ne.s32.totalorder %s280, %s294
    %p296 = scmp.eq.s32.totalorder %s97, 0
    %p297 = por %p295, %p296
    %s299 = sadd.s32 %s298, 1
    %p302 = scmp.eq.s32.totalorder %s91, 7
    %p303 = scmp.ne.s32.totalorder %s298, %s300
    %p304 = scmp.eq.s32.totalorder %s91, 0
    %p305 = por %p303, %p304
    %p306 = scmp.ne.s32.totalorder %s298, %s300
    %p307 = scmp.eq.s32.totalorder %s96, 7
    %p308 = por %p306, %p307
    %p309 = scmp.ne.s32.totalorder %s300, %s301
    %p310 = scmp.eq.s32.totalorder %s96, 0
    %p311 = por %p309, %p310
    %p312 = scmp.ne.s32.totalorder %s300, %s301
    %p313 = scmp.eq.s32.totalorder %s97, 7
    %p314 = por %p312, %p313
    %p316 = scmp.ne.s32.totalorder %s301, %s315
    %p317 = scmp.eq.s32.totalorder %s97, 0
    %p318 = por %p316, %p317
    %s320 = sadd.s32 %s319, 1
    %p323 = scmp.eq.s32.totalorder %s91, 7
    %p324 = scmp.ne.s32.totalorder %s319, %s321
    %p325 = scmp.eq.s32.totalorder %s91, 0
    %p326 = por %p324, %p325
    %p327 = scmp.ne.s32.totalorder %s319, %s321
    %p328 = scmp.eq.s32.totalorder %s96, 7
    %p329 = por %p327, %p328
    %p330 = scmp.ne.s32.totalorder %s321, %s322
    %p331 = scmp.eq.s32.totalorder %s96, 0
    %p332 = por %p330, %p331
    %p333 = scmp.ne.s32.totalorder %s321, %s322
    %p334 = scmp.eq.s32.totalorder %s97, 7
    %p335 = por %p333, %p334
    %p337 = scmp.ne.s32.totalorder %s322, %s336
    %p338 = scmp.eq.s32.totalorder %s97, 0
    %p339 = por %p337, %p338
    %s341 = sadd.s32 %s340, 1
    %p344 = scmp.eq.s32.totalorder %s91, 7
    %p345 = scmp.ne.s32.totalorder %s340, %s342
    %p346 = scmp.eq.s32.totalorder %s91, 0
    %p347 = por %p345, %p346
    %p348 = scmp.ne.s32.totalorder %s340, %s342
    %p349 = scmp.eq.s32.totalorder %s96, 7
    %p350 = por %p348, %p349
    %p351 = scmp.ne.s32.totalorder %s342, %s343
    %p352 = scmp.eq.s32.totalorder %s96, 0
    %p353 = por %p351, %p352
    %p354 = scmp.ne.s32.totalorder %s342, %s343
    %p355 = scmp.eq.s32.totalorder %s97, 7
    %p356 = por %p354, %p355
    %p358 = scmp.ne.s32.totalorder %s343, %s357
    %p359 = scmp.eq.s32.totalorder %s97, 0
    %p360 = por %p358, %p359
    %s362 = sadd.s32 %s361, 1
    %p365 = scmp.eq.s32.totalorder %s91, 7
    %p366 = scmp.ne.s32.totalorder %s361, %s363
    %p367 = scmp.eq.s32.totalorder %s91, 0
    %p368 = por %p366, %p367
    %p369 = scmp.ne.s32.totalorder %s361, %s363
    %p370 = scmp.eq.s32.totalorder %s96, 7
    %p371 = por %p369, %p370
    %p372 = scmp.ne.s32.totalorder %s363, %s364
    %p373 = scmp.eq.s32.totalorder %s96, 0
    %p374 = por %p372, %p373
    %p375 = scmp.ne.s32.totalorder %s363, %s364
    %p376 = scmp.eq.s32.totalorder %s97, 7
    %p377 = por %p375, %p376
    %p379 = scmp.ne.s32.totalorder %s364, %s378
    %p380 = scmp.eq.s32.totalorder %s97, 0
    %p381 = por %p379, %p380
    %s383 = sadd.s32 %s382, 1
    %p386 = scmp.eq.s32.totalorder %s91, 7
    %p387 = scmp.ne.s32.totalorder %s382, %s384
    %p388 = scmp.eq.s32.totalorder %s91, 0
    %p389 = por %p387, %p388
    %p390 = scmp.ne.s32.totalorder %s382, %s384
    %p391 = scmp.eq.s32.totalorder %s96, 7
    %p392 = por %p390, %p391
    %p393 = scmp.ne.s32.totalorder %s384, %s385
    %p394 = scmp.eq.s32.totalorder %s96, 0
    %p395 = por %p393, %p394
    %p396 = scmp.ne.s32.totalorder %s384, %s385
    %p397 = scmp.eq.s32.totalorder %s97, 7
    %p398 = por %p396, %p397
    %p400 = scmp.ne.s32.totalorder %s385, %s399
    %p401 = scmp.eq.s32.totalorder %s97, 0
    %p402 = por %p400, %p401
    %s404 = sadd.s32 %s403, 1
    %p407 = scmp.eq.s32.totalorder %s91, 7
    %p408 = scmp.ne.s32.totalorder %s403, %s405
    %p409 = scmp.eq.s32.totalorder %s91, 0
    %p410 = por %p408, %p409
    %p411 = scmp.ne.s32.totalorder %s403, %s405
    %p412 = scmp.eq.s32.totalorder %s96, 7
    %p413 = por %p411, %p412
    %p414 = scmp.ne.s32.totalorder %s405, %s406
    %p415 = scmp.eq.s32.totalorder %s96, 0
    %p416 = por %p414, %p415
    %p417 = scmp.ne.s32.totalorder %s405, %s406
    %p418 = scmp.eq.s32.totalorder %s97, 7
    %p419 = por %p417, %p418
    %p421 = scmp.ne.s32.totalorder %s406, %s420
    %p422 = scmp.eq.s32.totalorder %s97, 0
    %p423 = por %p421, %p422
    %s425 = sadd.s32 %s424, 1
    %p428 = scmp.eq.s32.totalorder %s91, 7
    %p429 = scmp.ne.s32.totalorder %s424, %s426
    %p430 = scmp.eq.s32.totalorder %s91, 0
    %p431 = por %p429, %p430
    %p432 = scmp.ne.s32.totalorder %s424, %s426
    %p433 = scmp.eq.s32.totalorder %s96, 7
    %p434 = por %p432, %p433
    %p435 = scmp.ne.s32.totalorder %s426, %s427
    %p436 = scmp.eq.s32.totalorder %s96, 0
    %p437 = por %p435, %p436
    %p438 = scmp.ne.s32.totalorder %s426, %s427
    %p439 = scmp.eq.s32.totalorder %s97, 7
    %p440 = por %p438, %p439
    %p442 = scmp.ne.s32.totalorder %s427, %s441
    %p443 = scmp.eq.s32.totalorder %s97, 0
    %p444 = por %p442, %p443
    %s446 = sadd.s32 %s445, 1
    %p449 = scmp.eq.s32.totalorder %s91, 7
    %p450 = scmp.ne.s32.totalorder %s445, %s447
    %p451 = scmp.eq.s32.totalorder %s91, 0
    %p452 = por %p450, %p451
    %p453 = scmp.ne.s32.totalorder %s445, %s447
    %p454 = scmp.eq.s32.totalorder %s96, 7
    %p455 = por %p453, %p454
    %p456 = scmp.ne.s32.totalorder %s447, %s448
    %p457 = scmp.eq.s32.totalorder %s96, 0
    %p458 = por %p456, %p457
    %p459 = scmp.ne.s32.totalorder %s447, %s448
    %p460 = scmp.eq.s32.totalorder %s97, 7
    %p461 = por %p459, %p460
    %p463 = scmp.ne.s32.totalorder %s448, %s462
    %p464 = scmp.eq.s32.totalorder %s97, 0
    %p465 = por %p463, %p464
    %s467 = sadd.s32 %s466, 1
    %p470 = scmp.eq.s32.totalorder %s91, 7
    %p471 = scmp.ne.s32.totalorder %s466, %s468
    %p472 = scmp.eq.s32.totalorder %s91, 0
    %p473 = por %p471, %p472
    %p474 = scmp.ne.s32.totalorder %s466, %s468
    %p475 = scmp.eq.s32.totalorder %s96, 7
    %p476 = por %p474, %p475
    %p477 = scmp.ne.s32.totalorder %s468, %s469
    %p478 = scmp.eq.s32.totalorder %s96, 0
    %p479 = por %p477, %p478
    %p480 = scmp.ne.s32.totalorder %s468, %s469
    %p481 = scmp.eq.s32.totalorder %s97, 7
    %p482 = por %p480, %p481
    %p484 = scmp.ne.s32.totalorder %s469, %s483
    %p485 = scmp.eq.s32.totalorder %s97, 0
    %p486 = por %p484, %p485
    %s488 = sadd.s32 %s487, 1
    %p491 = scmp.eq.s32.totalorder %s91, 7
    %p492 = scmp.ne.s32.totalorder %s487, %s489
    %p493 = scmp.eq.s32.totalorder %s91, 0
    %p494 = por %p492, %p493
    %p495 = scmp.ne.s32.totalorder %s487, %s489
    %p496 = scmp.eq.s32.totalorder %s96, 7
    %p497 = por %p495, %p496
    %p498 = scmp.ne.s32.totalorder %s489, %s490
    %p499 = scmp.eq.s32.totalorder %s96, 0
    %p500 = por %p498, %p499
    %p501 = scmp.ne.s32.totalorder %s489, %s490
    %p502 = scmp.eq.s32.totalorder %s97, 7
    %p503 = por %p501, %p502
    %p505 = scmp.ne.s32.totalorder %s490, %s504
    %p506 = scmp.eq.s32.totalorder %s97, 0
    %p507 = por %p505, %p506
    %s509 = sadd.s32 %s508, 1
    %p512 = scmp.eq.s32.totalorder %s91, 7
    %p513 = scmp.ne.s32.totalorder %s508, %s510
    %p514 = scmp.eq.s32.totalorder %s91, 0
    %p515 = por %p513, %p514
    %p516 = scmp.ne.s32.totalorder %s508, %s510
    %p517 = scmp.eq.s32.totalorder %s96, 7
    %p518 = por %p516, %p517
    %p519 = scmp.ne.s32.totalorder %s510, %s511
    %p520 = scmp.eq.s32.totalorder %s96, 0
    %p521 = por %p519, %p520
    %p522 = scmp.ne.s32.totalorder %s510, %s511
    %p523 = scmp.eq.s32.totalorder %s97, 7
    %p524 = por %p522, %p523
    %p526 = scmp.ne.s32.totalorder %s511, %s525
    %p527 = scmp.eq.s32.totalorder %s97, 0
    %p528 = por %p526, %p527
    %s530 = sadd.s32 %s529, 1
    %p533 = scmp.eq.s32.totalorder %s91, 7
    %p534 = scmp.ne.s32.totalorder %s529, %s531
    %p535 = scmp.eq.s32.totalorder %s91, 0
    %p536 = por %p534, %p535
    %p537 = scmp.ne.s32.totalorder %s529, %s531
    %p538 = scmp.eq.s32.totalorder %s96, 7
    %p539 = por %p537, %p538
    %p540 = scmp.ne.s32.totalorder %s531, %s532
    %p541 = scmp.eq.s32.totalorder %s96, 0
    %p542 = por %p540, %p541
    %p543 = scmp.ne.s32.totalorder %s531, %s532
    %p544 = scmp.eq.s32.totalorder %s97, 7
    %p545 = por %p543, %p544
    %p547 = scmp.ne.s32.totalorder %s532, %s546
    %p548 = scmp.eq.s32.totalorder %s97, 0
    %p549 = por %p547, %p548
    %s551 = sadd.s32 %s550, 1
    %p554 = scmp.eq.s32.totalorder %s91, 7
    %p555 = scmp.ne.s32.totalorder %s550, %s552
    %p556 = scmp.eq.s32.totalorder %s91, 0
    %p557 = por %p555, %p556
    %p558 = scmp.ne.s32.totalorder %s550, %s552
    %p559 = scmp.eq.s32.totalorder %s96, 7
    %p560 = por %p558, %p559
    %p561 = scmp.ne.s32.totalorder %s552, %s553
    %p562 = scmp.eq.s32.totalorder %s96, 0
    %p563 = por %p561, %p562
    %p564 = scmp.ne.s32.totalorder %s552, %s553
    %p565 = scmp.eq.s32.totalorder %s97, 7
    %p566 = por %p564, %p565
    %p568 = scmp.ne.s32.totalorder %s553, %s567
    %p569 = scmp.eq.s32.totalorder %s97, 0
    %p570 = por %p568, %p569
    %s572 = sadd.s32 %s571, 1
    %p575 = scmp.eq.s32.totalorder %s91, 7
    %p576 = scmp.ne.s32.totalorder %s571, %s573
    %p577 = scmp.eq.s32.totalorder %s91, 0
    %p578 = por %p576, %p577
    %p579 = scmp.ne.s32.totalorder %s571, %s573
    %p580 = scmp.eq.s32.totalorder %s96, 7
    %p581 = por %p579, %p580
    %p582 = scmp.ne.s32.totalorder %s573, %s574
    %p583 = scmp.eq.s32.totalorder %s96, 0
    %p584 = por %p582, %p583
    %p585 = scmp.ne.s32.totalorder %s573, %s574
    %p586 = scmp.eq.s32.totalorder %s97, 7
    %p587 = por %p585, %p586
    %p589 = scmp.ne.s32.totalorder %s574, %s588
    %p590 = scmp.eq.s32.totalorder %s97, 0
    %p591 = por %p589, %p590
    %s593 = sadd.s32 %s592, 1
    %p596 = scmp.eq.s32.totalorder %s91, 7
    %p597 = scmp.ne.s32.totalorder %s592, %s594
    %p598 = scmp.eq.s32.totalorder %s91, 0
    %p599 = por %p597, %p598
    %p600 = scmp.ne.s32.totalorder %s592, %s594
    %p601 = scmp.eq.s32.totalorder %s96, 7
    %p602 = por %p600, %p601
    %p603 = scmp.ne.s32.totalorder %s594, %s595
    %p604 = scmp.eq.s32.totalorder %s96, 0
    %p605 = por %p603, %p604
    %p606 = scmp.ne.s32.totalorder %s594, %s595
    %p607 = scmp.eq.s32.totalorder %s97, 7
    %p608 = por %p606, %p607
    %p610 = scmp.ne.s32.totalorder %s595, %s609
    %p611 = scmp.eq.s32.totalorder %s97, 0
    %p612 = por %p610, %p611
    %s614 = sadd.s32 %s613, 1
    %p617 = scmp.eq.s32.totalorder %s91, 7
    %p618 = scmp.ne.s32.totalorder %s613, %s615
    %p619 = scmp.eq.s32.totalorder %s91, 0
    %p620 = por %p618, %p619
    %p621 = scmp.ne.s32.totalorder %s613, %s615
    %p622 = scmp.eq.s32.totalorder %s96, 7
    %p623 = por %p621, %p622
    %p624 = scmp.ne.s32.totalorder %s615, %s616
    %p625 = scmp.eq.s32.totalorder %s96, 0
    %p626 = por %p624, %p625
    %p627 = scmp.ne.s32.totalorder %s615, %s616
    %p628 = scmp.eq.s32.totalorder %s97, 7
    %p629 = por %p627, %p628
    %p631 = scmp.ne.s32.totalorder %s616, %s630
    %p632 = scmp.eq.s32.totalorder %s97, 0
    %p633 = por %p631, %p632
    %s635 = sadd.s32 %s634, 1
    %p638 = scmp.eq.s32.totalorder %s91, 7
    %p639 = scmp.ne.s32.totalorder %s634, %s636
    %p640 = scmp.eq.s32.totalorder %s91, 0
    %p641 = por %p639, %p640
    %p642 = scmp.ne.s32.totalorder %s634, %s636
    %p643 = scmp.eq.s32.totalorder %s96, 7
    %p644 = por %p642, %p643
    %p645 = scmp.ne.s32.totalorder %s636, %s637
    %p646 = scmp.eq.s32.totalorder %s96, 0
    %p647 = por %p645, %p646
    %p648 = scmp.ne.s32.totalorder %s636, %s637
    %p649 = scmp.eq.s32.totalorder %s97, 7
    %p650 = por %p648, %p649
    %p652 = scmp.ne.s32.totalorder %s637, %s651
    %p653 = scmp.eq.s32.totalorder %s97, 0
    %p654 = por %p652, %p653
    %s656 = sadd.s32 %s655, 1
    %p659 = scmp.eq.s32.totalorder %s91, 7
    %p660 = scmp.ne.s32.totalorder %s655, %s657
    %p661 = scmp.eq.s32.totalorder %s91, 0
    %p662 = por %p660, %p661
    %p663 = scmp.ne.s32.totalorder %s655, %s657
    %p664 = scmp.eq.s32.totalorder %s96, 7
    %p665 = por %p663, %p664
    %p666 = scmp.ne.s32.totalorder %s657, %s658
    %p667 = scmp.eq.s32.totalorder %s96, 0
    %p668 = por %p666, %p667
    %p669 = scmp.ne.s32.totalorder %s657, %s658
    %p670 = scmp.eq.s32.totalorder %s97, 7
    %p671 = por %p669, %p670
    %p673 = scmp.ne.s32.totalorder %s658, %s672
    %p674 = scmp.eq.s32.totalorder %s97, 0
    %p675 = por %p673, %p674
    %s677 = sadd.s32 %s676, 1
    %p680 = scmp.eq.s32.totalorder %s91, 7
    %p681 = scmp.ne.s32.totalorder %s676, %s678
    %p682 = scmp.eq.s32.totalorder %s91, 0
    %p683 = por %p681, %p682
    %p684 = scmp.ne.s32.totalorder %s676, %s678
    %p685 = scmp.eq.s32.totalorder %s96, 7
    %p686 = por %p684, %p685
    %p687 = scmp.ne.s32.totalorder %s678, %s679
    %p688 = scmp.eq.s32.totalorder %s96, 0
    %p689 = por %p687, %p688
    %p690 = scmp.ne.s32.totalorder %s678, %s679
    %p691 = scmp.eq.s32.totalorder %s97, 7
    %p692 = por %p690, %p691
    %p694 = scmp.ne.s32.totalorder %s679, %s693
    %p695 = scmp.eq.s32.totalorder %s97, 0
    %p696 = por %p694, %p695
    %s698 = sadd.s32 %s697, 1
    %p701 = scmp.eq.s32.totalorder %s91, 7
    %p702 = scmp.ne.s32.totalorder %s697, %s699
    %p703 = scmp.eq.s32.totalorder %s91, 0
    %p704 = por %p702, %p703
    %p705 = scmp.ne.s32.totalorder %s697, %s699
    %p706 = scmp.eq.s32.totalorder %s96, 7
    %p707 = por %p705, %p706
    %p708 = scmp.ne.s32.totalorder %s699, %s700
    %p709 = scmp.eq.s32.totalorder %s96, 0
    %p710 = por %p708, %p709
    %p711 = scmp.ne.s32.totalorder %s699, %s700
    %p712 = scmp.eq.s32.totalorder %s97, 7
    %p713 = por %p711, %p712
    %p715 = scmp.ne.s32.totalorder %s700, %s714
    %p716 = scmp.eq.s32.totalorder %s97, 0
    %p717 = por %p715, %p716
    %s719 = sadd.s32 %s718, 1
    %p722 = scmp.eq.s32.totalorder %s91, 7
    %p723 = scmp.ne.s32.totalorder %s718, %s720
    %p724 = scmp.eq.s32.totalorder %s91, 0
    %p725 = por %p723, %p724
    %p726 = scmp.ne.s32.totalorder %s718, %s720
    %p727 = scmp.eq.s32.totalorder %s96, 7
    %p728 = por %p726, %p727
    %p729 = scmp.ne.s32.totalorder %s720, %s721
    %p730 = scmp.eq.s32.totalorder %s96, 0
    %p731 = por %p729, %p730
    %p732 = scmp.ne.s32.totalorder %s720, %s721
    %p733 = scmp.eq.s32.totalorder %s97, 7
    %p734 = por %p732, %p733
    %p736 = scmp.ne.s32.totalorder %s721, %s735
    %p737 = scmp.eq.s32.totalorder %s97, 0
    %p738 = por %p736, %p737
    %s740 = sadd.s32 %s739, 1
    %p743 = scmp.eq.s32.totalorder %s91, 7
    %p744 = scmp.ne.s32.totalorder %s739, %s741
    %p745 = scmp.eq.s32.totalorder %s91, 0
    %p746 = por %p744, %p745
    %p747 = scmp.ne.s32.totalorder %s739, %s741
    %p748 = scmp.eq.s32.totalorder %s96, 7
    %p749 = por %p747, %p748
    %p750 = scmp.ne.s32.totalorder %s741, %s742
    %p751 = scmp.eq.s32.totalorder %s96, 0
    %p752 = por %p750, %p751
    %p753 = scmp.ne.s32.totalorder %s741, %s742
    %p754 = scmp.eq.s32.totalorder %s97, 7
    %p755 = por %p753, %p754
    %p757 = scmp.ne.s32.totalorder %s742, %s756
    %p758 = scmp.eq.s32.totalorder %s97, 0
    %p759 = por %p757, %p758
    %s761 = sadd.s32 %s760, 1
    %p764 = scmp.eq.s32.totalorder %s91, 7
    %p765 = scmp.ne.s32.totalorder %s760, %s762
    %p766 = scmp.eq.s32.totalorder %s91, 0
    %p767 = por %p765, %p766
    %p768 = scmp.ne.s32.totalorder %s760, %s762
    %p769 = scmp.eq.s32.totalorder %s96, 7
    %p770 = por %p768, %p769
    %p771 = scmp.ne.s32.totalorder %s762, %s763
    %p772 = scmp.eq.s32.totalorder %s96, 0
    %p773 = por %p771, %p772
    %p774 = scmp.ne.s32.totalorder %s762, %s763
    %p775 = scmp.eq.s32.totalorder %s97, 7
    %p776 = por %p774, %p775
    %p778 = scmp.ne.s32.totalorder %s763, %s777
    %p779 = scmp.eq.s32.totalorder %s97, 0
    %p780 = por %p778, %p779
    %s782 = sadd.s32 %s781, 1
    %p785 = scmp.eq.s32.totalorder %s91, 7
    %p786 = scmp.ne.s32.totalorder %s781, %s783
    %p787 = scmp.eq.s32.totalorder %s91, 0
    %p788 = por %p786, %p787
    %p789 = scmp.ne.s32.totalorder %s781, %s783
    %p790 = scmp.eq.s32.totalorder %s96, 7
    %p791 = por %p789, %p790
    %p792 = scmp.ne.s32.totalorder %s783, %s784
    %p793 = scmp.eq.s32.totalorder %s96, 0
    %p794 = por %p792, %p793
    %p795 = scmp.ne.s32.totalorder %s783, %s784
    %p796 = scmp.eq.s32.totalorder %s97, 7
    %p797 = por %p795, %p796
    %p799 = scmp.ne.s32.totalorder %s784, %s798
    %p800 = scmp.eq.s32.totalorder %s97, 0
    %p801 = por %p799, %p800
    %s803 = sadd.s32 %s802, 1
    %p806 = scmp.eq.s32.totalorder %s91, 7
    %p807 = scmp.ne.s32.totalorder %s802, %s804
    %p808 = scmp.eq.s32.totalorder %s91, 0
    %p809 = por %p807, %p808
    %p810 = scmp.ne.s32.totalorder %s802, %s804
    %p811 = scmp.eq.s32.totalorder %s96, 7
    %p812 = por %p810, %p811
    %p813 = scmp.ne.s32.totalorder %s804, %s805
    %p814 = scmp.eq.s32.totalorder %s96, 0
    %p815 = por %p813, %p814
    %p816 = scmp.ne.s32.totalorder %s804, %s805
    %p817 = scmp.eq.s32.totalorder %s97, 7
    %p818 = por %p816, %p817
    %p820 = scmp.ne.s32.totalorder %s805, %s819
    %p821 = scmp.eq.s32.totalorder %s97, 0
    %p822 = por %p820, %p821
    %s824 = sadd.s32 %s823, 1
    %p827 = scmp.eq.s32.totalorder %s91, 7
    %p828 = scmp.ne.s32.totalorder %s823, %s825
    %p829 = scmp.eq.s32.totalorder %s91, 0
    %p830 = por %p828, %p829
    %p831 = scmp.ne.s32.totalorder %s823, %s825
    %p832 = scmp.eq.s32.totalorder %s96, 7
    %p833 = por %p831, %p832
    %p834 = scmp.ne.s32.totalorder %s825, %s826
    %p835 = scmp.eq.s32.totalorder %s96, 0
    %p836 = por %p834, %p835
    %p837 = scmp.ne.s32.totalorder %s825, %s826
    %p838 = scmp.eq.s32.totalorder %s97, 7
    %p839 = por %p837, %p838
    %p841 = scmp.ne.s32.totalorder %s826, %s840
    %p842 = scmp.eq.s32.totalorder %s97, 0
    %p843 = por %p841, %p842
    %s845 = sadd.s32 %s844, 1
    %p848 = scmp.eq.s32.totalorder %s91, 7
    %p849 = scmp.ne.s32.totalorder %s844, %s846
    %p850 = scmp.eq.s32.totalorder %s91, 0
    %p851 = por %p849, %p850
    %p852 = scmp.ne.s32.totalorder %s844, %s846
    %p853 = scmp.eq.s32.totalorder %s96, 7
    %p854 = por %p852, %p853
    %p855 = scmp.ne.s32.totalorder %s846, %s847
    %p856 = scmp.eq.s32.totalorder %s96, 0
    %p857 = por %p855, %p856
    %p858 = scmp.ne.s32.totalorder %s846, %s847
    %p859 = scmp.eq.s32.totalorder %s97, 7
    %p860 = por %p858, %p859
    %p862 = scmp.ne.s32.totalorder %s847, %s861
    %p863 = scmp.eq.s32.totalorder %s97, 0
    %p864 = por %p862, %p863
    %s866 = sadd.s32 %s865, 1
    %p869 = scmp.eq.s32.totalorder %s91, 7
    %p870 = scmp.ne.s32.totalorder %s865, %s867
    %p871 = scmp.eq.s32.totalorder %s91, 0
    %p872 = por %p870, %p871
    %p873 = scmp.ne.s32.totalorder %s865, %s867
    %p874 = scmp.eq.s32.totalorder %s96, 7
    %p875 = por %p873, %p874
    %p876 = scmp.ne.s32.totalorder %s867, %s868
    %p877 = scmp.eq.s32.totalorder %s96, 0
    %p878 = por %p876, %p877
    %p879 = scmp.ne.s32.totalorder %s867, %s868
    %p880 = scmp.eq.s32.totalorder %s97, 7
    %p881 = por %p879, %p880
    %p883 = scmp.ne.s32.totalorder %s868, %s882
    %p884 = scmp.eq.s32.totalorder %s97, 0
    %p885 = por %p883, %p884
    %s887 = sadd.s32 %s886, 1
    %p890 = scmp.eq.s32.totalorder %s91, 7
    %p891 = scmp.ne.s32.totalorder %s886, %s888
    %p892 = scmp.eq.s32.totalorder %s91, 0
    %p893 = por %p891, %p892
    %p894 = scmp.ne.s32.totalorder %s886, %s888
    %p895 = scmp.eq.s32.totalorder %s96, 7
    %p896 = por %p894, %p895
    %p897 = scmp.ne.s32.totalorder %s888, %s889
    %p898 = scmp.eq.s32.totalorder %s96, 0
    %p899 = por %p897, %p898
    %p900 = scmp.ne.s32.totalorder %s888, %s889
    %p901 = scmp.eq.s32.totalorder %s97, 7
    %p902 = por %p900, %p901
    %p904 = scmp.ne.s32.totalorder %s889, %s903
    %p905 = scmp.eq.s32.totalorder %s97, 0
    %p906 = por %p904, %p905
    %s908 = sadd.s32 %s907, 1
    %p911 = scmp.eq.s32.totalorder %s91, 7
    %p912 = scmp.ne.s32.totalorder %s907, %s909
    %p913 = scmp.eq.s32.totalorder %s91, 0
    %p914 = por %p912, %p913
    %p915 = scmp.ne.s32.totalorder %s907, %s909
    %p916 = scmp.eq.s32.totalorder %s96, 7
    %p917 = por %p915, %p916
    %p918 = scmp.ne.s32.totalorder %s909, %s910
    %p919 = scmp.eq.s32.totalorder %s96, 0
    %p920 = por %p918, %p919
    %p921 = scmp.ne.s32.totalorder %s909, %s910
    %p922 = scmp.eq.s32.totalorder %s97, 7
    %p923 = por %p921, %p922
    %p925 = scmp.ne.s32.totalorder %s910, %s924
    %p926 = scmp.eq.s32.totalorder %s97, 0
    %p927 = por %p925, %p926
    %s929 = sadd.s32 %s928, 1
    %p932 = scmp.eq.s32.totalorder %s91, 7
    %p933 = scmp.ne.s32.totalorder %s928, %s930
    %p934 = scmp.eq.s32.totalorder %s91, 0
    %p935 = por %p933, %p934
    %p936 = scmp.ne.s32.totalorder %s928, %s930
    %p937 = scmp.eq.s32.totalorder %s96, 7
    %p938 = por %p936, %p937
    %p939 = scmp.ne.s32.totalorder %s930, %s931
    %p940 = scmp.eq.s32.totalorder %s96, 0
    %p941 = por %p939, %p940
    %p942 = scmp.ne.s32.totalorder %s930, %s931
    %p943 = scmp.eq.s32.totalorder %s97, 7
    %p944 = por %p942, %p943
    %p946 = scmp.ne.s32.totalorder %s931, %s945
    %p947 = scmp.eq.s32.totalorder %s97, 0
    %p948 = por %p946, %p947
    %s950 = sadd.s32 %s949, 1
    %p953 = scmp.eq.s32.totalorder %s91, 7
    %p954 = scmp.ne.s32.totalorder %s949, %s951
    %p955 = scmp.eq.s32.totalorder %s91, 0
    %p956 = por %p954, %p955
    %p957 = scmp.ne.s32.totalorder %s949, %s951
    %p958 = scmp.eq.s32.totalorder %s96, 7
    %p959 = por %p957, %p958
    %p960 = scmp.ne.s32.totalorder %s951, %s952
    %p961 = scmp.eq.s32.totalorder %s96, 0
    %p962 = por %p960, %p961
    %p963 = scmp.ne.s32.totalorder %s951, %s952
    %p964 = scmp.eq.s32.totalorder %s97, 7
    %p965 = por %p963, %p964
    %p967 = scmp.ne.s32.totalorder %s952, %s966
    %p968 = scmp.eq.s32.totalorder %s97, 0
    %p969 = por %p967, %p968
    %s971 = sadd.s32 %s970, 1
    %p974 = scmp.eq.s32.totalorder %s91, 7
    %p975 = scmp.ne.s32.totalorder %s970, %s972
    %p976 = scmp.eq.s32.totalorder %s91, 0
    %p977 = por %p975, %p976
    %p978 = scmp.ne.s32.totalorder %s970, %s972
    %p979 = scmp.eq.s32.totalorder %s96, 7
    %p980 = por %p978, %p979
    %p981 = scmp.ne.s32.totalorder %s972, %s973
    %p982 = scmp.eq.s32.totalorder %s96, 0
    %p983 = por %p981, %p982
    %p984 = scmp.ne.s32.totalorder %s972, %s973
    %p985 = scmp.eq.s32.totalorder %s97, 7
    %p986 = por %p984, %p985
    %p988 = scmp.ne.s32.totalorder %s973, %s987
    %p989 = scmp.eq.s32.totalorder %s97, 0
    %p990 = por %p988, %p989
    %s991 = ssub.s32 %s91, %s98
    %p992 = scmp.eq.s32.totalorder %s991, 0
    %s994 = sadd.s32 %s993, 1
    %s995 = scalar_select %p992, %s993, %s994
    %p998 = pneg %p992
    %p999 = scmp.eq.s32.totalorder %s91, 7
    %p1000 = por %p998, %p999
    %p1001 = scmp.ne.s32.totalorder %s993, %s996
    %p1002 = scmp.eq.s32.totalorder %s91, 0
    %p1003 = por %p1001, %p1002
    %p1004 = scmp.ne.s32.totalorder %s993, %s996
    %p1005 = scmp.eq.s32.totalorder %s96, 7
    %p1006 = por %p1004, %p1005
    %p1007 = scmp.ne.s32.totalorder %s996, %s997
    %p1008 = scmp.eq.s32.totalorder %s96, 0
    %p1009 = por %p1007, %p1008
    %p1010 = scmp.ne.s32.totalorder %s996, %s997
    %p1011 = scmp.eq.s32.totalorder %s97, 7
    %p1012 = por %p1010, %p1011
    %p1014 = scmp.ne.s32.totalorder %s997, %s1013
    %p1015 = scmp.eq.s32.totalorder %s97, 0
    %p1016 = por %p1014, %p1015
    %p1017 = scmp.le.s32.totalorder 1, %s91
    %p1018 = scmp.lt.s32.totalorder %s91, 9
    %p1019 = pnand %p1017, %p1018
    %p1020 = pneg %p1019
    // Predicated region
    $region9: #{cnn_gru_net_forward.1} parent=5 // pred_check
      _
    $region10: #{cnn_gru_net_forward.1} parent=5 // pred_check_branch
      %1022 = sbr.rel (%p1019) target = $region12
    $region11: #{cnn_gru_net_forward.1} parent=5 // pred_region
      %s1023 = ssub.s32 %s91, 1
      // Predicated region
      $region13: #{cnn_gru_net_forward.1} parent=11 // pred_check
        %p1024 = pneg %p164
      $region14: #{cnn_gru_net_forward.1} parent=11 // pred_check_branch
        %1026 = sbr.rel (%p1024) target = $region16
      $region15: #{cnn_gru_net_forward.1} parent=11 // pred_region
        _
      $region16: #{cnn_gru_net_forward.1} parent=11 // pred_fallthru
        _
      // Predicated region
      $region17: #{cnn_gru_net_forward.1} parent=11 // pred_check
        %p1027 = pneg %p185
      $region18: #{cnn_gru_net_forward.1} parent=11 // pred_check_branch
        %1029 = sbr.rel (%p1027) target = $region20
      $region19: #{cnn_gru_net_forward.1} parent=11 // pred_region
        _
      $region20: #{cnn_gru_net_forward.1} parent=11 // pred_fallthru
        _
      // Predicated region
      $region21: #{cnn_gru_net_forward.1} parent=11 // pred_check
        %p1030 = pneg %p206
      $region22: #{cnn_gru_net_forward.1} parent=11 // pred_check_branch
        %1032 = sbr.rel (%p1030) target = $region24
      $region23: #{cnn_gru_net_forward.1} parent=11 // pred_region
        _
      $region24: #{cnn_gru_net_forward.1} parent=11 // pred_fallthru
        _
      // Predicated region
      $region25: #{cnn_gru_net_forward.1} parent=11 // pred_check
        %p1033 = pneg %p227
      $region26: #{cnn_gru_net_forward.1} parent=11 // pred_check_branch
        %1035 = sbr.rel (%p1033) target = $region28
      $region27: #{cnn_gru_net_forward.1} parent=11 // pred_region
        _
      $region28: #{cnn_gru_net_forward.1} parent=11 // pred_fallthru
        _
      // Predicated region
      $region29: #{cnn_gru_net_forward.1} parent=11 // pred_check
        %p1036 = pneg %p248
      $region30: #{cnn_gru_net_forward.1} parent=11 // pred_check_branch
        %1038 = sbr.rel (%p1036) target = $region32
      $region31: #{cnn_gru_net_forward.1} parent=11 // pred_region
        _
      $region32: #{cnn_gru_net_forward.1} parent=11 // pred_fallthru
        _
      // Predicated region
      $region33: #{cnn_gru_net_forward.1} parent=11 // pred_check
        %p1039 = pneg %p269
      $region34: #{cnn_gru_net_forward.1} parent=11 // pred_check_branch
        %1041 = sbr.rel (%p1039) target = $region36
      $region35: #{cnn_gru_net_forward.1} parent=11 // pred_region
        _
      $region36: #{cnn_gru_net_forward.1} parent=11 // pred_fallthru
        _
      // Predicated region
      $region37: #{cnn_gru_net_forward.1} parent=11 // pred_check
        %p1042 = pneg %p290
      $region38: #{cnn_gru_net_forward.1} parent=11 // pred_check_branch
        %1044 = sbr.rel (%p1042) target = $region40
      $region39: #{cnn_gru_net_forward.1} parent=11 // pred_region
        _
      $region40: #{cnn_gru_net_forward.1} parent=11 // pred_fallthru
        _
      // Predicated region
      $region41: #{cnn_gru_net_forward.1} parent=11 // pred_check
        %p1045 = pneg %p311
      $region42: #{cnn_gru_net_forward.1} parent=11 // pred_check_branch
        %1047 = sbr.rel (%p1045) target = $region44
      $region43: #{cnn_gru_net_forward.1} parent=11 // pred_region
        _
      $region44: #{cnn_gru_net_forward.1} parent=11 // pred_fallthru
        _
      // Predicated region
      $region45: #{cnn_gru_net_forward.1} parent=11 // pred_check
        %p1048 = pneg %p332
      $region46: #{cnn_gru_net_forward.1} parent=11 // pred_check_branch
        %1050 = sbr.rel (%p1048) target = $region48
      $region47: #{cnn_gru_net_forward.1} parent=11 // pred_region
        _
      $region48: #{cnn_gru_net_forward.1} parent=11 // pred_fallthru
        _
      // Predicated region
      $region49: #{cnn_gru_net_forward.1} parent=11 // pred_check
        %p1051 = pneg %p353
      $region50: #{cnn_gru_net_forward.1} parent=11 // pred_check_branch
        %1053 = sbr.rel (%p1051) target = $region52
      $region51: #{cnn_gru_net_forward.1} parent=11 // pred_region
        _
      $region52: #{cnn_gru_net_forward.1} parent=11 // pred_fallthru
        _
      // Predicated region
      $region53: #{cnn_gru_net_forward.1} parent=11 // pred_check
        %p1054 = pneg %p374
      $region54: #{cnn_gru_net_forward.1} parent=11 // pred_check_branch
        %1056 = sbr.rel (%p1054) target = $region56
      $region55: #{cnn_gru_net_forward.1} parent=11 // pred_region
        _
      $region56: #{cnn_gru_net_forward.1} parent=11 // pred_fallthru
        _
      // Predicated region
      $region57: #{cnn_gru_net_forward.1} parent=11 // pred_check
        %p1057 = pneg %p395
      $region58: #{cnn_gru_net_forward.1} parent=11 // pred_check_branch
        %1059 = sbr.rel (%p1057) target = $region60
      $region59: #{cnn_gru_net_forward.1} parent=11 // pred_region
        _
      $region60: #{cnn_gru_net_forward.1} parent=11 // pred_fallthru
        _
      // Predicated region
      $region61: #{cnn_gru_net_forward.1} parent=11 // pred_check
        %p1060 = pneg %p416
      $region62: #{cnn_gru_net_forward.1} parent=11 // pred_check_branch
        %1062 = sbr.rel (%p1060) target = $region64
      $region63: #{cnn_gru_net_forward.1} parent=11 // pred_region
        _
      $region64: #{cnn_gru_net_forward.1} parent=11 // pred_fallthru
        _
      // Predicated region
      $region65: #{cnn_gru_net_forward.1} parent=11 // pred_check
        %p1063 = pneg %p437
      $region66: #{cnn_gru_net_forward.1} parent=11 // pred_check_branch
        %1065 = sbr.rel (%p1063) target = $region68
      $region67: #{cnn_gru_net_forward.1} parent=11 // pred_region
        _
      $region68: #{cnn_gru_net_forward.1} parent=11 // pred_fallthru
        _
      // Predicated region
      $region69: #{cnn_gru_net_forward.1} parent=11 // pred_check
        %p1066 = pneg %p458
      $region70: #{cnn_gru_net_forward.1} parent=11 // pred_check_branch
        %1068 = sbr.rel (%p1066) target = $region72
      $region71: #{cnn_gru_net_forward.1} parent=11 // pred_region
        _
      $region72: #{cnn_gru_net_forward.1} parent=11 // pred_fallthru
        _
      // Predicated region
      $region73: #{cnn_gru_net_forward.1} parent=11 // pred_check
        %p1069 = pneg %p479
      $region74: #{cnn_gru_net_forward.1} parent=11 // pred_check_branch
        %1071 = sbr.rel (%p1069) target = $region76
      $region75: #{cnn_gru_net_forward.1} parent=11 // pred_region
        _
      $region76: #{cnn_gru_net_forward.1} parent=11 // pred_fallthru
        _
      // Predicated region
      $region77: #{cnn_gru_net_forward.1} parent=11 // pred_check
        %p1072 = pneg %p500
      $region78: #{cnn_gru_net_forward.1} parent=11 // pred_check_branch
        %1074 = sbr.rel (%p1072) target = $region80
      $region79: #{cnn_gru_net_forward.1} parent=11 // pred_region
        _
      $region80: #{cnn_gru_net_forward.1} parent=11 // pred_fallthru
        _
      // Predicated region
      $region81: #{cnn_gru_net_forward.1} parent=11 // pred_check
        %p1075 = pneg %p521
      $region82: #{cnn_gru_net_forward.1} parent=11 // pred_check_branch
        %1077 = sbr.rel (%p1075) target = $region84
      $region83: #{cnn_gru_net_forward.1} parent=11 // pred_region
        _
      $region84: #{cnn_gru_net_forward.1} parent=11 // pred_fallthru
        _
      // Predicated region
      $region85: #{cnn_gru_net_forward.1} parent=11 // pred_check
        %p1078 = pneg %p542
      $region86: #{cnn_gru_net_forward.1} parent=11 // pred_check_branch
        %1080 = sbr.rel (%p1078) target = $region88
      $region87: #{cnn_gru_net_forward.1} parent=11 // pred_region
        _
      $region88: #{cnn_gru_net_forward.1} parent=11 // pred_fallthru
        _
      // Predicated region
      $region89: #{cnn_gru_net_forward.1} parent=11 // pred_check
        %p1081 = pneg %p563
      $region90: #{cnn_gru_net_forward.1} parent=11 // pred_check_branch
        %1083 = sbr.rel (%p1081) target = $region92
      $region91: #{cnn_gru_net_forward.1} parent=11 // pred_region
        _
      $region92: #{cnn_gru_net_forward.1} parent=11 // pred_fallthru
        _
      // Predicated region
      $region93: #{cnn_gru_net_forward.1} parent=11 // pred_check
        %p1084 = pneg %p584
      $region94: #{cnn_gru_net_forward.1} parent=11 // pred_check_branch
        %1086 = sbr.rel (%p1084) target = $region96
      $region95: #{cnn_gru_net_forward.1} parent=11 // pred_region
        _
      $region96: #{cnn_gru_net_forward.1} parent=11 // pred_fallthru
        _
      // Predicated region
      $region97: #{cnn_gru_net_forward.1} parent=11 // pred_check
        %p1087 = pneg %p605
      $region98: #{cnn_gru_net_forward.1} parent=11 // pred_check_branch
        %1089 = sbr.rel (%p1087) target = $region100
      $region99: #{cnn_gru_net_forward.1} parent=11 // pred_region
        _
      $region100: #{cnn_gru_net_forward.1} parent=11 // pred_fallthru
        _
      // Predicated region
      $region101: #{cnn_gru_net_forward.1} parent=11 // pred_check
        %p1090 = pneg %p626
      $region102: #{cnn_gru_net_forward.1} parent=11 // pred_check_branch
        %1092 = sbr.rel (%p1090) target = $region104
      $region103: #{cnn_gru_net_forward.1} parent=11 // pred_region
        _
      $region104: #{cnn_gru_net_forward.1} parent=11 // pred_fallthru
        _
      // Predicated region
      $region105: #{cnn_gru_net_forward.1} parent=11 // pred_check
        %p1093 = pneg %p647
      $region106: #{cnn_gru_net_forward.1} parent=11 // pred_check_branch
        %1095 = sbr.rel (%p1093) target = $region108
      $region107: #{cnn_gru_net_forward.1} parent=11 // pred_region
        _
      $region108: #{cnn_gru_net_forward.1} parent=11 // pred_fallthru
        _
      // Predicated region
      $region109: #{cnn_gru_net_forward.1} parent=11 // pred_check
        %p1096 = pneg %p668
      $region110: #{cnn_gru_net_forward.1} parent=11 // pred_check_branch
        %1098 = sbr.rel (%p1096) target = $region112
      $region111: #{cnn_gru_net_forward.1} parent=11 // pred_region
        _
      $region112: #{cnn_gru_net_forward.1} parent=11 // pred_fallthru
        _
      // Predicated region
      $region113: #{cnn_gru_net_forward.1} parent=11 // pred_check
        %p1099 = pneg %p689
      $region114: #{cnn_gru_net_forward.1} parent=11 // pred_check_branch
        %1101 = sbr.rel (%p1099) target = $region116
      $region115: #{cnn_gru_net_forward.1} parent=11 // pred_region
        _
      $region116: #{cnn_gru_net_forward.1} parent=11 // pred_fallthru
        _
      // Predicated region
      $region117: #{cnn_gru_net_forward.1} parent=11 // pred_check
        %p1102 = pneg %p710
      $region118: #{cnn_gru_net_forward.1} parent=11 // pred_check_branch
        %1104 = sbr.rel (%p1102) target = $region120
      $region119: #{cnn_gru_net_forward.1} parent=11 // pred_region
        _
      $region120: #{cnn_gru_net_forward.1} parent=11 // pred_fallthru
        _
      // Predicated region
      $region121: #{cnn_gru_net_forward.1} parent=11 // pred_check
        %p1105 = pneg %p731
      $region122: #{cnn_gru_net_forward.1} parent=11 // pred_check_branch
        %1107 = sbr.rel (%p1105) target = $region124
      $region123: #{cnn_gru_net_forward.1} parent=11 // pred_region
        _
      $region124: #{cnn_gru_net_forward.1} parent=11 // pred_fallthru
        _
      // Predicated region
      $region125: #{cnn_gru_net_forward.1} parent=11 // pred_check
        %p1108 = pneg %p752
      $region126: #{cnn_gru_net_forward.1} parent=11 // pred_check_branch
        %1110 = sbr.rel (%p1108) target = $region128
      $region127: #{cnn_gru_net_forward.1} parent=11 // pred_region
        _
      $region128: #{cnn_gru_net_forward.1} parent=11 // pred_fallthru
        _
      // Predicated region
      $region129: #{cnn_gru_net_forward.1} parent=11 // pred_check
        %p1111 = pneg %p773
      $region130: #{cnn_gru_net_forward.1} parent=11 // pred_check_branch
        %1113 = sbr.rel (%p1111) target = $region132
      $region131: #{cnn_gru_net_forward.1} parent=11 // pred_region
        _
      $region132: #{cnn_gru_net_forward.1} parent=11 // pred_fallthru
        _
      // Predicated region
      $region133: #{cnn_gru_net_forward.1} parent=11 // pred_check
        %p1114 = pneg %p794
      $region134: #{cnn_gru_net_forward.1} parent=11 // pred_check_branch
        %1116 = sbr.rel (%p1114) target = $region136
      $region135: #{cnn_gru_net_forward.1} parent=11 // pred_region
        _
      $region136: #{cnn_gru_net_forward.1} parent=11 // pred_fallthru
        _
      // Predicated region
      $region137: #{cnn_gru_net_forward.1} parent=11 // pred_check
        %p1117 = pneg %p815
      $region138: #{cnn_gru_net_forward.1} parent=11 // pred_check_branch
        %1119 = sbr.rel (%p1117) target = $region140
      $region139: #{cnn_gru_net_forward.1} parent=11 // pred_region
        _
      $region140: #{cnn_gru_net_forward.1} parent=11 // pred_fallthru
        _
      // Predicated region
      $region141: #{cnn_gru_net_forward.1} parent=11 // pred_check
        %p1120 = pneg %p836
      $region142: #{cnn_gru_net_forward.1} parent=11 // pred_check_branch
        %1122 = sbr.rel (%p1120) target = $region144
      $region143: #{cnn_gru_net_forward.1} parent=11 // pred_region
        _
      $region144: #{cnn_gru_net_forward.1} parent=11 // pred_fallthru
        _
      // Predicated region
      $region145: #{cnn_gru_net_forward.1} parent=11 // pred_check
        %p1123 = pneg %p857
      $region146: #{cnn_gru_net_forward.1} parent=11 // pred_check_branch
        %1125 = sbr.rel (%p1123) target = $region148
      $region147: #{cnn_gru_net_forward.1} parent=11 // pred_region
        _
      $region148: #{cnn_gru_net_forward.1} parent=11 // pred_fallthru
        _
      // Predicated region
      $region149: #{cnn_gru_net_forward.1} parent=11 // pred_check
        %p1126 = pneg %p878
      $region150: #{cnn_gru_net_forward.1} parent=11 // pred_check_branch
        %1128 = sbr.rel (%p1126) target = $region152
      $region151: #{cnn_gru_net_forward.1} parent=11 // pred_region
        _
      $region152: #{cnn_gru_net_forward.1} parent=11 // pred_fallthru
        _
      // Predicated region
      $region153: #{cnn_gru_net_forward.1} parent=11 // pred_check
        %p1129 = pneg %p899
      $region154: #{cnn_gru_net_forward.1} parent=11 // pred_check_branch
        %1131 = sbr.rel (%p1129) target = $region156
      $region155: #{cnn_gru_net_forward.1} parent=11 // pred_region
        _
      $region156: #{cnn_gru_net_forward.1} parent=11 // pred_fallthru
        _
      // Predicated region
      $region157: #{cnn_gru_net_forward.1} parent=11 // pred_check
        %p1132 = pneg %p920
      $region158: #{cnn_gru_net_forward.1} parent=11 // pred_check_branch
        %1134 = sbr.rel (%p1132) target = $region160
      $region159: #{cnn_gru_net_forward.1} parent=11 // pred_region
        _
      $region160: #{cnn_gru_net_forward.1} parent=11 // pred_fallthru
        _
      // Predicated region
      $region161: #{cnn_gru_net_forward.1} parent=11 // pred_check
        %p1135 = pneg %p941
      $region162: #{cnn_gru_net_forward.1} parent=11 // pred_check_branch
        %1137 = sbr.rel (%p1135) target = $region164
      $region163: #{cnn_gru_net_forward.1} parent=11 // pred_region
        _
      $region164: #{cnn_gru_net_forward.1} parent=11 // pred_fallthru
        _
      // Predicated region
      $region165: #{cnn_gru_net_forward.1} parent=11 // pred_check
        %p1138 = pneg %p962
      $region166: #{cnn_gru_net_forward.1} parent=11 // pred_check_branch
        %1140 = sbr.rel (%p1138) target = $region168
      $region167: #{cnn_gru_net_forward.1} parent=11 // pred_region
        _
      $region168: #{cnn_gru_net_forward.1} parent=11 // pred_fallthru
        _
      // Predicated region
      $region169: #{cnn_gru_net_forward.1} parent=11 // pred_check
        %p1141 = pneg %p983
      $region170: #{cnn_gru_net_forward.1} parent=11 // pred_check_branch
        %1143 = sbr.rel (%p1141) target = $region172
      $region171: #{cnn_gru_net_forward.1} parent=11 // pred_region
        _
      $region172: #{cnn_gru_net_forward.1} parent=11 // pred_fallthru
        _
    $region12: #{cnn_gru_net_forward.1} parent=5 // pred_fallthru
      _
    %p1144 = scmp.lt.s32.totalorder %s91, 8
    // Predicated region
    $region173: #{cnn_gru_net_forward.1} parent=5 // pred_check
      %p1145 = pneg %p1144
    $region174: #{cnn_gru_net_forward.1} parent=5 // pred_check_branch
      %1147 = sbr.rel (%p1145) target = $region176
    $region175: #{cnn_gru_net_forward.1} parent=5 // pred_region
      // Predicated region
      $region177: #{cnn_gru_net_forward.1} parent=175 // pred_check
        %p1148 = pneg %p111
      $region178: #{cnn_gru_net_forward.1} parent=175 // pred_check_branch
        %1150 = sbr.rel (%p1148) target = $region180
      $region179: #{cnn_gru_net_forward.1} parent=175 // pred_region
        %p1151 = scmp.lt.s32.totalorder %s91, 7
        %s1152 = scalar_select %p1151, %s91, 7
        %s1153 = smul.addr %s1152, 4
        %s1154 = scalar_lea.vmem %s1, %s1153
      $region180: #{cnn_gru_net_forward.1} parent=175 // pred_fallthru
        _
      // Predicated region
      $region181: #{cnn_gru_net_forward.1} parent=175 // pred_check
        %p1155 = pneg %p137
      $region182: #{cnn_gru_net_forward.1} parent=175 // pred_check_branch
        %1157 = sbr.rel (%p1155) target = $region184
      $region183: #{cnn_gru_net_forward.1} parent=175 // pred_region
        %p1158 = scmp.lt.s32.totalorder %s91, 7
        %s1159 = scalar_select %p1158, %s91, 7
        %s1160 = smul.addr %s1159, 2
        %s1161 = scalar_lea.vmem %s3, %s1160
      $region184: #{cnn_gru_net_forward.1} parent=175 // pred_fallthru
        _
    $region176: #{cnn_gru_net_forward.1} parent=5 // pred_fallthru
      _
    %p1162 = scmp.le.s32.totalorder 1, %s91
    %p1163 = scmp.lt.s32.totalorder %s91, 9
    %p1164 = pnand %p1162, %p1163
    %p1165 = pneg %p1164
    // Predicated region
    $region185: #{cnn_gru_net_forward.1} parent=5 // pred_check
      _
    $region186: #{cnn_gru_net_forward.1} parent=5 // pred_check_branch
      %1167 = sbr.rel (%p1164) target = $region188
    $region187: #{cnn_gru_net_forward.1} parent=5 // pred_region
      %s1168 = ssub.s32 %s91, 1
      %p1169 = scmp.lt.s32.totalorder %s96, 7
      %s1170 = scalar_select %p1169, %s96, 7
      %s1171 = smul.addr %s1170, 4
      %s1172 = scalar_lea.vmem %s1, %s1171
      %p1173 = pneg %p117
      %p1174 = pneg %p114
      %p1175 = scmp.lt.s32.totalorder %s96, 7
      %s1176 = scalar_select %p1175, %s96, 7
      %s1177 = smul.addr %s1176, 2
      %s1178 = scalar_lea.vmem %s3, %s1177
      %p1179 = pneg %p143
      %p1180 = pneg %p140
      %p1181 = pneg %p164
      %p1182 = pneg %p161
      %p1183 = pneg %p185
      %p1184 = pneg %p182
      %p1185 = pneg %p206
      %p1186 = pneg %p203
      %p1187 = pneg %p227
      %p1188 = pneg %p224
      %p1189 = pneg %p248
      %p1190 = pneg %p245
      %p1191 = pneg %p269
      %p1192 = pneg %p266
      %p1193 = pneg %p290
      %p1194 = pneg %p287
      %p1195 = pneg %p311
      %p1196 = pneg %p308
      %p1197 = pneg %p332
      %p1198 = pneg %p329
      %p1199 = pneg %p353
      %p1200 = pneg %p350
      %p1201 = pneg %p374
      %p1202 = pneg %p371
      %p1203 = pneg %p395
      %p1204 = pneg %p392
      %p1205 = pneg %p416
      %p1206 = pneg %p413
      %p1207 = pneg %p437
      %p1208 = pneg %p434
      %p1209 = pneg %p458
      %p1210 = pneg %p455
      %p1211 = pneg %p479
      %p1212 = pneg %p476
      %p1213 = pneg %p500
      %p1214 = pneg %p497
      %p1215 = pneg %p521
      %p1216 = pneg %p518
      %p1217 = pneg %p542
      %p1218 = pneg %p539
      %p1219 = pneg %p563
      %p1220 = pneg %p560
      %p1221 = pneg %p584
      %p1222 = pneg %p581
      %p1223 = pneg %p605
      %p1224 = pneg %p602
      %p1225 = pneg %p626
      %p1226 = pneg %p623
      %p1227 = pneg %p647
      %p1228 = pneg %p644
      %p1229 = pneg %p668
      %p1230 = pneg %p665
      %p1231 = pneg %p689
      %p1232 = pneg %p686
      %p1233 = pneg %p710
      %p1234 = pneg %p707
      %p1235 = pneg %p731
      %p1236 = pneg %p728
      %p1237 = pneg %p752
      %p1238 = pneg %p749
      %p1239 = pneg %p773
      %p1240 = pneg %p770
      %p1241 = pneg %p794
      %p1242 = pneg %p791
      %p1243 = pneg %p815
      %p1244 = pneg %p812
      %p1245 = pneg %p836
      %p1246 = pneg %p833
      %p1247 = pneg %p857
      %p1248 = pneg %p854
      %p1249 = pneg %p878
      %p1250 = pneg %p875
      %p1251 = pneg %p899
      %p1252 = pneg %p896
      %p1253 = pneg %p920
      %p1254 = pneg %p917
      %p1255 = pneg %p941
      %p1256 = pneg %p938
      %p1257 = pneg %p962
      %p1258 = pneg %p959
      %p1259 = pneg %p983
      %p1260 = pneg %p980
      %p1261 = pneg %p1009
      %p1262 = pneg %p1006
      %p1263 = scmp.lt.s32.totalorder %s96, 7
      %s1264 = scalar_select %p1263, %s96, 7
      %s1265 = smul.addr %s1264, 6
      %s1266 = smul.addr %s1265, 2
      %s1267 = scalar_lea.vmem %s85, %s1266
      %p1268 = scmp.lt.s32.totalorder %s96, 7
      %s1269 = scalar_select %p1268, %s96, 7
      %s1270 = smul.addr %s1269, 4
      %s1271 = scalar_lea.vmem %s1, %s1270
      %p1272 = scmp.lt.s32.totalorder %s96, 7
      %s1273 = scalar_select %p1272, %s96, 7
      %s1274 = smul.addr %s1273, 2
      %s1275 = scalar_lea.vmem %s3, %s1274
      %p1276 = scmp.lt.s32.totalorder %s96, 7
      %s1277 = scalar_select %p1276, %s96, 7
      %s1278 = smul.addr %s1277, 6
      %s1279 = smul.addr %s1278, 2
      %s1280 = scalar_lea.vmem %s85, %s1279
      %p1281 = scmp.eq.s32.totalorder %s96, 0
      // Predicated region
      $region189: #{cnn_gru_net_forward.1} parent=187 // pred_check
        %p1282 = pneg %p1281
      $region190: #{cnn_gru_net_forward.1} parent=187 // pred_check_branch
        %1284 = sbr.rel (%p1282) target = $region192
      $region191: #{cnn_gru_net_forward.1} parent=187 // pred_region
        %vm1285 = vcmask 254976
        %1286 = vst.msk [vmem:[#allocation2] sm:$0x3] %vm1285, 0.0
        %1287 = vst.msk [vmem:[#allocation2 + $0x2] sm:$0x3] %vm1285, 0.0
        %1288 = vst.msk [vmem:[#allocation2 + $0x4] sm:$0x3] %vm1285, 0.0
        %1289 = vst.msk [vmem:[#allocation2 + $0x6] sm:$0x3] %vm1285, 0.0
        %1290 = vst.msk [vmem:[#allocation2 + $0x8] sm:$0x3] %vm1285, 0.0
        %1291 = vst.msk [vmem:[#allocation2 + $0xa] sm:$0x3] %vm1285, 0.0
      $region192: #{cnn_gru_net_forward.1} parent=187 // pred_fallthru
        _
      %v1292 = vld [vmem:[%s5] sm:$0xff]
      %v1293 = vld [vmem:[%s5 + $0x8] sm:$0x1]
      %v1294 = vld [vmem:[%s1271] sm:$0xf]
      %1296 = vrot.lane.b32.xlu0 %v1294, 9
      %v1297 = vpop.permute.xlu0 %1296
      %v1299 = vlaneseq
      %v1300 = vshrl.u32 %v1299, 7
      %v1301 = vsub.s32 0, %v1300
      %v1302 = vrot.slane %v1292, %v1301
      %v1303 = vmul.f32 %v1297, %v1302
      %1304 = vrot.lane.b32.xlu0 %v1294, 8
      %v1305 = vpop.permute.xlu0 %1304
      %vm1307 = vcmask 64512
      %v1308 = vlaneseq
      %v1309 = vshrl.u32 %v1308, 7
      %v1310 = vsub.s32 1, %v1309
      %v1311 = vrot.slane %v1292, %v1310
      %v1312 = vmul.f32 %v1305, %v1311
      %1313 = vrot.lane.b32.xlu0 %v1294, 7
      %v1314 = vpop.permute.xlu0 %1313
      %v1316 = vlaneseq
      %v1317 = vshrl.u32 %v1316, 7
      %v1318 = vsub.s32 2, %v1317
      %v1319 = vrot.slane %v1292, %v1318
      %v1320 = vmul.f32 %v1314, %v1319
      %1321 = vrot.lane.b32.xlu0 %v1294, 1
      %v1322 = vpop.permute.xlu0 %1321
      %v1324 = vlaneseq
      %v1325 = vshrl.u32 %v1324, 7
      %v1326 = vsub.s32 3, %v1325
      %v1327 = vrot.slane %v1292, %v1326
      %v1328 = vmul.f32 %v1322, %v1327
      %v1329 = vlaneseq
      %v1330 = vshrl.u32 %v1329, 7
      %v1331 = vsub.s32 4, %v1330
      %v1332 = vrot.slane %v1292, %v1331
      %v1333 = vmul.f32 %v1294, %v1332
      %1334 = vrot.lane.b32.xlu0 %v1294, 127
      %v1335 = vpop.permute.xlu0 %1334
      %v1337 = vlaneseq
      %v1338 = vshrl.u32 %v1337, 7
      %v1339 = vsub.s32 5, %v1338
      %v1340 = vrot.slane %v1292, %v1339
      %v1341 = vmul.f32 %v1335, %v1340
      %1342 = vrot.lane.b32.xlu0 %v1294, 121
      %v1343 = vpop.permute.xlu0 %1342
      %v1345 = vlaneseq
      %v1346 = vshrl.u32 %v1345, 7
      %v1347 = vsub.s32 6, %v1346
      %v1348 = vrot.slane %v1292, %v1347
      %v1349 = vmul.f32 %v1343, %v1348
      %1350 = vrot.lane.b32.xlu0 %v1294, 120
      %v1351 = vpop.permute.xlu0 %1350
      %v1353 = vlaneseq
      %v1354 = vshrl.u32 %v1353, 7
      %v1355 = vsub.s32 7, %v1354
      %v1356 = vrot.slane %v1292, %v1355
      %v1357 = vmul.f32 %v1351, %v1356
      %1358 = vrot.lane.b32.xlu0 %v1294, 119
      %v1359 = vpop.permute.xlu0 %1358
      %v1361 = vlaneseq
      %v1362 = vshrl.u32 %v1361, 7
      %v1363 = vsub.s32 0, %v1362
      %v1364 = vrot.slane %v1293, %v1363
      %v1365 = vmul.f32 %v1359, %v1364
      %v1367 = vrot.slane %v1312, 4
      %v1370 = vrot.slane %v1328, 4
      %v1373 = vrot.slane %v1341, 4
      %v1376 = vrot.slane %v1357, 4
      %vm1378 = vcmask 1043456
      %v1379 = vsel %vm1378, %v1303, %v1367
      %v1380 = vsel %vm1378, %v1320, %v1370
      %v1381 = vsel %vm1378, %v1333, %v1373
      %v1382 = vsel %vm1378, %v1349, %v1376
      %v1383 = vld [vmem:[%s7] sm:$0xff]
      %vm1384 = vcmask 293888
      %v1386 = vsel %vm1384, %v1383, 0
      %v1389 = vsel %vm1378, %v1365, 0
      %1391 = vmatprep.subr.mxu0 0.0
      %1392 = vmatpush1.msra.mxu0 0.0
      %1393 = vmatprep.subr.mxu0 0.0
      %1394 = vmatpush1.msra.mxu0 0.0
      %1395 = vmatprep.subr.mxu0 0.0
      %1396 = vmatpush1.msra.mxu0 0.0
      %1397 = vmatprep.subr.mxu0 0.0
      %1398 = vmatpush1.msra.mxu0 0.0
      %1399 = vmatprep.subr.mxu0 0.0
      %1400 = vmatpush1.msra.mxu0 0.0
      %1401 = vmatprep.subr.mxu0 0.0
      %1402 = vmatpush1.msra.mxu0 0.0
      %1403 = vmatprep.subr.mxu0 0.0
      %1404 = vmatpush1.msra.mxu0 0.0
      %1405 = vmatprep.subr.mxu0 0.0
      %1406 = vmatpush1.msra.mxu0 0.0
      %1407 = vmatprep.subr.mxu0 0.0
      %1408 = vmatpush1.msra.mxu0 0.0
      %1409 = vmatprep.subr.mxu0 0.0
      %1410 = vmatpush1.msra.mxu0 0.0
      %1411 = vmatprep.subr.mxu0 0.0
      %1412 = vmatpush1.msra.mxu0 0.0
      %1413 = vmatprep.subr.mxu0 0.0
      %1414 = vmatpush1.msra.mxu0 %v1389
      %1415 = vmatprep.subr.mxu0 0.0
      %1416 = vmatpush1.msra.mxu0 %v1382
      %1417 = vmatprep.subr.mxu0 0.0
      %1418 = vmatpush1.msra.mxu0 %v1381
      %1419 = vmatprep.subr.mxu0 0.0
      %1420 = vmatpush1.msra.mxu0 %v1380
      %1421 = vmatprep.subr.mxu0 0.0
      %1422 = vmatpush1.msra.mxu0 %v1379
      %1423 = vmatprep.subr.mxu0 0.0
      %1424 = vmatpush2.msra.mxu0 0.0
      %1425 = vmatprep.subr.mxu0 0.0
      %1426 = vmatpush2.msra.mxu0 0.0
      %1427 = vmatprep.subr.mxu0 0.0
      %1428 = vmatpush2.msra.mxu0 0.0
      %1429 = vmatprep.subr.mxu0 0.0
      %1430 = vmatpush2.msra.mxu0 0.0
      %1431 = vmatprep.subr.mxu0 0.0
      %1432 = vmatpush2.msra.mxu0 0.0
      %1433 = vmatprep.subr.mxu0 0.0
      %1434 = vmatpush2.msra.mxu0 0.0
      %1435 = vmatprep.subr.mxu0 0.0
      %1436 = vmatpush2.msra.mxu0 0.0
      %1437 = vmatprep.subr.mxu0 0.0
      %1438 = vmatpush2.msra.mxu0 0.0
      %1439 = vmatprep.subr.mxu0 0.0
      %1440 = vmatpush2.msra.mxu0 0.0
      %1441 = vmatprep.subr.mxu0 0.0
      %1442 = vmatpush2.msra.mxu0 0.0
      %1443 = vmatprep.subr.mxu0 0.0
      %1444 = vmatpush2.msra.mxu0 0.0
      %1445 = vmatprep.subr.mxu0 0.0
      %1446 = vmatpush2.msra.mxu0 0.0
      %1447 = vmatprep.subr.mxu0 0.0
      %1448 = vmatpush2.msra.mxu0 0.0
      %1449 = vmatprep.subr.mxu0 0.0
      %1450 = vmatpush2.msra.mxu0 0.0
      %1451 = vmatprep.subr.mxu0 0.0
      %1452 = vmatpush2.msra.mxu0 0.0
      %1453 = vmatprep.subr.mxu0 0.0
      %1454 = vmatpush2.msra.mxu0 0.0
      %1455 = vmatprep.mubr.f32.mxu0 0.0
      %1456 = vmatmul.mubr.f32.gmra.mxu0 %v1386
      %v1457 = vpop.f32.mrf.mxu0
      %v1458 = vadd.f32 0.0, %v1457
      %v1459 = vpop.f32.mrf.mxu0
      %1460 = vdwg.mxu0
      %1461 = vadd.xlane.f32.xlu0 %v1458
      %v1462 = vpop.xlane.xlu0 %1461
      %v1463 = vrcp.pop 128.0
      %v1464 = vmul.f32 %v1462, %v1463
      %v1465 = vsub.f32 %v1458, %v1464
      %v1466 = vmul.f32 %v1465, %v1465
      %1467 = vadd.xlane.f32.xlu0 %v1466
      %v1468 = vpop.xlane.xlu0 %1467
      %v1469 = vmul.f32 %v1468, %v1463
      %v1470 = vadd.f32 %v1469, 1e-05
      %v1471 = vrsqrt.pop %v1470
      %v1472 = vmul.f32 %v1465, %v1471
      %v1473 = vld [vmem:[%s21] sm:$0xff]
      %1475 = vset.pattern.permute.xlu0 0
      %1476 = vperm.xlu0 %1475, %v1473
      %v1477 = vpop.permute.xlu0 %1476
      %v1479 = vmul.f32 %v1472, %v1477
      %v1480 = vld [vmem:[%s35] sm:$0xff]
      %1482 = vset.pattern.permute.xlu0 0
      %1483 = vperm.xlu0 %1482, %v1480
      %v1484 = vpop.permute.xlu0 %1483
      %v1486 = vadd.f32 %v1479, %v1484
      %v1487 = vmax.f32 %v1486, 0.0
      %1489 = vrot.lane.b32.xlu0 %v1487, 9
      %v1490 = vpop.permute.xlu0 %1489
      %v1492 = vmul.f32 %v1490, %v1302
      %1493 = vrot.lane.b32.xlu0 %v1487, 8
      %v1494 = vpop.permute.xlu0 %1493
      %v1496 = vmul.f32 %v1494, %v1311
      %1497 = vrot.lane.b32.xlu0 %v1487, 7
      %v1498 = vpop.permute.xlu0 %1497
      %v1500 = vmul.f32 %v1498, %v1319
      %1501 = vrot.lane.b32.xlu0 %v1487, 1
      %v1502 = vpop.permute.xlu0 %1501
      %v1504 = vmul.f32 %v1502, %v1327
      %v1505 = vmul.f32 %v1487, %v1332
      %1506 = vrot.lane.b32.xlu0 %v1487, 127
      %v1507 = vpop.permute.xlu0 %1506
      %v1509 = vmul.f32 %v1507, %v1340
      %1510 = vrot.lane.b32.xlu0 %v1487, 121
      %v1511 = vpop.permute.xlu0 %1510
      %v1513 = vmul.f32 %v1511, %v1348
      %1514 = vrot.lane.b32.xlu0 %v1487, 120
      %v1515 = vpop.permute.xlu0 %1514
      %v1517 = vmul.f32 %v1515, %v1356
      %1518 = vrot.lane.b32.xlu0 %v1487, 119
      %v1519 = vpop.permute.xlu0 %1518
      %v1521 = vmul.f32 %v1519, %v1364
      %v1522 = vld [vmem:[%s9] sm:$0xff]
      %vm1523 = vcmask 588800
      %v1525 = vsel %vm1523, %v1522, 0
      %1527 = vmatprep.subr.mxu0 0.0
      %1528 = vmatpush1.msra.mxu0 0.0
      %1529 = vmatprep.subr.mxu0 0.0
      %1530 = vmatpush1.msra.mxu0 0.0
      %1531 = vmatprep.subr.mxu0 0.0
      %1532 = vmatpush1.msra.mxu0 0.0
      %1533 = vmatprep.subr.mxu0 0.0
      %1534 = vmatpush1.msra.mxu0 0.0
      %1535 = vmatprep.subr.mxu0 0.0
      %1536 = vmatpush1.msra.mxu0 0.0
      %1537 = vmatprep.subr.mxu0 0.0
      %1538 = vmatpush1.msra.mxu0 0.0
      %1539 = vmatprep.subr.mxu0 0.0
      %1540 = vmatpush1.msra.mxu0 0.0
      %1541 = vmatprep.subr.mxu0 0.0
      %1542 = vmatpush1.msra.mxu0 %v1521
      %1543 = vmatprep.subr.mxu0 0.0
      %1544 = vmatpush1.msra.mxu0 %v1517
      %1545 = vmatprep.subr.mxu0 0.0
      %1546 = vmatpush1.msra.mxu0 %v1513
      %1547 = vmatprep.subr.mxu0 0.0
      %1548 = vmatpush1.msra.mxu0 %v1509
      %1549 = vmatprep.subr.mxu0 0.0
      %1550 = vmatpush1.msra.mxu0 %v1505
      %1551 = vmatprep.subr.mxu0 0.0
      %1552 = vmatpush1.msra.mxu0 %v1504
      %1553 = vmatprep.subr.mxu0 0.0
      %1554 = vmatpush1.msra.mxu0 %v1500
      %1555 = vmatprep.subr.mxu0 0.0
      %1556 = vmatpush1.msra.mxu0 %v1496
      %1557 = vmatprep.subr.mxu0 0.0
      %1558 = vmatpush1.msra.mxu0 %v1492
      %1559 = vmatprep.subr.mxu0 0.0
      %1560 = vmatpush2.msra.mxu0 0.0
      %1561 = vmatprep.subr.mxu0 0.0
      %1562 = vmatpush2.msra.mxu0 0.0
      %1563 = vmatprep.subr.mxu0 0.0
      %1564 = vmatpush2.msra.mxu0 0.0
      %1565 = vmatprep.subr.mxu0 0.0
      %1566 = vmatpush2.msra.mxu0 0.0
      %1567 = vmatprep.subr.mxu0 0.0
      %1568 = vmatpush2.msra.mxu0 0.0
      %1569 = vmatprep.subr.mxu0 0.0
      %1570 = vmatpush2.msra.mxu0 0.0
      %1571 = vmatprep.subr.mxu0 0.0
      %1572 = vmatpush2.msra.mxu0 0.0
      %1573 = vmatprep.subr.mxu0 0.0
      %1574 = vmatpush2.msra.mxu0 0.0
      %1575 = vmatprep.subr.mxu0 0.0
      %1576 = vmatpush2.msra.mxu0 0.0
      %1577 = vmatprep.subr.mxu0 0.0
      %1578 = vmatpush2.msra.mxu0 0.0
      %1579 = vmatprep.subr.mxu0 0.0
      %1580 = vmatpush2.msra.mxu0 0.0
      %1581 = vmatprep.subr.mxu0 0.0
      %1582 = vmatpush2.msra.mxu0 0.0
      %1583 = vmatprep.subr.mxu0 0.0
      %1584 = vmatpush2.msra.mxu0 0.0
      %1585 = vmatprep.subr.mxu0 0.0
      %1586 = vmatpush2.msra.mxu0 0.0
      %1587 = vmatprep.subr.mxu0 0.0
      %1588 = vmatpush2.msra.mxu0 0.0
      %1589 = vmatprep.subr.mxu0 0.0
      %1590 = vmatpush2.msra.mxu0 0.0
      %1591 = vmatprep.mubr.f32.mxu0 0.0
      %1592 = vmatmul.mubr.f32.gmra.mxu0 %v1525
      %v1593 = vpop.f32.mrf.mxu0
      %v1594 = vadd.f32 0.0, %v1593
      %v1595 = vpop.f32.mrf.mxu0
      %1596 = vdwg.mxu0
      %1597 = vadd.xlane.f32.xlu0 %v1594
      %v1598 = vpop.xlane.xlu0 %1597
      %v1599 = vmul.f32 %v1598, %v1463
      %v1600 = vsub.f32 %v1594, %v1599
      %v1601 = vmul.f32 %v1600, %v1600
      %1602 = vadd.xlane.f32.xlu0 %v1601
      %v1603 = vpop.xlane.xlu0 %1602
      %v1604 = vmul.f32 %v1603, %v1463
      %v1605 = vadd.f32 %v1604, 1e-05
      %v1606 = vrsqrt.pop %v1605
      %v1607 = vmul.f32 %v1600, %v1606
      %v1608 = vld [vmem:[%s23] sm:$0xff]
      %1610 = vset.pattern.permute.xlu0 0
      %1611 = vperm.xlu0 %1610, %v1608
      %v1612 = vpop.permute.xlu0 %1611
      %v1614 = vmul.f32 %v1607, %v1612
      %v1615 = vld [vmem:[%s37] sm:$0xff]
      %1617 = vset.pattern.permute.xlu0 0
      %1618 = vperm.xlu0 %1617, %v1615
      %v1619 = vpop.permute.xlu0 %1618
      %v1621 = vadd.f32 %v1614, %v1619
      %v1622 = vmax.f32 %v1621, 0.0
      %1624 = vrot.lane.b32.xlu0 %v1622, 9
      %v1625 = vpop.permute.xlu0 %1624
      %v1627 = vmul.f32 %v1625, %v1302
      %1628 = vrot.lane.b32.xlu0 %v1622, 8
      %v1629 = vpop.permute.xlu0 %1628
      %v1631 = vmul.f32 %v1629, %v1311
      %1632 = vrot.lane.b32.xlu0 %v1622, 7
      %v1633 = vpop.permute.xlu0 %1632
      %v1635 = vmul.f32 %v1633, %v1319
      %1636 = vrot.lane.b32.xlu0 %v1622, 1
      %v1637 = vpop.permute.xlu0 %1636
      %v1639 = vmul.f32 %v1637, %v1327
      %v1640 = vmul.f32 %v1622, %v1332
      %1641 = vrot.lane.b32.xlu0 %v1622, 127
      %v1642 = vpop.permute.xlu0 %1641
      %v1644 = vmul.f32 %v1642, %v1340
      %1645 = vrot.lane.b32.xlu0 %v1622, 121
      %v1646 = vpop.permute.xlu0 %1645
      %v1648 = vmul.f32 %v1646, %v1348
      %1649 = vrot.lane.b32.xlu0 %v1622, 120
      %v1650 = vpop.permute.xlu0 %1649
      %v1652 = vmul.f32 %v1650, %v1356
      %1653 = vrot.lane.b32.xlu0 %v1622, 119
      %v1654 = vpop.permute.xlu0 %1653
      %v1656 = vmul.f32 %v1654, %v1364
      %v1657 = vld [vmem:[%s11] sm:$0xff]
      %v1659 = vsel %vm1523, %v1657, 0
      %1661 = vmatprep.subr.mxu0 0.0
      %1662 = vmatpush1.msra.mxu0 0.0
      %1663 = vmatprep.subr.mxu0 0.0
      %1664 = vmatpush1.msra.mxu0 0.0
      %1665 = vmatprep.subr.mxu0 0.0
      %1666 = vmatpush1.msra.mxu0 0.0
      %1667 = vmatprep.subr.mxu0 0.0
      %1668 = vmatpush1.msra.mxu0 0.0
      %1669 = vmatprep.subr.mxu0 0.0
      %1670 = vmatpush1.msra.mxu0 0.0
      %1671 = vmatprep.subr.mxu0 0.0
      %1672 = vmatpush1.msra.mxu0 0.0
      %1673 = vmatprep.subr.mxu0 0.0
      %1674 = vmatpush1.msra.mxu0 0.0
      %1675 = vmatprep.subr.mxu0 0.0
      %1676 = vmatpush1.msra.mxu0 %v1656
      %1677 = vmatprep.subr.mxu0 0.0
      %1678 = vmatpush1.msra.mxu0 %v1652
      %1679 = vmatprep.subr.mxu0 0.0
      %1680 = vmatpush1.msra.mxu0 %v1648
      %1681 = vmatprep.subr.mxu0 0.0
      %1682 = vmatpush1.msra.mxu0 %v1644
      %1683 = vmatprep.subr.mxu0 0.0
      %1684 = vmatpush1.msra.mxu0 %v1640
      %1685 = vmatprep.subr.mxu0 0.0
      %1686 = vmatpush1.msra.mxu0 %v1639
      %1687 = vmatprep.subr.mxu0 0.0
      %1688 = vmatpush1.msra.mxu0 %v1635
      %1689 = vmatprep.subr.mxu0 0.0
      %1690 = vmatpush1.msra.mxu0 %v1631
      %1691 = vmatprep.subr.mxu0 0.0
      %1692 = vmatpush1.msra.mxu0 %v1627
      %1693 = vmatprep.subr.mxu0 0.0
      %1694 = vmatpush2.msra.mxu0 0.0
      %1695 = vmatprep.subr.mxu0 0.0
      %1696 = vmatpush2.msra.mxu0 0.0
      %1697 = vmatprep.subr.mxu0 0.0
      %1698 = vmatpush2.msra.mxu0 0.0
      %1699 = vmatprep.subr.mxu0 0.0
      %1700 = vmatpush2.msra.mxu0 0.0
      %1701 = vmatprep.subr.mxu0 0.0
      %1702 = vmatpush2.msra.mxu0 0.0
      %1703 = vmatprep.subr.mxu0 0.0
      %1704 = vmatpush2.msra.mxu0 0.0
      %1705 = vmatprep.subr.mxu0 0.0
      %1706 = vmatpush2.msra.mxu0 0.0
      %1707 = vmatprep.subr.mxu0 0.0
      %1708 = vmatpush2.msra.mxu0 0.0
      %1709 = vmatprep.subr.mxu0 0.0
      %1710 = vmatpush2.msra.mxu0 0.0
      %1711 = vmatprep.subr.mxu0 0.0
      %1712 = vmatpush2.msra.mxu0 0.0
      %1713 = vmatprep.subr.mxu0 0.0
      %1714 = vmatpush2.msra.mxu0 0.0
      %1715 = vmatprep.subr.mxu0 0.0
      %1716 = vmatpush2.msra.mxu0 0.0
      %1717 = vmatprep.subr.mxu0 0.0
      %1718 = vmatpush2.msra.mxu0 0.0
      %1719 = vmatprep.subr.mxu0 0.0
      %1720 = vmatpush2.msra.mxu0 0.0
      %1721 = vmatprep.subr.mxu0 0.0
      %1722 = vmatpush2.msra.mxu0 0.0
      %1723 = vmatprep.subr.mxu0 0.0
      %1724 = vmatpush2.msra.mxu0 0.0
      %1725 = vmatprep.mubr.f32.mxu0 0.0
      %1726 = vmatmul.mubr.f32.gmra.mxu0 %v1659
      %v1727 = vpop.f32.mrf.mxu0
      %v1728 = vadd.f32 0.0, %v1727
      %v1729 = vpop.f32.mrf.mxu0
      %1730 = vdwg.mxu0
      %1731 = vadd.xlane.f32.xlu0 %v1728
      %v1732 = vpop.xlane.xlu0 %1731
      %v1733 = vmul.f32 %v1732, %v1463
      %v1734 = vsub.f32 %v1728, %v1733
      %v1735 = vmul.f32 %v1734, %v1734
      %1736 = vadd.xlane.f32.xlu0 %v1735
      %v1737 = vpop.xlane.xlu0 %1736
      %v1738 = vmul.f32 %v1737, %v1463
      %v1739 = vadd.f32 %v1738, 1e-05
      %v1740 = vrsqrt.pop %v1739
      %v1741 = vmul.f32 %v1734, %v1740
      %v1742 = vld [vmem:[%s25] sm:$0xff]
      %1744 = vset.pattern.permute.xlu0 0
      %1745 = vperm.xlu0 %1744, %v1742
      %v1746 = vpop.permute.xlu0 %1745
      %v1748 = vmul.f32 %v1741, %v1746
      %v1749 = vld [vmem:[%s39] sm:$0xff]
      %1751 = vset.pattern.permute.xlu0 0
      %1752 = vperm.xlu0 %1751, %v1749
      %v1753 = vpop.permute.xlu0 %1752
      %v1755 = vadd.f32 %v1748, %v1753
      %v1756 = vmax.f32 %v1755, 0.0
      %1758 = vrot.lane.b32.xlu0 %v1756, 9
      %v1759 = vpop.permute.xlu0 %1758
      %v1761 = vmul.f32 %v1759, %v1302
      %1762 = vrot.lane.b32.xlu0 %v1756, 8
      %v1763 = vpop.permute.xlu0 %1762
      %v1765 = vmul.f32 %v1763, %v1311
      %1766 = vrot.lane.b32.xlu0 %v1756, 7
      %v1767 = vpop.permute.xlu0 %1766
      %v1769 = vmul.f32 %v1767, %v1319
      %1770 = vrot.lane.b32.xlu0 %v1756, 1
      %v1771 = vpop.permute.xlu0 %1770
      %v1773 = vmul.f32 %v1771, %v1327
      %v1774 = vmul.f32 %v1756, %v1332
      %1775 = vrot.lane.b32.xlu0 %v1756, 127
      %v1776 = vpop.permute.xlu0 %1775
      %v1778 = vmul.f32 %v1776, %v1340
      %1779 = vrot.lane.b32.xlu0 %v1756, 121
      %v1780 = vpop.permute.xlu0 %1779
      %v1782 = vmul.f32 %v1780, %v1348
      %1783 = vrot.lane.b32.xlu0 %v1756, 120
      %v1784 = vpop.permute.xlu0 %1783
      %v1786 = vmul.f32 %v1784, %v1356
      %1787 = vrot.lane.b32.xlu0 %v1756, 119
      %v1788 = vpop.permute.xlu0 %1787
      %v1790 = vmul.f32 %v1788, %v1364
      %v1791 = vld [vmem:[%s13] sm:$0xff]
      %v1793 = vsel %vm1523, %v1791, 0
      %1795 = vmatprep.subr.mxu0 0.0
      %1796 = vmatpush1.msra.mxu0 0.0
      %1797 = vmatprep.subr.mxu0 0.0
      %1798 = vmatpush1.msra.mxu0 0.0
      %1799 = vmatprep.subr.mxu0 0.0
      %1800 = vmatpush1.msra.mxu0 0.0
      %1801 = vmatprep.subr.mxu0 0.0
      %1802 = vmatpush1.msra.mxu0 0.0
      %1803 = vmatprep.subr.mxu0 0.0
      %1804 = vmatpush1.msra.mxu0 0.0
      %1805 = vmatprep.subr.mxu0 0.0
      %1806 = vmatpush1.msra.mxu0 0.0
      %1807 = vmatprep.subr.mxu0 0.0
      %1808 = vmatpush1.msra.mxu0 0.0
      %1809 = vmatprep.subr.mxu0 0.0
      %1810 = vmatpush1.msra.mxu0 %v1790
      %1811 = vmatprep.subr.mxu0 0.0
      %1812 = vmatpush1.msra.mxu0 %v1786
      %1813 = vmatprep.subr.mxu0 0.0
      %1814 = vmatpush1.msra.mxu0 %v1782
      %1815 = vmatprep.subr.mxu0 0.0
      %1816 = vmatpush1.msra.mxu0 %v1778
      %1817 = vmatprep.subr.mxu0 0.0
      %1818 = vmatpush1.msra.mxu0 %v1774
      %1819 = vmatprep.subr.mxu0 0.0
      %1820 = vmatpush1.msra.mxu0 %v1773
      %1821 = vmatprep.subr.mxu0 0.0
      %1822 = vmatpush1.msra.mxu0 %v1769
      %1823 = vmatprep.subr.mxu0 0.0
      %1824 = vmatpush1.msra.mxu0 %v1765
      %1825 = vmatprep.subr.mxu0 0.0
      %1826 = vmatpush1.msra.mxu0 %v1761
      %1827 = vmatprep.subr.mxu0 0.0
      %1828 = vmatpush2.msra.mxu0 0.0
      %1829 = vmatprep.subr.mxu0 0.0
      %1830 = vmatpush2.msra.mxu0 0.0
      %1831 = vmatprep.subr.mxu0 0.0
      %1832 = vmatpush2.msra.mxu0 0.0
      %1833 = vmatprep.subr.mxu0 0.0
      %1834 = vmatpush2.msra.mxu0 0.0
      %1835 = vmatprep.subr.mxu0 0.0
      %1836 = vmatpush2.msra.mxu0 0.0
      %1837 = vmatprep.subr.mxu0 0.0
      %1838 = vmatpush2.msra.mxu0 0.0
      %1839 = vmatprep.subr.mxu0 0.0
      %1840 = vmatpush2.msra.mxu0 0.0
      %1841 = vmatprep.subr.mxu0 0.0
      %1842 = vmatpush2.msra.mxu0 0.0
      %1843 = vmatprep.subr.mxu0 0.0
      %1844 = vmatpush2.msra.mxu0 0.0
      %1845 = vmatprep.subr.mxu0 0.0
      %1846 = vmatpush2.msra.mxu0 0.0
      %1847 = vmatprep.subr.mxu0 0.0
      %1848 = vmatpush2.msra.mxu0 0.0
      %1849 = vmatprep.subr.mxu0 0.0
      %1850 = vmatpush2.msra.mxu0 0.0
      %1851 = vmatprep.subr.mxu0 0.0
      %1852 = vmatpush2.msra.mxu0 0.0
      %1853 = vmatprep.subr.mxu0 0.0
      %1854 = vmatpush2.msra.mxu0 0.0
      %1855 = vmatprep.subr.mxu0 0.0
      %1856 = vmatpush2.msra.mxu0 0.0
      %1857 = vmatprep.subr.mxu0 0.0
      %1858 = vmatpush2.msra.mxu0 0.0
      %1859 = vmatprep.mubr.f32.mxu0 0.0
      %1860 = vmatmul.mubr.f32.gmra.mxu0 %v1793
      %v1861 = vpop.f32.mrf.mxu0
      %v1862 = vadd.f32 0.0, %v1861
      %v1863 = vpop.f32.mrf.mxu0
      %1864 = vdwg.mxu0
      %1865 = vadd.xlane.f32.xlu0 %v1862
      %v1866 = vpop.xlane.xlu0 %1865
      %v1867 = vmul.f32 %v1866, %v1463
      %v1868 = vsub.f32 %v1862, %v1867
      %v1869 = vmul.f32 %v1868, %v1868
      %1870 = vadd.xlane.f32.xlu0 %v1869
      %v1871 = vpop.xlane.xlu0 %1870
      %v1872 = vmul.f32 %v1871, %v1463
      %v1873 = vadd.f32 %v1872, 1e-05
      %v1874 = vrsqrt.pop %v1873
      %v1875 = vmul.f32 %v1868, %v1874
      %v1876 = vld [vmem:[%s27] sm:$0xff]
      %1878 = vset.pattern.permute.xlu0 0
      %1879 = vperm.xlu0 %1878, %v1876
      %v1880 = vpop.permute.xlu0 %1879
      %v1882 = vmul.f32 %v1875, %v1880
      %v1883 = vld [vmem:[%s41] sm:$0xff]
      %1885 = vset.pattern.permute.xlu0 0
      %1886 = vperm.xlu0 %1885, %v1883
      %v1887 = vpop.permute.xlu0 %1886
      %v1889 = vadd.f32 %v1882, %v1887
      %v1890 = vmax.f32 %v1889, 0.0
      %1892 = vrot.lane.b32.xlu0 %v1890, 9
      %v1893 = vpop.permute.xlu0 %1892
      %v1895 = vmul.f32 %v1893, %v1302
      %1896 = vrot.lane.b32.xlu0 %v1890, 8
      %v1897 = vpop.permute.xlu0 %1896
      %v1899 = vmul.f32 %v1897, %v1311
      %1900 = vrot.lane.b32.xlu0 %v1890, 7
      %v1901 = vpop.permute.xlu0 %1900
      %v1903 = vmul.f32 %v1901, %v1319
      %1904 = vrot.lane.b32.xlu0 %v1890, 1
      %v1905 = vpop.permute.xlu0 %1904
      %v1907 = vmul.f32 %v1905, %v1327
      %v1908 = vmul.f32 %v1890, %v1332
      %1909 = vrot.lane.b32.xlu0 %v1890, 127
      %v1910 = vpop.permute.xlu0 %1909
      %v1912 = vmul.f32 %v1910, %v1340
      %1913 = vrot.lane.b32.xlu0 %v1890, 121
      %v1914 = vpop.permute.xlu0 %1913
      %v1916 = vmul.f32 %v1914, %v1348
      %1917 = vrot.lane.b32.xlu0 %v1890, 120
      %v1918 = vpop.permute.xlu0 %1917
      %v1920 = vmul.f32 %v1918, %v1356
      %1921 = vrot.lane.b32.xlu0 %v1890, 119
      %v1922 = vpop.permute.xlu0 %1921
      %v1924 = vmul.f32 %v1922, %v1364
      %v1925 = vld [vmem:[%s15] sm:$0xff]
      %v1927 = vsel %vm1523, %v1925, 0
      %1929 = vmatprep.subr.mxu0 0.0
      %1930 = vmatpush1.msra.mxu0 0.0
      %1931 = vmatprep.subr.mxu0 0.0
      %1932 = vmatpush1.msra.mxu0 0.0
      %1933 = vmatprep.subr.mxu0 0.0
      %1934 = vmatpush1.msra.mxu0 0.0
      %1935 = vmatprep.subr.mxu0 0.0
      %1936 = vmatpush1.msra.mxu0 0.0
      %1937 = vmatprep.subr.mxu0 0.0
      %1938 = vmatpush1.msra.mxu0 0.0
      %1939 = vmatprep.subr.mxu0 0.0
      %1940 = vmatpush1.msra.mxu0 0.0
      %1941 = vmatprep.subr.mxu0 0.0
      %1942 = vmatpush1.msra.mxu0 0.0
      %1943 = vmatprep.subr.mxu0 0.0
      %1944 = vmatpush1.msra.mxu0 %v1924
      %1945 = vmatprep.subr.mxu0 0.0
      %1946 = vmatpush1.msra.mxu0 %v1920
      %1947 = vmatprep.subr.mxu0 0.0
      %1948 = vmatpush1.msra.mxu0 %v1916
      %1949 = vmatprep.subr.mxu0 0.0
      %1950 = vmatpush1.msra.mxu0 %v1912
      %1951 = vmatprep.subr.mxu0 0.0
      %1952 = vmatpush1.msra.mxu0 %v1908
      %1953 = vmatprep.subr.mxu0 0.0
      %1954 = vmatpush1.msra.mxu0 %v1907
      %1955 = vmatprep.subr.mxu0 0.0
      %1956 = vmatpush1.msra.mxu0 %v1903
      %1957 = vmatprep.subr.mxu0 0.0
      %1958 = vmatpush1.msra.mxu0 %v1899
      %1959 = vmatprep.subr.mxu0 0.0
      %1960 = vmatpush1.msra.mxu0 %v1895
      %1961 = vmatprep.subr.mxu0 0.0
      %1962 = vmatpush2.msra.mxu0 0.0
      %1963 = vmatprep.subr.mxu0 0.0
      %1964 = vmatpush2.msra.mxu0 0.0
      %1965 = vmatprep.subr.mxu0 0.0
      %1966 = vmatpush2.msra.mxu0 0.0
      %1967 = vmatprep.subr.mxu0 0.0
      %1968 = vmatpush2.msra.mxu0 0.0
      %1969 = vmatprep.subr.mxu0 0.0
      %1970 = vmatpush2.msra.mxu0 0.0
      %1971 = vmatprep.subr.mxu0 0.0
      %1972 = vmatpush2.msra.mxu0 0.0
      %1973 = vmatprep.subr.mxu0 0.0
      %1974 = vmatpush2.msra.mxu0 0.0
      %1975 = vmatprep.subr.mxu0 0.0
      %1976 = vmatpush2.msra.mxu0 0.0
      %1977 = vmatprep.subr.mxu0 0.0
      %1978 = vmatpush2.msra.mxu0 0.0
      %1979 = vmatprep.subr.mxu0 0.0
      %1980 = vmatpush2.msra.mxu0 0.0
      %1981 = vmatprep.subr.mxu0 0.0
      %1982 = vmatpush2.msra.mxu0 0.0
      %1983 = vmatprep.subr.mxu0 0.0
      %1984 = vmatpush2.msra.mxu0 0.0
      %1985 = vmatprep.subr.mxu0 0.0
      %1986 = vmatpush2.msra.mxu0 0.0
      %1987 = vmatprep.subr.mxu0 0.0
      %1988 = vmatpush2.msra.mxu0 0.0
      %1989 = vmatprep.subr.mxu0 0.0
      %1990 = vmatpush2.msra.mxu0 0.0
      %1991 = vmatprep.subr.mxu0 0.0
      %1992 = vmatpush2.msra.mxu0 0.0
      %1993 = vmatprep.mubr.f32.mxu0 0.0
      %1994 = vmatmul.mubr.f32.gmra.mxu0 %v1927
      %v1995 = vpop.f32.mrf.mxu0
      %v1996 = vadd.f32 0.0, %v1995
      %v1997 = vpop.f32.mrf.mxu0
      %1998 = vdwg.mxu0
      %1999 = vadd.xlane.f32.xlu0 %v1996
      %v2000 = vpop.xlane.xlu0 %1999
      %v2001 = vmul.f32 %v2000, %v1463
      %v2002 = vsub.f32 %v1996, %v2001
      %v2003 = vmul.f32 %v2002, %v2002
      %2004 = vadd.xlane.f32.xlu0 %v2003
      %v2005 = vpop.xlane.xlu0 %2004
      %v2006 = vmul.f32 %v2005, %v1463
      %v2007 = vadd.f32 %v2006, 1e-05
      %v2008 = vrsqrt.pop %v2007
      %v2009 = vmul.f32 %v2002, %v2008
      %v2010 = vld [vmem:[%s29] sm:$0xff]
      %2012 = vset.pattern.permute.xlu0 0
      %2013 = vperm.xlu0 %2012, %v2010
      %v2014 = vpop.permute.xlu0 %2013
      %v2016 = vmul.f32 %v2009, %v2014
      %v2017 = vld [vmem:[%s43] sm:$0xff]
      %2019 = vset.pattern.permute.xlu0 0
      %2020 = vperm.xlu0 %2019, %v2017
      %v2021 = vpop.permute.xlu0 %2020
      %v2023 = vadd.f32 %v2016, %v2021
      %v2024 = vmax.f32 %v2023, 0.0
      %2026 = vrot.lane.b32.xlu0 %v2024, 9
      %v2027 = vpop.permute.xlu0 %2026
      %v2029 = vmul.f32 %v2027, %v1302
      %2030 = vrot.lane.b32.xlu0 %v2024, 8
      %v2031 = vpop.permute.xlu0 %2030
      %v2033 = vmul.f32 %v2031, %v1311
      %2034 = vrot.lane.b32.xlu0 %v2024, 7
      %v2035 = vpop.permute.xlu0 %2034
      %v2037 = vmul.f32 %v2035, %v1319
      %2038 = vrot.lane.b32.xlu0 %v2024, 1
      %v2039 = vpop.permute.xlu0 %2038
      %v2041 = vmul.f32 %v2039, %v1327
      %v2042 = vmul.f32 %v2024, %v1332
      %2043 = vrot.lane.b32.xlu0 %v2024, 127
      %v2044 = vpop.permute.xlu0 %2043
      %v2046 = vmul.f32 %v2044, %v1340
      %2047 = vrot.lane.b32.xlu0 %v2024, 121
      %v2048 = vpop.permute.xlu0 %2047
      %v2050 = vmul.f32 %v2048, %v1348
      %2051 = vrot.lane.b32.xlu0 %v2024, 120
      %v2052 = vpop.permute.xlu0 %2051
      %v2054 = vmul.f32 %v2052, %v1356
      %2055 = vrot.lane.b32.xlu0 %v2024, 119
      %v2056 = vpop.permute.xlu0 %2055
      %v2058 = vmul.f32 %v2056, %v1364
      %v2059 = vld [vmem:[%s17] sm:$0xff]
      %v2061 = vsel %vm1523, %v2059, 0
      %2063 = vmatprep.subr.mxu0 0.0
      %2064 = vmatpush1.msra.mxu0 0.0
      %2065 = vmatprep.subr.mxu0 0.0
      %2066 = vmatpush1.msra.mxu0 0.0
      %2067 = vmatprep.subr.mxu0 0.0
      %2068 = vmatpush1.msra.mxu0 0.0
      %2069 = vmatprep.subr.mxu0 0.0
      %2070 = vmatpush1.msra.mxu0 0.0
      %2071 = vmatprep.subr.mxu0 0.0
      %2072 = vmatpush1.msra.mxu0 0.0
      %2073 = vmatprep.subr.mxu0 0.0
      %2074 = vmatpush1.msra.mxu0 0.0
      %2075 = vmatprep.subr.mxu0 0.0
      %2076 = vmatpush1.msra.mxu0 0.0
      %2077 = vmatprep.subr.mxu0 0.0
      %2078 = vmatpush1.msra.mxu0 %v2058
      %2079 = vmatprep.subr.mxu0 0.0
      %2080 = vmatpush1.msra.mxu0 %v2054
      %2081 = vmatprep.subr.mxu0 0.0
      %2082 = vmatpush1.msra.mxu0 %v2050
      %2083 = vmatprep.subr.mxu0 0.0
      %2084 = vmatpush1.msra.mxu0 %v2046
      %2085 = vmatprep.subr.mxu0 0.0
      %2086 = vmatpush1.msra.mxu0 %v2042
      %2087 = vmatprep.subr.mxu0 0.0
      %2088 = vmatpush1.msra.mxu0 %v2041
      %2089 = vmatprep.subr.mxu0 0.0
      %2090 = vmatpush1.msra.mxu0 %v2037
      %2091 = vmatprep.subr.mxu0 0.0
      %2092 = vmatpush1.msra.mxu0 %v2033
      %2093 = vmatprep.subr.mxu0 0.0
      %2094 = vmatpush1.msra.mxu0 %v2029
      %2095 = vmatprep.subr.mxu0 0.0
      %2096 = vmatpush2.msra.mxu0 0.0
      %2097 = vmatprep.subr.mxu0 0.0
      %2098 = vmatpush2.msra.mxu0 0.0
      %2099 = vmatprep.subr.mxu0 0.0
      %2100 = vmatpush2.msra.mxu0 0.0
      %2101 = vmatprep.subr.mxu0 0.0
      %2102 = vmatpush2.msra.mxu0 0.0
      %2103 = vmatprep.subr.mxu0 0.0
      %2104 = vmatpush2.msra.mxu0 0.0
      %2105 = vmatprep.subr.mxu0 0.0
      %2106 = vmatpush2.msra.mxu0 0.0
      %2107 = vmatprep.subr.mxu0 0.0
      %2108 = vmatpush2.msra.mxu0 0.0
      %2109 = vmatprep.subr.mxu0 0.0
      %2110 = vmatpush2.msra.mxu0 0.0
      %2111 = vmatprep.subr.mxu0 0.0
      %2112 = vmatpush2.msra.mxu0 0.0
      %2113 = vmatprep.subr.mxu0 0.0
      %2114 = vmatpush2.msra.mxu0 0.0
      %2115 = vmatprep.subr.mxu0 0.0
      %2116 = vmatpush2.msra.mxu0 0.0
      %2117 = vmatprep.subr.mxu0 0.0
      %2118 = vmatpush2.msra.mxu0 0.0
      %2119 = vmatprep.subr.mxu0 0.0
      %2120 = vmatpush2.msra.mxu0 0.0
      %2121 = vmatprep.subr.mxu0 0.0
      %2122 = vmatpush2.msra.mxu0 0.0
      %2123 = vmatprep.subr.mxu0 0.0
      %2124 = vmatpush2.msra.mxu0 0.0
      %2125 = vmatprep.subr.mxu0 0.0
      %2126 = vmatpush2.msra.mxu0 0.0
      %2127 = vmatprep.mubr.f32.mxu0 0.0
      %2128 = vmatmul.mubr.f32.gmra.mxu0 %v2061
      %v2129 = vpop.f32.mrf.mxu0
      %v2130 = vadd.f32 0.0, %v2129
      %v2131 = vpop.f32.mrf.mxu0
      %2132 = vdwg.mxu0
      %2133 = vadd.xlane.f32.xlu0 %v2130
      %v2134 = vpop.xlane.xlu0 %2133
      %v2135 = vmul.f32 %v2134, %v1463
      %v2136 = vsub.f32 %v2130, %v2135
      %v2137 = vmul.f32 %v2136, %v2136
      %2138 = vadd.xlane.f32.xlu0 %v2137
      %v2139 = vpop.xlane.xlu0 %2138
      %v2140 = vmul.f32 %v2139, %v1463
      %v2141 = vadd.f32 %v2140, 1e-05
      %v2142 = vrsqrt.pop %v2141
      %v2143 = vmul.f32 %v2136, %v2142
      %v2144 = vld [vmem:[%s31] sm:$0xff]
      %2146 = vset.pattern.permute.xlu0 0
      %2147 = vperm.xlu0 %2146, %v2144
      %v2148 = vpop.permute.xlu0 %2147
      %v2150 = vmul.f32 %v2143, %v2148
      %v2151 = vld [vmem:[%s45] sm:$0xff]
      %2153 = vset.pattern.permute.xlu0 0
      %2154 = vperm.xlu0 %2153, %v2151
      %v2155 = vpop.permute.xlu0 %2154
      %v2157 = vadd.f32 %v2150, %v2155
      %v2158 = vmax.f32 %v2157, 0.0
      %2160 = vrot.lane.b32.xlu0 %v2158, 9
      %v2161 = vpop.permute.xlu0 %2160
      %v2163 = vmul.f32 %v2161, %v1302
      %2164 = vrot.lane.b32.xlu0 %v2158, 8
      %v2165 = vpop.permute.xlu0 %2164
      %v2167 = vmul.f32 %v2165, %v1311
      %2168 = vrot.lane.b32.xlu0 %v2158, 7
      %v2169 = vpop.permute.xlu0 %2168
      %v2171 = vmul.f32 %v2169, %v1319
      %2172 = vrot.lane.b32.xlu0 %v2158, 1
      %v2173 = vpop.permute.xlu0 %2172
      %v2175 = vmul.f32 %v2173, %v1327
      %v2176 = vmul.f32 %v2158, %v1332
      %2177 = vrot.lane.b32.xlu0 %v2158, 127
      %v2178 = vpop.permute.xlu0 %2177
      %v2180 = vmul.f32 %v2178, %v1340
      %2181 = vrot.lane.b32.xlu0 %v2158, 121
      %v2182 = vpop.permute.xlu0 %2181
      %v2184 = vmul.f32 %v2182, %v1348
      %2185 = vrot.lane.b32.xlu0 %v2158, 120
      %v2186 = vpop.permute.xlu0 %2185
      %v2188 = vmul.f32 %v2186, %v1356
      %2189 = vrot.lane.b32.xlu0 %v2158, 119
      %v2190 = vpop.permute.xlu0 %2189
      %v2192 = vmul.f32 %v2190, %v1364
      %v2193 = vld [vmem:[%s19] sm:$0xf]
      %v2195 = vsel %vm1523, %v2193, 0
      %2197 = vmatprep.subr.mxu0 0.0
      %2198 = vmatpush1.msra.mxu0 0.0
      %2199 = vmatprep.subr.mxu0 0.0
      %2200 = vmatpush1.msra.mxu0 0.0
      %2201 = vmatprep.subr.mxu0 0.0
      %2202 = vmatpush1.msra.mxu0 0.0
      %2203 = vmatprep.subr.mxu0 0.0
      %2204 = vmatpush1.msra.mxu0 0.0
      %2205 = vmatprep.subr.mxu0 0.0
      %2206 = vmatpush1.msra.mxu0 0.0
      %2207 = vmatprep.subr.mxu0 0.0
      %2208 = vmatpush1.msra.mxu0 0.0
      %2209 = vmatprep.subr.mxu0 0.0
      %2210 = vmatpush1.msra.mxu0 0.0
      %2211 = vmatprep.subr.mxu0 0.0
      %2212 = vmatpush1.msra.mxu0 %v2192
      %2213 = vmatprep.subr.mxu0 0.0
      %2214 = vmatpush1.msra.mxu0 %v2188
      %2215 = vmatprep.subr.mxu0 0.0
      %2216 = vmatpush1.msra.mxu0 %v2184
      %2217 = vmatprep.subr.mxu0 0.0
      %2218 = vmatpush1.msra.mxu0 %v2180
      %2219 = vmatprep.subr.mxu0 0.0
      %2220 = vmatpush1.msra.mxu0 %v2176
      %2221 = vmatprep.subr.mxu0 0.0
      %2222 = vmatpush1.msra.mxu0 %v2175
      %2223 = vmatprep.subr.mxu0 0.0
      %2224 = vmatpush1.msra.mxu0 %v2171
      %2225 = vmatprep.subr.mxu0 0.0
      %2226 = vmatpush1.msra.mxu0 %v2167
      %2227 = vmatprep.subr.mxu0 0.0
      %2228 = vmatpush1.msra.mxu0 %v2163
      %2229 = vmatprep.subr.mxu0 0.0
      %2230 = vmatpush2.msra.mxu0 0.0
      %2231 = vmatprep.subr.mxu0 0.0
      %2232 = vmatpush2.msra.mxu0 0.0
      %2233 = vmatprep.subr.mxu0 0.0
      %2234 = vmatpush2.msra.mxu0 0.0
      %2235 = vmatprep.subr.mxu0 0.0
      %2236 = vmatpush2.msra.mxu0 0.0
      %2237 = vmatprep.subr.mxu0 0.0
      %2238 = vmatpush2.msra.mxu0 0.0
      %2239 = vmatprep.subr.mxu0 0.0
      %2240 = vmatpush2.msra.mxu0 0.0
      %2241 = vmatprep.subr.mxu0 0.0
      %2242 = vmatpush2.msra.mxu0 0.0
      %2243 = vmatprep.subr.mxu0 0.0
      %2244 = vmatpush2.msra.mxu0 0.0
      %2245 = vmatprep.subr.mxu0 0.0
      %2246 = vmatpush2.msra.mxu0 0.0
      %2247 = vmatprep.subr.mxu0 0.0
      %2248 = vmatpush2.msra.mxu0 0.0
      %2249 = vmatprep.subr.mxu0 0.0
      %2250 = vmatpush2.msra.mxu0 0.0
      %2251 = vmatprep.subr.mxu0 0.0
      %2252 = vmatpush2.msra.mxu0 0.0
      %2253 = vmatprep.subr.mxu0 0.0
      %2254 = vmatpush2.msra.mxu0 0.0
      %2255 = vmatprep.subr.mxu0 0.0
      %2256 = vmatpush2.msra.mxu0 0.0
      %2257 = vmatprep.subr.mxu0 0.0
      %2258 = vmatpush2.msra.mxu0 0.0
      %2259 = vmatprep.subr.mxu0 0.0
      %2260 = vmatpush2.msra.mxu0 0.0
      %2261 = vmatprep.mubr.f32.mxu0 0.0
      %2262 = vmatmul.mubr.f32.gmra.mxu0 %v2195
      %v2263 = vpop.f32.mrf.mxu0
      %v2264 = vadd.f32 0.0, %v2263
      %v2265 = vpop.f32.mrf.mxu0
      %2266 = vdwg.mxu0
      %v2267 = vsel %vm1378, %v2264, 0.0
      %2268 = vadd.xlane.f32.xlu0 %v2267
      %v2269 = vpop.xlane.xlu0 %2268
      %v2270 = vmul.f32 %v2269, %v1463
      %v2271 = vsub.f32 %v2264, %v2270
      %v2272 = vmul.f32 %v2271, %v2271
      %v2273 = vsel %vm1378, %v2272, 0.0
      %2274 = vadd.xlane.f32.xlu0 %v2273
      %v2275 = vpop.xlane.xlu0 %2274
      %v2276 = vmul.f32 %v2275, %v1463
      %v2277 = vadd.f32 %v2276, 1e-05
      %v2278 = vrsqrt.pop %v2277
      %v2279 = vmul.f32 %v2271, %v2278
      %v2280 = vld [vmem:[%s33] sm:$0xf]
      %2282 = vset.pattern.permute.xlu0 0
      %2283 = vperm.xlu0 %2282, %v2280
      %v2284 = vpop.permute.xlu0 %2283
      %v2286 = vmul.f32 %v2279, %v2284
      %v2287 = vld [vmem:[%s47] sm:$0xf]
      %2289 = vset.pattern.permute.xlu0 0
      %2290 = vperm.xlu0 %2289, %v2287
      %v2291 = vpop.permute.xlu0 %2290
      %v2293 = vadd.f32 %v2286, %v2291
      %v2294 = vmax.f32 %v2293, 0.0
      %v2296 = vrot.slane %v2294, 7
      %2297 = vrot.lane.b32.xlu0 %v2296, 64
      %v2298 = vpop.permute.xlu0 %2297
      %vm2300 = vcmask 1040384
      %v2301 = vsel %vm2300, %v2294, %v2298
      %v2302 = vrot.slane %v2294, 1
      %2304 = vrot.lane.b32.xlu0 %v2294, 64
      %v2305 = vpop.permute.xlu0 %2304
      %v2307 = vsel %vm2300, %v2302, %v2305
      %v2308 = vrot.slane %v2294, 2
      %2310 = vrot.lane.b32.xlu0 %v2302, 64
      %v2311 = vpop.permute.xlu0 %2310
      %v2313 = vsel %vm2300, %v2308, %v2311
      %v2314 = vrot.slane %v2294, 3
      %2316 = vrot.lane.b32.xlu0 %v2308, 64
      %v2317 = vpop.permute.xlu0 %2316
      %v2319 = vsel %vm2300, %v2314, %v2317
      %2321 = vrot.lane.b32.xlu0 %v2307, 64
      %v2322 = vpop.permute.xlu0 %2321
      %2325 = vrot.lane.b32.xlu0 %v2319, 64
      %v2326 = vpop.permute.xlu0 %2325
      %vm2328 = vcmask 523264
      %v2329 = vsel %vm2328, %v2301, %v2322
      %v2330 = vsel %vm2328, %v2313, %v2326
      %v2331 = vld [vmem:[%s1275] sm:$0x3]
      %v2332 = vld [vmem:[%s49] sm:$0xff]
      %v2333 = vld [vmem:[%s49 + $0x8] sm:$0xff]
      %v2334 = vld [vmem:[%s51] sm:$0x1]
      %v2336 = vlaneseq
      %v2337 = vshrl.u32 %v2336, 7
      %v2338 = vsub.s32 0, %v2337
      %v2339 = vrot.slane %v2334, %v2338
      %vm2341 = vcmask 130048
      %v2343 = vsel %vm2341, %v2331, 0
      %2345 = vmatprep.subr.mxu0 0.0
      %2346 = vmatpush1.msra.mxu0 0.0
      %2347 = vmatprep.subr.mxu0 0.0
      %2348 = vmatpush1.msra.mxu0 0.0
      %2349 = vmatprep.subr.mxu0 0.0
      %2350 = vmatpush1.msra.mxu0 0.0
      %2351 = vmatprep.subr.mxu0 0.0
      %2352 = vmatpush1.msra.mxu0 0.0
      %2353 = vmatprep.subr.mxu0 0.0
      %2354 = vmatpush1.msra.mxu0 0.0
      %2355 = vmatprep.subr.mxu0 0.0
      %2356 = vmatpush1.msra.mxu0 0.0
      %2357 = vmatprep.subr.mxu0 0.0
      %2358 = vmatpush1.msra.mxu0 0.0
      %2359 = vmatprep.subr.mxu0 0.0
      %2360 = vmatpush1.msra.mxu0 0.0
      %2361 = vmatprep.subr.mxu0 0.0
      %2362 = vmatpush1.msra.mxu0 0.0
      %2363 = vmatprep.subr.mxu0 0.0
      %2364 = vmatpush1.msra.mxu0 0.0
      %2365 = vmatprep.subr.mxu0 0.0
      %2366 = vmatpush1.msra.mxu0 0.0
      %2367 = vmatprep.subr.mxu0 0.0
      %2368 = vmatpush1.msra.mxu0 0.0
      %2369 = vmatprep.subr.mxu0 0.0
      %2370 = vmatpush1.msra.mxu0 0.0
      %2371 = vmatprep.subr.mxu0 0.0
      %2372 = vmatpush1.msra.mxu0 0.0
      %2373 = vmatprep.subr.mxu0 0.0
      %2374 = vmatpush1.msra.mxu0 %v2333
      %2375 = vmatprep.subr.mxu0 0.0
      %2376 = vmatpush1.msra.mxu0 %v2332
      %2377 = vmatprep.subr.mxu0 0.0
      %2378 = vmatpush2.msra.mxu0 0.0
      %2379 = vmatprep.subr.mxu0 0.0
      %2380 = vmatpush2.msra.mxu0 0.0
      %2381 = vmatprep.subr.mxu0 0.0
      %2382 = vmatpush2.msra.mxu0 0.0
      %2383 = vmatprep.subr.mxu0 0.0
      %2384 = vmatpush2.msra.mxu0 0.0
      %2385 = vmatprep.subr.mxu0 0.0
      %2386 = vmatpush2.msra.mxu0 0.0
      %2387 = vmatprep.subr.mxu0 0.0
      %2388 = vmatpush2.msra.mxu0 0.0
      %2389 = vmatprep.subr.mxu0 0.0
      %2390 = vmatpush2.msra.mxu0 0.0
      %2391 = vmatprep.subr.mxu0 0.0
      %2392 = vmatpush2.msra.mxu0 0.0
      %2393 = vmatprep.subr.mxu0 0.0
      %2394 = vmatpush2.msra.mxu0 0.0
      %2395 = vmatprep.subr.mxu0 0.0
      %2396 = vmatpush2.msra.mxu0 0.0
      %2397 = vmatprep.subr.mxu0 0.0
      %2398 = vmatpush2.msra.mxu0 0.0
      %2399 = vmatprep.subr.mxu0 0.0
      %2400 = vmatpush2.msra.mxu0 0.0
      %2401 = vmatprep.subr.mxu0 0.0
      %2402 = vmatpush2.msra.mxu0 0.0
      %2403 = vmatprep.subr.mxu0 0.0
      %2404 = vmatpush2.msra.mxu0 0.0
      %2405 = vmatprep.subr.mxu0 0.0
      %2406 = vmatpush2.msra.mxu0 0.0
      %2407 = vmatprep.subr.mxu0 0.0
      %2408 = vmatpush2.msra.mxu0 0.0
      %2409 = vmatprep.mubr.f32.mxu0 0.0
      %2410 = vmatmul.mubr.f32.gmra.mxu0 %v2343
      %v2411 = vpop.f32.mrf.mxu0
      %v2412 = vadd.f32 %v2339, %v2411
      %v2413 = vpop.f32.mrf.mxu0
      %2414 = vdwg.mxu0
      %v2415 = vmax.f32 %v2412, 0.0
      %v2416 = vld [vmem:[%s53] sm:$0xff]
      %v2417 = vld [vmem:[%s53 + $0x8] sm:$0xff]
      %v2418 = vld [vmem:[%s53 + $0x10] sm:$0xff]
      %v2419 = vld [vmem:[%s53 + $0x18] sm:$0xff]
      %v2420 = vld [vmem:[%s53 + $0x20] sm:$0xff]
      %v2421 = vld [vmem:[%s53 + $0x28] sm:$0xff]
      %v2422 = vld [vmem:[%s53 + $0x30] sm:$0xff]
      %v2423 = vld [vmem:[%s53 + $0x38] sm:$0xff]
      %v2424 = vld [vmem:[%s53 + $0x40] sm:$0xff]
      %v2425 = vld [vmem:[%s53 + $0x48] sm:$0xff]
      %v2426 = vld [vmem:[%s53 + $0x50] sm:$0xff]
      %v2427 = vld [vmem:[%s53 + $0x58] sm:$0xff]
      %v2428 = vld [vmem:[%s53 + $0x60] sm:$0xff]
      %v2429 = vld [vmem:[%s53 + $0x68] sm:$0xff]
      %v2430 = vld [vmem:[%s53 + $0x70] sm:$0xff]
      %v2431 = vld [vmem:[%s53 + $0x78] sm:$0xff]
      %v2432 = vld [vmem:[%s53 + $0x80] sm:$0xff]
      %v2433 = vld [vmem:[%s53 + $0x88] sm:$0xff]
      %v2434 = vld [vmem:[%s53 + $0x90] sm:$0xff]
      %v2435 = vld [vmem:[%s53 + $0x98] sm:$0xff]
      %v2436 = vld [vmem:[%s53 + $0xa0] sm:$0xff]
      %v2437 = vld [vmem:[%s53 + $0xa8] sm:$0xff]
      %v2438 = vld [vmem:[%s53 + $0xb0] sm:$0xff]
      %v2439 = vld [vmem:[%s53 + $0xb8] sm:$0xff]
      %v2440 = vld [vmem:[%s53 + $0xc0] sm:$0xff]
      %v2441 = vld [vmem:[%s53 + $0xc8] sm:$0xff]
      %v2442 = vld [vmem:[%s53 + $0xd0] sm:$0xff]
      %v2443 = vld [vmem:[%s53 + $0xd8] sm:$0xff]
      %v2444 = vld [vmem:[%s53 + $0xe0] sm:$0xff]
      %v2445 = vld [vmem:[%s53 + $0xe8] sm:$0xff]
      %v2446 = vld [vmem:[%s53 + $0xf0] sm:$0xff]
      %v2447 = vld [vmem:[%s53 + $0xf8] sm:$0xff]
      %v2448 = vld [vmem:[%s53 + $0x100] sm:$0xff]
      %v2449 = vld [vmem:[%s53 + $0x108] sm:$0xff]
      %v2450 = vld [vmem:[%s53 + $0x110] sm:$0xff]
      %v2451 = vld [vmem:[%s53 + $0x118] sm:$0xff]
      %v2452 = vld [vmem:[%s53 + $0x120] sm:$0xff]
      %v2453 = vld [vmem:[%s53 + $0x128] sm:$0xff]
      %v2454 = vld [vmem:[%s53 + $0x130] sm:$0xff]
      %v2455 = vld [vmem:[%s53 + $0x138] sm:$0xff]
      %v2456 = vld [vmem:[%s53 + $0x140] sm:$0xff]
      %v2457 = vld [vmem:[%s53 + $0x148] sm:$0xff]
      %v2458 = vld [vmem:[%s53 + $0x150] sm:$0xff]
      %v2459 = vld [vmem:[%s53 + $0x158] sm:$0xff]
      %v2460 = vld [vmem:[%s53 + $0x160] sm:$0xff]
      %v2461 = vld [vmem:[%s53 + $0x168] sm:$0xff]
      %v2462 = vld [vmem:[%s53 + $0x170] sm:$0xff]
      %v2463 = vld [vmem:[%s53 + $0x178] sm:$0xff]
      %v2464 = vld [vmem:[%s53 + $0x180] sm:$0xff]
      %v2465 = vld [vmem:[%s53 + $0x188] sm:$0xff]
      %v2466 = vld [vmem:[%s53 + $0x190] sm:$0xff]
      %v2467 = vld [vmem:[%s53 + $0x198] sm:$0xff]
      %v2468 = vld [vmem:[%s53 + $0x1a0] sm:$0xff]
      %v2469 = vld [vmem:[%s53 + $0x1a8] sm:$0xff]
      %v2470 = vld [vmem:[%s53 + $0x1b0] sm:$0xff]
      %v2471 = vld [vmem:[%s53 + $0x1b8] sm:$0xff]
      %v2472 = vld [vmem:[%s53 + $0x1c0] sm:$0xff]
      %v2473 = vld [vmem:[%s53 + $0x1c8] sm:$0xff]
      %v2474 = vld [vmem:[%s53 + $0x1d0] sm:$0xff]
      %v2475 = vld [vmem:[%s53 + $0x1d8] sm:$0xff]
      %v2476 = vld [vmem:[%s53 + $0x1e0] sm:$0xff]
      %v2477 = vld [vmem:[%s53 + $0x1e8] sm:$0xff]
      %v2478 = vld [vmem:[%s53 + $0x1f0] sm:$0xff]
      %v2479 = vld [vmem:[%s53 + $0x1f8] sm:$0xff]
      %v2480 = vld [vmem:[%s53 + $0x200] sm:$0xff]
      %v2481 = vld [vmem:[%s53 + $0x208] sm:$0xff]
      %v2482 = vld [vmem:[%s53 + $0x210] sm:$0xff]
      %v2483 = vld [vmem:[%s53 + $0x218] sm:$0xff]
      %v2484 = vld [vmem:[%s53 + $0x220] sm:$0xff]
      %v2485 = vld [vmem:[%s53 + $0x228] sm:$0xff]
      %v2486 = vld [vmem:[%s53 + $0x230] sm:$0xff]
      %v2487 = vld [vmem:[%s53 + $0x238] sm:$0xff]
      %v2488 = vld [vmem:[%s53 + $0x240] sm:$0xff]
      %v2489 = vld [vmem:[%s53 + $0x248] sm:$0xff]
      %v2490 = vld [vmem:[%s53 + $0x250] sm:$0xff]
      %v2491 = vld [vmem:[%s53 + $0x258] sm:$0xff]
      %v2492 = vld [vmem:[%s53 + $0x260] sm:$0xff]
      %v2493 = vld [vmem:[%s53 + $0x268] sm:$0xff]
      %v2494 = vld [vmem:[%s53 + $0x270] sm:$0xff]
      %v2495 = vld [vmem:[%s53 + $0x278] sm:$0xff]
      %v2496 = vld [vmem:[%s53 + $0x280] sm:$0xff]
      %v2497 = vld [vmem:[%s53 + $0x288] sm:$0xff]
      %v2498 = vld [vmem:[%s53 + $0x290] sm:$0xff]
      %v2499 = vld [vmem:[%s53 + $0x298] sm:$0xff]
      %v2500 = vld [vmem:[%s53 + $0x2a0] sm:$0xff]
      %v2501 = vld [vmem:[%s53 + $0x2a8] sm:$0xff]
      %v2502 = vld [vmem:[%s53 + $0x2b0] sm:$0xff]
      %v2503 = vld [vmem:[%s53 + $0x2b8] sm:$0xff]
      %v2504 = vld [vmem:[%s53 + $0x2c0] sm:$0xff]
      %v2505 = vld [vmem:[%s53 + $0x2c8] sm:$0xff]
      %v2506 = vld [vmem:[%s53 + $0x2d0] sm:$0xff]
      %v2507 = vld [vmem:[%s53 + $0x2d8] sm:$0xff]
      %v2508 = vld [vmem:[%s53 + $0x2e0] sm:$0xff]
      %v2509 = vld [vmem:[%s53 + $0x2e8] sm:$0xff]
      %v2510 = vld [vmem:[%s53 + $0x2f0] sm:$0xff]
      %v2511 = vld [vmem:[%s53 + $0x2f8] sm:$0xff]
      %v2512 = vld [vmem:[%s53 + $0x300] sm:$0xff]
      %v2513 = vld [vmem:[%s53 + $0x308] sm:$0xff]
      %v2514 = vld [vmem:[%s53 + $0x310] sm:$0xff]
      %v2515 = vld [vmem:[%s53 + $0x318] sm:$0xff]
      %v2516 = vld [vmem:[%s53 + $0x320] sm:$0xff]
      %v2517 = vld [vmem:[%s53 + $0x328] sm:$0xff]
      %v2518 = vld [vmem:[%s53 + $0x330] sm:$0xff]
      %v2519 = vld [vmem:[%s53 + $0x338] sm:$0xff]
      %v2520 = vld [vmem:[%s53 + $0x340] sm:$0xff]
      %v2521 = vld [vmem:[%s53 + $0x348] sm:$0xff]
      %v2522 = vld [vmem:[%s53 + $0x350] sm:$0xff]
      %v2523 = vld [vmem:[%s53 + $0x358] sm:$0xff]
      %v2524 = vld [vmem:[%s53 + $0x360] sm:$0xff]
      %v2525 = vld [vmem:[%s53 + $0x368] sm:$0xff]
      %v2526 = vld [vmem:[%s53 + $0x370] sm:$0xff]
      %v2527 = vld [vmem:[%s53 + $0x378] sm:$0xff]
      %v2528 = vld [vmem:[%s53 + $0x380] sm:$0xff]
      %v2529 = vld [vmem:[%s53 + $0x388] sm:$0xff]
      %v2530 = vld [vmem:[%s53 + $0x390] sm:$0xff]
      %v2531 = vld [vmem:[%s53 + $0x398] sm:$0xff]
      %v2532 = vld [vmem:[%s53 + $0x3a0] sm:$0xff]
      %v2533 = vld [vmem:[%s53 + $0x3a8] sm:$0xff]
      %v2534 = vld [vmem:[%s53 + $0x3b0] sm:$0xff]
      %v2535 = vld [vmem:[%s53 + $0x3b8] sm:$0xff]
      %v2536 = vld [vmem:[%s53 + $0x3c0] sm:$0xff]
      %v2537 = vld [vmem:[%s53 + $0x3c8] sm:$0xff]
      %v2538 = vld [vmem:[%s53 + $0x3d0] sm:$0xff]
      %v2539 = vld [vmem:[%s53 + $0x3d8] sm:$0xff]
      %v2540 = vld [vmem:[%s53 + $0x3e0] sm:$0xff]
      %v2541 = vld [vmem:[%s53 + $0x3e8] sm:$0xff]
      %v2542 = vld [vmem:[%s53 + $0x3f0] sm:$0xff]
      %v2543 = vld [vmem:[%s53 + $0x3f8] sm:$0xff]
      %v2544 = vld [vmem:[%s53 + $0x400] sm:$0xff]
      %v2545 = vld [vmem:[%s53 + $0x408] sm:$0xff]
      %v2546 = vld [vmem:[%s53 + $0x410] sm:$0xff]
      %v2547 = vld [vmem:[%s53 + $0x418] sm:$0xff]
      %v2548 = vld [vmem:[%s53 + $0x420] sm:$0xff]
      %v2549 = vld [vmem:[%s53 + $0x428] sm:$0xff]
      %v2550 = vld [vmem:[%s53 + $0x430] sm:$0xff]
      %v2551 = vld [vmem:[%s53 + $0x438] sm:$0xff]
      %v2552 = vld [vmem:[%s53 + $0x440] sm:$0xff]
      %v2553 = vld [vmem:[%s53 + $0x448] sm:$0xff]
      %v2554 = vld [vmem:[%s53 + $0x450] sm:$0xff]
      %v2555 = vld [vmem:[%s53 + $0x458] sm:$0xff]
      %v2556 = vld [vmem:[%s53 + $0x460] sm:$0xff]
      %v2557 = vld [vmem:[%s53 + $0x468] sm:$0xff]
      %v2558 = vld [vmem:[%s53 + $0x470] sm:$0xff]
      %v2559 = vld [vmem:[%s53 + $0x478] sm:$0xff]
      %v2560 = vld [vmem:[%s53 + $0x480] sm:$0xff]
      %v2561 = vld [vmem:[%s53 + $0x488] sm:$0xff]
      %v2562 = vld [vmem:[%s53 + $0x490] sm:$0xff]
      %v2563 = vld [vmem:[%s53 + $0x498] sm:$0xff]
      %v2564 = vld [vmem:[%s53 + $0x4a0] sm:$0xff]
      %v2565 = vld [vmem:[%s53 + $0x4a8] sm:$0xff]
      %v2566 = vld [vmem:[%s53 + $0x4b0] sm:$0xff]
      %v2567 = vld [vmem:[%s53 + $0x4b8] sm:$0xff]
      %v2568 = vld [vmem:[%s53 + $0x4c0] sm:$0xff]
      %v2569 = vld [vmem:[%s53 + $0x4c8] sm:$0xff]
      %v2570 = vld [vmem:[%s53 + $0x4d0] sm:$0xff]
      %v2571 = vld [vmem:[%s53 + $0x4d8] sm:$0xff]
      %v2572 = vld [vmem:[%s53 + $0x4e0] sm:$0xff]
      %v2573 = vld [vmem:[%s53 + $0x4e8] sm:$0xff]
      %v2574 = vld [vmem:[%s53 + $0x4f0] sm:$0xff]
      %v2575 = vld [vmem:[%s53 + $0x4f8] sm:$0xff]
      %v2576 = vld [vmem:[%s53 + $0x500] sm:$0xff]
      %v2577 = vld [vmem:[%s53 + $0x508] sm:$0xff]
      %v2578 = vld [vmem:[%s53 + $0x510] sm:$0xff]
      %v2579 = vld [vmem:[%s53 + $0x518] sm:$0xff]
      %v2580 = vld [vmem:[%s53 + $0x520] sm:$0xff]
      %v2581 = vld [vmem:[%s53 + $0x528] sm:$0xff]
      %v2582 = vld [vmem:[%s53 + $0x530] sm:$0xff]
      %v2583 = vld [vmem:[%s53 + $0x538] sm:$0xff]
      %v2584 = vld [vmem:[%s53 + $0x540] sm:$0xff]
      %v2585 = vld [vmem:[%s53 + $0x548] sm:$0xff]
      %v2586 = vld [vmem:[%s53 + $0x550] sm:$0xff]
      %v2587 = vld [vmem:[%s53 + $0x558] sm:$0xff]
      %v2588 = vld [vmem:[%s53 + $0x560] sm:$0xff]
      %v2589 = vld [vmem:[%s53 + $0x568] sm:$0xff]
      %v2590 = vld [vmem:[%s53 + $0x570] sm:$0xff]
      %v2591 = vld [vmem:[%s53 + $0x578] sm:$0xff]
      %v2592 = vld [vmem:[%s53 + $0x580] sm:$0xff]
      %v2593 = vld [vmem:[%s53 + $0x588] sm:$0xff]
      %v2594 = vld [vmem:[%s53 + $0x590] sm:$0xff]
      %v2595 = vld [vmem:[%s53 + $0x598] sm:$0xff]
      %v2596 = vld [vmem:[%s53 + $0x5a0] sm:$0xff]
      %v2597 = vld [vmem:[%s53 + $0x5a8] sm:$0xff]
      %v2598 = vld [vmem:[%s53 + $0x5b0] sm:$0xff]
      %v2599 = vld [vmem:[%s53 + $0x5b8] sm:$0xff]
      %v2600 = vld [vmem:[%s53 + $0x5c0] sm:$0xff]
      %v2601 = vld [vmem:[%s53 + $0x5c8] sm:$0xff]
      %v2602 = vld [vmem:[%s53 + $0x5d0] sm:$0xff]
      %v2603 = vld [vmem:[%s53 + $0x5d8] sm:$0xff]
      %v2604 = vld [vmem:[%s53 + $0x5e0] sm:$0xff]
      %v2605 = vld [vmem:[%s53 + $0x5e8] sm:$0xff]
      %v2606 = vld [vmem:[%s53 + $0x5f0] sm:$0xff]
      %v2607 = vld [vmem:[%s53 + $0x5f8] sm:$0xff]
      %v2608 = vld [vmem:[%s53 + $0x600] sm:$0xff]
      %v2609 = vld [vmem:[%s53 + $0x608] sm:$0xff]
      %v2610 = vld [vmem:[%s53 + $0x610] sm:$0xff]
      %v2611 = vld [vmem:[%s53 + $0x618] sm:$0xff]
      %v2612 = vld [vmem:[%s53 + $0x620] sm:$0xff]
      %v2613 = vld [vmem:[%s53 + $0x628] sm:$0xff]
      %v2614 = vld [vmem:[%s55] sm:$0x1]
      %v2615 = vld [vmem:[%s55 + $0x1] sm:$0x1]
      %v2616 = vld [vmem:[%s55 + $0x2] sm:$0x1]
      %v2617 = vld [vmem:[%s55 + $0x3] sm:$0x1]
      %v2618 = vld [vmem:[%s55 + $0x4] sm:$0x1]
      %v2619 = vld [vmem:[%s55 + $0x5] sm:$0x1]
      %v2626 = vlaneseq
      %v2627 = vshrl.u32 %v2626, 7
      %v2628 = vsub.s32 0, %v2627
      %v2629 = vrot.slane %v2614, %v2628
      %v2630 = vlaneseq
      %v2631 = vshrl.u32 %v2630, 7
      %v2632 = vsub.s32 0, %v2631
      %v2633 = vrot.slane %v2615, %v2632
      %v2634 = vlaneseq
      %v2635 = vshrl.u32 %v2634, 7
      %v2636 = vsub.s32 0, %v2635
      %v2637 = vrot.slane %v2616, %v2636
      %v2638 = vlaneseq
      %v2639 = vshrl.u32 %v2638, 7
      %v2640 = vsub.s32 0, %v2639
      %v2641 = vrot.slane %v2617, %v2640
      %v2642 = vlaneseq
      %v2643 = vshrl.u32 %v2642, 7
      %v2644 = vsub.s32 0, %v2643
      %v2645 = vrot.slane %v2618, %v2644
      %v2646 = vlaneseq
      %v2647 = vshrl.u32 %v2646, 7
      %v2648 = vsub.s32 0, %v2647
      %v2649 = vrot.slane %v2619, %v2648
      %v2657 = vsel %vm1307, %v2415, 0
      %2659 = vmatprep.subr.mxu0 0.0
      %2660 = vmatpush1.msra.mxu0 %v2431
      %2661 = vmatprep.subr.mxu0 0.0
      %2662 = vmatpush1.msra.mxu0 %v2430
      %2663 = vmatprep.subr.mxu0 0.0
      %2664 = vmatpush1.msra.mxu0 %v2429
      %2665 = vmatprep.subr.mxu0 0.0
      %2666 = vmatpush1.msra.mxu0 %v2428
      %2667 = vmatprep.subr.mxu0 0.0
      %2668 = vmatpush1.msra.mxu0 %v2427
      %2669 = vmatprep.subr.mxu0 0.0
      %2670 = vmatpush1.msra.mxu0 %v2426
      %2671 = vmatprep.subr.mxu0 0.0
      %2672 = vmatpush1.msra.mxu0 %v2425
      %2673 = vmatprep.subr.mxu0 0.0
      %2674 = vmatpush1.msra.mxu0 %v2424
      %2675 = vmatprep.subr.mxu0 0.0
      %2676 = vmatpush1.msra.mxu0 %v2423
      %2677 = vmatprep.subr.mxu0 0.0
      %2678 = vmatpush1.msra.mxu0 %v2422
      %2679 = vmatprep.subr.mxu0 0.0
      %2680 = vmatpush1.msra.mxu0 %v2421
      %2681 = vmatprep.subr.mxu0 0.0
      %2682 = vmatpush1.msra.mxu0 %v2420
      %2683 = vmatprep.subr.mxu0 0.0
      %2684 = vmatpush1.msra.mxu0 %v2419
      %2685 = vmatprep.subr.mxu0 0.0
      %2686 = vmatpush1.msra.mxu0 %v2418
      %2687 = vmatprep.subr.mxu0 0.0
      %2688 = vmatpush1.msra.mxu0 %v2417
      %2689 = vmatprep.subr.mxu0 0.0
      %2690 = vmatpush1.msra.mxu0 %v2416
      %2691 = vmatprep.subr.mxu0 0.0
      %2692 = vmatpush2.msra.mxu0 %v2447
      %2693 = vmatprep.subr.mxu0 0.0
      %2694 = vmatpush2.msra.mxu0 %v2446
      %2695 = vmatprep.subr.mxu0 0.0
      %2696 = vmatpush2.msra.mxu0 %v2445
      %2697 = vmatprep.subr.mxu0 0.0
      %2698 = vmatpush2.msra.mxu0 %v2444
      %2699 = vmatprep.subr.mxu0 0.0
      %2700 = vmatpush2.msra.mxu0 %v2443
      %2701 = vmatprep.subr.mxu0 0.0
      %2702 = vmatpush2.msra.mxu0 %v2442
      %2703 = vmatprep.subr.mxu0 0.0
      %2704 = vmatpush2.msra.mxu0 %v2441
      %2705 = vmatprep.subr.mxu0 0.0
      %2706 = vmatpush2.msra.mxu0 %v2440
      %2707 = vmatprep.subr.mxu0 0.0
      %2708 = vmatpush2.msra.mxu0 %v2439
      %2709 = vmatprep.subr.mxu0 0.0
      %2710 = vmatpush2.msra.mxu0 %v2438
      %2711 = vmatprep.subr.mxu0 0.0
      %2712 = vmatpush2.msra.mxu0 %v2437
      %2713 = vmatprep.subr.mxu0 0.0
      %2714 = vmatpush2.msra.mxu0 %v2436
      %2715 = vmatprep.subr.mxu0 0.0
      %2716 = vmatpush2.msra.mxu0 %v2435
      %2717 = vmatprep.subr.mxu0 0.0
      %2718 = vmatpush2.msra.mxu0 %v2434
      %2719 = vmatprep.subr.mxu0 0.0
      %2720 = vmatpush2.msra.mxu0 %v2433
      %2721 = vmatprep.subr.mxu0 0.0
      %2722 = vmatpush2.msra.mxu0 %v2432
      %2723 = vmatprep.mubr.f32.mxu0 %v2330
      %2724 = vmatmul.mubr.f32.gmra.mxu0 %v2329
      %v2725 = vpop.f32.mrf.mxu0
      %v2726 = vadd.f32 %v2629, %v2725
      %v2727 = vpop.f32.mrf.mxu0
      %2728 = vdwg.mxu0
      %2729 = vmatprep.subr.mxu0 0.0
      %2730 = vmatpush1.msra.mxu0 0.0
      %2731 = vmatprep.subr.mxu0 0.0
      %2732 = vmatpush1.msra.mxu0 0.0
      %2733 = vmatprep.subr.mxu0 0.0
      %2734 = vmatpush1.msra.mxu0 0.0
      %2735 = vmatprep.subr.mxu0 0.0
      %2736 = vmatpush1.msra.mxu0 0.0
      %2737 = vmatprep.subr.mxu0 0.0
      %2738 = vmatpush1.msra.mxu0 0.0
      %2739 = vmatprep.subr.mxu0 0.0
      %2740 = vmatpush1.msra.mxu0 0.0
      %2741 = vmatprep.subr.mxu0 0.0
      %2742 = vmatpush1.msra.mxu0 0.0
      %2743 = vmatprep.subr.mxu0 0.0
      %2744 = vmatpush1.msra.mxu0 0.0
      %2745 = vmatprep.subr.mxu0 0.0
      %2746 = vmatpush1.msra.mxu0 0.0
      %2747 = vmatprep.subr.mxu0 0.0
      %2748 = vmatpush1.msra.mxu0 0.0
      %2749 = vmatprep.subr.mxu0 0.0
      %2750 = vmatpush1.msra.mxu0 0.0
      %2751 = vmatprep.subr.mxu0 0.0
      %2752 = vmatpush1.msra.mxu0 0.0
      %2753 = vmatprep.subr.mxu0 0.0
      %2754 = vmatpush1.msra.mxu0 0.0
      %2755 = vmatprep.subr.mxu0 0.0
      %2756 = vmatpush1.msra.mxu0 0.0
      %2757 = vmatprep.subr.mxu0 0.0
      %2758 = vmatpush1.msra.mxu0 0.0
      %2759 = vmatprep.subr.mxu0 0.0
      %2760 = vmatpush1.msra.mxu0 %v2448
      %2761 = vmatprep.subr.mxu0 0.0
      %2762 = vmatpush2.msra.mxu0 0.0
      %2763 = vmatprep.subr.mxu0 0.0
      %2764 = vmatpush2.msra.mxu0 0.0
      %2765 = vmatprep.subr.mxu0 0.0
      %2766 = vmatpush2.msra.mxu0 0.0
      %2767 = vmatprep.subr.mxu0 0.0
      %2768 = vmatpush2.msra.mxu0 0.0
      %2769 = vmatprep.subr.mxu0 0.0
      %2770 = vmatpush2.msra.mxu0 0.0
      %2771 = vmatprep.subr.mxu0 0.0
      %2772 = vmatpush2.msra.mxu0 0.0
      %2773 = vmatprep.subr.mxu0 0.0
      %2774 = vmatpush2.msra.mxu0 0.0
      %2775 = vmatprep.subr.mxu0 0.0
      %2776 = vmatpush2.msra.mxu0 0.0
      %2777 = vmatprep.subr.mxu0 0.0
      %2778 = vmatpush2.msra.mxu0 0.0
      %2779 = vmatprep.subr.mxu0 0.0
      %2780 = vmatpush2.msra.mxu0 0.0
      %2781 = vmatprep.subr.mxu0 0.0
      %2782 = vmatpush2.msra.mxu0 0.0
      %2783 = vmatprep.subr.mxu0 0.0
      %2784 = vmatpush2.msra.mxu0 0.0
      %2785 = vmatprep.subr.mxu0 0.0
      %2786 = vmatpush2.msra.mxu0 0.0
      %2787 = vmatprep.subr.mxu0 0.0
      %2788 = vmatpush2.msra.mxu0 0.0
      %2789 = vmatprep.subr.mxu0 0.0
      %2790 = vmatpush2.msra.mxu0 0.0
      %2791 = vmatprep.subr.mxu0 0.0
      %2792 = vmatpush2.msra.mxu0 0.0
      %2793 = vmatprep.mubr.f32.mxu0 0.0
      %2794 = vmatmul.mubr.f32.gmra.mxu0 %v2657
      %v2795 = vpop.f32.mrf.mxu0
      %v2796 = vadd.f32 %v2726, %v2795
      %v2797 = vpop.f32.mrf.mxu0
      %2798 = vdwg.mxu0
      %2799 = vmatprep.subr.mxu0 0.0
      %2800 = vmatpush1.msra.mxu0 %v2464
      %2801 = vmatprep.subr.mxu0 0.0
      %2802 = vmatpush1.msra.mxu0 %v2463
      %2803 = vmatprep.subr.mxu0 0.0
      %2804 = vmatpush1.msra.mxu0 %v2462
      %2805 = vmatprep.subr.mxu0 0.0
      %2806 = vmatpush1.msra.mxu0 %v2461
      %2807 = vmatprep.subr.mxu0 0.0
      %2808 = vmatpush1.msra.mxu0 %v2460
      %2809 = vmatprep.subr.mxu0 0.0
      %2810 = vmatpush1.msra.mxu0 %v2459
      %2811 = vmatprep.subr.mxu0 0.0
      %2812 = vmatpush1.msra.mxu0 %v2458
      %2813 = vmatprep.subr.mxu0 0.0
      %2814 = vmatpush1.msra.mxu0 %v2457
      %2815 = vmatprep.subr.mxu0 0.0
      %2816 = vmatpush1.msra.mxu0 %v2456
      %2817 = vmatprep.subr.mxu0 0.0
      %2818 = vmatpush1.msra.mxu0 %v2455
      %2819 = vmatprep.subr.mxu0 0.0
      %2820 = vmatpush1.msra.mxu0 %v2454
      %2821 = vmatprep.subr.mxu0 0.0
      %2822 = vmatpush1.msra.mxu0 %v2453
      %2823 = vmatprep.subr.mxu0 0.0
      %2824 = vmatpush1.msra.mxu0 %v2452
      %2825 = vmatprep.subr.mxu0 0.0
      %2826 = vmatpush1.msra.mxu0 %v2451
      %2827 = vmatprep.subr.mxu0 0.0
      %2828 = vmatpush1.msra.mxu0 %v2450
      %2829 = vmatprep.subr.mxu0 0.0
      %2830 = vmatpush1.msra.mxu0 %v2449
      %2831 = vmatprep.subr.mxu0 0.0
      %2832 = vmatpush2.msra.mxu0 %v2480
      %2833 = vmatprep.subr.mxu0 0.0
      %2834 = vmatpush2.msra.mxu0 %v2479
      %2835 = vmatprep.subr.mxu0 0.0
      %2836 = vmatpush2.msra.mxu0 %v2478
      %2837 = vmatprep.subr.mxu0 0.0
      %2838 = vmatpush2.msra.mxu0 %v2477
      %2839 = vmatprep.subr.mxu0 0.0
      %2840 = vmatpush2.msra.mxu0 %v2476
      %2841 = vmatprep.subr.mxu0 0.0
      %2842 = vmatpush2.msra.mxu0 %v2475
      %2843 = vmatprep.subr.mxu0 0.0
      %2844 = vmatpush2.msra.mxu0 %v2474
      %2845 = vmatprep.subr.mxu0 0.0
      %2846 = vmatpush2.msra.mxu0 %v2473
      %2847 = vmatprep.subr.mxu0 0.0
      %2848 = vmatpush2.msra.mxu0 %v2472
      %2849 = vmatprep.subr.mxu0 0.0
      %2850 = vmatpush2.msra.mxu0 %v2471
      %2851 = vmatprep.subr.mxu0 0.0
      %2852 = vmatpush2.msra.mxu0 %v2470
      %2853 = vmatprep.subr.mxu0 0.0
      %2854 = vmatpush2.msra.mxu0 %v2469
      %2855 = vmatprep.subr.mxu0 0.0
      %2856 = vmatpush2.msra.mxu0 %v2468
      %2857 = vmatprep.subr.mxu0 0.0
      %2858 = vmatpush2.msra.mxu0 %v2467
      %2859 = vmatprep.subr.mxu0 0.0
      %2860 = vmatpush2.msra.mxu0 %v2466
      %2861 = vmatprep.subr.mxu0 0.0
      %2862 = vmatpush2.msra.mxu0 %v2465
      %2863 = vmatprep.mubr.f32.mxu0 %v2330
      %2864 = vmatmul.mubr.f32.gmra.mxu0 %v2329
      %v2865 = vpop.f32.mrf.mxu0
      %v2866 = vadd.f32 %v2633, %v2865
      %v2867 = vpop.f32.mrf.mxu0
      %2868 = vdwg.mxu0
      %2869 = vmatprep.subr.mxu0 0.0
      %2870 = vmatpush1.msra.mxu0 0.0
      %2871 = vmatprep.subr.mxu0 0.0
      %2872 = vmatpush1.msra.mxu0 0.0
      %2873 = vmatprep.subr.mxu0 0.0
      %2874 = vmatpush1.msra.mxu0 0.0
      %2875 = vmatprep.subr.mxu0 0.0
      %2876 = vmatpush1.msra.mxu0 0.0
      %2877 = vmatprep.subr.mxu0 0.0
      %2878 = vmatpush1.msra.mxu0 0.0
      %2879 = vmatprep.subr.mxu0 0.0
      %2880 = vmatpush1.msra.mxu0 0.0
      %2881 = vmatprep.subr.mxu0 0.0
      %2882 = vmatpush1.msra.mxu0 0.0
      %2883 = vmatprep.subr.mxu0 0.0
      %2884 = vmatpush1.msra.mxu0 0.0
      %2885 = vmatprep.subr.mxu0 0.0
      %2886 = vmatpush1.msra.mxu0 0.0
      %2887 = vmatprep.subr.mxu0 0.0
      %2888 = vmatpush1.msra.mxu0 0.0
      %2889 = vmatprep.subr.mxu0 0.0
      %2890 = vmatpush1.msra.mxu0 0.0
      %2891 = vmatprep.subr.mxu0 0.0
      %2892 = vmatpush1.msra.mxu0 0.0
      %2893 = vmatprep.subr.mxu0 0.0
      %2894 = vmatpush1.msra.mxu0 0.0
      %2895 = vmatprep.subr.mxu0 0.0
      %2896 = vmatpush1.msra.mxu0 0.0
      %2897 = vmatprep.subr.mxu0 0.0
      %2898 = vmatpush1.msra.mxu0 0.0
      %2899 = vmatprep.subr.mxu0 0.0
      %2900 = vmatpush1.msra.mxu0 %v2481
      %2901 = vmatprep.subr.mxu0 0.0
      %2902 = vmatpush2.msra.mxu0 0.0
      %2903 = vmatprep.subr.mxu0 0.0
      %2904 = vmatpush2.msra.mxu0 0.0
      %2905 = vmatprep.subr.mxu0 0.0
      %2906 = vmatpush2.msra.mxu0 0.0
      %2907 = vmatprep.subr.mxu0 0.0
      %2908 = vmatpush2.msra.mxu0 0.0
      %2909 = vmatprep.subr.mxu0 0.0
      %2910 = vmatpush2.msra.mxu0 0.0
      %2911 = vmatprep.subr.mxu0 0.0
      %2912 = vmatpush2.msra.mxu0 0.0
      %2913 = vmatprep.subr.mxu0 0.0
      %2914 = vmatpush2.msra.mxu0 0.0
      %2915 = vmatprep.subr.mxu0 0.0
      %2916 = vmatpush2.msra.mxu0 0.0
      %2917 = vmatprep.subr.mxu0 0.0
      %2918 = vmatpush2.msra.mxu0 0.0
      %2919 = vmatprep.subr.mxu0 0.0
      %2920 = vmatpush2.msra.mxu0 0.0
      %2921 = vmatprep.subr.mxu0 0.0
      %2922 = vmatpush2.msra.mxu0 0.0
      %2923 = vmatprep.subr.mxu0 0.0
      %2924 = vmatpush2.msra.mxu0 0.0
      %2925 = vmatprep.subr.mxu0 0.0
      %2926 = vmatpush2.msra.mxu0 0.0
      %2927 = vmatprep.subr.mxu0 0.0
      %2928 = vmatpush2.msra.mxu0 0.0
      %2929 = vmatprep.subr.mxu0 0.0
      %2930 = vmatpush2.msra.mxu0 0.0
      %2931 = vmatprep.subr.mxu0 0.0
      %2932 = vmatpush2.msra.mxu0 0.0
      %2933 = vmatprep.mubr.f32.mxu0 0.0
      %2934 = vmatmul.mubr.f32.gmra.mxu0 %v2657
      %v2935 = vpop.f32.mrf.mxu0
      %v2936 = vadd.f32 %v2866, %v2935
      %v2937 = vpop.f32.mrf.mxu0
      %2938 = vdwg.mxu0
      %2939 = vmatprep.subr.mxu0 0.0
      %2940 = vmatpush1.msra.mxu0 %v2497
      %2941 = vmatprep.subr.mxu0 0.0
      %2942 = vmatpush1.msra.mxu0 %v2496
      %2943 = vmatprep.subr.mxu0 0.0
      %2944 = vmatpush1.msra.mxu0 %v2495
      %2945 = vmatprep.subr.mxu0 0.0
      %2946 = vmatpush1.msra.mxu0 %v2494
      %2947 = vmatprep.subr.mxu0 0.0
      %2948 = vmatpush1.msra.mxu0 %v2493
      %2949 = vmatprep.subr.mxu0 0.0
      %2950 = vmatpush1.msra.mxu0 %v2492
      %2951 = vmatprep.subr.mxu0 0.0
      %2952 = vmatpush1.msra.mxu0 %v2491
      %2953 = vmatprep.subr.mxu0 0.0
      %2954 = vmatpush1.msra.mxu0 %v2490
      %2955 = vmatprep.subr.mxu0 0.0
      %2956 = vmatpush1.msra.mxu0 %v2489
      %2957 = vmatprep.subr.mxu0 0.0
      %2958 = vmatpush1.msra.mxu0 %v2488
      %2959 = vmatprep.subr.mxu0 0.0
      %2960 = vmatpush1.msra.mxu0 %v2487
      %2961 = vmatprep.subr.mxu0 0.0
      %2962 = vmatpush1.msra.mxu0 %v2486
      %2963 = vmatprep.subr.mxu0 0.0
      %2964 = vmatpush1.msra.mxu0 %v2485
      %2965 = vmatprep.subr.mxu0 0.0
      %2966 = vmatpush1.msra.mxu0 %v2484
      %2967 = vmatprep.subr.mxu0 0.0
      %2968 = vmatpush1.msra.mxu0 %v2483
      %2969 = vmatprep.subr.mxu0 0.0
      %2970 = vmatpush1.msra.mxu0 %v2482
      %2971 = vmatprep.subr.mxu0 0.0
      %2972 = vmatpush2.msra.mxu0 %v2513
      %2973 = vmatprep.subr.mxu0 0.0
      %2974 = vmatpush2.msra.mxu0 %v2512
      %2975 = vmatprep.subr.mxu0 0.0
      %2976 = vmatpush2.msra.mxu0 %v2511
      %2977 = vmatprep.subr.mxu0 0.0
      %2978 = vmatpush2.msra.mxu0 %v2510
      %2979 = vmatprep.subr.mxu0 0.0
      %2980 = vmatpush2.msra.mxu0 %v2509
      %2981 = vmatprep.subr.mxu0 0.0
      %2982 = vmatpush2.msra.mxu0 %v2508
      %2983 = vmatprep.subr.mxu0 0.0
      %2984 = vmatpush2.msra.mxu0 %v2507
      %2985 = vmatprep.subr.mxu0 0.0
      %2986 = vmatpush2.msra.mxu0 %v2506
      %2987 = vmatprep.subr.mxu0 0.0
      %2988 = vmatpush2.msra.mxu0 %v2505
      %2989 = vmatprep.subr.mxu0 0.0
      %2990 = vmatpush2.msra.mxu0 %v2504
      %2991 = vmatprep.subr.mxu0 0.0
      %2992 = vmatpush2.msra.mxu0 %v2503
      %2993 = vmatprep.subr.mxu0 0.0
      %2994 = vmatpush2.msra.mxu0 %v2502
      %2995 = vmatprep.subr.mxu0 0.0
      %2996 = vmatpush2.msra.mxu0 %v2501
      %2997 = vmatprep.subr.mxu0 0.0
      %2998 = vmatpush2.msra.mxu0 %v2500
      %2999 = vmatprep.subr.mxu0 0.0
      %3000 = vmatpush2.msra.mxu0 %v2499
      %3001 = vmatprep.subr.mxu0 0.0
      %3002 = vmatpush2.msra.mxu0 %v2498
      %3003 = vmatprep.mubr.f32.mxu0 %v2330
      %3004 = vmatmul.mubr.f32.gmra.mxu0 %v2329
      %v3005 = vpop.f32.mrf.mxu0
      %v3006 = vadd.f32 %v2637, %v3005
      %v3007 = vpop.f32.mrf.mxu0
      %3008 = vdwg.mxu0
      %3009 = vmatprep.subr.mxu0 0.0
      %3010 = vmatpush1.msra.mxu0 0.0
      %3011 = vmatprep.subr.mxu0 0.0
      %3012 = vmatpush1.msra.mxu0 0.0
      %3013 = vmatprep.subr.mxu0 0.0
      %3014 = vmatpush1.msra.mxu0 0.0
      %3015 = vmatprep.subr.mxu0 0.0
      %3016 = vmatpush1.msra.mxu0 0.0
      %3017 = vmatprep.subr.mxu0 0.0
      %3018 = vmatpush1.msra.mxu0 0.0
      %3019 = vmatprep.subr.mxu0 0.0
      %3020 = vmatpush1.msra.mxu0 0.0
      %3021 = vmatprep.subr.mxu0 0.0
      %3022 = vmatpush1.msra.mxu0 0.0
      %3023 = vmatprep.subr.mxu0 0.0
      %3024 = vmatpush1.msra.mxu0 0.0
      %3025 = vmatprep.subr.mxu0 0.0
      %3026 = vmatpush1.msra.mxu0 0.0
      %3027 = vmatprep.subr.mxu0 0.0
      %3028 = vmatpush1.msra.mxu0 0.0
      %3029 = vmatprep.subr.mxu0 0.0
      %3030 = vmatpush1.msra.mxu0 0.0
      %3031 = vmatprep.subr.mxu0 0.0
      %3032 = vmatpush1.msra.mxu0 0.0
      %3033 = vmatprep.subr.mxu0 0.0
      %3034 = vmatpush1.msra.mxu0 0.0
      %3035 = vmatprep.subr.mxu0 0.0
      %3036 = vmatpush1.msra.mxu0 0.0
      %3037 = vmatprep.subr.mxu0 0.0
      %3038 = vmatpush1.msra.mxu0 0.0
      %3039 = vmatprep.subr.mxu0 0.0
      %3040 = vmatpush1.msra.mxu0 %v2514
      %3041 = vmatprep.subr.mxu0 0.0
      %3042 = vmatpush2.msra.mxu0 0.0
      %3043 = vmatprep.subr.mxu0 0.0
      %3044 = vmatpush2.msra.mxu0 0.0
      %3045 = vmatprep.subr.mxu0 0.0
      %3046 = vmatpush2.msra.mxu0 0.0
      %3047 = vmatprep.subr.mxu0 0.0
      %3048 = vmatpush2.msra.mxu0 0.0
      %3049 = vmatprep.subr.mxu0 0.0
      %3050 = vmatpush2.msra.mxu0 0.0
      %3051 = vmatprep.subr.mxu0 0.0
      %3052 = vmatpush2.msra.mxu0 0.0
      %3053 = vmatprep.subr.mxu0 0.0
      %3054 = vmatpush2.msra.mxu0 0.0
      %3055 = vmatprep.subr.mxu0 0.0
      %3056 = vmatpush2.msra.mxu0 0.0
      %3057 = vmatprep.subr.mxu0 0.0
      %3058 = vmatpush2.msra.mxu0 0.0
      %3059 = vmatprep.subr.mxu0 0.0
      %3060 = vmatpush2.msra.mxu0 0.0
      %3061 = vmatprep.subr.mxu0 0.0
      %3062 = vmatpush2.msra.mxu0 0.0
      %3063 = vmatprep.subr.mxu0 0.0
      %3064 = vmatpush2.msra.mxu0 0.0
      %3065 = vmatprep.subr.mxu0 0.0
      %3066 = vmatpush2.msra.mxu0 0.0
      %3067 = vmatprep.subr.mxu0 0.0
      %3068 = vmatpush2.msra.mxu0 0.0
      %3069 = vmatprep.subr.mxu0 0.0
      %3070 = vmatpush2.msra.mxu0 0.0
      %3071 = vmatprep.subr.mxu0 0.0
      %3072 = vmatpush2.msra.mxu0 0.0
      %3073 = vmatprep.mubr.f32.mxu0 0.0
      %3074 = vmatmul.mubr.f32.gmra.mxu0 %v2657
      %v3075 = vpop.f32.mrf.mxu0
      %v3076 = vadd.f32 %v3006, %v3075
      %v3077 = vpop.f32.mrf.mxu0
      %3078 = vdwg.mxu0
      %3079 = vmatprep.subr.mxu0 0.0
      %3080 = vmatpush1.msra.mxu0 %v2530
      %3081 = vmatprep.subr.mxu0 0.0
      %3082 = vmatpush1.msra.mxu0 %v2529
      %3083 = vmatprep.subr.mxu0 0.0
      %3084 = vmatpush1.msra.mxu0 %v2528
      %3085 = vmatprep.subr.mxu0 0.0
      %3086 = vmatpush1.msra.mxu0 %v2527
      %3087 = vmatprep.subr.mxu0 0.0
      %3088 = vmatpush1.msra.mxu0 %v2526
      %3089 = vmatprep.subr.mxu0 0.0
      %3090 = vmatpush1.msra.mxu0 %v2525
      %3091 = vmatprep.subr.mxu0 0.0
      %3092 = vmatpush1.msra.mxu0 %v2524
      %3093 = vmatprep.subr.mxu0 0.0
      %3094 = vmatpush1.msra.mxu0 %v2523
      %3095 = vmatprep.subr.mxu0 0.0
      %3096 = vmatpush1.msra.mxu0 %v2522
      %3097 = vmatprep.subr.mxu0 0.0
      %3098 = vmatpush1.msra.mxu0 %v2521
      %3099 = vmatprep.subr.mxu0 0.0
      %3100 = vmatpush1.msra.mxu0 %v2520
      %3101 = vmatprep.subr.mxu0 0.0
      %3102 = vmatpush1.msra.mxu0 %v2519
      %3103 = vmatprep.subr.mxu0 0.0
      %3104 = vmatpush1.msra.mxu0 %v2518
      %3105 = vmatprep.subr.mxu0 0.0
      %3106 = vmatpush1.msra.mxu0 %v2517
      %3107 = vmatprep.subr.mxu0 0.0
      %3108 = vmatpush1.msra.mxu0 %v2516
      %3109 = vmatprep.subr.mxu0 0.0
      %3110 = vmatpush1.msra.mxu0 %v2515
      %3111 = vmatprep.subr.mxu0 0.0
      %3112 = vmatpush2.msra.mxu0 %v2546
      %3113 = vmatprep.subr.mxu0 0.0
      %3114 = vmatpush2.msra.mxu0 %v2545
      %3115 = vmatprep.subr.mxu0 0.0
      %3116 = vmatpush2.msra.mxu0 %v2544
      %3117 = vmatprep.subr.mxu0 0.0
      %3118 = vmatpush2.msra.mxu0 %v2543
      %3119 = vmatprep.subr.mxu0 0.0
      %3120 = vmatpush2.msra.mxu0 %v2542
      %3121 = vmatprep.subr.mxu0 0.0
      %3122 = vmatpush2.msra.mxu0 %v2541
      %3123 = vmatprep.subr.mxu0 0.0
      %3124 = vmatpush2.msra.mxu0 %v2540
      %3125 = vmatprep.subr.mxu0 0.0
      %3126 = vmatpush2.msra.mxu0 %v2539
      %3127 = vmatprep.subr.mxu0 0.0
      %3128 = vmatpush2.msra.mxu0 %v2538
      %3129 = vmatprep.subr.mxu0 0.0
      %3130 = vmatpush2.msra.mxu0 %v2537
      %3131 = vmatprep.subr.mxu0 0.0
      %3132 = vmatpush2.msra.mxu0 %v2536
      %3133 = vmatprep.subr.mxu0 0.0
      %3134 = vmatpush2.msra.mxu0 %v2535
      %3135 = vmatprep.subr.mxu0 0.0
      %3136 = vmatpush2.msra.mxu0 %v2534
      %3137 = vmatprep.subr.mxu0 0.0
      %3138 = vmatpush2.msra.mxu0 %v2533
      %3139 = vmatprep.subr.mxu0 0.0
      %3140 = vmatpush2.msra.mxu0 %v2532
      %3141 = vmatprep.subr.mxu0 0.0
      %3142 = vmatpush2.msra.mxu0 %v2531
      %3143 = vmatprep.mubr.f32.mxu0 %v2330
      %3144 = vmatmul.mubr.f32.gmra.mxu0 %v2329
      %v3145 = vpop.f32.mrf.mxu0
      %v3146 = vadd.f32 %v2641, %v3145
      %v3147 = vpop.f32.mrf.mxu0
      %3148 = vdwg.mxu0
      %3149 = vmatprep.subr.mxu0 0.0
      %3150 = vmatpush1.msra.mxu0 0.0
      %3151 = vmatprep.subr.mxu0 0.0
      %3152 = vmatpush1.msra.mxu0 0.0
      %3153 = vmatprep.subr.mxu0 0.0
      %3154 = vmatpush1.msra.mxu0 0.0
      %3155 = vmatprep.subr.mxu0 0.0
      %3156 = vmatpush1.msra.mxu0 0.0
      %3157 = vmatprep.subr.mxu0 0.0
      %3158 = vmatpush1.msra.mxu0 0.0
      %3159 = vmatprep.subr.mxu0 0.0
      %3160 = vmatpush1.msra.mxu0 0.0
      %3161 = vmatprep.subr.mxu0 0.0
      %3162 = vmatpush1.msra.mxu0 0.0
      %3163 = vmatprep.subr.mxu0 0.0
      %3164 = vmatpush1.msra.mxu0 0.0
      %3165 = vmatprep.subr.mxu0 0.0
      %3166 = vmatpush1.msra.mxu0 0.0
      %3167 = vmatprep.subr.mxu0 0.0
      %3168 = vmatpush1.msra.mxu0 0.0
      %3169 = vmatprep.subr.mxu0 0.0
      %3170 = vmatpush1.msra.mxu0 0.0
      %3171 = vmatprep.subr.mxu0 0.0
      %3172 = vmatpush1.msra.mxu0 0.0
      %3173 = vmatprep.subr.mxu0 0.0
      %3174 = vmatpush1.msra.mxu0 0.0
      %3175 = vmatprep.subr.mxu0 0.0
      %3176 = vmatpush1.msra.mxu0 0.0
      %3177 = vmatprep.subr.mxu0 0.0
      %3178 = vmatpush1.msra.mxu0 0.0
      %3179 = vmatprep.subr.mxu0 0.0
      %3180 = vmatpush1.msra.mxu0 %v2547
      %3181 = vmatprep.subr.mxu0 0.0
      %3182 = vmatpush2.msra.mxu0 0.0
      %3183 = vmatprep.subr.mxu0 0.0
      %3184 = vmatpush2.msra.mxu0 0.0
      %3185 = vmatprep.subr.mxu0 0.0
      %3186 = vmatpush2.msra.mxu0 0.0
      %3187 = vmatprep.subr.mxu0 0.0
      %3188 = vmatpush2.msra.mxu0 0.0
      %3189 = vmatprep.subr.mxu0 0.0
      %3190 = vmatpush2.msra.mxu0 0.0
      %3191 = vmatprep.subr.mxu0 0.0
      %3192 = vmatpush2.msra.mxu0 0.0
      %3193 = vmatprep.subr.mxu0 0.0
      %3194 = vmatpush2.msra.mxu0 0.0
      %3195 = vmatprep.subr.mxu0 0.0
      %3196 = vmatpush2.msra.mxu0 0.0
      %3197 = vmatprep.subr.mxu0 0.0
      %3198 = vmatpush2.msra.mxu0 0.0
      %3199 = vmatprep.subr.mxu0 0.0
      %3200 = vmatpush2.msra.mxu0 0.0
      %3201 = vmatprep.subr.mxu0 0.0
      %3202 = vmatpush2.msra.mxu0 0.0
      %3203 = vmatprep.subr.mxu0 0.0
      %3204 = vmatpush2.msra.mxu0 0.0
      %3205 = vmatprep.subr.mxu0 0.0
      %3206 = vmatpush2.msra.mxu0 0.0
      %3207 = vmatprep.subr.mxu0 0.0
      %3208 = vmatpush2.msra.mxu0 0.0
      %3209 = vmatprep.subr.mxu0 0.0
      %3210 = vmatpush2.msra.mxu0 0.0
      %3211 = vmatprep.subr.mxu0 0.0
      %3212 = vmatpush2.msra.mxu0 0.0
      %3213 = vmatprep.mubr.f32.mxu0 0.0
      %3214 = vmatmul.mubr.f32.gmra.mxu0 %v2657
      %v3215 = vpop.f32.mrf.mxu0
      %v3216 = vadd.f32 %v3146, %v3215
      %v3217 = vpop.f32.mrf.mxu0
      %3218 = vdwg.mxu0
      %3219 = vmatprep.subr.mxu0 0.0
      %3220 = vmatpush1.msra.mxu0 %v2563
      %3221 = vmatprep.subr.mxu0 0.0
      %3222 = vmatpush1.msra.mxu0 %v2562
      %3223 = vmatprep.subr.mxu0 0.0
      %3224 = vmatpush1.msra.mxu0 %v2561
      %3225 = vmatprep.subr.mxu0 0.0
      %3226 = vmatpush1.msra.mxu0 %v2560
      %3227 = vmatprep.subr.mxu0 0.0
      %3228 = vmatpush1.msra.mxu0 %v2559
      %3229 = vmatprep.subr.mxu0 0.0
      %3230 = vmatpush1.msra.mxu0 %v2558
      %3231 = vmatprep.subr.mxu0 0.0
      %3232 = vmatpush1.msra.mxu0 %v2557
      %3233 = vmatprep.subr.mxu0 0.0
      %3234 = vmatpush1.msra.mxu0 %v2556
      %3235 = vmatprep.subr.mxu0 0.0
      %3236 = vmatpush1.msra.mxu0 %v2555
      %3237 = vmatprep.subr.mxu0 0.0
      %3238 = vmatpush1.msra.mxu0 %v2554
      %3239 = vmatprep.subr.mxu0 0.0
      %3240 = vmatpush1.msra.mxu0 %v2553
      %3241 = vmatprep.subr.mxu0 0.0
      %3242 = vmatpush1.msra.mxu0 %v2552
      %3243 = vmatprep.subr.mxu0 0.0
      %3244 = vmatpush1.msra.mxu0 %v2551
      %3245 = vmatprep.subr.mxu0 0.0
      %3246 = vmatpush1.msra.mxu0 %v2550
      %3247 = vmatprep.subr.mxu0 0.0
      %3248 = vmatpush1.msra.mxu0 %v2549
      %3249 = vmatprep.subr.mxu0 0.0
      %3250 = vmatpush1.msra.mxu0 %v2548
      %3251 = vmatprep.subr.mxu0 0.0
      %3252 = vmatpush2.msra.mxu0 %v2579
      %3253 = vmatprep.subr.mxu0 0.0
      %3254 = vmatpush2.msra.mxu0 %v2578
      %3255 = vmatprep.subr.mxu0 0.0
      %3256 = vmatpush2.msra.mxu0 %v2577
      %3257 = vmatprep.subr.mxu0 0.0
      %3258 = vmatpush2.msra.mxu0 %v2576
      %3259 = vmatprep.subr.mxu0 0.0
      %3260 = vmatpush2.msra.mxu0 %v2575
      %3261 = vmatprep.subr.mxu0 0.0
      %3262 = vmatpush2.msra.mxu0 %v2574
      %3263 = vmatprep.subr.mxu0 0.0
      %3264 = vmatpush2.msra.mxu0 %v2573
      %3265 = vmatprep.subr.mxu0 0.0
      %3266 = vmatpush2.msra.mxu0 %v2572
      %3267 = vmatprep.subr.mxu0 0.0
      %3268 = vmatpush2.msra.mxu0 %v2571
      %3269 = vmatprep.subr.mxu0 0.0
      %3270 = vmatpush2.msra.mxu0 %v2570
      %3271 = vmatprep.subr.mxu0 0.0
      %3272 = vmatpush2.msra.mxu0 %v2569
      %3273 = vmatprep.subr.mxu0 0.0
      %3274 = vmatpush2.msra.mxu0 %v2568
      %3275 = vmatprep.subr.mxu0 0.0
      %3276 = vmatpush2.msra.mxu0 %v2567
      %3277 = vmatprep.subr.mxu0 0.0
      %3278 = vmatpush2.msra.mxu0 %v2566
      %3279 = vmatprep.subr.mxu0 0.0
      %3280 = vmatpush2.msra.mxu0 %v2565
      %3281 = vmatprep.subr.mxu0 0.0
      %3282 = vmatpush2.msra.mxu0 %v2564
      %3283 = vmatprep.mubr.f32.mxu0 %v2330
      %3284 = vmatmul.mubr.f32.gmra.mxu0 %v2329
      %v3285 = vpop.f32.mrf.mxu0
      %v3286 = vadd.f32 %v2645, %v3285
      %v3287 = vpop.f32.mrf.mxu0
      %3288 = vdwg.mxu0
      %3289 = vmatprep.subr.mxu0 0.0
      %3290 = vmatpush1.msra.mxu0 0.0
      %3291 = vmatprep.subr.mxu0 0.0
      %3292 = vmatpush1.msra.mxu0 0.0
      %3293 = vmatprep.subr.mxu0 0.0
      %3294 = vmatpush1.msra.mxu0 0.0
      %3295 = vmatprep.subr.mxu0 0.0
      %3296 = vmatpush1.msra.mxu0 0.0
      %3297 = vmatprep.subr.mxu0 0.0
      %3298 = vmatpush1.msra.mxu0 0.0
      %3299 = vmatprep.subr.mxu0 0.0
      %3300 = vmatpush1.msra.mxu0 0.0
      %3301 = vmatprep.subr.mxu0 0.0
      %3302 = vmatpush1.msra.mxu0 0.0
      %3303 = vmatprep.subr.mxu0 0.0
      %3304 = vmatpush1.msra.mxu0 0.0
      %3305 = vmatprep.subr.mxu0 0.0
      %3306 = vmatpush1.msra.mxu0 0.0
      %3307 = vmatprep.subr.mxu0 0.0
      %3308 = vmatpush1.msra.mxu0 0.0
      %3309 = vmatprep.subr.mxu0 0.0
      %3310 = vmatpush1.msra.mxu0 0.0
      %3311 = vmatprep.subr.mxu0 0.0
      %3312 = vmatpush1.msra.mxu0 0.0
      %3313 = vmatprep.subr.mxu0 0.0
      %3314 = vmatpush1.msra.mxu0 0.0
      %3315 = vmatprep.subr.mxu0 0.0
      %3316 = vmatpush1.msra.mxu0 0.0
      %3317 = vmatprep.subr.mxu0 0.0
      %3318 = vmatpush1.msra.mxu0 0.0
      %3319 = vmatprep.subr.mxu0 0.0
      %3320 = vmatpush1.msra.mxu0 %v2580
      %3321 = vmatprep.subr.mxu0 0.0
      %3322 = vmatpush2.msra.mxu0 0.0
      %3323 = vmatprep.subr.mxu0 0.0
      %3324 = vmatpush2.msra.mxu0 0.0
      %3325 = vmatprep.subr.mxu0 0.0
      %3326 = vmatpush2.msra.mxu0 0.0
      %3327 = vmatprep.subr.mxu0 0.0
      %3328 = vmatpush2.msra.mxu0 0.0
      %3329 = vmatprep.subr.mxu0 0.0
      %3330 = vmatpush2.msra.mxu0 0.0
      %3331 = vmatprep.subr.mxu0 0.0
      %3332 = vmatpush2.msra.mxu0 0.0
      %3333 = vmatprep.subr.mxu0 0.0
      %3334 = vmatpush2.msra.mxu0 0.0
      %3335 = vmatprep.subr.mxu0 0.0
      %3336 = vmatpush2.msra.mxu0 0.0
      %3337 = vmatprep.subr.mxu0 0.0
      %3338 = vmatpush2.msra.mxu0 0.0
      %3339 = vmatprep.subr.mxu0 0.0
      %3340 = vmatpush2.msra.mxu0 0.0
      %3341 = vmatprep.subr.mxu0 0.0
      %3342 = vmatpush2.msra.mxu0 0.0
      %3343 = vmatprep.subr.mxu0 0.0
      %3344 = vmatpush2.msra.mxu0 0.0
      %3345 = vmatprep.subr.mxu0 0.0
      %3346 = vmatpush2.msra.mxu0 0.0
      %3347 = vmatprep.subr.mxu0 0.0
      %3348 = vmatpush2.msra.mxu0 0.0
      %3349 = vmatprep.subr.mxu0 0.0
      %3350 = vmatpush2.msra.mxu0 0.0
      %3351 = vmatprep.subr.mxu0 0.0
      %3352 = vmatpush2.msra.mxu0 0.0
      %3353 = vmatprep.mubr.f32.mxu0 0.0
      %3354 = vmatmul.mubr.f32.gmra.mxu0 %v2657
      %v3355 = vpop.f32.mrf.mxu0
      %v3356 = vadd.f32 %v3286, %v3355
      %v3357 = vpop.f32.mrf.mxu0
      %3358 = vdwg.mxu0
      %3359 = vmatprep.subr.mxu0 0.0
      %3360 = vmatpush1.msra.mxu0 %v2596
      %3361 = vmatprep.subr.mxu0 0.0
      %3362 = vmatpush1.msra.mxu0 %v2595
      %3363 = vmatprep.subr.mxu0 0.0
      %3364 = vmatpush1.msra.mxu0 %v2594
      %3365 = vmatprep.subr.mxu0 0.0
      %3366 = vmatpush1.msra.mxu0 %v2593
      %3367 = vmatprep.subr.mxu0 0.0
      %3368 = vmatpush1.msra.mxu0 %v2592
      %3369 = vmatprep.subr.mxu0 0.0
      %3370 = vmatpush1.msra.mxu0 %v2591
      %3371 = vmatprep.subr.mxu0 0.0
      %3372 = vmatpush1.msra.mxu0 %v2590
      %3373 = vmatprep.subr.mxu0 0.0
      %3374 = vmatpush1.msra.mxu0 %v2589
      %3375 = vmatprep.subr.mxu0 0.0
      %3376 = vmatpush1.msra.mxu0 %v2588
      %3377 = vmatprep.subr.mxu0 0.0
      %3378 = vmatpush1.msra.mxu0 %v2587
      %3379 = vmatprep.subr.mxu0 0.0
      %3380 = vmatpush1.msra.mxu0 %v2586
      %3381 = vmatprep.subr.mxu0 0.0
      %3382 = vmatpush1.msra.mxu0 %v2585
      %3383 = vmatprep.subr.mxu0 0.0
      %3384 = vmatpush1.msra.mxu0 %v2584
      %3385 = vmatprep.subr.mxu0 0.0
      %3386 = vmatpush1.msra.mxu0 %v2583
      %3387 = vmatprep.subr.mxu0 0.0
      %3388 = vmatpush1.msra.mxu0 %v2582
      %3389 = vmatprep.subr.mxu0 0.0
      %3390 = vmatpush1.msra.mxu0 %v2581
      %3391 = vmatprep.subr.mxu0 0.0
      %3392 = vmatpush2.msra.mxu0 %v2612
      %3393 = vmatprep.subr.mxu0 0.0
      %3394 = vmatpush2.msra.mxu0 %v2611
      %3395 = vmatprep.subr.mxu0 0.0
      %3396 = vmatpush2.msra.mxu0 %v2610
      %3397 = vmatprep.subr.mxu0 0.0
      %3398 = vmatpush2.msra.mxu0 %v2609
      %3399 = vmatprep.subr.mxu0 0.0
      %3400 = vmatpush2.msra.mxu0 %v2608
      %3401 = vmatprep.subr.mxu0 0.0
      %3402 = vmatpush2.msra.mxu0 %v2607
      %3403 = vmatprep.subr.mxu0 0.0
      %3404 = vmatpush2.msra.mxu0 %v2606
      %3405 = vmatprep.subr.mxu0 0.0
      %3406 = vmatpush2.msra.mxu0 %v2605
      %3407 = vmatprep.subr.mxu0 0.0
      %3408 = vmatpush2.msra.mxu0 %v2604
      %3409 = vmatprep.subr.mxu0 0.0
      %3410 = vmatpush2.msra.mxu0 %v2603
      %3411 = vmatprep.subr.mxu0 0.0
      %3412 = vmatpush2.msra.mxu0 %v2602
      %3413 = vmatprep.subr.mxu0 0.0
      %3414 = vmatpush2.msra.mxu0 %v2601
      %3415 = vmatprep.subr.mxu0 0.0
      %3416 = vmatpush2.msra.mxu0 %v2600
      %3417 = vmatprep.subr.mxu0 0.0
      %3418 = vmatpush2.msra.mxu0 %v2599
      %3419 = vmatprep.subr.mxu0 0.0
      %3420 = vmatpush2.msra.mxu0 %v2598
      %3421 = vmatprep.subr.mxu0 0.0
      %3422 = vmatpush2.msra.mxu0 %v2597
      %3423 = vmatprep.mubr.f32.mxu0 %v2330
      %3424 = vmatmul.mubr.f32.gmra.mxu0 %v2329
      %v3425 = vpop.f32.mrf.mxu0
      %v3426 = vadd.f32 %v2649, %v3425
      %v3427 = vpop.f32.mrf.mxu0
      %3428 = vdwg.mxu0
      %3429 = vmatprep.subr.mxu0 0.0
      %3430 = vmatpush1.msra.mxu0 0.0
      %3431 = vmatprep.subr.mxu0 0.0
      %3432 = vmatpush1.msra.mxu0 0.0
      %3433 = vmatprep.subr.mxu0 0.0
      %3434 = vmatpush1.msra.mxu0 0.0
      %3435 = vmatprep.subr.mxu0 0.0
      %3436 = vmatpush1.msra.mxu0 0.0
      %3437 = vmatprep.subr.mxu0 0.0
      %3438 = vmatpush1.msra.mxu0 0.0
      %3439 = vmatprep.subr.mxu0 0.0
      %3440 = vmatpush1.msra.mxu0 0.0
      %3441 = vmatprep.subr.mxu0 0.0
      %3442 = vmatpush1.msra.mxu0 0.0
      %3443 = vmatprep.subr.mxu0 0.0
      %3444 = vmatpush1.msra.mxu0 0.0
      %3445 = vmatprep.subr.mxu0 0.0
      %3446 = vmatpush1.msra.mxu0 0.0
      %3447 = vmatprep.subr.mxu0 0.0
      %3448 = vmatpush1.msra.mxu0 0.0
      %3449 = vmatprep.subr.mxu0 0.0
      %3450 = vmatpush1.msra.mxu0 0.0
      %3451 = vmatprep.subr.mxu0 0.0
      %3452 = vmatpush1.msra.mxu0 0.0
      %3453 = vmatprep.subr.mxu0 0.0
      %3454 = vmatpush1.msra.mxu0 0.0
      %3455 = vmatprep.subr.mxu0 0.0
      %3456 = vmatpush1.msra.mxu0 0.0
      %3457 = vmatprep.subr.mxu0 0.0
      %3458 = vmatpush1.msra.mxu0 0.0
      %3459 = vmatprep.subr.mxu0 0.0
      %3460 = vmatpush1.msra.mxu0 %v2613
      %3461 = vmatprep.subr.mxu0 0.0
      %3462 = vmatpush2.msra.mxu0 0.0
      %3463 = vmatprep.subr.mxu0 0.0
      %3464 = vmatpush2.msra.mxu0 0.0
      %3465 = vmatprep.subr.mxu0 0.0
      %3466 = vmatpush2.msra.mxu0 0.0
      %3467 = vmatprep.subr.mxu0 0.0
      %3468 = vmatpush2.msra.mxu0 0.0
      %3469 = vmatprep.subr.mxu0 0.0
      %3470 = vmatpush2.msra.mxu0 0.0
      %3471 = vmatprep.subr.mxu0 0.0
      %3472 = vmatpush2.msra.mxu0 0.0
      %3473 = vmatprep.subr.mxu0 0.0
      %3474 = vmatpush2.msra.mxu0 0.0
      %3475 = vmatprep.subr.mxu0 0.0
      %3476 = vmatpush2.msra.mxu0 0.0
      %3477 = vmatprep.subr.mxu0 0.0
      %3478 = vmatpush2.msra.mxu0 0.0
      %3479 = vmatprep.subr.mxu0 0.0
      %3480 = vmatpush2.msra.mxu0 0.0
      %3481 = vmatprep.subr.mxu0 0.0
      %3482 = vmatpush2.msra.mxu0 0.0
      %3483 = vmatprep.subr.mxu0 0.0
      %3484 = vmatpush2.msra.mxu0 0.0
      %3485 = vmatprep.subr.mxu0 0.0
      %3486 = vmatpush2.msra.mxu0 0.0
      %3487 = vmatprep.subr.mxu0 0.0
      %3488 = vmatpush2.msra.mxu0 0.0
      %3489 = vmatprep.subr.mxu0 0.0
      %3490 = vmatpush2.msra.mxu0 0.0
      %3491 = vmatprep.subr.mxu0 0.0
      %3492 = vmatpush2.msra.mxu0 0.0
      %3493 = vmatprep.mubr.f32.mxu0 0.0
      %3494 = vmatmul.mubr.f32.gmra.mxu0 %v2657
      %v3495 = vpop.f32.mrf.mxu0
      %v3496 = vadd.f32 %v3426, %v3495
      %v3497 = vpop.f32.mrf.mxu0
      %3498 = vdwg.mxu0
      %v3499 = vmax.f32 %v2796, 0.0
      %v3500 = vmax.f32 %v2936, 0.0
      %v3501 = vmax.f32 %v3076, 0.0
      %v3502 = vmax.f32 %v3216, 0.0
      %v3503 = vmax.f32 %v3356, 0.0
      %v3504 = vmax.f32 %v3496, 0.0
      %v3505 = vld [vmem:[#allocation2] sm:$0x3]
      %v3506 = vld [vmem:[#allocation2 + $0x2] sm:$0x3]
      %v3507 = vld [vmem:[#allocation2 + $0x4] sm:$0x3]
      %v3508 = vld [vmem:[#allocation2 + $0x6] sm:$0x3]
      %v3509 = vld [vmem:[#allocation2 + $0x8] sm:$0x3]
      %v3510 = vld [vmem:[#allocation2 + $0xa] sm:$0x3]
      %v3511 = vld [vmem:[%s57] sm:$0xff]
      %v3512 = vld [vmem:[%s57 + $0x8] sm:$0xff]
      %v3513 = vld [vmem:[%s57 + $0x10] sm:$0xff]
      %v3514 = vld [vmem:[%s57 + $0x18] sm:$0xff]
      %v3515 = vld [vmem:[%s57 + $0x20] sm:$0xff]
      %v3516 = vld [vmem:[%s57 + $0x28] sm:$0xff]
      %v3517 = vld [vmem:[%s57 + $0x30] sm:$0xff]
      %v3518 = vld [vmem:[%s57 + $0x38] sm:$0xff]
      %v3519 = vld [vmem:[%s57 + $0x40] sm:$0xff]
      %v3520 = vld [vmem:[%s57 + $0x48] sm:$0xff]
      %v3521 = vld [vmem:[%s57 + $0x50] sm:$0xff]
      %v3522 = vld [vmem:[%s57 + $0x58] sm:$0xff]
      %v3523 = vld [vmem:[%s57 + $0x60] sm:$0xff]
      %v3524 = vld [vmem:[%s57 + $0x68] sm:$0xff]
      %v3525 = vld [vmem:[%s57 + $0x70] sm:$0xff]
      %v3526 = vld [vmem:[%s57 + $0x78] sm:$0xff]
      %v3527 = vld [vmem:[%s57 + $0x80] sm:$0xff]
      %v3528 = vld [vmem:[%s57 + $0x88] sm:$0xff]
      %v3529 = vld [vmem:[%s57 + $0x90] sm:$0xff]
      %v3530 = vld [vmem:[%s57 + $0x98] sm:$0xff]
      %v3531 = vld [vmem:[%s57 + $0xa0] sm:$0xff]
      %v3532 = vld [vmem:[%s57 + $0xa8] sm:$0xff]
      %v3533 = vld [vmem:[%s57 + $0xb0] sm:$0xff]
      %v3534 = vld [vmem:[%s57 + $0xb8] sm:$0xff]
      %v3535 = vld [vmem:[%s69] sm:$0x1]
      %v3536 = vld [vmem:[%s69 + $0x1] sm:$0x1]
      %v3537 = vld [vmem:[%s69 + $0x2] sm:$0x1]
      %v3538 = vld [vmem:[%s69 + $0x3] sm:$0x1]
      %v3539 = vld [vmem:[%s69 + $0x4] sm:$0x1]
      %v3540 = vld [vmem:[%s69 + $0x5] sm:$0x1]
      %v3547 = vlaneseq
      %v3548 = vshrl.u32 %v3547, 7
      %v3549 = vsub.s32 0, %v3548
      %v3550 = vrot.slane %v3535, %v3549
      %v3551 = vlaneseq
      %v3552 = vshrl.u32 %v3551, 7
      %v3553 = vsub.s32 0, %v3552
      %v3554 = vrot.slane %v3536, %v3553
      %v3555 = vlaneseq
      %v3556 = vshrl.u32 %v3555, 7
      %v3557 = vsub.s32 0, %v3556
      %v3558 = vrot.slane %v3537, %v3557
      %v3559 = vlaneseq
      %v3560 = vshrl.u32 %v3559, 7
      %v3561 = vsub.s32 0, %v3560
      %v3562 = vrot.slane %v3538, %v3561
      %v3563 = vlaneseq
      %v3564 = vshrl.u32 %v3563, 7
      %v3565 = vsub.s32 0, %v3564
      %v3566 = vrot.slane %v3539, %v3565
      %v3567 = vlaneseq
      %v3568 = vshrl.u32 %v3567, 7
      %v3569 = vsub.s32 0, %v3568
      %v3570 = vrot.slane %v3540, %v3569
      %vm3577 = vcmask 261120
      %v3579 = vsel %vm3577, %v3499, 0
      %3581 = vmatprep.subr.mxu0 0.0
      %3582 = vmatpush1.msra.mxu0 0.0
      %3583 = vmatprep.subr.mxu0 0.0
      %3584 = vmatpush1.msra.mxu0 0.0
      %3585 = vmatprep.subr.mxu0 0.0
      %3586 = vmatpush1.msra.mxu0 0.0
      %3587 = vmatprep.subr.mxu0 0.0
      %3588 = vmatpush1.msra.mxu0 0.0
      %3589 = vmatprep.subr.mxu0 0.0
      %3590 = vmatpush1.msra.mxu0 0.0
      %3591 = vmatprep.subr.mxu0 0.0
      %3592 = vmatpush1.msra.mxu0 0.0
      %3593 = vmatprep.subr.mxu0 0.0
      %3594 = vmatpush1.msra.mxu0 0.0
      %3595 = vmatprep.subr.mxu0 0.0
      %3596 = vmatpush1.msra.mxu0 0.0
      %3597 = vmatprep.subr.mxu0 0.0
      %3598 = vmatpush1.msra.mxu0 0.0
      %3599 = vmatprep.subr.mxu0 0.0
      %3600 = vmatpush1.msra.mxu0 0.0
      %3601 = vmatprep.subr.mxu0 0.0
      %3602 = vmatpush1.msra.mxu0 0.0
      %3603 = vmatprep.subr.mxu0 0.0
      %3604 = vmatpush1.msra.mxu0 0.0
      %3605 = vmatprep.subr.mxu0 0.0
      %3606 = vmatpush1.msra.mxu0 %v3514
      %3607 = vmatprep.subr.mxu0 0.0
      %3608 = vmatpush1.msra.mxu0 %v3513
      %3609 = vmatprep.subr.mxu0 0.0
      %3610 = vmatpush1.msra.mxu0 %v3512
      %3611 = vmatprep.subr.mxu0 0.0
      %3612 = vmatpush1.msra.mxu0 %v3511
      %3613 = vmatprep.subr.mxu0 0.0
      %3614 = vmatpush2.msra.mxu0 0.0
      %3615 = vmatprep.subr.mxu0 0.0
      %3616 = vmatpush2.msra.mxu0 0.0
      %3617 = vmatprep.subr.mxu0 0.0
      %3618 = vmatpush2.msra.mxu0 0.0
      %3619 = vmatprep.subr.mxu0 0.0
      %3620 = vmatpush2.msra.mxu0 0.0
      %3621 = vmatprep.subr.mxu0 0.0
      %3622 = vmatpush2.msra.mxu0 0.0
      %3623 = vmatprep.subr.mxu0 0.0
      %3624 = vmatpush2.msra.mxu0 0.0
      %3625 = vmatprep.subr.mxu0 0.0
      %3626 = vmatpush2.msra.mxu0 0.0
      %3627 = vmatprep.subr.mxu0 0.0
      %3628 = vmatpush2.msra.mxu0 0.0
      %3629 = vmatprep.subr.mxu0 0.0
      %3630 = vmatpush2.msra.mxu0 0.0
      %3631 = vmatprep.subr.mxu0 0.0
      %3632 = vmatpush2.msra.mxu0 0.0
      %3633 = vmatprep.subr.mxu0 0.0
      %3634 = vmatpush2.msra.mxu0 0.0
      %3635 = vmatprep.subr.mxu0 0.0
      %3636 = vmatpush2.msra.mxu0 0.0
      %3637 = vmatprep.subr.mxu0 0.0
      %3638 = vmatpush2.msra.mxu0 0.0
      %3639 = vmatprep.subr.mxu0 0.0
      %3640 = vmatpush2.msra.mxu0 0.0
      %3641 = vmatprep.subr.mxu0 0.0
      %3642 = vmatpush2.msra.mxu0 0.0
      %3643 = vmatprep.subr.mxu0 0.0
      %3644 = vmatpush2.msra.mxu0 0.0
      %3645 = vmatprep.mubr.f32.mxu0 0.0
      %3646 = vmatmul.mubr.f32.gmra.mxu0 %v3579
      %v3647 = vpop.f32.mrf.mxu0
      %v3648 = vadd.f32 %v3550, %v3647
      %v3649 = vpop.f32.mrf.mxu0
      %3650 = vdwg.mxu0
      %v3652 = vsel %vm3577, %v3500, 0
      %3654 = vmatprep.subr.mxu0 0.0
      %3655 = vmatpush1.msra.mxu0 0.0
      %3656 = vmatprep.subr.mxu0 0.0
      %3657 = vmatpush1.msra.mxu0 0.0
      %3658 = vmatprep.subr.mxu0 0.0
      %3659 = vmatpush1.msra.mxu0 0.0
      %3660 = vmatprep.subr.mxu0 0.0
      %3661 = vmatpush1.msra.mxu0 0.0
      %3662 = vmatprep.subr.mxu0 0.0
      %3663 = vmatpush1.msra.mxu0 0.0
      %3664 = vmatprep.subr.mxu0 0.0
      %3665 = vmatpush1.msra.mxu0 0.0
      %3666 = vmatprep.subr.mxu0 0.0
      %3667 = vmatpush1.msra.mxu0 0.0
      %3668 = vmatprep.subr.mxu0 0.0
      %3669 = vmatpush1.msra.mxu0 0.0
      %3670 = vmatprep.subr.mxu0 0.0
      %3671 = vmatpush1.msra.mxu0 0.0
      %3672 = vmatprep.subr.mxu0 0.0
      %3673 = vmatpush1.msra.mxu0 0.0
      %3674 = vmatprep.subr.mxu0 0.0
      %3675 = vmatpush1.msra.mxu0 0.0
      %3676 = vmatprep.subr.mxu0 0.0
      %3677 = vmatpush1.msra.mxu0 0.0
      %3678 = vmatprep.subr.mxu0 0.0
      %3679 = vmatpush1.msra.mxu0 %v3518
      %3680 = vmatprep.subr.mxu0 0.0
      %3681 = vmatpush1.msra.mxu0 %v3517
      %3682 = vmatprep.subr.mxu0 0.0
      %3683 = vmatpush1.msra.mxu0 %v3516
      %3684 = vmatprep.subr.mxu0 0.0
      %3685 = vmatpush1.msra.mxu0 %v3515
      %3686 = vmatprep.subr.mxu0 0.0
      %3687 = vmatpush2.msra.mxu0 0.0
      %3688 = vmatprep.subr.mxu0 0.0
      %3689 = vmatpush2.msra.mxu0 0.0
      %3690 = vmatprep.subr.mxu0 0.0
      %3691 = vmatpush2.msra.mxu0 0.0
      %3692 = vmatprep.subr.mxu0 0.0
      %3693 = vmatpush2.msra.mxu0 0.0
      %3694 = vmatprep.subr.mxu0 0.0
      %3695 = vmatpush2.msra.mxu0 0.0
      %3696 = vmatprep.subr.mxu0 0.0
      %3697 = vmatpush2.msra.mxu0 0.0
      %3698 = vmatprep.subr.mxu0 0.0
      %3699 = vmatpush2.msra.mxu0 0.0
      %3700 = vmatprep.subr.mxu0 0.0
      %3701 = vmatpush2.msra.mxu0 0.0
      %3702 = vmatprep.subr.mxu0 0.0
      %3703 = vmatpush2.msra.mxu0 0.0
      %3704 = vmatprep.subr.mxu0 0.0
      %3705 = vmatpush2.msra.mxu0 0.0
      %3706 = vmatprep.subr.mxu0 0.0
      %3707 = vmatpush2.msra.mxu0 0.0
      %3708 = vmatprep.subr.mxu0 0.0
      %3709 = vmatpush2.msra.mxu0 0.0
      %3710 = vmatprep.subr.mxu0 0.0
      %3711 = vmatpush2.msra.mxu0 0.0
      %3712 = vmatprep.subr.mxu0 0.0
      %3713 = vmatpush2.msra.mxu0 0.0
      %3714 = vmatprep.subr.mxu0 0.0
      %3715 = vmatpush2.msra.mxu0 0.0
      %3716 = vmatprep.subr.mxu0 0.0
      %3717 = vmatpush2.msra.mxu0 0.0
      %3718 = vmatprep.mubr.f32.mxu0 0.0
      %3719 = vmatmul.mubr.f32.gmra.mxu0 %v3652
      %v3720 = vpop.f32.mrf.mxu0
      %v3721 = vadd.f32 %v3554, %v3720
      %v3722 = vpop.f32.mrf.mxu0
      %3723 = vdwg.mxu0
      %v3725 = vsel %vm3577, %v3501, 0
      %3727 = vmatprep.subr.mxu0 0.0
      %3728 = vmatpush1.msra.mxu0 0.0
      %3729 = vmatprep.subr.mxu0 0.0
      %3730 = vmatpush1.msra.mxu0 0.0
      %3731 = vmatprep.subr.mxu0 0.0
      %3732 = vmatpush1.msra.mxu0 0.0
      %3733 = vmatprep.subr.mxu0 0.0
      %3734 = vmatpush1.msra.mxu0 0.0
      %3735 = vmatprep.subr.mxu0 0.0
      %3736 = vmatpush1.msra.mxu0 0.0
      %3737 = vmatprep.subr.mxu0 0.0
      %3738 = vmatpush1.msra.mxu0 0.0
      %3739 = vmatprep.subr.mxu0 0.0
      %3740 = vmatpush1.msra.mxu0 0.0
      %3741 = vmatprep.subr.mxu0 0.0
      %3742 = vmatpush1.msra.mxu0 0.0
      %3743 = vmatprep.subr.mxu0 0.0
      %3744 = vmatpush1.msra.mxu0 0.0
      %3745 = vmatprep.subr.mxu0 0.0
      %3746 = vmatpush1.msra.mxu0 0.0
      %3747 = vmatprep.subr.mxu0 0.0
      %3748 = vmatpush1.msra.mxu0 0.0
      %3749 = vmatprep.subr.mxu0 0.0
      %3750 = vmatpush1.msra.mxu0 0.0
      %3751 = vmatprep.subr.mxu0 0.0
      %3752 = vmatpush1.msra.mxu0 %v3522
      %3753 = vmatprep.subr.mxu0 0.0
      %3754 = vmatpush1.msra.mxu0 %v3521
      %3755 = vmatprep.subr.mxu0 0.0
      %3756 = vmatpush1.msra.mxu0 %v3520
      %3757 = vmatprep.subr.mxu0 0.0
      %3758 = vmatpush1.msra.mxu0 %v3519
      %3759 = vmatprep.subr.mxu0 0.0
      %3760 = vmatpush2.msra.mxu0 0.0
      %3761 = vmatprep.subr.mxu0 0.0
      %3762 = vmatpush2.msra.mxu0 0.0
      %3763 = vmatprep.subr.mxu0 0.0
      %3764 = vmatpush2.msra.mxu0 0.0
      %3765 = vmatprep.subr.mxu0 0.0
      %3766 = vmatpush2.msra.mxu0 0.0
      %3767 = vmatprep.subr.mxu0 0.0
      %3768 = vmatpush2.msra.mxu0 0.0
      %3769 = vmatprep.subr.mxu0 0.0
      %3770 = vmatpush2.msra.mxu0 0.0
      %3771 = vmatprep.subr.mxu0 0.0
      %3772 = vmatpush2.msra.mxu0 0.0
      %3773 = vmatprep.subr.mxu0 0.0
      %3774 = vmatpush2.msra.mxu0 0.0
      %3775 = vmatprep.subr.mxu0 0.0
      %3776 = vmatpush2.msra.mxu0 0.0
      %3777 = vmatprep.subr.mxu0 0.0
      %3778 = vmatpush2.msra.mxu0 0.0
      %3779 = vmatprep.subr.mxu0 0.0
      %3780 = vmatpush2.msra.mxu0 0.0
      %3781 = vmatprep.subr.mxu0 0.0
      %3782 = vmatpush2.msra.mxu0 0.0
      %3783 = vmatprep.subr.mxu0 0.0
      %3784 = vmatpush2.msra.mxu0 0.0
      %3785 = vmatprep.subr.mxu0 0.0
      %3786 = vmatpush2.msra.mxu0 0.0
      %3787 = vmatprep.subr.mxu0 0.0
      %3788 = vmatpush2.msra.mxu0 0.0
      %3789 = vmatprep.subr.mxu0 0.0
      %3790 = vmatpush2.msra.mxu0 0.0
      %3791 = vmatprep.mubr.f32.mxu0 0.0
      %3792 = vmatmul.mubr.f32.gmra.mxu0 %v3725
      %v3793 = vpop.f32.mrf.mxu0
      %v3794 = vadd.f32 %v3558, %v3793
      %v3795 = vpop.f32.mrf.mxu0
      %3796 = vdwg.mxu0
      %v3798 = vsel %vm3577, %v3502, 0
      %3800 = vmatprep.subr.mxu0 0.0
      %3801 = vmatpush1.msra.mxu0 0.0
      %3802 = vmatprep.subr.mxu0 0.0
      %3803 = vmatpush1.msra.mxu0 0.0
      %3804 = vmatprep.subr.mxu0 0.0
      %3805 = vmatpush1.msra.mxu0 0.0
      %3806 = vmatprep.subr.mxu0 0.0
      %3807 = vmatpush1.msra.mxu0 0.0
      %3808 = vmatprep.subr.mxu0 0.0
      %3809 = vmatpush1.msra.mxu0 0.0
      %3810 = vmatprep.subr.mxu0 0.0
      %3811 = vmatpush1.msra.mxu0 0.0
      %3812 = vmatprep.subr.mxu0 0.0
      %3813 = vmatpush1.msra.mxu0 0.0
      %3814 = vmatprep.subr.mxu0 0.0
      %3815 = vmatpush1.msra.mxu0 0.0
      %3816 = vmatprep.subr.mxu0 0.0
      %3817 = vmatpush1.msra.mxu0 0.0
      %3818 = vmatprep.subr.mxu0 0.0
      %3819 = vmatpush1.msra.mxu0 0.0
      %3820 = vmatprep.subr.mxu0 0.0
      %3821 = vmatpush1.msra.mxu0 0.0
      %3822 = vmatprep.subr.mxu0 0.0
      %3823 = vmatpush1.msra.mxu0 0.0
      %3824 = vmatprep.subr.mxu0 0.0
      %3825 = vmatpush1.msra.mxu0 %v3526
      %3826 = vmatprep.subr.mxu0 0.0
      %3827 = vmatpush1.msra.mxu0 %v3525
      %3828 = vmatprep.subr.mxu0 0.0
      %3829 = vmatpush1.msra.mxu0 %v3524
      %3830 = vmatprep.subr.mxu0 0.0
      %3831 = vmatpush1.msra.mxu0 %v3523
      %3832 = vmatprep.subr.mxu0 0.0
      %3833 = vmatpush2.msra.mxu0 0.0
      %3834 = vmatprep.subr.mxu0 0.0
      %3835 = vmatpush2.msra.mxu0 0.0
      %3836 = vmatprep.subr.mxu0 0.0
      %3837 = vmatpush2.msra.mxu0 0.0
      %3838 = vmatprep.subr.mxu0 0.0
      %3839 = vmatpush2.msra.mxu0 0.0
      %3840 = vmatprep.subr.mxu0 0.0
      %3841 = vmatpush2.msra.mxu0 0.0
      %3842 = vmatprep.subr.mxu0 0.0
      %3843 = vmatpush2.msra.mxu0 0.0
      %3844 = vmatprep.subr.mxu0 0.0
      %3845 = vmatpush2.msra.mxu0 0.0
      %3846 = vmatprep.subr.mxu0 0.0
      %3847 = vmatpush2.msra.mxu0 0.0
      %3848 = vmatprep.subr.mxu0 0.0
      %3849 = vmatpush2.msra.mxu0 0.0
      %3850 = vmatprep.subr.mxu0 0.0
      %3851 = vmatpush2.msra.mxu0 0.0
      %3852 = vmatprep.subr.mxu0 0.0
      %3853 = vmatpush2.msra.mxu0 0.0
      %3854 = vmatprep.subr.mxu0 0.0
      %3855 = vmatpush2.msra.mxu0 0.0
      %3856 = vmatprep.subr.mxu0 0.0
      %3857 = vmatpush2.msra.mxu0 0.0
      %3858 = vmatprep.subr.mxu0 0.0
      %3859 = vmatpush2.msra.mxu0 0.0
      %3860 = vmatprep.subr.mxu0 0.0
      %3861 = vmatpush2.msra.mxu0 0.0
      %3862 = vmatprep.subr.mxu0 0.0
      %3863 = vmatpush2.msra.mxu0 0.0
      %3864 = vmatprep.mubr.f32.mxu0 0.0
      %3865 = vmatmul.mubr.f32.gmra.mxu0 %v3798
      %v3866 = vpop.f32.mrf.mxu0
      %v3867 = vadd.f32 %v3562, %v3866
      %v3868 = vpop.f32.mrf.mxu0
      %3869 = vdwg.mxu0
      %v3871 = vsel %vm3577, %v3503, 0
      %3873 = vmatprep.subr.mxu0 0.0
      %3874 = vmatpush1.msra.mxu0 0.0
      %3875 = vmatprep.subr.mxu0 0.0
      %3876 = vmatpush1.msra.mxu0 0.0
      %3877 = vmatprep.subr.mxu0 0.0
      %3878 = vmatpush1.msra.mxu0 0.0
      %3879 = vmatprep.subr.mxu0 0.0
      %3880 = vmatpush1.msra.mxu0 0.0
      %3881 = vmatprep.subr.mxu0 0.0
      %3882 = vmatpush1.msra.mxu0 0.0
      %3883 = vmatprep.subr.mxu0 0.0
      %3884 = vmatpush1.msra.mxu0 0.0
      %3885 = vmatprep.subr.mxu0 0.0
      %3886 = vmatpush1.msra.mxu0 0.0
      %3887 = vmatprep.subr.mxu0 0.0
      %3888 = vmatpush1.msra.mxu0 0.0
      %3889 = vmatprep.subr.mxu0 0.0
      %3890 = vmatpush1.msra.mxu0 0.0
      %3891 = vmatprep.subr.mxu0 0.0
      %3892 = vmatpush1.msra.mxu0 0.0
      %3893 = vmatprep.subr.mxu0 0.0
      %3894 = vmatpush1.msra.mxu0 0.0
      %3895 = vmatprep.subr.mxu0 0.0
      %3896 = vmatpush1.msra.mxu0 0.0
      %3897 = vmatprep.subr.mxu0 0.0
      %3898 = vmatpush1.msra.mxu0 %v3530
      %3899 = vmatprep.subr.mxu0 0.0
      %3900 = vmatpush1.msra.mxu0 %v3529
      %3901 = vmatprep.subr.mxu0 0.0
      %3902 = vmatpush1.msra.mxu0 %v3528
      %3903 = vmatprep.subr.mxu0 0.0
      %3904 = vmatpush1.msra.mxu0 %v3527
      %3905 = vmatprep.subr.mxu0 0.0
      %3906 = vmatpush2.msra.mxu0 0.0
      %3907 = vmatprep.subr.mxu0 0.0
      %3908 = vmatpush2.msra.mxu0 0.0
      %3909 = vmatprep.subr.mxu0 0.0
      %3910 = vmatpush2.msra.mxu0 0.0
      %3911 = vmatprep.subr.mxu0 0.0
      %3912 = vmatpush2.msra.mxu0 0.0
      %3913 = vmatprep.subr.mxu0 0.0
      %3914 = vmatpush2.msra.mxu0 0.0
      %3915 = vmatprep.subr.mxu0 0.0
      %3916 = vmatpush2.msra.mxu0 0.0
      %3917 = vmatprep.subr.mxu0 0.0
      %3918 = vmatpush2.msra.mxu0 0.0
      %3919 = vmatprep.subr.mxu0 0.0
      %3920 = vmatpush2.msra.mxu0 0.0
      %3921 = vmatprep.subr.mxu0 0.0
      %3922 = vmatpush2.msra.mxu0 0.0
      %3923 = vmatprep.subr.mxu0 0.0
      %3924 = vmatpush2.msra.mxu0 0.0
      %3925 = vmatprep.subr.mxu0 0.0
      %3926 = vmatpush2.msra.mxu0 0.0
      %3927 = vmatprep.subr.mxu0 0.0
      %3928 = vmatpush2.msra.mxu0 0.0
      %3929 = vmatprep.subr.mxu0 0.0
      %3930 = vmatpush2.msra.mxu0 0.0
      %3931 = vmatprep.subr.mxu0 0.0
      %3932 = vmatpush2.msra.mxu0 0.0
      %3933 = vmatprep.subr.mxu0 0.0
      %3934 = vmatpush2.msra.mxu0 0.0
      %3935 = vmatprep.subr.mxu0 0.0
      %3936 = vmatpush2.msra.mxu0 0.0
      %3937 = vmatprep.mubr.f32.mxu0 0.0
      %3938 = vmatmul.mubr.f32.gmra.mxu0 %v3871
      %v3939 = vpop.f32.mrf.mxu0
      %v3940 = vadd.f32 %v3566, %v3939
      %v3941 = vpop.f32.mrf.mxu0
      %3942 = vdwg.mxu0
      %v3944 = vsel %vm3577, %v3504, 0
      %3946 = vmatprep.subr.mxu0 0.0
      %3947 = vmatpush1.msra.mxu0 0.0
      %3948 = vmatprep.subr.mxu0 0.0
      %3949 = vmatpush1.msra.mxu0 0.0
      %3950 = vmatprep.subr.mxu0 0.0
      %3951 = vmatpush1.msra.mxu0 0.0
      %3952 = vmatprep.subr.mxu0 0.0
      %3953 = vmatpush1.msra.mxu0 0.0
      %3954 = vmatprep.subr.mxu0 0.0
      %3955 = vmatpush1.msra.mxu0 0.0
      %3956 = vmatprep.subr.mxu0 0.0
      %3957 = vmatpush1.msra.mxu0 0.0
      %3958 = vmatprep.subr.mxu0 0.0
      %3959 = vmatpush1.msra.mxu0 0.0
      %3960 = vmatprep.subr.mxu0 0.0
      %3961 = vmatpush1.msra.mxu0 0.0
      %3962 = vmatprep.subr.mxu0 0.0
      %3963 = vmatpush1.msra.mxu0 0.0
      %3964 = vmatprep.subr.mxu0 0.0
      %3965 = vmatpush1.msra.mxu0 0.0
      %3966 = vmatprep.subr.mxu0 0.0
      %3967 = vmatpush1.msra.mxu0 0.0
      %3968 = vmatprep.subr.mxu0 0.0
      %3969 = vmatpush1.msra.mxu0 0.0
      %3970 = vmatprep.subr.mxu0 0.0
      %3971 = vmatpush1.msra.mxu0 %v3534
      %3972 = vmatprep.subr.mxu0 0.0
      %3973 = vmatpush1.msra.mxu0 %v3533
      %3974 = vmatprep.subr.mxu0 0.0
      %3975 = vmatpush1.msra.mxu0 %v3532
      %3976 = vmatprep.subr.mxu0 0.0
      %3977 = vmatpush1.msra.mxu0 %v3531
      %3978 = vmatprep.subr.mxu0 0.0
      %3979 = vmatpush2.msra.mxu0 0.0
      %3980 = vmatprep.subr.mxu0 0.0
      %3981 = vmatpush2.msra.mxu0 0.0
      %3982 = vmatprep.subr.mxu0 0.0
      %3983 = vmatpush2.msra.mxu0 0.0
      %3984 = vmatprep.subr.mxu0 0.0
      %3985 = vmatpush2.msra.mxu0 0.0
      %3986 = vmatprep.subr.mxu0 0.0
      %3987 = vmatpush2.msra.mxu0 0.0
      %3988 = vmatprep.subr.mxu0 0.0
      %3989 = vmatpush2.msra.mxu0 0.0
      %3990 = vmatprep.subr.mxu0 0.0
      %3991 = vmatpush2.msra.mxu0 0.0
      %3992 = vmatprep.subr.mxu0 0.0
      %3993 = vmatpush2.msra.mxu0 0.0
      %3994 = vmatprep.subr.mxu0 0.0
      %3995 = vmatpush2.msra.mxu0 0.0
      %3996 = vmatprep.subr.mxu0 0.0
      %3997 = vmatpush2.msra.mxu0 0.0
      %3998 = vmatprep.subr.mxu0 0.0
      %3999 = vmatpush2.msra.mxu0 0.0
      %4000 = vmatprep.subr.mxu0 0.0
      %4001 = vmatpush2.msra.mxu0 0.0
      %4002 = vmatprep.subr.mxu0 0.0
      %4003 = vmatpush2.msra.mxu0 0.0
      %4004 = vmatprep.subr.mxu0 0.0
      %4005 = vmatpush2.msra.mxu0 0.0
      %4006 = vmatprep.subr.mxu0 0.0
      %4007 = vmatpush2.msra.mxu0 0.0
      %4008 = vmatprep.subr.mxu0 0.0
      %4009 = vmatpush2.msra.mxu0 0.0
      %4010 = vmatprep.mubr.f32.mxu0 0.0
      %4011 = vmatmul.mubr.f32.gmra.mxu0 %v3944
      %v4012 = vpop.f32.mrf.mxu0
      %v4013 = vadd.f32 %v3570, %v4012
      %v4014 = vpop.f32.mrf.mxu0
      %4015 = vdwg.mxu0
      %v4016 = vld [vmem:[%s63] sm:$0xff]
      %v4017 = vld [vmem:[%s63 + $0x8] sm:$0xff]
      %v4018 = vld [vmem:[%s63 + $0x10] sm:$0xff]
      %v4019 = vld [vmem:[%s63 + $0x18] sm:$0xff]
      %v4020 = vld [vmem:[%s63 + $0x20] sm:$0xff]
      %v4021 = vld [vmem:[%s63 + $0x28] sm:$0xff]
      %v4022 = vld [vmem:[%s63 + $0x30] sm:$0xff]
      %v4023 = vld [vmem:[%s63 + $0x38] sm:$0xff]
      %v4024 = vld [vmem:[%s63 + $0x40] sm:$0xff]
      %v4025 = vld [vmem:[%s63 + $0x48] sm:$0xff]
      %v4026 = vld [vmem:[%s63 + $0x50] sm:$0xff]
      %v4027 = vld [vmem:[%s63 + $0x58] sm:$0xff]
      %v4028 = vld [vmem:[%s63 + $0x60] sm:$0xff]
      %v4029 = vld [vmem:[%s63 + $0x68] sm:$0xff]
      %v4030 = vld [vmem:[%s63 + $0x70] sm:$0xff]
      %v4031 = vld [vmem:[%s63 + $0x78] sm:$0xff]
      %v4032 = vld [vmem:[%s63 + $0x80] sm:$0xff]
      %v4033 = vld [vmem:[%s63 + $0x88] sm:$0xff]
      %v4034 = vld [vmem:[%s63 + $0x90] sm:$0xff]
      %v4035 = vld [vmem:[%s63 + $0x98] sm:$0xff]
      %v4036 = vld [vmem:[%s63 + $0xa0] sm:$0xff]
      %v4037 = vld [vmem:[%s63 + $0xa8] sm:$0xff]
      %v4038 = vld [vmem:[%s63 + $0xb0] sm:$0xff]
      %v4039 = vld [vmem:[%s63 + $0xb8] sm:$0xff]
      %v4041 = vsel %vm3577, %v3505, 0
      %4043 = vmatprep.subr.mxu0 0.0
      %4044 = vmatpush1.msra.mxu0 0.0
      %4045 = vmatprep.subr.mxu0 0.0
      %4046 = vmatpush1.msra.mxu0 0.0
      %4047 = vmatprep.subr.mxu0 0.0
      %4048 = vmatpush1.msra.mxu0 0.0
      %4049 = vmatprep.subr.mxu0 0.0
      %4050 = vmatpush1.msra.mxu0 0.0
      %4051 = vmatprep.subr.mxu0 0.0
      %4052 = vmatpush1.msra.mxu0 0.0
      %4053 = vmatprep.subr.mxu0 0.0
      %4054 = vmatpush1.msra.mxu0 0.0
      %4055 = vmatprep.subr.mxu0 0.0
      %4056 = vmatpush1.msra.mxu0 0.0
      %4057 = vmatprep.subr.mxu0 0.0
      %4058 = vmatpush1.msra.mxu0 0.0
      %4059 = vmatprep.subr.mxu0 0.0
      %4060 = vmatpush1.msra.mxu0 0.0
      %4061 = vmatprep.subr.mxu0 0.0
      %4062 = vmatpush1.msra.mxu0 0.0
      %4063 = vmatprep.subr.mxu0 0.0
      %4064 = vmatpush1.msra.mxu0 0.0
      %4065 = vmatprep.subr.mxu0 0.0
      %4066 = vmatpush1.msra.mxu0 0.0
      %4067 = vmatprep.subr.mxu0 0.0
      %4068 = vmatpush1.msra.mxu0 %v4019
      %4069 = vmatprep.subr.mxu0 0.0
      %4070 = vmatpush1.msra.mxu0 %v4018
      %4071 = vmatprep.subr.mxu0 0.0
      %4072 = vmatpush1.msra.mxu0 %v4017
      %4073 = vmatprep.subr.mxu0 0.0
      %4074 = vmatpush1.msra.mxu0 %v4016
      %4075 = vmatprep.subr.mxu0 0.0
      %4076 = vmatpush2.msra.mxu0 0.0
      %4077 = vmatprep.subr.mxu0 0.0
      %4078 = vmatpush2.msra.mxu0 0.0
      %4079 = vmatprep.subr.mxu0 0.0
      %4080 = vmatpush2.msra.mxu0 0.0
      %4081 = vmatprep.subr.mxu0 0.0
      %4082 = vmatpush2.msra.mxu0 0.0
      %4083 = vmatprep.subr.mxu0 0.0
      %4084 = vmatpush2.msra.mxu0 0.0
      %4085 = vmatprep.subr.mxu0 0.0
      %4086 = vmatpush2.msra.mxu0 0.0
      %4087 = vmatprep.subr.mxu0 0.0
      %4088 = vmatpush2.msra.mxu0 0.0
      %4089 = vmatprep.subr.mxu0 0.0
      %4090 = vmatpush2.msra.mxu0 0.0
      %4091 = vmatprep.subr.mxu0 0.0
      %4092 = vmatpush2.msra.mxu0 0.0
      %4093 = vmatprep.subr.mxu0 0.0
      %4094 = vmatpush2.msra.mxu0 0.0
      %4095 = vmatprep.subr.mxu0 0.0
      %4096 = vmatpush2.msra.mxu0 0.0
      %4097 = vmatprep.subr.mxu0 0.0
      %4098 = vmatpush2.msra.mxu0 0.0
      %4099 = vmatprep.subr.mxu0 0.0
      %4100 = vmatpush2.msra.mxu0 0.0
      %4101 = vmatprep.subr.mxu0 0.0
      %4102 = vmatpush2.msra.mxu0 0.0
      %4103 = vmatprep.subr.mxu0 0.0
      %4104 = vmatpush2.msra.mxu0 0.0
      %4105 = vmatprep.subr.mxu0 0.0
      %4106 = vmatpush2.msra.mxu0 0.0
      %4107 = vmatprep.mubr.f32.mxu0 0.0
      %4108 = vmatmul.mubr.f32.gmra.mxu0 %v4041
      %v4109 = vpop.f32.mrf.mxu0
      %v4110 = vadd.f32 0.0, %v4109
      %v4111 = vpop.f32.mrf.mxu0
      %4112 = vdwg.mxu0
      %v4114 = vsel %vm3577, %v3506, 0
      %4116 = vmatprep.subr.mxu0 0.0
      %4117 = vmatpush1.msra.mxu0 0.0
      %4118 = vmatprep.subr.mxu0 0.0
      %4119 = vmatpush1.msra.mxu0 0.0
      %4120 = vmatprep.subr.mxu0 0.0
      %4121 = vmatpush1.msra.mxu0 0.0
      %4122 = vmatprep.subr.mxu0 0.0
      %4123 = vmatpush1.msra.mxu0 0.0
      %4124 = vmatprep.subr.mxu0 0.0
      %4125 = vmatpush1.msra.mxu0 0.0
      %4126 = vmatprep.subr.mxu0 0.0
      %4127 = vmatpush1.msra.mxu0 0.0
      %4128 = vmatprep.subr.mxu0 0.0
      %4129 = vmatpush1.msra.mxu0 0.0
      %4130 = vmatprep.subr.mxu0 0.0
      %4131 = vmatpush1.msra.mxu0 0.0
      %4132 = vmatprep.subr.mxu0 0.0
      %4133 = vmatpush1.msra.mxu0 0.0
      %4134 = vmatprep.subr.mxu0 0.0
      %4135 = vmatpush1.msra.mxu0 0.0
      %4136 = vmatprep.subr.mxu0 0.0
      %4137 = vmatpush1.msra.mxu0 0.0
      %4138 = vmatprep.subr.mxu0 0.0
      %4139 = vmatpush1.msra.mxu0 0.0
      %4140 = vmatprep.subr.mxu0 0.0
      %4141 = vmatpush1.msra.mxu0 %v4023
      %4142 = vmatprep.subr.mxu0 0.0
      %4143 = vmatpush1.msra.mxu0 %v4022
      %4144 = vmatprep.subr.mxu0 0.0
      %4145 = vmatpush1.msra.mxu0 %v4021
      %4146 = vmatprep.subr.mxu0 0.0
      %4147 = vmatpush1.msra.mxu0 %v4020
      %4148 = vmatprep.subr.mxu0 0.0
      %4149 = vmatpush2.msra.mxu0 0.0
      %4150 = vmatprep.subr.mxu0 0.0
      %4151 = vmatpush2.msra.mxu0 0.0
      %4152 = vmatprep.subr.mxu0 0.0
      %4153 = vmatpush2.msra.mxu0 0.0
      %4154 = vmatprep.subr.mxu0 0.0
      %4155 = vmatpush2.msra.mxu0 0.0
      %4156 = vmatprep.subr.mxu0 0.0
      %4157 = vmatpush2.msra.mxu0 0.0
      %4158 = vmatprep.subr.mxu0 0.0
      %4159 = vmatpush2.msra.mxu0 0.0
      %4160 = vmatprep.subr.mxu0 0.0
      %4161 = vmatpush2.msra.mxu0 0.0
      %4162 = vmatprep.subr.mxu0 0.0
      %4163 = vmatpush2.msra.mxu0 0.0
      %4164 = vmatprep.subr.mxu0 0.0
      %4165 = vmatpush2.msra.mxu0 0.0
      %4166 = vmatprep.subr.mxu0 0.0
      %4167 = vmatpush2.msra.mxu0 0.0
      %4168 = vmatprep.subr.mxu0 0.0
      %4169 = vmatpush2.msra.mxu0 0.0
      %4170 = vmatprep.subr.mxu0 0.0
      %4171 = vmatpush2.msra.mxu0 0.0
      %4172 = vmatprep.subr.mxu0 0.0
      %4173 = vmatpush2.msra.mxu0 0.0
      %4174 = vmatprep.subr.mxu0 0.0
      %4175 = vmatpush2.msra.mxu0 0.0
      %4176 = vmatprep.subr.mxu0 0.0
      %4177 = vmatpush2.msra.mxu0 0.0
      %4178 = vmatprep.subr.mxu0 0.0
      %4179 = vmatpush2.msra.mxu0 0.0
      %4180 = vmatprep.mubr.f32.mxu0 0.0
      %4181 = vmatmul.mubr.f32.gmra.mxu0 %v4114
      %v4182 = vpop.f32.mrf.mxu0
      %v4183 = vadd.f32 0.0, %v4182
      %v4184 = vpop.f32.mrf.mxu0
      %4185 = vdwg.mxu0
      %v4187 = vsel %vm3577, %v3507, 0
      %4189 = vmatprep.subr.mxu0 0.0
      %4190 = vmatpush1.msra.mxu0 0.0
      %4191 = vmatprep.subr.mxu0 0.0
      %4192 = vmatpush1.msra.mxu0 0.0
      %4193 = vmatprep.subr.mxu0 0.0
      %4194 = vmatpush1.msra.mxu0 0.0
      %4195 = vmatprep.subr.mxu0 0.0
      %4196 = vmatpush1.msra.mxu0 0.0
      %4197 = vmatprep.subr.mxu0 0.0
      %4198 = vmatpush1.msra.mxu0 0.0
      %4199 = vmatprep.subr.mxu0 0.0
      %4200 = vmatpush1.msra.mxu0 0.0
      %4201 = vmatprep.subr.mxu0 0.0
      %4202 = vmatpush1.msra.mxu0 0.0
      %4203 = vmatprep.subr.mxu0 0.0
      %4204 = vmatpush1.msra.mxu0 0.0
      %4205 = vmatprep.subr.mxu0 0.0
      %4206 = vmatpush1.msra.mxu0 0.0
      %4207 = vmatprep.subr.mxu0 0.0
      %4208 = vmatpush1.msra.mxu0 0.0
      %4209 = vmatprep.subr.mxu0 0.0
      %4210 = vmatpush1.msra.mxu0 0.0
      %4211 = vmatprep.subr.mxu0 0.0
      %4212 = vmatpush1.msra.mxu0 0.0
      %4213 = vmatprep.subr.mxu0 0.0
      %4214 = vmatpush1.msra.mxu0 %v4027
      %4215 = vmatprep.subr.mxu0 0.0
      %4216 = vmatpush1.msra.mxu0 %v4026
      %4217 = vmatprep.subr.mxu0 0.0
      %4218 = vmatpush1.msra.mxu0 %v4025
      %4219 = vmatprep.subr.mxu0 0.0
      %4220 = vmatpush1.msra.mxu0 %v4024
      %4221 = vmatprep.subr.mxu0 0.0
      %4222 = vmatpush2.msra.mxu0 0.0
      %4223 = vmatprep.subr.mxu0 0.0
      %4224 = vmatpush2.msra.mxu0 0.0
      %4225 = vmatprep.subr.mxu0 0.0
      %4226 = vmatpush2.msra.mxu0 0.0
      %4227 = vmatprep.subr.mxu0 0.0
      %4228 = vmatpush2.msra.mxu0 0.0
      %4229 = vmatprep.subr.mxu0 0.0
      %4230 = vmatpush2.msra.mxu0 0.0
      %4231 = vmatprep.subr.mxu0 0.0
      %4232 = vmatpush2.msra.mxu0 0.0
      %4233 = vmatprep.subr.mxu0 0.0
      %4234 = vmatpush2.msra.mxu0 0.0
      %4235 = vmatprep.subr.mxu0 0.0
      %4236 = vmatpush2.msra.mxu0 0.0
      %4237 = vmatprep.subr.mxu0 0.0
      %4238 = vmatpush2.msra.mxu0 0.0
      %4239 = vmatprep.subr.mxu0 0.0
      %4240 = vmatpush2.msra.mxu0 0.0
      %4241 = vmatprep.subr.mxu0 0.0
      %4242 = vmatpush2.msra.mxu0 0.0
      %4243 = vmatprep.subr.mxu0 0.0
      %4244 = vmatpush2.msra.mxu0 0.0
      %4245 = vmatprep.subr.mxu0 0.0
      %4246 = vmatpush2.msra.mxu0 0.0
      %4247 = vmatprep.subr.mxu0 0.0
      %4248 = vmatpush2.msra.mxu0 0.0
      %4249 = vmatprep.subr.mxu0 0.0
      %4250 = vmatpush2.msra.mxu0 0.0
      %4251 = vmatprep.subr.mxu0 0.0
      %4252 = vmatpush2.msra.mxu0 0.0
      %4253 = vmatprep.mubr.f32.mxu0 0.0
      %4254 = vmatmul.mubr.f32.gmra.mxu0 %v4187
      %v4255 = vpop.f32.mrf.mxu0
      %v4256 = vadd.f32 0.0, %v4255
      %v4257 = vpop.f32.mrf.mxu0
      %4258 = vdwg.mxu0
      %v4260 = vsel %vm3577, %v3508, 0
      %4262 = vmatprep.subr.mxu0 0.0
      %4263 = vmatpush1.msra.mxu0 0.0
      %4264 = vmatprep.subr.mxu0 0.0
      %4265 = vmatpush1.msra.mxu0 0.0
      %4266 = vmatprep.subr.mxu0 0.0
      %4267 = vmatpush1.msra.mxu0 0.0
      %4268 = vmatprep.subr.mxu0 0.0
      %4269 = vmatpush1.msra.mxu0 0.0
      %4270 = vmatprep.subr.mxu0 0.0
      %4271 = vmatpush1.msra.mxu0 0.0
      %4272 = vmatprep.subr.mxu0 0.0
      %4273 = vmatpush1.msra.mxu0 0.0
      %4274 = vmatprep.subr.mxu0 0.0
      %4275 = vmatpush1.msra.mxu0 0.0
      %4276 = vmatprep.subr.mxu0 0.0
      %4277 = vmatpush1.msra.mxu0 0.0
      %4278 = vmatprep.subr.mxu0 0.0
      %4279 = vmatpush1.msra.mxu0 0.0
      %4280 = vmatprep.subr.mxu0 0.0
      %4281 = vmatpush1.msra.mxu0 0.0
      %4282 = vmatprep.subr.mxu0 0.0
      %4283 = vmatpush1.msra.mxu0 0.0
      %4284 = vmatprep.subr.mxu0 0.0
      %4285 = vmatpush1.msra.mxu0 0.0
      %4286 = vmatprep.subr.mxu0 0.0
      %4287 = vmatpush1.msra.mxu0 %v4031
      %4288 = vmatprep.subr.mxu0 0.0
      %4289 = vmatpush1.msra.mxu0 %v4030
      %4290 = vmatprep.subr.mxu0 0.0
      %4291 = vmatpush1.msra.mxu0 %v4029
      %4292 = vmatprep.subr.mxu0 0.0
      %4293 = vmatpush1.msra.mxu0 %v4028
      %4294 = vmatprep.subr.mxu0 0.0
      %4295 = vmatpush2.msra.mxu0 0.0
      %4296 = vmatprep.subr.mxu0 0.0
      %4297 = vmatpush2.msra.mxu0 0.0
      %4298 = vmatprep.subr.mxu0 0.0
      %4299 = vmatpush2.msra.mxu0 0.0
      %4300 = vmatprep.subr.mxu0 0.0
      %4301 = vmatpush2.msra.mxu0 0.0
      %4302 = vmatprep.subr.mxu0 0.0
      %4303 = vmatpush2.msra.mxu0 0.0
      %4304 = vmatprep.subr.mxu0 0.0
      %4305 = vmatpush2.msra.mxu0 0.0
      %4306 = vmatprep.subr.mxu0 0.0
      %4307 = vmatpush2.msra.mxu0 0.0
      %4308 = vmatprep.subr.mxu0 0.0
      %4309 = vmatpush2.msra.mxu0 0.0
      %4310 = vmatprep.subr.mxu0 0.0
      %4311 = vmatpush2.msra.mxu0 0.0
      %4312 = vmatprep.subr.mxu0 0.0
      %4313 = vmatpush2.msra.mxu0 0.0
      %4314 = vmatprep.subr.mxu0 0.0
      %4315 = vmatpush2.msra.mxu0 0.0
      %4316 = vmatprep.subr.mxu0 0.0
      %4317 = vmatpush2.msra.mxu0 0.0
      %4318 = vmatprep.subr.mxu0 0.0
      %4319 = vmatpush2.msra.mxu0 0.0
      %4320 = vmatprep.subr.mxu0 0.0
      %4321 = vmatpush2.msra.mxu0 0.0
      %4322 = vmatprep.subr.mxu0 0.0
      %4323 = vmatpush2.msra.mxu0 0.0
      %4324 = vmatprep.subr.mxu0 0.0
      %4325 = vmatpush2.msra.mxu0 0.0
      %4326 = vmatprep.mubr.f32.mxu0 0.0
      %4327 = vmatmul.mubr.f32.gmra.mxu0 %v4260
      %v4328 = vpop.f32.mrf.mxu0
      %v4329 = vadd.f32 0.0, %v4328
      %v4330 = vpop.f32.mrf.mxu0
      %4331 = vdwg.mxu0
      %v4333 = vsel %vm3577, %v3509, 0
      %4335 = vmatprep.subr.mxu0 0.0
      %4336 = vmatpush1.msra.mxu0 0.0
      %4337 = vmatprep.subr.mxu0 0.0
      %4338 = vmatpush1.msra.mxu0 0.0
      %4339 = vmatprep.subr.mxu0 0.0
      %4340 = vmatpush1.msra.mxu0 0.0
      %4341 = vmatprep.subr.mxu0 0.0
      %4342 = vmatpush1.msra.mxu0 0.0
      %4343 = vmatprep.subr.mxu0 0.0
      %4344 = vmatpush1.msra.mxu0 0.0
      %4345 = vmatprep.subr.mxu0 0.0
      %4346 = vmatpush1.msra.mxu0 0.0
      %4347 = vmatprep.subr.mxu0 0.0
      %4348 = vmatpush1.msra.mxu0 0.0
      %4349 = vmatprep.subr.mxu0 0.0
      %4350 = vmatpush1.msra.mxu0 0.0
      %4351 = vmatprep.subr.mxu0 0.0
      %4352 = vmatpush1.msra.mxu0 0.0
      %4353 = vmatprep.subr.mxu0 0.0
      %4354 = vmatpush1.msra.mxu0 0.0
      %4355 = vmatprep.subr.mxu0 0.0
      %4356 = vmatpush1.msra.mxu0 0.0
      %4357 = vmatprep.subr.mxu0 0.0
      %4358 = vmatpush1.msra.mxu0 0.0
      %4359 = vmatprep.subr.mxu0 0.0
      %4360 = vmatpush1.msra.mxu0 %v4035
      %4361 = vmatprep.subr.mxu0 0.0
      %4362 = vmatpush1.msra.mxu0 %v4034
      %4363 = vmatprep.subr.mxu0 0.0
      %4364 = vmatpush1.msra.mxu0 %v4033
      %4365 = vmatprep.subr.mxu0 0.0
      %4366 = vmatpush1.msra.mxu0 %v4032
      %4367 = vmatprep.subr.mxu0 0.0
      %4368 = vmatpush2.msra.mxu0 0.0
      %4369 = vmatprep.subr.mxu0 0.0
      %4370 = vmatpush2.msra.mxu0 0.0
      %4371 = vmatprep.subr.mxu0 0.0
      %4372 = vmatpush2.msra.mxu0 0.0
      %4373 = vmatprep.subr.mxu0 0.0
      %4374 = vmatpush2.msra.mxu0 0.0
      %4375 = vmatprep.subr.mxu0 0.0
      %4376 = vmatpush2.msra.mxu0 0.0
      %4377 = vmatprep.subr.mxu0 0.0
      %4378 = vmatpush2.msra.mxu0 0.0
      %4379 = vmatprep.subr.mxu0 0.0
      %4380 = vmatpush2.msra.mxu0 0.0
      %4381 = vmatprep.subr.mxu0 0.0
      %4382 = vmatpush2.msra.mxu0 0.0
      %4383 = vmatprep.subr.mxu0 0.0
      %4384 = vmatpush2.msra.mxu0 0.0
      %4385 = vmatprep.subr.mxu0 0.0
      %4386 = vmatpush2.msra.mxu0 0.0
      %4387 = vmatprep.subr.mxu0 0.0
      %4388 = vmatpush2.msra.mxu0 0.0
      %4389 = vmatprep.subr.mxu0 0.0
      %4390 = vmatpush2.msra.mxu0 0.0
      %4391 = vmatprep.subr.mxu0 0.0
      %4392 = vmatpush2.msra.mxu0 0.0
      %4393 = vmatprep.subr.mxu0 0.0
      %4394 = vmatpush2.msra.mxu0 0.0
      %4395 = vmatprep.subr.mxu0 0.0
      %4396 = vmatpush2.msra.mxu0 0.0
      %4397 = vmatprep.subr.mxu0 0.0
      %4398 = vmatpush2.msra.mxu0 0.0
      %4399 = vmatprep.mubr.f32.mxu0 0.0
      %4400 = vmatmul.mubr.f32.gmra.mxu0 %v4333
      %v4401 = vpop.f32.mrf.mxu0
      %v4402 = vadd.f32 0.0, %v4401
      %v4403 = vpop.f32.mrf.mxu0
      %4404 = vdwg.mxu0
      %v4406 = vsel %vm3577, %v3510, 0
      %4408 = vmatprep.subr.mxu0 0.0
      %4409 = vmatpush1.msra.mxu0 0.0
      %4410 = vmatprep.subr.mxu0 0.0
      %4411 = vmatpush1.msra.mxu0 0.0
      %4412 = vmatprep.subr.mxu0 0.0
      %4413 = vmatpush1.msra.mxu0 0.0
      %4414 = vmatprep.subr.mxu0 0.0
      %4415 = vmatpush1.msra.mxu0 0.0
      %4416 = vmatprep.subr.mxu0 0.0
      %4417 = vmatpush1.msra.mxu0 0.0
      %4418 = vmatprep.subr.mxu0 0.0
      %4419 = vmatpush1.msra.mxu0 0.0
      %4420 = vmatprep.subr.mxu0 0.0
      %4421 = vmatpush1.msra.mxu0 0.0
      %4422 = vmatprep.subr.mxu0 0.0
      %4423 = vmatpush1.msra.mxu0 0.0
      %4424 = vmatprep.subr.mxu0 0.0
      %4425 = vmatpush1.msra.mxu0 0.0
      %4426 = vmatprep.subr.mxu0 0.0
      %4427 = vmatpush1.msra.mxu0 0.0
      %4428 = vmatprep.subr.mxu0 0.0
      %4429 = vmatpush1.msra.mxu0 0.0
      %4430 = vmatprep.subr.mxu0 0.0
      %4431 = vmatpush1.msra.mxu0 0.0
      %4432 = vmatprep.subr.mxu0 0.0
      %4433 = vmatpush1.msra.mxu0 %v4039
      %4434 = vmatprep.subr.mxu0 0.0
      %4435 = vmatpush1.msra.mxu0 %v4038
      %4436 = vmatprep.subr.mxu0 0.0
      %4437 = vmatpush1.msra.mxu0 %v4037
      %4438 = vmatprep.subr.mxu0 0.0
      %4439 = vmatpush1.msra.mxu0 %v4036
      %4440 = vmatprep.subr.mxu0 0.0
      %4441 = vmatpush2.msra.mxu0 0.0
      %4442 = vmatprep.subr.mxu0 0.0
      %4443 = vmatpush2.msra.mxu0 0.0
      %4444 = vmatprep.subr.mxu0 0.0
      %4445 = vmatpush2.msra.mxu0 0.0
      %4446 = vmatprep.subr.mxu0 0.0
      %4447 = vmatpush2.msra.mxu0 0.0
      %4448 = vmatprep.subr.mxu0 0.0
      %4449 = vmatpush2.msra.mxu0 0.0
      %4450 = vmatprep.subr.mxu0 0.0
      %4451 = vmatpush2.msra.mxu0 0.0
      %4452 = vmatprep.subr.mxu0 0.0
      %4453 = vmatpush2.msra.mxu0 0.0
      %4454 = vmatprep.subr.mxu0 0.0
      %4455 = vmatpush2.msra.mxu0 0.0
      %4456 = vmatprep.subr.mxu0 0.0
      %4457 = vmatpush2.msra.mxu0 0.0
      %4458 = vmatprep.subr.mxu0 0.0
      %4459 = vmatpush2.msra.mxu0 0.0
      %4460 = vmatprep.subr.mxu0 0.0
      %4461 = vmatpush2.msra.mxu0 0.0
      %4462 = vmatprep.subr.mxu0 0.0
      %4463 = vmatpush2.msra.mxu0 0.0
      %4464 = vmatprep.subr.mxu0 0.0
      %4465 = vmatpush2.msra.mxu0 0.0
      %4466 = vmatprep.subr.mxu0 0.0
      %4467 = vmatpush2.msra.mxu0 0.0
      %4468 = vmatprep.subr.mxu0 0.0
      %4469 = vmatpush2.msra.mxu0 0.0
      %4470 = vmatprep.subr.mxu0 0.0
      %4471 = vmatpush2.msra.mxu0 0.0
      %4472 = vmatprep.mubr.f32.mxu0 0.0
      %4473 = vmatmul.mubr.f32.gmra.mxu0 %v4406
      %v4474 = vpop.f32.mrf.mxu0
      %v4475 = vadd.f32 0.0, %v4474
      %v4476 = vpop.f32.mrf.mxu0
      %4477 = vdwg.mxu0
      %v4478 = vadd.f32 %v3648, %v4110
      %v4479 = vadd.f32 %v3721, %v4183
      %v4480 = vadd.f32 %v3794, %v4256
      %v4481 = vadd.f32 %v3867, %v4329
      %v4482 = vadd.f32 %v3940, %v4402
      %v4483 = vadd.f32 %v4013, %v4475
      %v4484 = vld [vmem:[%s75] sm:$0x1]
      %v4485 = vld [vmem:[%s75 + $0x1] sm:$0x1]
      %v4486 = vld [vmem:[%s75 + $0x2] sm:$0x1]
      %v4487 = vld [vmem:[%s75 + $0x3] sm:$0x1]
      %v4488 = vld [vmem:[%s75 + $0x4] sm:$0x1]
      %v4489 = vld [vmem:[%s75 + $0x5] sm:$0x1]
      %v4496 = vlaneseq
      %v4497 = vshrl.u32 %v4496, 7
      %v4498 = vsub.s32 0, %v4497
      %v4499 = vrot.slane %v4484, %v4498
      %v4500 = vlaneseq
      %v4501 = vshrl.u32 %v4500, 7
      %v4502 = vsub.s32 0, %v4501
      %v4503 = vrot.slane %v4485, %v4502
      %v4504 = vlaneseq
      %v4505 = vshrl.u32 %v4504, 7
      %v4506 = vsub.s32 0, %v4505
      %v4507 = vrot.slane %v4486, %v4506
      %v4508 = vlaneseq
      %v4509 = vshrl.u32 %v4508, 7
      %v4510 = vsub.s32 0, %v4509
      %v4511 = vrot.slane %v4487, %v4510
      %v4512 = vlaneseq
      %v4513 = vshrl.u32 %v4512, 7
      %v4514 = vsub.s32 0, %v4513
      %v4515 = vrot.slane %v4488, %v4514
      %v4516 = vlaneseq
      %v4517 = vshrl.u32 %v4516, 7
      %v4518 = vsub.s32 0, %v4517
      %v4519 = vrot.slane %v4489, %v4518
      %v4526 = vadd.f32 %v4478, %v4499
      %v4527 = vadd.f32 %v4479, %v4503
      %v4528 = vadd.f32 %v4480, %v4507
      %v4529 = vadd.f32 %v4481, %v4511
      %v4530 = vadd.f32 %v4482, %v4515
      %v4531 = vadd.f32 %v4483, %v4519
      %v4532 = vxor.u32 %v4526, 2147483648
      %v4533 = vxor.u32 %v4527, 2147483648
      %v4534 = vxor.u32 %v4528, 2147483648
      %v4535 = vxor.u32 %v4529, 2147483648
      %v4536 = vxor.u32 %v4530, 2147483648
      %v4537 = vxor.u32 %v4531, 2147483648
      %v4538 = vmul.f32 %v4532, 1.442695
      %v4539 = vpow.pop %v4538
      %v4540 = vmul.f32 %v4533, 1.442695
      %v4541 = vpow.pop %v4540
      %v4542 = vmul.f32 %v4534, 1.442695
      %v4543 = vpow.pop %v4542
      %v4544 = vmul.f32 %v4535, 1.442695
      %v4545 = vpow.pop %v4544
      %v4546 = vmul.f32 %v4536, 1.442695
      %v4547 = vpow.pop %v4546
      %v4548 = vmul.f32 %v4537, 1.442695
      %v4549 = vpow.pop %v4548
      %v4550 = vadd.f32 %v4539, 1.0
      %v4551 = vadd.f32 %v4541, 1.0
      %v4552 = vadd.f32 %v4543, 1.0
      %v4553 = vadd.f32 %v4545, 1.0
      %v4554 = vadd.f32 %v4547, 1.0
      %v4555 = vadd.f32 %v4549, 1.0
      %v4556 = vrcp.pop %v4550
      %v4557 = vmul.f32 1.0, %v4556
      %v4558 = vrcp.pop %v4551
      %v4559 = vmul.f32 1.0, %v4558
      %v4560 = vrcp.pop %v4552
      %v4561 = vmul.f32 1.0, %v4560
      %v4562 = vrcp.pop %v4553
      %v4563 = vmul.f32 1.0, %v4562
      %v4564 = vrcp.pop %v4554
      %v4565 = vmul.f32 1.0, %v4564
      %v4566 = vrcp.pop %v4555
      %v4567 = vmul.f32 1.0, %v4566
      %v4568 = vld [vmem:[%s59] sm:$0xff]
      %v4569 = vld [vmem:[%s59 + $0x8] sm:$0xff]
      %v4570 = vld [vmem:[%s59 + $0x10] sm:$0xff]
      %v4571 = vld [vmem:[%s59 + $0x18] sm:$0xff]
      %v4572 = vld [vmem:[%s59 + $0x20] sm:$0xff]
      %v4573 = vld [vmem:[%s59 + $0x28] sm:$0xff]
      %v4574 = vld [vmem:[%s59 + $0x30] sm:$0xff]
      %v4575 = vld [vmem:[%s59 + $0x38] sm:$0xff]
      %v4576 = vld [vmem:[%s59 + $0x40] sm:$0xff]
      %v4577 = vld [vmem:[%s59 + $0x48] sm:$0xff]
      %v4578 = vld [vmem:[%s59 + $0x50] sm:$0xff]
      %v4579 = vld [vmem:[%s59 + $0x58] sm:$0xff]
      %v4580 = vld [vmem:[%s59 + $0x60] sm:$0xff]
      %v4581 = vld [vmem:[%s59 + $0x68] sm:$0xff]
      %v4582 = vld [vmem:[%s59 + $0x70] sm:$0xff]
      %v4583 = vld [vmem:[%s59 + $0x78] sm:$0xff]
      %v4584 = vld [vmem:[%s59 + $0x80] sm:$0xff]
      %v4585 = vld [vmem:[%s59 + $0x88] sm:$0xff]
      %v4586 = vld [vmem:[%s59 + $0x90] sm:$0xff]
      %v4587 = vld [vmem:[%s59 + $0x98] sm:$0xff]
      %v4588 = vld [vmem:[%s59 + $0xa0] sm:$0xff]
      %v4589 = vld [vmem:[%s59 + $0xa8] sm:$0xff]
      %v4590 = vld [vmem:[%s59 + $0xb0] sm:$0xff]
      %v4591 = vld [vmem:[%s59 + $0xb8] sm:$0xff]
      %v4592 = vld [vmem:[%s71] sm:$0x1]
      %v4593 = vld [vmem:[%s71 + $0x1] sm:$0x1]
      %v4594 = vld [vmem:[%s71 + $0x2] sm:$0x1]
      %v4595 = vld [vmem:[%s71 + $0x3] sm:$0x1]
      %v4596 = vld [vmem:[%s71 + $0x4] sm:$0x1]
      %v4597 = vld [vmem:[%s71 + $0x5] sm:$0x1]
      %v4604 = vlaneseq
      %v4605 = vshrl.u32 %v4604, 7
      %v4606 = vsub.s32 0, %v4605
      %v4607 = vrot.slane %v4592, %v4606
      %v4608 = vlaneseq
      %v4609 = vshrl.u32 %v4608, 7
      %v4610 = vsub.s32 0, %v4609
      %v4611 = vrot.slane %v4593, %v4610
      %v4612 = vlaneseq
      %v4613 = vshrl.u32 %v4612, 7
      %v4614 = vsub.s32 0, %v4613
      %v4615 = vrot.slane %v4594, %v4614
      %v4616 = vlaneseq
      %v4617 = vshrl.u32 %v4616, 7
      %v4618 = vsub.s32 0, %v4617
      %v4619 = vrot.slane %v4595, %v4618
      %v4620 = vlaneseq
      %v4621 = vshrl.u32 %v4620, 7
      %v4622 = vsub.s32 0, %v4621
      %v4623 = vrot.slane %v4596, %v4622
      %v4624 = vlaneseq
      %v4625 = vshrl.u32 %v4624, 7
      %v4626 = vsub.s32 0, %v4625
      %v4627 = vrot.slane %v4597, %v4626
      %4634 = vmatprep.subr.mxu0 0.0
      %4635 = vmatpush1.msra.mxu0 0.0
      %4636 = vmatprep.subr.mxu0 0.0
      %4637 = vmatpush1.msra.mxu0 0.0
      %4638 = vmatprep.subr.mxu0 0.0
      %4639 = vmatpush1.msra.mxu0 0.0
      %4640 = vmatprep.subr.mxu0 0.0
      %4641 = vmatpush1.msra.mxu0 0.0
      %4642 = vmatprep.subr.mxu0 0.0
      %4643 = vmatpush1.msra.mxu0 0.0
      %4644 = vmatprep.subr.mxu0 0.0
      %4645 = vmatpush1.msra.mxu0 0.0
      %4646 = vmatprep.subr.mxu0 0.0
      %4647 = vmatpush1.msra.mxu0 0.0
      %4648 = vmatprep.subr.mxu0 0.0
      %4649 = vmatpush1.msra.mxu0 0.0
      %4650 = vmatprep.subr.mxu0 0.0
      %4651 = vmatpush1.msra.mxu0 0.0
      %4652 = vmatprep.subr.mxu0 0.0
      %4653 = vmatpush1.msra.mxu0 0.0
      %4654 = vmatprep.subr.mxu0 0.0
      %4655 = vmatpush1.msra.mxu0 0.0
      %4656 = vmatprep.subr.mxu0 0.0
      %4657 = vmatpush1.msra.mxu0 0.0
      %4658 = vmatprep.subr.mxu0 0.0
      %4659 = vmatpush1.msra.mxu0 %v4571
      %4660 = vmatprep.subr.mxu0 0.0
      %4661 = vmatpush1.msra.mxu0 %v4570
      %4662 = vmatprep.subr.mxu0 0.0
      %4663 = vmatpush1.msra.mxu0 %v4569
      %4664 = vmatprep.subr.mxu0 0.0
      %4665 = vmatpush1.msra.mxu0 %v4568
      %4666 = vmatprep.subr.mxu0 0.0
      %4667 = vmatpush2.msra.mxu0 0.0
      %4668 = vmatprep.subr.mxu0 0.0
      %4669 = vmatpush2.msra.mxu0 0.0
      %4670 = vmatprep.subr.mxu0 0.0
      %4671 = vmatpush2.msra.mxu0 0.0
      %4672 = vmatprep.subr.mxu0 0.0
      %4673 = vmatpush2.msra.mxu0 0.0
      %4674 = vmatprep.subr.mxu0 0.0
      %4675 = vmatpush2.msra.mxu0 0.0
      %4676 = vmatprep.subr.mxu0 0.0
      %4677 = vmatpush2.msra.mxu0 0.0
      %4678 = vmatprep.subr.mxu0 0.0
      %4679 = vmatpush2.msra.mxu0 0.0
      %4680 = vmatprep.subr.mxu0 0.0
      %4681 = vmatpush2.msra.mxu0 0.0
      %4682 = vmatprep.subr.mxu0 0.0
      %4683 = vmatpush2.msra.mxu0 0.0
      %4684 = vmatprep.subr.mxu0 0.0
      %4685 = vmatpush2.msra.mxu0 0.0
      %4686 = vmatprep.subr.mxu0 0.0
      %4687 = vmatpush2.msra.mxu0 0.0
      %4688 = vmatprep.subr.mxu0 0.0
      %4689 = vmatpush2.msra.mxu0 0.0
      %4690 = vmatprep.subr.mxu0 0.0
      %4691 = vmatpush2.msra.mxu0 0.0
      %4692 = vmatprep.subr.mxu0 0.0
      %4693 = vmatpush2.msra.mxu0 0.0
      %4694 = vmatprep.subr.mxu0 0.0
      %4695 = vmatpush2.msra.mxu0 0.0
      %4696 = vmatprep.subr.mxu0 0.0
      %4697 = vmatpush2.msra.mxu0 0.0
      %4698 = vmatprep.mubr.f32.mxu0 0.0
      %4699 = vmatmul.mubr.f32.gmra.mxu0 %v3579
      %v4700 = vpop.f32.mrf.mxu0
      %v4701 = vadd.f32 %v4607, %v4700
      %v4702 = vpop.f32.mrf.mxu0
      %4703 = vdwg.mxu0
      %4704 = vmatprep.subr.mxu0 0.0
      %4705 = vmatpush1.msra.mxu0 0.0
      %4706 = vmatprep.subr.mxu0 0.0
      %4707 = vmatpush1.msra.mxu0 0.0
      %4708 = vmatprep.subr.mxu0 0.0
      %4709 = vmatpush1.msra.mxu0 0.0
      %4710 = vmatprep.subr.mxu0 0.0
      %4711 = vmatpush1.msra.mxu0 0.0
      %4712 = vmatprep.subr.mxu0 0.0
      %4713 = vmatpush1.msra.mxu0 0.0
      %4714 = vmatprep.subr.mxu0 0.0
      %4715 = vmatpush1.msra.mxu0 0.0
      %4716 = vmatprep.subr.mxu0 0.0
      %4717 = vmatpush1.msra.mxu0 0.0
      %4718 = vmatprep.subr.mxu0 0.0
      %4719 = vmatpush1.msra.mxu0 0.0
      %4720 = vmatprep.subr.mxu0 0.0
      %4721 = vmatpush1.msra.mxu0 0.0
      %4722 = vmatprep.subr.mxu0 0.0
      %4723 = vmatpush1.msra.mxu0 0.0
      %4724 = vmatprep.subr.mxu0 0.0
      %4725 = vmatpush1.msra.mxu0 0.0
      %4726 = vmatprep.subr.mxu0 0.0
      %4727 = vmatpush1.msra.mxu0 0.0
      %4728 = vmatprep.subr.mxu0 0.0
      %4729 = vmatpush1.msra.mxu0 %v4575
      %4730 = vmatprep.subr.mxu0 0.0
      %4731 = vmatpush1.msra.mxu0 %v4574
      %4732 = vmatprep.subr.mxu0 0.0
      %4733 = vmatpush1.msra.mxu0 %v4573
      %4734 = vmatprep.subr.mxu0 0.0
      %4735 = vmatpush1.msra.mxu0 %v4572
      %4736 = vmatprep.subr.mxu0 0.0
      %4737 = vmatpush2.msra.mxu0 0.0
      %4738 = vmatprep.subr.mxu0 0.0
      %4739 = vmatpush2.msra.mxu0 0.0
      %4740 = vmatprep.subr.mxu0 0.0
      %4741 = vmatpush2.msra.mxu0 0.0
      %4742 = vmatprep.subr.mxu0 0.0
      %4743 = vmatpush2.msra.mxu0 0.0
      %4744 = vmatprep.subr.mxu0 0.0
      %4745 = vmatpush2.msra.mxu0 0.0
      %4746 = vmatprep.subr.mxu0 0.0
      %4747 = vmatpush2.msra.mxu0 0.0
      %4748 = vmatprep.subr.mxu0 0.0
      %4749 = vmatpush2.msra.mxu0 0.0
      %4750 = vmatprep.subr.mxu0 0.0
      %4751 = vmatpush2.msra.mxu0 0.0
      %4752 = vmatprep.subr.mxu0 0.0
      %4753 = vmatpush2.msra.mxu0 0.0
      %4754 = vmatprep.subr.mxu0 0.0
      %4755 = vmatpush2.msra.mxu0 0.0
      %4756 = vmatprep.subr.mxu0 0.0
      %4757 = vmatpush2.msra.mxu0 0.0
      %4758 = vmatprep.subr.mxu0 0.0
      %4759 = vmatpush2.msra.mxu0 0.0
      %4760 = vmatprep.subr.mxu0 0.0
      %4761 = vmatpush2.msra.mxu0 0.0
      %4762 = vmatprep.subr.mxu0 0.0
      %4763 = vmatpush2.msra.mxu0 0.0
      %4764 = vmatprep.subr.mxu0 0.0
      %4765 = vmatpush2.msra.mxu0 0.0
      %4766 = vmatprep.subr.mxu0 0.0
      %4767 = vmatpush2.msra.mxu0 0.0
      %4768 = vmatprep.mubr.f32.mxu0 0.0
      %4769 = vmatmul.mubr.f32.gmra.mxu0 %v3652
      %v4770 = vpop.f32.mrf.mxu0
      %v4771 = vadd.f32 %v4611, %v4770
      %v4772 = vpop.f32.mrf.mxu0
      %4773 = vdwg.mxu0
      %4774 = vmatprep.subr.mxu0 0.0
      %4775 = vmatpush1.msra.mxu0 0.0
      %4776 = vmatprep.subr.mxu0 0.0
      %4777 = vmatpush1.msra.mxu0 0.0
      %4778 = vmatprep.subr.mxu0 0.0
      %4779 = vmatpush1.msra.mxu0 0.0
      %4780 = vmatprep.subr.mxu0 0.0
      %4781 = vmatpush1.msra.mxu0 0.0
      %4782 = vmatprep.subr.mxu0 0.0
      %4783 = vmatpush1.msra.mxu0 0.0
      %4784 = vmatprep.subr.mxu0 0.0
      %4785 = vmatpush1.msra.mxu0 0.0
      %4786 = vmatprep.subr.mxu0 0.0
      %4787 = vmatpush1.msra.mxu0 0.0
      %4788 = vmatprep.subr.mxu0 0.0
      %4789 = vmatpush1.msra.mxu0 0.0
      %4790 = vmatprep.subr.mxu0 0.0
      %4791 = vmatpush1.msra.mxu0 0.0
      %4792 = vmatprep.subr.mxu0 0.0
      %4793 = vmatpush1.msra.mxu0 0.0
      %4794 = vmatprep.subr.mxu0 0.0
      %4795 = vmatpush1.msra.mxu0 0.0
      %4796 = vmatprep.subr.mxu0 0.0
      %4797 = vmatpush1.msra.mxu0 0.0
      %4798 = vmatprep.subr.mxu0 0.0
      %4799 = vmatpush1.msra.mxu0 %v4579
      %4800 = vmatprep.subr.mxu0 0.0
      %4801 = vmatpush1.msra.mxu0 %v4578
      %4802 = vmatprep.subr.mxu0 0.0
      %4803 = vmatpush1.msra.mxu0 %v4577
      %4804 = vmatprep.subr.mxu0 0.0
      %4805 = vmatpush1.msra.mxu0 %v4576
      %4806 = vmatprep.subr.mxu0 0.0
      %4807 = vmatpush2.msra.mxu0 0.0
      %4808 = vmatprep.subr.mxu0 0.0
      %4809 = vmatpush2.msra.mxu0 0.0
      %4810 = vmatprep.subr.mxu0 0.0
      %4811 = vmatpush2.msra.mxu0 0.0
      %4812 = vmatprep.subr.mxu0 0.0
      %4813 = vmatpush2.msra.mxu0 0.0
      %4814 = vmatprep.subr.mxu0 0.0
      %4815 = vmatpush2.msra.mxu0 0.0
      %4816 = vmatprep.subr.mxu0 0.0
      %4817 = vmatpush2.msra.mxu0 0.0
      %4818 = vmatprep.subr.mxu0 0.0
      %4819 = vmatpush2.msra.mxu0 0.0
      %4820 = vmatprep.subr.mxu0 0.0
      %4821 = vmatpush2.msra.mxu0 0.0
      %4822 = vmatprep.subr.mxu0 0.0
      %4823 = vmatpush2.msra.mxu0 0.0
      %4824 = vmatprep.subr.mxu0 0.0
      %4825 = vmatpush2.msra.mxu0 0.0
      %4826 = vmatprep.subr.mxu0 0.0
      %4827 = vmatpush2.msra.mxu0 0.0
      %4828 = vmatprep.subr.mxu0 0.0
      %4829 = vmatpush2.msra.mxu0 0.0
      %4830 = vmatprep.subr.mxu0 0.0
      %4831 = vmatpush2.msra.mxu0 0.0
      %4832 = vmatprep.subr.mxu0 0.0
      %4833 = vmatpush2.msra.mxu0 0.0
      %4834 = vmatprep.subr.mxu0 0.0
      %4835 = vmatpush2.msra.mxu0 0.0
      %4836 = vmatprep.subr.mxu0 0.0
      %4837 = vmatpush2.msra.mxu0 0.0
      %4838 = vmatprep.mubr.f32.mxu0 0.0
      %4839 = vmatmul.mubr.f32.gmra.mxu0 %v3725
      %v4840 = vpop.f32.mrf.mxu0
      %v4841 = vadd.f32 %v4615, %v4840
      %v4842 = vpop.f32.mrf.mxu0
      %4843 = vdwg.mxu0
      %4844 = vmatprep.subr.mxu0 0.0
      %4845 = vmatpush1.msra.mxu0 0.0
      %4846 = vmatprep.subr.mxu0 0.0
      %4847 = vmatpush1.msra.mxu0 0.0
      %4848 = vmatprep.subr.mxu0 0.0
      %4849 = vmatpush1.msra.mxu0 0.0
      %4850 = vmatprep.subr.mxu0 0.0
      %4851 = vmatpush1.msra.mxu0 0.0
      %4852 = vmatprep.subr.mxu0 0.0
      %4853 = vmatpush1.msra.mxu0 0.0
      %4854 = vmatprep.subr.mxu0 0.0
      %4855 = vmatpush1.msra.mxu0 0.0
      %4856 = vmatprep.subr.mxu0 0.0
      %4857 = vmatpush1.msra.mxu0 0.0
      %4858 = vmatprep.subr.mxu0 0.0
      %4859 = vmatpush1.msra.mxu0 0.0
      %4860 = vmatprep.subr.mxu0 0.0
      %4861 = vmatpush1.msra.mxu0 0.0
      %4862 = vmatprep.subr.mxu0 0.0
      %4863 = vmatpush1.msra.mxu0 0.0
      %4864 = vmatprep.subr.mxu0 0.0
      %4865 = vmatpush1.msra.mxu0 0.0
      %4866 = vmatprep.subr.mxu0 0.0
      %4867 = vmatpush1.msra.mxu0 0.0
      %4868 = vmatprep.subr.mxu0 0.0
      %4869 = vmatpush1.msra.mxu0 %v4583
      %4870 = vmatprep.subr.mxu0 0.0
      %4871 = vmatpush1.msra.mxu0 %v4582
      %4872 = vmatprep.subr.mxu0 0.0
      %4873 = vmatpush1.msra.mxu0 %v4581
      %4874 = vmatprep.subr.mxu0 0.0
      %4875 = vmatpush1.msra.mxu0 %v4580
      %4876 = vmatprep.subr.mxu0 0.0
      %4877 = vmatpush2.msra.mxu0 0.0
      %4878 = vmatprep.subr.mxu0 0.0
      %4879 = vmatpush2.msra.mxu0 0.0
      %4880 = vmatprep.subr.mxu0 0.0
      %4881 = vmatpush2.msra.mxu0 0.0
      %4882 = vmatprep.subr.mxu0 0.0
      %4883 = vmatpush2.msra.mxu0 0.0
      %4884 = vmatprep.subr.mxu0 0.0
      %4885 = vmatpush2.msra.mxu0 0.0
      %4886 = vmatprep.subr.mxu0 0.0
      %4887 = vmatpush2.msra.mxu0 0.0
      %4888 = vmatprep.subr.mxu0 0.0
      %4889 = vmatpush2.msra.mxu0 0.0
      %4890 = vmatprep.subr.mxu0 0.0
      %4891 = vmatpush2.msra.mxu0 0.0
      %4892 = vmatprep.subr.mxu0 0.0
      %4893 = vmatpush2.msra.mxu0 0.0
      %4894 = vmatprep.subr.mxu0 0.0
      %4895 = vmatpush2.msra.mxu0 0.0
      %4896 = vmatprep.subr.mxu0 0.0
      %4897 = vmatpush2.msra.mxu0 0.0
      %4898 = vmatprep.subr.mxu0 0.0
      %4899 = vmatpush2.msra.mxu0 0.0
      %4900 = vmatprep.subr.mxu0 0.0
      %4901 = vmatpush2.msra.mxu0 0.0
      %4902 = vmatprep.subr.mxu0 0.0
      %4903 = vmatpush2.msra.mxu0 0.0
      %4904 = vmatprep.subr.mxu0 0.0
      %4905 = vmatpush2.msra.mxu0 0.0
      %4906 = vmatprep.subr.mxu0 0.0
      %4907 = vmatpush2.msra.mxu0 0.0
      %4908 = vmatprep.mubr.f32.mxu0 0.0
      %4909 = vmatmul.mubr.f32.gmra.mxu0 %v3798
      %v4910 = vpop.f32.mrf.mxu0
      %v4911 = vadd.f32 %v4619, %v4910
      %v4912 = vpop.f32.mrf.mxu0
      %4913 = vdwg.mxu0
      %4914 = vmatprep.subr.mxu0 0.0
      %4915 = vmatpush1.msra.mxu0 0.0
      %4916 = vmatprep.subr.mxu0 0.0
      %4917 = vmatpush1.msra.mxu0 0.0
      %4918 = vmatprep.subr.mxu0 0.0
      %4919 = vmatpush1.msra.mxu0 0.0
      %4920 = vmatprep.subr.mxu0 0.0
      %4921 = vmatpush1.msra.mxu0 0.0
      %4922 = vmatprep.subr.mxu0 0.0
      %4923 = vmatpush1.msra.mxu0 0.0
      %4924 = vmatprep.subr.mxu0 0.0
      %4925 = vmatpush1.msra.mxu0 0.0
      %4926 = vmatprep.subr.mxu0 0.0
      %4927 = vmatpush1.msra.mxu0 0.0
      %4928 = vmatprep.subr.mxu0 0.0
      %4929 = vmatpush1.msra.mxu0 0.0
      %4930 = vmatprep.subr.mxu0 0.0
      %4931 = vmatpush1.msra.mxu0 0.0
      %4932 = vmatprep.subr.mxu0 0.0
      %4933 = vmatpush1.msra.mxu0 0.0
      %4934 = vmatprep.subr.mxu0 0.0
      %4935 = vmatpush1.msra.mxu0 0.0
      %4936 = vmatprep.subr.mxu0 0.0
      %4937 = vmatpush1.msra.mxu0 0.0
      %4938 = vmatprep.subr.mxu0 0.0
      %4939 = vmatpush1.msra.mxu0 %v4587
      %4940 = vmatprep.subr.mxu0 0.0
      %4941 = vmatpush1.msra.mxu0 %v4586
      %4942 = vmatprep.subr.mxu0 0.0
      %4943 = vmatpush1.msra.mxu0 %v4585
      %4944 = vmatprep.subr.mxu0 0.0
      %4945 = vmatpush1.msra.mxu0 %v4584
      %4946 = vmatprep.subr.mxu0 0.0
      %4947 = vmatpush2.msra.mxu0 0.0
      %4948 = vmatprep.subr.mxu0 0.0
      %4949 = vmatpush2.msra.mxu0 0.0
      %4950 = vmatprep.subr.mxu0 0.0
      %4951 = vmatpush2.msra.mxu0 0.0
      %4952 = vmatprep.subr.mxu0 0.0
      %4953 = vmatpush2.msra.mxu0 0.0
      %4954 = vmatprep.subr.mxu0 0.0
      %4955 = vmatpush2.msra.mxu0 0.0
      %4956 = vmatprep.subr.mxu0 0.0
      %4957 = vmatpush2.msra.mxu0 0.0
      %4958 = vmatprep.subr.mxu0 0.0
      %4959 = vmatpush2.msra.mxu0 0.0
      %4960 = vmatprep.subr.mxu0 0.0
      %4961 = vmatpush2.msra.mxu0 0.0
      %4962 = vmatprep.subr.mxu0 0.0
      %4963 = vmatpush2.msra.mxu0 0.0
      %4964 = vmatprep.subr.mxu0 0.0
      %4965 = vmatpush2.msra.mxu0 0.0
      %4966 = vmatprep.subr.mxu0 0.0
      %4967 = vmatpush2.msra.mxu0 0.0
      %4968 = vmatprep.subr.mxu0 0.0
      %4969 = vmatpush2.msra.mxu0 0.0
      %4970 = vmatprep.subr.mxu0 0.0
      %4971 = vmatpush2.msra.mxu0 0.0
      %4972 = vmatprep.subr.mxu0 0.0
      %4973 = vmatpush2.msra.mxu0 0.0
      %4974 = vmatprep.subr.mxu0 0.0
      %4975 = vmatpush2.msra.mxu0 0.0
      %4976 = vmatprep.subr.mxu0 0.0
      %4977 = vmatpush2.msra.mxu0 0.0
      %4978 = vmatprep.mubr.f32.mxu0 0.0
      %4979 = vmatmul.mubr.f32.gmra.mxu0 %v3871
      %v4980 = vpop.f32.mrf.mxu0
      %v4981 = vadd.f32 %v4623, %v4980
      %v4982 = vpop.f32.mrf.mxu0
      %4983 = vdwg.mxu0
      %4984 = vmatprep.subr.mxu0 0.0
      %4985 = vmatpush1.msra.mxu0 0.0
      %4986 = vmatprep.subr.mxu0 0.0
      %4987 = vmatpush1.msra.mxu0 0.0
      %4988 = vmatprep.subr.mxu0 0.0
      %4989 = vmatpush1.msra.mxu0 0.0
      %4990 = vmatprep.subr.mxu0 0.0
      %4991 = vmatpush1.msra.mxu0 0.0
      %4992 = vmatprep.subr.mxu0 0.0
      %4993 = vmatpush1.msra.mxu0 0.0
      %4994 = vmatprep.subr.mxu0 0.0
      %4995 = vmatpush1.msra.mxu0 0.0
      %4996 = vmatprep.subr.mxu0 0.0
      %4997 = vmatpush1.msra.mxu0 0.0
      %4998 = vmatprep.subr.mxu0 0.0
      %4999 = vmatpush1.msra.mxu0 0.0
      %5000 = vmatprep.subr.mxu0 0.0
      %5001 = vmatpush1.msra.mxu0 0.0
      %5002 = vmatprep.subr.mxu0 0.0
      %5003 = vmatpush1.msra.mxu0 0.0
      %5004 = vmatprep.subr.mxu0 0.0
      %5005 = vmatpush1.msra.mxu0 0.0
      %5006 = vmatprep.subr.mxu0 0.0
      %5007 = vmatpush1.msra.mxu0 0.0
      %5008 = vmatprep.subr.mxu0 0.0
      %5009 = vmatpush1.msra.mxu0 %v4591
      %5010 = vmatprep.subr.mxu0 0.0
      %5011 = vmatpush1.msra.mxu0 %v4590
      %5012 = vmatprep.subr.mxu0 0.0
      %5013 = vmatpush1.msra.mxu0 %v4589
      %5014 = vmatprep.subr.mxu0 0.0
      %5015 = vmatpush1.msra.mxu0 %v4588
      %5016 = vmatprep.subr.mxu0 0.0
      %5017 = vmatpush2.msra.mxu0 0.0
      %5018 = vmatprep.subr.mxu0 0.0
      %5019 = vmatpush2.msra.mxu0 0.0
      %5020 = vmatprep.subr.mxu0 0.0
      %5021 = vmatpush2.msra.mxu0 0.0
      %5022 = vmatprep.subr.mxu0 0.0
      %5023 = vmatpush2.msra.mxu0 0.0
      %5024 = vmatprep.subr.mxu0 0.0
      %5025 = vmatpush2.msra.mxu0 0.0
      %5026 = vmatprep.subr.mxu0 0.0
      %5027 = vmatpush2.msra.mxu0 0.0
      %5028 = vmatprep.subr.mxu0 0.0
      %5029 = vmatpush2.msra.mxu0 0.0
      %5030 = vmatprep.subr.mxu0 0.0
      %5031 = vmatpush2.msra.mxu0 0.0
      %5032 = vmatprep.subr.mxu0 0.0
      %5033 = vmatpush2.msra.mxu0 0.0
      %5034 = vmatprep.subr.mxu0 0.0
      %5035 = vmatpush2.msra.mxu0 0.0
      %5036 = vmatprep.subr.mxu0 0.0
      %5037 = vmatpush2.msra.mxu0 0.0
      %5038 = vmatprep.subr.mxu0 0.0
      %5039 = vmatpush2.msra.mxu0 0.0
      %5040 = vmatprep.subr.mxu0 0.0
      %5041 = vmatpush2.msra.mxu0 0.0
      %5042 = vmatprep.subr.mxu0 0.0
      %5043 = vmatpush2.msra.mxu0 0.0
      %5044 = vmatprep.subr.mxu0 0.0
      %5045 = vmatpush2.msra.mxu0 0.0
      %5046 = vmatprep.subr.mxu0 0.0
      %5047 = vmatpush2.msra.mxu0 0.0
      %5048 = vmatprep.mubr.f32.mxu0 0.0
      %5049 = vmatmul.mubr.f32.gmra.mxu0 %v3944
      %v5050 = vpop.f32.mrf.mxu0
      %v5051 = vadd.f32 %v4627, %v5050
      %v5052 = vpop.f32.mrf.mxu0
      %5053 = vdwg.mxu0
      %v5054 = vld [vmem:[%s65] sm:$0xff]
      %v5055 = vld [vmem:[%s65 + $0x8] sm:$0xff]
      %v5056 = vld [vmem:[%s65 + $0x10] sm:$0xff]
      %v5057 = vld [vmem:[%s65 + $0x18] sm:$0xff]
      %v5058 = vld [vmem:[%s65 + $0x20] sm:$0xff]
      %v5059 = vld [vmem:[%s65 + $0x28] sm:$0xff]
      %v5060 = vld [vmem:[%s65 + $0x30] sm:$0xff]
      %v5061 = vld [vmem:[%s65 + $0x38] sm:$0xff]
      %v5062 = vld [vmem:[%s65 + $0x40] sm:$0xff]
      %v5063 = vld [vmem:[%s65 + $0x48] sm:$0xff]
      %v5064 = vld [vmem:[%s65 + $0x50] sm:$0xff]
      %v5065 = vld [vmem:[%s65 + $0x58] sm:$0xff]
      %v5066 = vld [vmem:[%s65 + $0x60] sm:$0xff]
      %v5067 = vld [vmem:[%s65 + $0x68] sm:$0xff]
      %v5068 = vld [vmem:[%s65 + $0x70] sm:$0xff]
      %v5069 = vld [vmem:[%s65 + $0x78] sm:$0xff]
      %v5070 = vld [vmem:[%s65 + $0x80] sm:$0xff]
      %v5071 = vld [vmem:[%s65 + $0x88] sm:$0xff]
      %v5072 = vld [vmem:[%s65 + $0x90] sm:$0xff]
      %v5073 = vld [vmem:[%s65 + $0x98] sm:$0xff]
      %v5074 = vld [vmem:[%s65 + $0xa0] sm:$0xff]
      %v5075 = vld [vmem:[%s65 + $0xa8] sm:$0xff]
      %v5076 = vld [vmem:[%s65 + $0xb0] sm:$0xff]
      %v5077 = vld [vmem:[%s65 + $0xb8] sm:$0xff]
      %5078 = vmatprep.subr.mxu0 0.0
      %5079 = vmatpush1.msra.mxu0 0.0
      %5080 = vmatprep.subr.mxu0 0.0
      %5081 = vmatpush1.msra.mxu0 0.0
      %5082 = vmatprep.subr.mxu0 0.0
      %5083 = vmatpush1.msra.mxu0 0.0
      %5084 = vmatprep.subr.mxu0 0.0
      %5085 = vmatpush1.msra.mxu0 0.0
      %5086 = vmatprep.subr.mxu0 0.0
      %5087 = vmatpush1.msra.mxu0 0.0
      %5088 = vmatprep.subr.mxu0 0.0
      %5089 = vmatpush1.msra.mxu0 0.0
      %5090 = vmatprep.subr.mxu0 0.0
      %5091 = vmatpush1.msra.mxu0 0.0
      %5092 = vmatprep.subr.mxu0 0.0
      %5093 = vmatpush1.msra.mxu0 0.0
      %5094 = vmatprep.subr.mxu0 0.0
      %5095 = vmatpush1.msra.mxu0 0.0
      %5096 = vmatprep.subr.mxu0 0.0
      %5097 = vmatpush1.msra.mxu0 0.0
      %5098 = vmatprep.subr.mxu0 0.0
      %5099 = vmatpush1.msra.mxu0 0.0
      %5100 = vmatprep.subr.mxu0 0.0
      %5101 = vmatpush1.msra.mxu0 0.0
      %5102 = vmatprep.subr.mxu0 0.0
      %5103 = vmatpush1.msra.mxu0 %v5057
      %5104 = vmatprep.subr.mxu0 0.0
      %5105 = vmatpush1.msra.mxu0 %v5056
      %5106 = vmatprep.subr.mxu0 0.0
      %5107 = vmatpush1.msra.mxu0 %v5055
      %5108 = vmatprep.subr.mxu0 0.0
      %5109 = vmatpush1.msra.mxu0 %v5054
      %5110 = vmatprep.subr.mxu0 0.0
      %5111 = vmatpush2.msra.mxu0 0.0
      %5112 = vmatprep.subr.mxu0 0.0
      %5113 = vmatpush2.msra.mxu0 0.0
      %5114 = vmatprep.subr.mxu0 0.0
      %5115 = vmatpush2.msra.mxu0 0.0
      %5116 = vmatprep.subr.mxu0 0.0
      %5117 = vmatpush2.msra.mxu0 0.0
      %5118 = vmatprep.subr.mxu0 0.0
      %5119 = vmatpush2.msra.mxu0 0.0
      %5120 = vmatprep.subr.mxu0 0.0
      %5121 = vmatpush2.msra.mxu0 0.0
      %5122 = vmatprep.subr.mxu0 0.0
      %5123 = vmatpush2.msra.mxu0 0.0
      %5124 = vmatprep.subr.mxu0 0.0
      %5125 = vmatpush2.msra.mxu0 0.0
      %5126 = vmatprep.subr.mxu0 0.0
      %5127 = vmatpush2.msra.mxu0 0.0
      %5128 = vmatprep.subr.mxu0 0.0
      %5129 = vmatpush2.msra.mxu0 0.0
      %5130 = vmatprep.subr.mxu0 0.0
      %5131 = vmatpush2.msra.mxu0 0.0
      %5132 = vmatprep.subr.mxu0 0.0
      %5133 = vmatpush2.msra.mxu0 0.0
      %5134 = vmatprep.subr.mxu0 0.0
      %5135 = vmatpush2.msra.mxu0 0.0
      %5136 = vmatprep.subr.mxu0 0.0
      %5137 = vmatpush2.msra.mxu0 0.0
      %5138 = vmatprep.subr.mxu0 0.0
      %5139 = vmatpush2.msra.mxu0 0.0
      %5140 = vmatprep.subr.mxu0 0.0
      %5141 = vmatpush2.msra.mxu0 0.0
      %5142 = vmatprep.mubr.f32.mxu0 0.0
      %5143 = vmatmul.mubr.f32.gmra.mxu0 %v4041
      %v5144 = vpop.f32.mrf.mxu0
      %v5145 = vadd.f32 0.0, %v5144
      %v5146 = vpop.f32.mrf.mxu0
      %5147 = vdwg.mxu0
      %5148 = vmatprep.subr.mxu0 0.0
      %5149 = vmatpush1.msra.mxu0 0.0
      %5150 = vmatprep.subr.mxu0 0.0
      %5151 = vmatpush1.msra.mxu0 0.0
      %5152 = vmatprep.subr.mxu0 0.0
      %5153 = vmatpush1.msra.mxu0 0.0
      %5154 = vmatprep.subr.mxu0 0.0
      %5155 = vmatpush1.msra.mxu0 0.0
      %5156 = vmatprep.subr.mxu0 0.0
      %5157 = vmatpush1.msra.mxu0 0.0
      %5158 = vmatprep.subr.mxu0 0.0
      %5159 = vmatpush1.msra.mxu0 0.0
      %5160 = vmatprep.subr.mxu0 0.0
      %5161 = vmatpush1.msra.mxu0 0.0
      %5162 = vmatprep.subr.mxu0 0.0
      %5163 = vmatpush1.msra.mxu0 0.0
      %5164 = vmatprep.subr.mxu0 0.0
      %5165 = vmatpush1.msra.mxu0 0.0
      %5166 = vmatprep.subr.mxu0 0.0
      %5167 = vmatpush1.msra.mxu0 0.0
      %5168 = vmatprep.subr.mxu0 0.0
      %5169 = vmatpush1.msra.mxu0 0.0
      %5170 = vmatprep.subr.mxu0 0.0
      %5171 = vmatpush1.msra.mxu0 0.0
      %5172 = vmatprep.subr.mxu0 0.0
      %5173 = vmatpush1.msra.mxu0 %v5061
      %5174 = vmatprep.subr.mxu0 0.0
      %5175 = vmatpush1.msra.mxu0 %v5060
      %5176 = vmatprep.subr.mxu0 0.0
      %5177 = vmatpush1.msra.mxu0 %v5059
      %5178 = vmatprep.subr.mxu0 0.0
      %5179 = vmatpush1.msra.mxu0 %v5058
      %5180 = vmatprep.subr.mxu0 0.0
      %5181 = vmatpush2.msra.mxu0 0.0
      %5182 = vmatprep.subr.mxu0 0.0
      %5183 = vmatpush2.msra.mxu0 0.0
      %5184 = vmatprep.subr.mxu0 0.0
      %5185 = vmatpush2.msra.mxu0 0.0
      %5186 = vmatprep.subr.mxu0 0.0
      %5187 = vmatpush2.msra.mxu0 0.0
      %5188 = vmatprep.subr.mxu0 0.0
      %5189 = vmatpush2.msra.mxu0 0.0
      %5190 = vmatprep.subr.mxu0 0.0
      %5191 = vmatpush2.msra.mxu0 0.0
      %5192 = vmatprep.subr.mxu0 0.0
      %5193 = vmatpush2.msra.mxu0 0.0
      %5194 = vmatprep.subr.mxu0 0.0
      %5195 = vmatpush2.msra.mxu0 0.0
      %5196 = vmatprep.subr.mxu0 0.0
      %5197 = vmatpush2.msra.mxu0 0.0
      %5198 = vmatprep.subr.mxu0 0.0
      %5199 = vmatpush2.msra.mxu0 0.0
      %5200 = vmatprep.subr.mxu0 0.0
      %5201 = vmatpush2.msra.mxu0 0.0
      %5202 = vmatprep.subr.mxu0 0.0
      %5203 = vmatpush2.msra.mxu0 0.0
      %5204 = vmatprep.subr.mxu0 0.0
      %5205 = vmatpush2.msra.mxu0 0.0
      %5206 = vmatprep.subr.mxu0 0.0
      %5207 = vmatpush2.msra.mxu0 0.0
      %5208 = vmatprep.subr.mxu0 0.0
      %5209 = vmatpush2.msra.mxu0 0.0
      %5210 = vmatprep.subr.mxu0 0.0
      %5211 = vmatpush2.msra.mxu0 0.0
      %5212 = vmatprep.mubr.f32.mxu0 0.0
      %5213 = vmatmul.mubr.f32.gmra.mxu0 %v4114
      %v5214 = vpop.f32.mrf.mxu0
      %v5215 = vadd.f32 0.0, %v5214
      %v5216 = vpop.f32.mrf.mxu0
      %5217 = vdwg.mxu0
      %5218 = vmatprep.subr.mxu0 0.0
      %5219 = vmatpush1.msra.mxu0 0.0
      %5220 = vmatprep.subr.mxu0 0.0
      %5221 = vmatpush1.msra.mxu0 0.0
      %5222 = vmatprep.subr.mxu0 0.0
      %5223 = vmatpush1.msra.mxu0 0.0
      %5224 = vmatprep.subr.mxu0 0.0
      %5225 = vmatpush1.msra.mxu0 0.0
      %5226 = vmatprep.subr.mxu0 0.0
      %5227 = vmatpush1.msra.mxu0 0.0
      %5228 = vmatprep.subr.mxu0 0.0
      %5229 = vmatpush1.msra.mxu0 0.0
      %5230 = vmatprep.subr.mxu0 0.0
      %5231 = vmatpush1.msra.mxu0 0.0
      %5232 = vmatprep.subr.mxu0 0.0
      %5233 = vmatpush1.msra.mxu0 0.0
      %5234 = vmatprep.subr.mxu0 0.0
      %5235 = vmatpush1.msra.mxu0 0.0
      %5236 = vmatprep.subr.mxu0 0.0
      %5237 = vmatpush1.msra.mxu0 0.0
      %5238 = vmatprep.subr.mxu0 0.0
      %5239 = vmatpush1.msra.mxu0 0.0
      %5240 = vmatprep.subr.mxu0 0.0
      %5241 = vmatpush1.msra.mxu0 0.0
      %5242 = vmatprep.subr.mxu0 0.0
      %5243 = vmatpush1.msra.mxu0 %v5065
      %5244 = vmatprep.subr.mxu0 0.0
      %5245 = vmatpush1.msra.mxu0 %v5064
      %5246 = vmatprep.subr.mxu0 0.0
      %5247 = vmatpush1.msra.mxu0 %v5063
      %5248 = vmatprep.subr.mxu0 0.0
      %5249 = vmatpush1.msra.mxu0 %v5062
      %5250 = vmatprep.subr.mxu0 0.0
      %5251 = vmatpush2.msra.mxu0 0.0
      %5252 = vmatprep.subr.mxu0 0.0
      %5253 = vmatpush2.msra.mxu0 0.0
      %5254 = vmatprep.subr.mxu0 0.0
      %5255 = vmatpush2.msra.mxu0 0.0
      %5256 = vmatprep.subr.mxu0 0.0
      %5257 = vmatpush2.msra.mxu0 0.0
      %5258 = vmatprep.subr.mxu0 0.0
      %5259 = vmatpush2.msra.mxu0 0.0
      %5260 = vmatprep.subr.mxu0 0.0
      %5261 = vmatpush2.msra.mxu0 0.0
      %5262 = vmatprep.subr.mxu0 0.0
      %5263 = vmatpush2.msra.mxu0 0.0
      %5264 = vmatprep.subr.mxu0 0.0
      %5265 = vmatpush2.msra.mxu0 0.0
      %5266 = vmatprep.subr.mxu0 0.0
      %5267 = vmatpush2.msra.mxu0 0.0
      %5268 = vmatprep.subr.mxu0 0.0
      %5269 = vmatpush2.msra.mxu0 0.0
      %5270 = vmatprep.subr.mxu0 0.0
      %5271 = vmatpush2.msra.mxu0 0.0
      %5272 = vmatprep.subr.mxu0 0.0
      %5273 = vmatpush2.msra.mxu0 0.0
      %5274 = vmatprep.subr.mxu0 0.0
      %5275 = vmatpush2.msra.mxu0 0.0
      %5276 = vmatprep.subr.mxu0 0.0
      %5277 = vmatpush2.msra.mxu0 0.0
      %5278 = vmatprep.subr.mxu0 0.0
      %5279 = vmatpush2.msra.mxu0 0.0
      %5280 = vmatprep.subr.mxu0 0.0
      %5281 = vmatpush2.msra.mxu0 0.0
      %5282 = vmatprep.mubr.f32.mxu0 0.0
      %5283 = vmatmul.mubr.f32.gmra.mxu0 %v4187
      %v5284 = vpop.f32.mrf.mxu0
      %v5285 = vadd.f32 0.0, %v5284
      %v5286 = vpop.f32.mrf.mxu0
      %5287 = vdwg.mxu0
      %5288 = vmatprep.subr.mxu0 0.0
      %5289 = vmatpush1.msra.mxu0 0.0
      %5290 = vmatprep.subr.mxu0 0.0
      %5291 = vmatpush1.msra.mxu0 0.0
      %5292 = vmatprep.subr.mxu0 0.0
      %5293 = vmatpush1.msra.mxu0 0.0
      %5294 = vmatprep.subr.mxu0 0.0
      %5295 = vmatpush1.msra.mxu0 0.0
      %5296 = vmatprep.subr.mxu0 0.0
      %5297 = vmatpush1.msra.mxu0 0.0
      %5298 = vmatprep.subr.mxu0 0.0
      %5299 = vmatpush1.msra.mxu0 0.0
      %5300 = vmatprep.subr.mxu0 0.0
      %5301 = vmatpush1.msra.mxu0 0.0
      %5302 = vmatprep.subr.mxu0 0.0
      %5303 = vmatpush1.msra.mxu0 0.0
      %5304 = vmatprep.subr.mxu0 0.0
      %5305 = vmatpush1.msra.mxu0 0.0
      %5306 = vmatprep.subr.mxu0 0.0
      %5307 = vmatpush1.msra.mxu0 0.0
      %5308 = vmatprep.subr.mxu0 0.0
      %5309 = vmatpush1.msra.mxu0 0.0
      %5310 = vmatprep.subr.mxu0 0.0
      %5311 = vmatpush1.msra.mxu0 0.0
      %5312 = vmatprep.subr.mxu0 0.0
      %5313 = vmatpush1.msra.mxu0 %v5069
      %5314 = vmatprep.subr.mxu0 0.0
      %5315 = vmatpush1.msra.mxu0 %v5068
      %5316 = vmatprep.subr.mxu0 0.0
      %5317 = vmatpush1.msra.mxu0 %v5067
      %5318 = vmatprep.subr.mxu0 0.0
      %5319 = vmatpush1.msra.mxu0 %v5066
      %5320 = vmatprep.subr.mxu0 0.0
      %5321 = vmatpush2.msra.mxu0 0.0
      %5322 = vmatprep.subr.mxu0 0.0
      %5323 = vmatpush2.msra.mxu0 0.0
      %5324 = vmatprep.subr.mxu0 0.0
      %5325 = vmatpush2.msra.mxu0 0.0
      %5326 = vmatprep.subr.mxu0 0.0
      %5327 = vmatpush2.msra.mxu0 0.0
      %5328 = vmatprep.subr.mxu0 0.0
      %5329 = vmatpush2.msra.mxu0 0.0
      %5330 = vmatprep.subr.mxu0 0.0
      %5331 = vmatpush2.msra.mxu0 0.0
      %5332 = vmatprep.subr.mxu0 0.0
      %5333 = vmatpush2.msra.mxu0 0.0
      %5334 = vmatprep.subr.mxu0 0.0
      %5335 = vmatpush2.msra.mxu0 0.0
      %5336 = vmatprep.subr.mxu0 0.0
      %5337 = vmatpush2.msra.mxu0 0.0
      %5338 = vmatprep.subr.mxu0 0.0
      %5339 = vmatpush2.msra.mxu0 0.0
      %5340 = vmatprep.subr.mxu0 0.0
      %5341 = vmatpush2.msra.mxu0 0.0
      %5342 = vmatprep.subr.mxu0 0.0
      %5343 = vmatpush2.msra.mxu0 0.0
      %5344 = vmatprep.subr.mxu0 0.0
      %5345 = vmatpush2.msra.mxu0 0.0
      %5346 = vmatprep.subr.mxu0 0.0
      %5347 = vmatpush2.msra.mxu0 0.0
      %5348 = vmatprep.subr.mxu0 0.0
      %5349 = vmatpush2.msra.mxu0 0.0
      %5350 = vmatprep.subr.mxu0 0.0
      %5351 = vmatpush2.msra.mxu0 0.0
      %5352 = vmatprep.mubr.f32.mxu0 0.0
      %5353 = vmatmul.mubr.f32.gmra.mxu0 %v4260
      %v5354 = vpop.f32.mrf.mxu0
      %v5355 = vadd.f32 0.0, %v5354
      %v5356 = vpop.f32.mrf.mxu0
      %5357 = vdwg.mxu0
      %5358 = vmatprep.subr.mxu0 0.0
      %5359 = vmatpush1.msra.mxu0 0.0
      %5360 = vmatprep.subr.mxu0 0.0
      %5361 = vmatpush1.msra.mxu0 0.0
      %5362 = vmatprep.subr.mxu0 0.0
      %5363 = vmatpush1.msra.mxu0 0.0
      %5364 = vmatprep.subr.mxu0 0.0
      %5365 = vmatpush1.msra.mxu0 0.0
      %5366 = vmatprep.subr.mxu0 0.0
      %5367 = vmatpush1.msra.mxu0 0.0
      %5368 = vmatprep.subr.mxu0 0.0
      %5369 = vmatpush1.msra.mxu0 0.0
      %5370 = vmatprep.subr.mxu0 0.0
      %5371 = vmatpush1.msra.mxu0 0.0
      %5372 = vmatprep.subr.mxu0 0.0
      %5373 = vmatpush1.msra.mxu0 0.0
      %5374 = vmatprep.subr.mxu0 0.0
      %5375 = vmatpush1.msra.mxu0 0.0
      %5376 = vmatprep.subr.mxu0 0.0
      %5377 = vmatpush1.msra.mxu0 0.0
      %5378 = vmatprep.subr.mxu0 0.0
      %5379 = vmatpush1.msra.mxu0 0.0
      %5380 = vmatprep.subr.mxu0 0.0
      %5381 = vmatpush1.msra.mxu0 0.0
      %5382 = vmatprep.subr.mxu0 0.0
      %5383 = vmatpush1.msra.mxu0 %v5073
      %5384 = vmatprep.subr.mxu0 0.0
      %5385 = vmatpush1.msra.mxu0 %v5072
      %5386 = vmatprep.subr.mxu0 0.0
      %5387 = vmatpush1.msra.mxu0 %v5071
      %5388 = vmatprep.subr.mxu0 0.0
      %5389 = vmatpush1.msra.mxu0 %v5070
      %5390 = vmatprep.subr.mxu0 0.0
      %5391 = vmatpush2.msra.mxu0 0.0
      %5392 = vmatprep.subr.mxu0 0.0
      %5393 = vmatpush2.msra.mxu0 0.0
      %5394 = vmatprep.subr.mxu0 0.0
      %5395 = vmatpush2.msra.mxu0 0.0
      %5396 = vmatprep.subr.mxu0 0.0
      %5397 = vmatpush2.msra.mxu0 0.0
      %5398 = vmatprep.subr.mxu0 0.0
      %5399 = vmatpush2.msra.mxu0 0.0
      %5400 = vmatprep.subr.mxu0 0.0
      %5401 = vmatpush2.msra.mxu0 0.0
      %5402 = vmatprep.subr.mxu0 0.0
      %5403 = vmatpush2.msra.mxu0 0.0
      %5404 = vmatprep.subr.mxu0 0.0
      %5405 = vmatpush2.msra.mxu0 0.0
      %5406 = vmatprep.subr.mxu0 0.0
      %5407 = vmatpush2.msra.mxu0 0.0
      %5408 = vmatprep.subr.mxu0 0.0
      %5409 = vmatpush2.msra.mxu0 0.0
      %5410 = vmatprep.subr.mxu0 0.0
      %5411 = vmatpush2.msra.mxu0 0.0
      %5412 = vmatprep.subr.mxu0 0.0
      %5413 = vmatpush2.msra.mxu0 0.0
      %5414 = vmatprep.subr.mxu0 0.0
      %5415 = vmatpush2.msra.mxu0 0.0
      %5416 = vmatprep.subr.mxu0 0.0
      %5417 = vmatpush2.msra.mxu0 0.0
      %5418 = vmatprep.subr.mxu0 0.0
      %5419 = vmatpush2.msra.mxu0 0.0
      %5420 = vmatprep.subr.mxu0 0.0
      %5421 = vmatpush2.msra.mxu0 0.0
      %5422 = vmatprep.mubr.f32.mxu0 0.0
      %5423 = vmatmul.mubr.f32.gmra.mxu0 %v4333
      %v5424 = vpop.f32.mrf.mxu0
      %v5425 = vadd.f32 0.0, %v5424
      %v5426 = vpop.f32.mrf.mxu0
      %5427 = vdwg.mxu0
      %5428 = vmatprep.subr.mxu0 0.0
      %5429 = vmatpush1.msra.mxu0 0.0
      %5430 = vmatprep.subr.mxu0 0.0
      %5431 = vmatpush1.msra.mxu0 0.0
      %5432 = vmatprep.subr.mxu0 0.0
      %5433 = vmatpush1.msra.mxu0 0.0
      %5434 = vmatprep.subr.mxu0 0.0
      %5435 = vmatpush1.msra.mxu0 0.0
      %5436 = vmatprep.subr.mxu0 0.0
      %5437 = vmatpush1.msra.mxu0 0.0
      %5438 = vmatprep.subr.mxu0 0.0
      %5439 = vmatpush1.msra.mxu0 0.0
      %5440 = vmatprep.subr.mxu0 0.0
      %5441 = vmatpush1.msra.mxu0 0.0
      %5442 = vmatprep.subr.mxu0 0.0
      %5443 = vmatpush1.msra.mxu0 0.0
      %5444 = vmatprep.subr.mxu0 0.0
      %5445 = vmatpush1.msra.mxu0 0.0
      %5446 = vmatprep.subr.mxu0 0.0
      %5447 = vmatpush1.msra.mxu0 0.0
      %5448 = vmatprep.subr.mxu0 0.0
      %5449 = vmatpush1.msra.mxu0 0.0
      %5450 = vmatprep.subr.mxu0 0.0
      %5451 = vmatpush1.msra.mxu0 0.0
      %5452 = vmatprep.subr.mxu0 0.0
      %5453 = vmatpush1.msra.mxu0 %v5077
      %5454 = vmatprep.subr.mxu0 0.0
      %5455 = vmatpush1.msra.mxu0 %v5076
      %5456 = vmatprep.subr.mxu0 0.0
      %5457 = vmatpush1.msra.mxu0 %v5075
      %5458 = vmatprep.subr.mxu0 0.0
      %5459 = vmatpush1.msra.mxu0 %v5074
      %5460 = vmatprep.subr.mxu0 0.0
      %5461 = vmatpush2.msra.mxu0 0.0
      %5462 = vmatprep.subr.mxu0 0.0
      %5463 = vmatpush2.msra.mxu0 0.0
      %5464 = vmatprep.subr.mxu0 0.0
      %5465 = vmatpush2.msra.mxu0 0.0
      %5466 = vmatprep.subr.mxu0 0.0
      %5467 = vmatpush2.msra.mxu0 0.0
      %5468 = vmatprep.subr.mxu0 0.0
      %5469 = vmatpush2.msra.mxu0 0.0
      %5470 = vmatprep.subr.mxu0 0.0
      %5471 = vmatpush2.msra.mxu0 0.0
      %5472 = vmatprep.subr.mxu0 0.0
      %5473 = vmatpush2.msra.mxu0 0.0
      %5474 = vmatprep.subr.mxu0 0.0
      %5475 = vmatpush2.msra.mxu0 0.0
      %5476 = vmatprep.subr.mxu0 0.0
      %5477 = vmatpush2.msra.mxu0 0.0
      %5478 = vmatprep.subr.mxu0 0.0
      %5479 = vmatpush2.msra.mxu0 0.0
      %5480 = vmatprep.subr.mxu0 0.0
      %5481 = vmatpush2.msra.mxu0 0.0
      %5482 = vmatprep.subr.mxu0 0.0
      %5483 = vmatpush2.msra.mxu0 0.0
      %5484 = vmatprep.subr.mxu0 0.0
      %5485 = vmatpush2.msra.mxu0 0.0
      %5486 = vmatprep.subr.mxu0 0.0
      %5487 = vmatpush2.msra.mxu0 0.0
      %5488 = vmatprep.subr.mxu0 0.0
      %5489 = vmatpush2.msra.mxu0 0.0
      %5490 = vmatprep.subr.mxu0 0.0
      %5491 = vmatpush2.msra.mxu0 0.0
      %5492 = vmatprep.mubr.f32.mxu0 0.0
      %5493 = vmatmul.mubr.f32.gmra.mxu0 %v4406
      %v5494 = vpop.f32.mrf.mxu0
      %v5495 = vadd.f32 0.0, %v5494
      %v5496 = vpop.f32.mrf.mxu0
      %5497 = vdwg.mxu0
      %v5498 = vadd.f32 %v4701, %v5145
      %v5499 = vadd.f32 %v4771, %v5215
      %v5500 = vadd.f32 %v4841, %v5285
      %v5501 = vadd.f32 %v4911, %v5355
      %v5502 = vadd.f32 %v4981, %v5425
      %v5503 = vadd.f32 %v5051, %v5495
      %v5504 = vld [vmem:[%s77] sm:$0x1]
      %v5505 = vld [vmem:[%s77 + $0x1] sm:$0x1]
      %v5506 = vld [vmem:[%s77 + $0x2] sm:$0x1]
      %v5507 = vld [vmem:[%s77 + $0x3] sm:$0x1]
      %v5508 = vld [vmem:[%s77 + $0x4] sm:$0x1]
      %v5509 = vld [vmem:[%s77 + $0x5] sm:$0x1]
      %v5516 = vlaneseq
      %v5517 = vshrl.u32 %v5516, 7
      %v5518 = vsub.s32 0, %v5517
      %v5519 = vrot.slane %v5504, %v5518
      %v5520 = vlaneseq
      %v5521 = vshrl.u32 %v5520, 7
      %v5522 = vsub.s32 0, %v5521
      %v5523 = vrot.slane %v5505, %v5522
      %v5524 = vlaneseq
      %v5525 = vshrl.u32 %v5524, 7
      %v5526 = vsub.s32 0, %v5525
      %v5527 = vrot.slane %v5506, %v5526
      %v5528 = vlaneseq
      %v5529 = vshrl.u32 %v5528, 7
      %v5530 = vsub.s32 0, %v5529
      %v5531 = vrot.slane %v5507, %v5530
      %v5532 = vlaneseq
      %v5533 = vshrl.u32 %v5532, 7
      %v5534 = vsub.s32 0, %v5533
      %v5535 = vrot.slane %v5508, %v5534
      %v5536 = vlaneseq
      %v5537 = vshrl.u32 %v5536, 7
      %v5538 = vsub.s32 0, %v5537
      %v5539 = vrot.slane %v5509, %v5538
      %v5546 = vadd.f32 %v5498, %v5519
      %v5547 = vadd.f32 %v5499, %v5523
      %v5548 = vadd.f32 %v5500, %v5527
      %v5549 = vadd.f32 %v5501, %v5531
      %v5550 = vadd.f32 %v5502, %v5535
      %v5551 = vadd.f32 %v5503, %v5539
      %v5552 = vxor.u32 %v5546, 2147483648
      %v5553 = vxor.u32 %v5547, 2147483648
      %v5554 = vxor.u32 %v5548, 2147483648
      %v5555 = vxor.u32 %v5549, 2147483648
      %v5556 = vxor.u32 %v5550, 2147483648
      %v5557 = vxor.u32 %v5551, 2147483648
      %v5558 = vmul.f32 %v5552, 1.442695
      %v5559 = vpow.pop %v5558
      %v5560 = vmul.f32 %v5553, 1.442695
      %v5561 = vpow.pop %v5560
      %v5562 = vmul.f32 %v5554, 1.442695
      %v5563 = vpow.pop %v5562
      %v5564 = vmul.f32 %v5555, 1.442695
      %v5565 = vpow.pop %v5564
      %v5566 = vmul.f32 %v5556, 1.442695
      %v5567 = vpow.pop %v5566
      %v5568 = vmul.f32 %v5557, 1.442695
      %v5569 = vpow.pop %v5568
      %v5570 = vadd.f32 %v5559, 1.0
      %v5571 = vadd.f32 %v5561, 1.0
      %v5572 = vadd.f32 %v5563, 1.0
      %v5573 = vadd.f32 %v5565, 1.0
      %v5574 = vadd.f32 %v5567, 1.0
      %v5575 = vadd.f32 %v5569, 1.0
      %v5576 = vrcp.pop %v5570
      %v5577 = vmul.f32 1.0, %v5576
      %v5578 = vrcp.pop %v5571
      %v5579 = vmul.f32 1.0, %v5578
      %v5580 = vrcp.pop %v5572
      %v5581 = vmul.f32 1.0, %v5580
      %v5582 = vrcp.pop %v5573
      %v5583 = vmul.f32 1.0, %v5582
      %v5584 = vrcp.pop %v5574
      %v5585 = vmul.f32 1.0, %v5584
      %v5586 = vrcp.pop %v5575
      %v5587 = vmul.f32 1.0, %v5586
      %v5588 = vld [vmem:[%s61] sm:$0xff]
      %v5589 = vld [vmem:[%s61 + $0x8] sm:$0xff]
      %v5590 = vld [vmem:[%s61 + $0x10] sm:$0xff]
      %v5591 = vld [vmem:[%s61 + $0x18] sm:$0xff]
      %v5592 = vld [vmem:[%s61 + $0x20] sm:$0xff]
      %v5593 = vld [vmem:[%s61 + $0x28] sm:$0xff]
      %v5594 = vld [vmem:[%s61 + $0x30] sm:$0xff]
      %v5595 = vld [vmem:[%s61 + $0x38] sm:$0xff]
      %v5596 = vld [vmem:[%s61 + $0x40] sm:$0xff]
      %v5597 = vld [vmem:[%s61 + $0x48] sm:$0xff]
      %v5598 = vld [vmem:[%s61 + $0x50] sm:$0xff]
      %v5599 = vld [vmem:[%s61 + $0x58] sm:$0xff]
      %v5600 = vld [vmem:[%s61 + $0x60] sm:$0xff]
      %v5601 = vld [vmem:[%s61 + $0x68] sm:$0xff]
      %v5602 = vld [vmem:[%s61 + $0x70] sm:$0xff]
      %v5603 = vld [vmem:[%s61 + $0x78] sm:$0xff]
      %v5604 = vld [vmem:[%s61 + $0x80] sm:$0xff]
      %v5605 = vld [vmem:[%s61 + $0x88] sm:$0xff]
      %v5606 = vld [vmem:[%s61 + $0x90] sm:$0xff]
      %v5607 = vld [vmem:[%s61 + $0x98] sm:$0xff]
      %v5608 = vld [vmem:[%s61 + $0xa0] sm:$0xff]
      %v5609 = vld [vmem:[%s61 + $0xa8] sm:$0xff]
      %v5610 = vld [vmem:[%s61 + $0xb0] sm:$0xff]
      %v5611 = vld [vmem:[%s61 + $0xb8] sm:$0xff]
      %v5612 = vld [vmem:[%s73] sm:$0x1]
      %v5613 = vld [vmem:[%s73 + $0x1] sm:$0x1]
      %v5614 = vld [vmem:[%s73 + $0x2] sm:$0x1]
      %v5615 = vld [vmem:[%s73 + $0x3] sm:$0x1]
      %v5616 = vld [vmem:[%s73 + $0x4] sm:$0x1]
      %v5617 = vld [vmem:[%s73 + $0x5] sm:$0x1]
      %v5624 = vlaneseq
      %v5625 = vshrl.u32 %v5624, 7
      %v5626 = vsub.s32 0, %v5625
      %v5627 = vrot.slane %v5612, %v5626
      %v5628 = vlaneseq
      %v5629 = vshrl.u32 %v5628, 7
      %v5630 = vsub.s32 0, %v5629
      %v5631 = vrot.slane %v5613, %v5630
      %v5632 = vlaneseq
      %v5633 = vshrl.u32 %v5632, 7
      %v5634 = vsub.s32 0, %v5633
      %v5635 = vrot.slane %v5614, %v5634
      %v5636 = vlaneseq
      %v5637 = vshrl.u32 %v5636, 7
      %v5638 = vsub.s32 0, %v5637
      %v5639 = vrot.slane %v5615, %v5638
      %v5640 = vlaneseq
      %v5641 = vshrl.u32 %v5640, 7
      %v5642 = vsub.s32 0, %v5641
      %v5643 = vrot.slane %v5616, %v5642
      %v5644 = vlaneseq
      %v5645 = vshrl.u32 %v5644, 7
      %v5646 = vsub.s32 0, %v5645
      %v5647 = vrot.slane %v5617, %v5646
      %5654 = vmatprep.subr.mxu0 0.0
      %5655 = vmatpush1.msra.mxu0 0.0
      %5656 = vmatprep.subr.mxu0 0.0
      %5657 = vmatpush1.msra.mxu0 0.0
      %5658 = vmatprep.subr.mxu0 0.0
      %5659 = vmatpush1.msra.mxu0 0.0
      %5660 = vmatprep.subr.mxu0 0.0
      %5661 = vmatpush1.msra.mxu0 0.0
      %5662 = vmatprep.subr.mxu0 0.0
      %5663 = vmatpush1.msra.mxu0 0.0
      %5664 = vmatprep.subr.mxu0 0.0
      %5665 = vmatpush1.msra.mxu0 0.0
      %5666 = vmatprep.subr.mxu0 0.0
      %5667 = vmatpush1.msra.mxu0 0.0
      %5668 = vmatprep.subr.mxu0 0.0
      %5669 = vmatpush1.msra.mxu0 0.0
      %5670 = vmatprep.subr.mxu0 0.0
      %5671 = vmatpush1.msra.mxu0 0.0
      %5672 = vmatprep.subr.mxu0 0.0
      %5673 = vmatpush1.msra.mxu0 0.0
      %5674 = vmatprep.subr.mxu0 0.0
      %5675 = vmatpush1.msra.mxu0 0.0
      %5676 = vmatprep.subr.mxu0 0.0
      %5677 = vmatpush1.msra.mxu0 0.0
      %5678 = vmatprep.subr.mxu0 0.0
      %5679 = vmatpush1.msra.mxu0 %v5591
      %5680 = vmatprep.subr.mxu0 0.0
      %5681 = vmatpush1.msra.mxu0 %v5590
      %5682 = vmatprep.subr.mxu0 0.0
      %5683 = vmatpush1.msra.mxu0 %v5589
      %5684 = vmatprep.subr.mxu0 0.0
      %5685 = vmatpush1.msra.mxu0 %v5588
      %5686 = vmatprep.subr.mxu0 0.0
      %5687 = vmatpush2.msra.mxu0 0.0
      %5688 = vmatprep.subr.mxu0 0.0
      %5689 = vmatpush2.msra.mxu0 0.0
      %5690 = vmatprep.subr.mxu0 0.0
      %5691 = vmatpush2.msra.mxu0 0.0
      %5692 = vmatprep.subr.mxu0 0.0
      %5693 = vmatpush2.msra.mxu0 0.0
      %5694 = vmatprep.subr.mxu0 0.0
      %5695 = vmatpush2.msra.mxu0 0.0
      %5696 = vmatprep.subr.mxu0 0.0
      %5697 = vmatpush2.msra.mxu0 0.0
      %5698 = vmatprep.subr.mxu0 0.0
      %5699 = vmatpush2.msra.mxu0 0.0
      %5700 = vmatprep.subr.mxu0 0.0
      %5701 = vmatpush2.msra.mxu0 0.0
      %5702 = vmatprep.subr.mxu0 0.0
      %5703 = vmatpush2.msra.mxu0 0.0
      %5704 = vmatprep.subr.mxu0 0.0
      %5705 = vmatpush2.msra.mxu0 0.0
      %5706 = vmatprep.subr.mxu0 0.0
      %5707 = vmatpush2.msra.mxu0 0.0
      %5708 = vmatprep.subr.mxu0 0.0
      %5709 = vmatpush2.msra.mxu0 0.0
      %5710 = vmatprep.subr.mxu0 0.0
      %5711 = vmatpush2.msra.mxu0 0.0
      %5712 = vmatprep.subr.mxu0 0.0
      %5713 = vmatpush2.msra.mxu0 0.0
      %5714 = vmatprep.subr.mxu0 0.0
      %5715 = vmatpush2.msra.mxu0 0.0
      %5716 = vmatprep.subr.mxu0 0.0
      %5717 = vmatpush2.msra.mxu0 0.0
      %5718 = vmatprep.mubr.f32.mxu0 0.0
      %5719 = vmatmul.mubr.f32.gmra.mxu0 %v3579
      %v5720 = vpop.f32.mrf.mxu0
      %v5721 = vadd.f32 %v5627, %v5720
      %v5722 = vpop.f32.mrf.mxu0
      %5723 = vdwg.mxu0
      %5724 = vmatprep.subr.mxu0 0.0
      %5725 = vmatpush1.msra.mxu0 0.0
      %5726 = vmatprep.subr.mxu0 0.0
      %5727 = vmatpush1.msra.mxu0 0.0
      %5728 = vmatprep.subr.mxu0 0.0
      %5729 = vmatpush1.msra.mxu0 0.0
      %5730 = vmatprep.subr.mxu0 0.0
      %5731 = vmatpush1.msra.mxu0 0.0
      %5732 = vmatprep.subr.mxu0 0.0
      %5733 = vmatpush1.msra.mxu0 0.0
      %5734 = vmatprep.subr.mxu0 0.0
      %5735 = vmatpush1.msra.mxu0 0.0
      %5736 = vmatprep.subr.mxu0 0.0
      %5737 = vmatpush1.msra.mxu0 0.0
      %5738 = vmatprep.subr.mxu0 0.0
      %5739 = vmatpush1.msra.mxu0 0.0
      %5740 = vmatprep.subr.mxu0 0.0
      %5741 = vmatpush1.msra.mxu0 0.0
      %5742 = vmatprep.subr.mxu0 0.0
      %5743 = vmatpush1.msra.mxu0 0.0
      %5744 = vmatprep.subr.mxu0 0.0
      %5745 = vmatpush1.msra.mxu0 0.0
      %5746 = vmatprep.subr.mxu0 0.0
      %5747 = vmatpush1.msra.mxu0 0.0
      %5748 = vmatprep.subr.mxu0 0.0
      %5749 = vmatpush1.msra.mxu0 %v5595
      %5750 = vmatprep.subr.mxu0 0.0
      %5751 = vmatpush1.msra.mxu0 %v5594
      %5752 = vmatprep.subr.mxu0 0.0
      %5753 = vmatpush1.msra.mxu0 %v5593
      %5754 = vmatprep.subr.mxu0 0.0
      %5755 = vmatpush1.msra.mxu0 %v5592
      %5756 = vmatprep.subr.mxu0 0.0
      %5757 = vmatpush2.msra.mxu0 0.0
      %5758 = vmatprep.subr.mxu0 0.0
      %5759 = vmatpush2.msra.mxu0 0.0
      %5760 = vmatprep.subr.mxu0 0.0
      %5761 = vmatpush2.msra.mxu0 0.0
      %5762 = vmatprep.subr.mxu0 0.0
      %5763 = vmatpush2.msra.mxu0 0.0
      %5764 = vmatprep.subr.mxu0 0.0
      %5765 = vmatpush2.msra.mxu0 0.0
      %5766 = vmatprep.subr.mxu0 0.0
      %5767 = vmatpush2.msra.mxu0 0.0
      %5768 = vmatprep.subr.mxu0 0.0
      %5769 = vmatpush2.msra.mxu0 0.0
      %5770 = vmatprep.subr.mxu0 0.0
      %5771 = vmatpush2.msra.mxu0 0.0
      %5772 = vmatprep.subr.mxu0 0.0
      %5773 = vmatpush2.msra.mxu0 0.0
      %5774 = vmatprep.subr.mxu0 0.0
      %5775 = vmatpush2.msra.mxu0 0.0
      %5776 = vmatprep.subr.mxu0 0.0
      %5777 = vmatpush2.msra.mxu0 0.0
      %5778 = vmatprep.subr.mxu0 0.0
      %5779 = vmatpush2.msra.mxu0 0.0
      %5780 = vmatprep.subr.mxu0 0.0
      %5781 = vmatpush2.msra.mxu0 0.0
      %5782 = vmatprep.subr.mxu0 0.0
      %5783 = vmatpush2.msra.mxu0 0.0
      %5784 = vmatprep.subr.mxu0 0.0
      %5785 = vmatpush2.msra.mxu0 0.0
      %5786 = vmatprep.subr.mxu0 0.0
      %5787 = vmatpush2.msra.mxu0 0.0
      %5788 = vmatprep.mubr.f32.mxu0 0.0
      %5789 = vmatmul.mubr.f32.gmra.mxu0 %v3652
      %v5790 = vpop.f32.mrf.mxu0
      %v5791 = vadd.f32 %v5631, %v5790
      %v5792 = vpop.f32.mrf.mxu0
      %5793 = vdwg.mxu0
      %5794 = vmatprep.subr.mxu0 0.0
      %5795 = vmatpush1.msra.mxu0 0.0
      %5796 = vmatprep.subr.mxu0 0.0
      %5797 = vmatpush1.msra.mxu0 0.0
      %5798 = vmatprep.subr.mxu0 0.0
      %5799 = vmatpush1.msra.mxu0 0.0
      %5800 = vmatprep.subr.mxu0 0.0
      %5801 = vmatpush1.msra.mxu0 0.0
      %5802 = vmatprep.subr.mxu0 0.0
      %5803 = vmatpush1.msra.mxu0 0.0
      %5804 = vmatprep.subr.mxu0 0.0
      %5805 = vmatpush1.msra.mxu0 0.0
      %5806 = vmatprep.subr.mxu0 0.0
      %5807 = vmatpush1.msra.mxu0 0.0
      %5808 = vmatprep.subr.mxu0 0.0
      %5809 = vmatpush1.msra.mxu0 0.0
      %5810 = vmatprep.subr.mxu0 0.0
      %5811 = vmatpush1.msra.mxu0 0.0
      %5812 = vmatprep.subr.mxu0 0.0
      %5813 = vmatpush1.msra.mxu0 0.0
      %5814 = vmatprep.subr.mxu0 0.0
      %5815 = vmatpush1.msra.mxu0 0.0
      %5816 = vmatprep.subr.mxu0 0.0
      %5817 = vmatpush1.msra.mxu0 0.0
      %5818 = vmatprep.subr.mxu0 0.0
      %5819 = vmatpush1.msra.mxu0 %v5599
      %5820 = vmatprep.subr.mxu0 0.0
      %5821 = vmatpush1.msra.mxu0 %v5598
      %5822 = vmatprep.subr.mxu0 0.0
      %5823 = vmatpush1.msra.mxu0 %v5597
      %5824 = vmatprep.subr.mxu0 0.0
      %5825 = vmatpush1.msra.mxu0 %v5596
      %5826 = vmatprep.subr.mxu0 0.0
      %5827 = vmatpush2.msra.mxu0 0.0
      %5828 = vmatprep.subr.mxu0 0.0
      %5829 = vmatpush2.msra.mxu0 0.0
      %5830 = vmatprep.subr.mxu0 0.0
      %5831 = vmatpush2.msra.mxu0 0.0
      %5832 = vmatprep.subr.mxu0 0.0
      %5833 = vmatpush2.msra.mxu0 0.0
      %5834 = vmatprep.subr.mxu0 0.0
      %5835 = vmatpush2.msra.mxu0 0.0
      %5836 = vmatprep.subr.mxu0 0.0
      %5837 = vmatpush2.msra.mxu0 0.0
      %5838 = vmatprep.subr.mxu0 0.0
      %5839 = vmatpush2.msra.mxu0 0.0
      %5840 = vmatprep.subr.mxu0 0.0
      %5841 = vmatpush2.msra.mxu0 0.0
      %5842 = vmatprep.subr.mxu0 0.0
      %5843 = vmatpush2.msra.mxu0 0.0
      %5844 = vmatprep.subr.mxu0 0.0
      %5845 = vmatpush2.msra.mxu0 0.0
      %5846 = vmatprep.subr.mxu0 0.0
      %5847 = vmatpush2.msra.mxu0 0.0
      %5848 = vmatprep.subr.mxu0 0.0
      %5849 = vmatpush2.msra.mxu0 0.0
      %5850 = vmatprep.subr.mxu0 0.0
      %5851 = vmatpush2.msra.mxu0 0.0
      %5852 = vmatprep.subr.mxu0 0.0
      %5853 = vmatpush2.msra.mxu0 0.0
      %5854 = vmatprep.subr.mxu0 0.0
      %5855 = vmatpush2.msra.mxu0 0.0
      %5856 = vmatprep.subr.mxu0 0.0
      %5857 = vmatpush2.msra.mxu0 0.0
      %5858 = vmatprep.mubr.f32.mxu0 0.0
      %5859 = vmatmul.mubr.f32.gmra.mxu0 %v3725
      %v5860 = vpop.f32.mrf.mxu0
      %v5861 = vadd.f32 %v5635, %v5860
      %v5862 = vpop.f32.mrf.mxu0
      %5863 = vdwg.mxu0
      %5864 = vmatprep.subr.mxu0 0.0
      %5865 = vmatpush1.msra.mxu0 0.0
      %5866 = vmatprep.subr.mxu0 0.0
      %5867 = vmatpush1.msra.mxu0 0.0
      %5868 = vmatprep.subr.mxu0 0.0
      %5869 = vmatpush1.msra.mxu0 0.0
      %5870 = vmatprep.subr.mxu0 0.0
      %5871 = vmatpush1.msra.mxu0 0.0
      %5872 = vmatprep.subr.mxu0 0.0
      %5873 = vmatpush1.msra.mxu0 0.0
      %5874 = vmatprep.subr.mxu0 0.0
      %5875 = vmatpush1.msra.mxu0 0.0
      %5876 = vmatprep.subr.mxu0 0.0
      %5877 = vmatpush1.msra.mxu0 0.0
      %5878 = vmatprep.subr.mxu0 0.0
      %5879 = vmatpush1.msra.mxu0 0.0
      %5880 = vmatprep.subr.mxu0 0.0
      %5881 = vmatpush1.msra.mxu0 0.0
      %5882 = vmatprep.subr.mxu0 0.0
      %5883 = vmatpush1.msra.mxu0 0.0
      %5884 = vmatprep.subr.mxu0 0.0
      %5885 = vmatpush1.msra.mxu0 0.0
      %5886 = vmatprep.subr.mxu0 0.0
      %5887 = vmatpush1.msra.mxu0 0.0
      %5888 = vmatprep.subr.mxu0 0.0
      %5889 = vmatpush1.msra.mxu0 %v5603
      %5890 = vmatprep.subr.mxu0 0.0
      %5891 = vmatpush1.msra.mxu0 %v5602
      %5892 = vmatprep.subr.mxu0 0.0
      %5893 = vmatpush1.msra.mxu0 %v5601
      %5894 = vmatprep.subr.mxu0 0.0
      %5895 = vmatpush1.msra.mxu0 %v5600
      %5896 = vmatprep.subr.mxu0 0.0
      %5897 = vmatpush2.msra.mxu0 0.0
      %5898 = vmatprep.subr.mxu0 0.0
      %5899 = vmatpush2.msra.mxu0 0.0
      %5900 = vmatprep.subr.mxu0 0.0
      %5901 = vmatpush2.msra.mxu0 0.0
      %5902 = vmatprep.subr.mxu0 0.0
      %5903 = vmatpush2.msra.mxu0 0.0
      %5904 = vmatprep.subr.mxu0 0.0
      %5905 = vmatpush2.msra.mxu0 0.0
      %5906 = vmatprep.subr.mxu0 0.0
      %5907 = vmatpush2.msra.mxu0 0.0
      %5908 = vmatprep.subr.mxu0 0.0
      %5909 = vmatpush2.msra.mxu0 0.0
      %5910 = vmatprep.subr.mxu0 0.0
      %5911 = vmatpush2.msra.mxu0 0.0
      %5912 = vmatprep.subr.mxu0 0.0
      %5913 = vmatpush2.msra.mxu0 0.0
      %5914 = vmatprep.subr.mxu0 0.0
      %5915 = vmatpush2.msra.mxu0 0.0
      %5916 = vmatprep.subr.mxu0 0.0
      %5917 = vmatpush2.msra.mxu0 0.0
      %5918 = vmatprep.subr.mxu0 0.0
      %5919 = vmatpush2.msra.mxu0 0.0
      %5920 = vmatprep.subr.mxu0 0.0
      %5921 = vmatpush2.msra.mxu0 0.0
      %5922 = vmatprep.subr.mxu0 0.0
      %5923 = vmatpush2.msra.mxu0 0.0
      %5924 = vmatprep.subr.mxu0 0.0
      %5925 = vmatpush2.msra.mxu0 0.0
      %5926 = vmatprep.subr.mxu0 0.0
      %5927 = vmatpush2.msra.mxu0 0.0
      %5928 = vmatprep.mubr.f32.mxu0 0.0
      %5929 = vmatmul.mubr.f32.gmra.mxu0 %v3798
      %v5930 = vpop.f32.mrf.mxu0
      %v5931 = vadd.f32 %v5639, %v5930
      %v5932 = vpop.f32.mrf.mxu0
      %5933 = vdwg.mxu0
      %5934 = vmatprep.subr.mxu0 0.0
      %5935 = vmatpush1.msra.mxu0 0.0
      %5936 = vmatprep.subr.mxu0 0.0
      %5937 = vmatpush1.msra.mxu0 0.0
      %5938 = vmatprep.subr.mxu0 0.0
      %5939 = vmatpush1.msra.mxu0 0.0
      %5940 = vmatprep.subr.mxu0 0.0
      %5941 = vmatpush1.msra.mxu0 0.0
      %5942 = vmatprep.subr.mxu0 0.0
      %5943 = vmatpush1.msra.mxu0 0.0
      %5944 = vmatprep.subr.mxu0 0.0
      %5945 = vmatpush1.msra.mxu0 0.0
      %5946 = vmatprep.subr.mxu0 0.0
      %5947 = vmatpush1.msra.mxu0 0.0
      %5948 = vmatprep.subr.mxu0 0.0
      %5949 = vmatpush1.msra.mxu0 0.0
      %5950 = vmatprep.subr.mxu0 0.0
      %5951 = vmatpush1.msra.mxu0 0.0
      %5952 = vmatprep.subr.mxu0 0.0
      %5953 = vmatpush1.msra.mxu0 0.0
      %5954 = vmatprep.subr.mxu0 0.0
      %5955 = vmatpush1.msra.mxu0 0.0
      %5956 = vmatprep.subr.mxu0 0.0
      %5957 = vmatpush1.msra.mxu0 0.0
      %5958 = vmatprep.subr.mxu0 0.0
      %5959 = vmatpush1.msra.mxu0 %v5607
      %5960 = vmatprep.subr.mxu0 0.0
      %5961 = vmatpush1.msra.mxu0 %v5606
      %5962 = vmatprep.subr.mxu0 0.0
      %5963 = vmatpush1.msra.mxu0 %v5605
      %5964 = vmatprep.subr.mxu0 0.0
      %5965 = vmatpush1.msra.mxu0 %v5604
      %5966 = vmatprep.subr.mxu0 0.0
      %5967 = vmatpush2.msra.mxu0 0.0
      %5968 = vmatprep.subr.mxu0 0.0
      %5969 = vmatpush2.msra.mxu0 0.0
      %5970 = vmatprep.subr.mxu0 0.0
      %5971 = vmatpush2.msra.mxu0 0.0
      %5972 = vmatprep.subr.mxu0 0.0
      %5973 = vmatpush2.msra.mxu0 0.0
      %5974 = vmatprep.subr.mxu0 0.0
      %5975 = vmatpush2.msra.mxu0 0.0
      %5976 = vmatprep.subr.mxu0 0.0
      %5977 = vmatpush2.msra.mxu0 0.0
      %5978 = vmatprep.subr.mxu0 0.0
      %5979 = vmatpush2.msra.mxu0 0.0
      %5980 = vmatprep.subr.mxu0 0.0
      %5981 = vmatpush2.msra.mxu0 0.0
      %5982 = vmatprep.subr.mxu0 0.0
      %5983 = vmatpush2.msra.mxu0 0.0
      %5984 = vmatprep.subr.mxu0 0.0
      %5985 = vmatpush2.msra.mxu0 0.0
      %5986 = vmatprep.subr.mxu0 0.0
      %5987 = vmatpush2.msra.mxu0 0.0
      %5988 = vmatprep.subr.mxu0 0.0
      %5989 = vmatpush2.msra.mxu0 0.0
      %5990 = vmatprep.subr.mxu0 0.0
      %5991 = vmatpush2.msra.mxu0 0.0
      %5992 = vmatprep.subr.mxu0 0.0
      %5993 = vmatpush2.msra.mxu0 0.0
      %5994 = vmatprep.subr.mxu0 0.0
      %5995 = vmatpush2.msra.mxu0 0.0
      %5996 = vmatprep.subr.mxu0 0.0
      %5997 = vmatpush2.msra.mxu0 0.0
      %5998 = vmatprep.mubr.f32.mxu0 0.0
      %5999 = vmatmul.mubr.f32.gmra.mxu0 %v3871
      %v6000 = vpop.f32.mrf.mxu0
      %v6001 = vadd.f32 %v5643, %v6000
      %v6002 = vpop.f32.mrf.mxu0
      %6003 = vdwg.mxu0
      %6004 = vmatprep.subr.mxu0 0.0
      %6005 = vmatpush1.msra.mxu0 0.0
      %6006 = vmatprep.subr.mxu0 0.0
      %6007 = vmatpush1.msra.mxu0 0.0
      %6008 = vmatprep.subr.mxu0 0.0
      %6009 = vmatpush1.msra.mxu0 0.0
      %6010 = vmatprep.subr.mxu0 0.0
      %6011 = vmatpush1.msra.mxu0 0.0
      %6012 = vmatprep.subr.mxu0 0.0
      %6013 = vmatpush1.msra.mxu0 0.0
      %6014 = vmatprep.subr.mxu0 0.0
      %6015 = vmatpush1.msra.mxu0 0.0
      %6016 = vmatprep.subr.mxu0 0.0
      %6017 = vmatpush1.msra.mxu0 0.0
      %6018 = vmatprep.subr.mxu0 0.0
      %6019 = vmatpush1.msra.mxu0 0.0
      %6020 = vmatprep.subr.mxu0 0.0
      %6021 = vmatpush1.msra.mxu0 0.0
      %6022 = vmatprep.subr.mxu0 0.0
      %6023 = vmatpush1.msra.mxu0 0.0
      %6024 = vmatprep.subr.mxu0 0.0
      %6025 = vmatpush1.msra.mxu0 0.0
      %6026 = vmatprep.subr.mxu0 0.0
      %6027 = vmatpush1.msra.mxu0 0.0
      %6028 = vmatprep.subr.mxu0 0.0
      %6029 = vmatpush1.msra.mxu0 %v5611
      %6030 = vmatprep.subr.mxu0 0.0
      %6031 = vmatpush1.msra.mxu0 %v5610
      %6032 = vmatprep.subr.mxu0 0.0
      %6033 = vmatpush1.msra.mxu0 %v5609
      %6034 = vmatprep.subr.mxu0 0.0
      %6035 = vmatpush1.msra.mxu0 %v5608
      %6036 = vmatprep.subr.mxu0 0.0
      %6037 = vmatpush2.msra.mxu0 0.0
      %6038 = vmatprep.subr.mxu0 0.0
      %6039 = vmatpush2.msra.mxu0 0.0
      %6040 = vmatprep.subr.mxu0 0.0
      %6041 = vmatpush2.msra.mxu0 0.0
      %6042 = vmatprep.subr.mxu0 0.0
      %6043 = vmatpush2.msra.mxu0 0.0
      %6044 = vmatprep.subr.mxu0 0.0
      %6045 = vmatpush2.msra.mxu0 0.0
      %6046 = vmatprep.subr.mxu0 0.0
      %6047 = vmatpush2.msra.mxu0 0.0
      %6048 = vmatprep.subr.mxu0 0.0
      %6049 = vmatpush2.msra.mxu0 0.0
      %6050 = vmatprep.subr.mxu0 0.0
      %6051 = vmatpush2.msra.mxu0 0.0
      %6052 = vmatprep.subr.mxu0 0.0
      %6053 = vmatpush2.msra.mxu0 0.0
      %6054 = vmatprep.subr.mxu0 0.0
      %6055 = vmatpush2.msra.mxu0 0.0
      %6056 = vmatprep.subr.mxu0 0.0
      %6057 = vmatpush2.msra.mxu0 0.0
      %6058 = vmatprep.subr.mxu0 0.0
      %6059 = vmatpush2.msra.mxu0 0.0
      %6060 = vmatprep.subr.mxu0 0.0
      %6061 = vmatpush2.msra.mxu0 0.0
      %6062 = vmatprep.subr.mxu0 0.0
      %6063 = vmatpush2.msra.mxu0 0.0
      %6064 = vmatprep.subr.mxu0 0.0
      %6065 = vmatpush2.msra.mxu0 0.0
      %6066 = vmatprep.subr.mxu0 0.0
      %6067 = vmatpush2.msra.mxu0 0.0
      %6068 = vmatprep.mubr.f32.mxu0 0.0
      %6069 = vmatmul.mubr.f32.gmra.mxu0 %v3944
      %v6070 = vpop.f32.mrf.mxu0
      %v6071 = vadd.f32 %v5647, %v6070
      %v6072 = vpop.f32.mrf.mxu0
      %6073 = vdwg.mxu0
      %v6074 = vld [vmem:[%s67] sm:$0xff]
      %v6075 = vld [vmem:[%s67 + $0x8] sm:$0xff]
      %v6076 = vld [vmem:[%s67 + $0x10] sm:$0xff]
      %v6077 = vld [vmem:[%s67 + $0x18] sm:$0xff]
      %v6078 = vld [vmem:[%s67 + $0x20] sm:$0xff]
      %v6079 = vld [vmem:[%s67 + $0x28] sm:$0xff]
      %v6080 = vld [vmem:[%s67 + $0x30] sm:$0xff]
      %v6081 = vld [vmem:[%s67 + $0x38] sm:$0xff]
      %v6082 = vld [vmem:[%s67 + $0x40] sm:$0xff]
      %v6083 = vld [vmem:[%s67 + $0x48] sm:$0xff]
      %v6084 = vld [vmem:[%s67 + $0x50] sm:$0xff]
      %v6085 = vld [vmem:[%s67 + $0x58] sm:$0xff]
      %v6086 = vld [vmem:[%s67 + $0x60] sm:$0xff]
      %v6087 = vld [vmem:[%s67 + $0x68] sm:$0xff]
      %v6088 = vld [vmem:[%s67 + $0x70] sm:$0xff]
      %v6089 = vld [vmem:[%s67 + $0x78] sm:$0xff]
      %v6090 = vld [vmem:[%s67 + $0x80] sm:$0xff]
      %v6091 = vld [vmem:[%s67 + $0x88] sm:$0xff]
      %v6092 = vld [vmem:[%s67 + $0x90] sm:$0xff]
      %v6093 = vld [vmem:[%s67 + $0x98] sm:$0xff]
      %v6094 = vld [vmem:[%s67 + $0xa0] sm:$0xff]
      %v6095 = vld [vmem:[%s67 + $0xa8] sm:$0xff]
      %v6096 = vld [vmem:[%s67 + $0xb0] sm:$0xff]
      %v6097 = vld [vmem:[%s67 + $0xb8] sm:$0xff]
      %v6098 = vld [vmem:[%s79] sm:$0x1]
      %v6099 = vld [vmem:[%s79 + $0x1] sm:$0x1]
      %v6100 = vld [vmem:[%s79 + $0x2] sm:$0x1]
      %v6101 = vld [vmem:[%s79 + $0x3] sm:$0x1]
      %v6102 = vld [vmem:[%s79 + $0x4] sm:$0x1]
      %v6103 = vld [vmem:[%s79 + $0x5] sm:$0x1]
      %v6110 = vlaneseq
      %v6111 = vshrl.u32 %v6110, 7
      %v6112 = vsub.s32 0, %v6111
      %v6113 = vrot.slane %v6098, %v6112
      %v6114 = vlaneseq
      %v6115 = vshrl.u32 %v6114, 7
      %v6116 = vsub.s32 0, %v6115
      %v6117 = vrot.slane %v6099, %v6116
      %v6118 = vlaneseq
      %v6119 = vshrl.u32 %v6118, 7
      %v6120 = vsub.s32 0, %v6119
      %v6121 = vrot.slane %v6100, %v6120
      %v6122 = vlaneseq
      %v6123 = vshrl.u32 %v6122, 7
      %v6124 = vsub.s32 0, %v6123
      %v6125 = vrot.slane %v6101, %v6124
      %v6126 = vlaneseq
      %v6127 = vshrl.u32 %v6126, 7
      %v6128 = vsub.s32 0, %v6127
      %v6129 = vrot.slane %v6102, %v6128
      %v6130 = vlaneseq
      %v6131 = vshrl.u32 %v6130, 7
      %v6132 = vsub.s32 0, %v6131
      %v6133 = vrot.slane %v6103, %v6132
      %6140 = vmatprep.subr.mxu0 0.0
      %6141 = vmatpush1.msra.mxu0 0.0
      %6142 = vmatprep.subr.mxu0 0.0
      %6143 = vmatpush1.msra.mxu0 0.0
      %6144 = vmatprep.subr.mxu0 0.0
      %6145 = vmatpush1.msra.mxu0 0.0
      %6146 = vmatprep.subr.mxu0 0.0
      %6147 = vmatpush1.msra.mxu0 0.0
      %6148 = vmatprep.subr.mxu0 0.0
      %6149 = vmatpush1.msra.mxu0 0.0
      %6150 = vmatprep.subr.mxu0 0.0
      %6151 = vmatpush1.msra.mxu0 0.0
      %6152 = vmatprep.subr.mxu0 0.0
      %6153 = vmatpush1.msra.mxu0 0.0
      %6154 = vmatprep.subr.mxu0 0.0
      %6155 = vmatpush1.msra.mxu0 0.0
      %6156 = vmatprep.subr.mxu0 0.0
      %6157 = vmatpush1.msra.mxu0 0.0
      %6158 = vmatprep.subr.mxu0 0.0
      %6159 = vmatpush1.msra.mxu0 0.0
      %6160 = vmatprep.subr.mxu0 0.0
      %6161 = vmatpush1.msra.mxu0 0.0
      %6162 = vmatprep.subr.mxu0 0.0
      %6163 = vmatpush1.msra.mxu0 0.0
      %6164 = vmatprep.subr.mxu0 0.0
      %6165 = vmatpush1.msra.mxu0 %v6077
      %6166 = vmatprep.subr.mxu0 0.0
      %6167 = vmatpush1.msra.mxu0 %v6076
      %6168 = vmatprep.subr.mxu0 0.0
      %6169 = vmatpush1.msra.mxu0 %v6075
      %6170 = vmatprep.subr.mxu0 0.0
      %6171 = vmatpush1.msra.mxu0 %v6074
      %6172 = vmatprep.subr.mxu0 0.0
      %6173 = vmatpush2.msra.mxu0 0.0
      %6174 = vmatprep.subr.mxu0 0.0
      %6175 = vmatpush2.msra.mxu0 0.0
      %6176 = vmatprep.subr.mxu0 0.0
      %6177 = vmatpush2.msra.mxu0 0.0
      %6178 = vmatprep.subr.mxu0 0.0
      %6179 = vmatpush2.msra.mxu0 0.0
      %6180 = vmatprep.subr.mxu0 0.0
      %6181 = vmatpush2.msra.mxu0 0.0
      %6182 = vmatprep.subr.mxu0 0.0
      %6183 = vmatpush2.msra.mxu0 0.0
      %6184 = vmatprep.subr.mxu0 0.0
      %6185 = vmatpush2.msra.mxu0 0.0
      %6186 = vmatprep.subr.mxu0 0.0
      %6187 = vmatpush2.msra.mxu0 0.0
      %6188 = vmatprep.subr.mxu0 0.0
      %6189 = vmatpush2.msra.mxu0 0.0
      %6190 = vmatprep.subr.mxu0 0.0
      %6191 = vmatpush2.msra.mxu0 0.0
      %6192 = vmatprep.subr.mxu0 0.0
      %6193 = vmatpush2.msra.mxu0 0.0
      %6194 = vmatprep.subr.mxu0 0.0
      %6195 = vmatpush2.msra.mxu0 0.0
      %6196 = vmatprep.subr.mxu0 0.0
      %6197 = vmatpush2.msra.mxu0 0.0
      %6198 = vmatprep.subr.mxu0 0.0
      %6199 = vmatpush2.msra.mxu0 0.0
      %6200 = vmatprep.subr.mxu0 0.0
      %6201 = vmatpush2.msra.mxu0 0.0
      %6202 = vmatprep.subr.mxu0 0.0
      %6203 = vmatpush2.msra.mxu0 0.0
      %6204 = vmatprep.mubr.f32.mxu0 0.0
      %6205 = vmatmul.mubr.f32.gmra.mxu0 %v4041
      %v6206 = vpop.f32.mrf.mxu0
      %v6207 = vadd.f32 %v6113, %v6206
      %v6208 = vpop.f32.mrf.mxu0
      %6209 = vdwg.mxu0
      %6210 = vmatprep.subr.mxu0 0.0
      %6211 = vmatpush1.msra.mxu0 0.0
      %6212 = vmatprep.subr.mxu0 0.0
      %6213 = vmatpush1.msra.mxu0 0.0
      %6214 = vmatprep.subr.mxu0 0.0
      %6215 = vmatpush1.msra.mxu0 0.0
      %6216 = vmatprep.subr.mxu0 0.0
      %6217 = vmatpush1.msra.mxu0 0.0
      %6218 = vmatprep.subr.mxu0 0.0
      %6219 = vmatpush1.msra.mxu0 0.0
      %6220 = vmatprep.subr.mxu0 0.0
      %6221 = vmatpush1.msra.mxu0 0.0
      %6222 = vmatprep.subr.mxu0 0.0
      %6223 = vmatpush1.msra.mxu0 0.0
      %6224 = vmatprep.subr.mxu0 0.0
      %6225 = vmatpush1.msra.mxu0 0.0
      %6226 = vmatprep.subr.mxu0 0.0
      %6227 = vmatpush1.msra.mxu0 0.0
      %6228 = vmatprep.subr.mxu0 0.0
      %6229 = vmatpush1.msra.mxu0 0.0
      %6230 = vmatprep.subr.mxu0 0.0
      %6231 = vmatpush1.msra.mxu0 0.0
      %6232 = vmatprep.subr.mxu0 0.0
      %6233 = vmatpush1.msra.mxu0 0.0
      %6234 = vmatprep.subr.mxu0 0.0
      %6235 = vmatpush1.msra.mxu0 %v6081
      %6236 = vmatprep.subr.mxu0 0.0
      %6237 = vmatpush1.msra.mxu0 %v6080
      %6238 = vmatprep.subr.mxu0 0.0
      %6239 = vmatpush1.msra.mxu0 %v6079
      %6240 = vmatprep.subr.mxu0 0.0
      %6241 = vmatpush1.msra.mxu0 %v6078
      %6242 = vmatprep.subr.mxu0 0.0
      %6243 = vmatpush2.msra.mxu0 0.0
      %6244 = vmatprep.subr.mxu0 0.0
      %6245 = vmatpush2.msra.mxu0 0.0
      %6246 = vmatprep.subr.mxu0 0.0
      %6247 = vmatpush2.msra.mxu0 0.0
      %6248 = vmatprep.subr.mxu0 0.0
      %6249 = vmatpush2.msra.mxu0 0.0
      %6250 = vmatprep.subr.mxu0 0.0
      %6251 = vmatpush2.msra.mxu0 0.0
      %6252 = vmatprep.subr.mxu0 0.0
      %6253 = vmatpush2.msra.mxu0 0.0
      %6254 = vmatprep.subr.mxu0 0.0
      %6255 = vmatpush2.msra.mxu0 0.0
      %6256 = vmatprep.subr.mxu0 0.0
      %6257 = vmatpush2.msra.mxu0 0.0
      %6258 = vmatprep.subr.mxu0 0.0
      %6259 = vmatpush2.msra.mxu0 0.0
      %6260 = vmatprep.subr.mxu0 0.0
      %6261 = vmatpush2.msra.mxu0 0.0
      %6262 = vmatprep.subr.mxu0 0.0
      %6263 = vmatpush2.msra.mxu0 0.0
      %6264 = vmatprep.subr.mxu0 0.0
      %6265 = vmatpush2.msra.mxu0 0.0
      %6266 = vmatprep.subr.mxu0 0.0
      %6267 = vmatpush2.msra.mxu0 0.0
      %6268 = vmatprep.subr.mxu0 0.0
      %6269 = vmatpush2.msra.mxu0 0.0
      %6270 = vmatprep.subr.mxu0 0.0
      %6271 = vmatpush2.msra.mxu0 0.0
      %6272 = vmatprep.subr.mxu0 0.0
      %6273 = vmatpush2.msra.mxu0 0.0
      %6274 = vmatprep.mubr.f32.mxu0 0.0
      %6275 = vmatmul.mubr.f32.gmra.mxu0 %v4114
      %v6276 = vpop.f32.mrf.mxu0
      %v6277 = vadd.f32 %v6117, %v6276
      %v6278 = vpop.f32.mrf.mxu0
      %6279 = vdwg.mxu0
      %6280 = vmatprep.subr.mxu0 0.0
      %6281 = vmatpush1.msra.mxu0 0.0
      %6282 = vmatprep.subr.mxu0 0.0
      %6283 = vmatpush1.msra.mxu0 0.0
      %6284 = vmatprep.subr.mxu0 0.0
      %6285 = vmatpush1.msra.mxu0 0.0
      %6286 = vmatprep.subr.mxu0 0.0
      %6287 = vmatpush1.msra.mxu0 0.0
      %6288 = vmatprep.subr.mxu0 0.0
      %6289 = vmatpush1.msra.mxu0 0.0
      %6290 = vmatprep.subr.mxu0 0.0
      %6291 = vmatpush1.msra.mxu0 0.0
      %6292 = vmatprep.subr.mxu0 0.0
      %6293 = vmatpush1.msra.mxu0 0.0
      %6294 = vmatprep.subr.mxu0 0.0
      %6295 = vmatpush1.msra.mxu0 0.0
      %6296 = vmatprep.subr.mxu0 0.0
      %6297 = vmatpush1.msra.mxu0 0.0
      %6298 = vmatprep.subr.mxu0 0.0
      %6299 = vmatpush1.msra.mxu0 0.0
      %6300 = vmatprep.subr.mxu0 0.0
      %6301 = vmatpush1.msra.mxu0 0.0
      %6302 = vmatprep.subr.mxu0 0.0
      %6303 = vmatpush1.msra.mxu0 0.0
      %6304 = vmatprep.subr.mxu0 0.0
      %6305 = vmatpush1.msra.mxu0 %v6085
      %6306 = vmatprep.subr.mxu0 0.0
      %6307 = vmatpush1.msra.mxu0 %v6084
      %6308 = vmatprep.subr.mxu0 0.0
      %6309 = vmatpush1.msra.mxu0 %v6083
      %6310 = vmatprep.subr.mxu0 0.0
      %6311 = vmatpush1.msra.mxu0 %v6082
      %6312 = vmatprep.subr.mxu0 0.0
      %6313 = vmatpush2.msra.mxu0 0.0
      %6314 = vmatprep.subr.mxu0 0.0
      %6315 = vmatpush2.msra.mxu0 0.0
      %6316 = vmatprep.subr.mxu0 0.0
      %6317 = vmatpush2.msra.mxu0 0.0
      %6318 = vmatprep.subr.mxu0 0.0
      %6319 = vmatpush2.msra.mxu0 0.0
      %6320 = vmatprep.subr.mxu0 0.0
      %6321 = vmatpush2.msra.mxu0 0.0
      %6322 = vmatprep.subr.mxu0 0.0
      %6323 = vmatpush2.msra.mxu0 0.0
      %6324 = vmatprep.subr.mxu0 0.0
      %6325 = vmatpush2.msra.mxu0 0.0
      %6326 = vmatprep.subr.mxu0 0.0
      %6327 = vmatpush2.msra.mxu0 0.0
      %6328 = vmatprep.subr.mxu0 0.0
      %6329 = vmatpush2.msra.mxu0 0.0
      %6330 = vmatprep.subr.mxu0 0.0
      %6331 = vmatpush2.msra.mxu0 0.0
      %6332 = vmatprep.subr.mxu0 0.0
      %6333 = vmatpush2.msra.mxu0 0.0
      %6334 = vmatprep.subr.mxu0 0.0
      %6335 = vmatpush2.msra.mxu0 0.0
      %6336 = vmatprep.subr.mxu0 0.0
      %6337 = vmatpush2.msra.mxu0 0.0
      %6338 = vmatprep.subr.mxu0 0.0
      %6339 = vmatpush2.msra.mxu0 0.0
      %6340 = vmatprep.subr.mxu0 0.0
      %6341 = vmatpush2.msra.mxu0 0.0
      %6342 = vmatprep.subr.mxu0 0.0
      %6343 = vmatpush2.msra.mxu0 0.0
      %6344 = vmatprep.mubr.f32.mxu0 0.0
      %6345 = vmatmul.mubr.f32.gmra.mxu0 %v4187
      %v6346 = vpop.f32.mrf.mxu0
      %v6347 = vadd.f32 %v6121, %v6346
      %v6348 = vpop.f32.mrf.mxu0
      %6349 = vdwg.mxu0
      %6350 = vmatprep.subr.mxu0 0.0
      %6351 = vmatpush1.msra.mxu0 0.0
      %6352 = vmatprep.subr.mxu0 0.0
      %6353 = vmatpush1.msra.mxu0 0.0
      %6354 = vmatprep.subr.mxu0 0.0
      %6355 = vmatpush1.msra.mxu0 0.0
      %6356 = vmatprep.subr.mxu0 0.0
      %6357 = vmatpush1.msra.mxu0 0.0
      %6358 = vmatprep.subr.mxu0 0.0
      %6359 = vmatpush1.msra.mxu0 0.0
      %6360 = vmatprep.subr.mxu0 0.0
      %6361 = vmatpush1.msra.mxu0 0.0
      %6362 = vmatprep.subr.mxu0 0.0
      %6363 = vmatpush1.msra.mxu0 0.0
      %6364 = vmatprep.subr.mxu0 0.0
      %6365 = vmatpush1.msra.mxu0 0.0
      %6366 = vmatprep.subr.mxu0 0.0
      %6367 = vmatpush1.msra.mxu0 0.0
      %6368 = vmatprep.subr.mxu0 0.0
      %6369 = vmatpush1.msra.mxu0 0.0
      %6370 = vmatprep.subr.mxu0 0.0
      %6371 = vmatpush1.msra.mxu0 0.0
      %6372 = vmatprep.subr.mxu0 0.0
      %6373 = vmatpush1.msra.mxu0 0.0
      %6374 = vmatprep.subr.mxu0 0.0
      %6375 = vmatpush1.msra.mxu0 %v6089
      %6376 = vmatprep.subr.mxu0 0.0
      %6377 = vmatpush1.msra.mxu0 %v6088
      %6378 = vmatprep.subr.mxu0 0.0
      %6379 = vmatpush1.msra.mxu0 %v6087
      %6380 = vmatprep.subr.mxu0 0.0
      %6381 = vmatpush1.msra.mxu0 %v6086
      %6382 = vmatprep.subr.mxu0 0.0
      %6383 = vmatpush2.msra.mxu0 0.0
      %6384 = vmatprep.subr.mxu0 0.0
      %6385 = vmatpush2.msra.mxu0 0.0
      %6386 = vmatprep.subr.mxu0 0.0
      %6387 = vmatpush2.msra.mxu0 0.0
      %6388 = vmatprep.subr.mxu0 0.0
      %6389 = vmatpush2.msra.mxu0 0.0
      %6390 = vmatprep.subr.mxu0 0.0
      %6391 = vmatpush2.msra.mxu0 0.0
      %6392 = vmatprep.subr.mxu0 0.0
      %6393 = vmatpush2.msra.mxu0 0.0
      %6394 = vmatprep.subr.mxu0 0.0
      %6395 = vmatpush2.msra.mxu0 0.0
      %6396 = vmatprep.subr.mxu0 0.0
      %6397 = vmatpush2.msra.mxu0 0.0
      %6398 = vmatprep.subr.mxu0 0.0
      %6399 = vmatpush2.msra.mxu0 0.0
      %6400 = vmatprep.subr.mxu0 0.0
      %6401 = vmatpush2.msra.mxu0 0.0
      %6402 = vmatprep.subr.mxu0 0.0
      %6403 = vmatpush2.msra.mxu0 0.0
      %6404 = vmatprep.subr.mxu0 0.0
      %6405 = vmatpush2.msra.mxu0 0.0
      %6406 = vmatprep.subr.mxu0 0.0
      %6407 = vmatpush2.msra.mxu0 0.0
      %6408 = vmatprep.subr.mxu0 0.0
      %6409 = vmatpush2.msra.mxu0 0.0
      %6410 = vmatprep.subr.mxu0 0.0
      %6411 = vmatpush2.msra.mxu0 0.0
      %6412 = vmatprep.subr.mxu0 0.0
      %6413 = vmatpush2.msra.mxu0 0.0
      %6414 = vmatprep.mubr.f32.mxu0 0.0
      %6415 = vmatmul.mubr.f32.gmra.mxu0 %v4260
      %v6416 = vpop.f32.mrf.mxu0
      %v6417 = vadd.f32 %v6125, %v6416
      %v6418 = vpop.f32.mrf.mxu0
      %6419 = vdwg.mxu0
      %6420 = vmatprep.subr.mxu0 0.0
      %6421 = vmatpush1.msra.mxu0 0.0
      %6422 = vmatprep.subr.mxu0 0.0
      %6423 = vmatpush1.msra.mxu0 0.0
      %6424 = vmatprep.subr.mxu0 0.0
      %6425 = vmatpush1.msra.mxu0 0.0
      %6426 = vmatprep.subr.mxu0 0.0
      %6427 = vmatpush1.msra.mxu0 0.0
      %6428 = vmatprep.subr.mxu0 0.0
      %6429 = vmatpush1.msra.mxu0 0.0
      %6430 = vmatprep.subr.mxu0 0.0
      %6431 = vmatpush1.msra.mxu0 0.0
      %6432 = vmatprep.subr.mxu0 0.0
      %6433 = vmatpush1.msra.mxu0 0.0
      %6434 = vmatprep.subr.mxu0 0.0
      %6435 = vmatpush1.msra.mxu0 0.0
      %6436 = vmatprep.subr.mxu0 0.0
      %6437 = vmatpush1.msra.mxu0 0.0
      %6438 = vmatprep.subr.mxu0 0.0
      %6439 = vmatpush1.msra.mxu0 0.0
      %6440 = vmatprep.subr.mxu0 0.0
      %6441 = vmatpush1.msra.mxu0 0.0
      %6442 = vmatprep.subr.mxu0 0.0
      %6443 = vmatpush1.msra.mxu0 0.0
      %6444 = vmatprep.subr.mxu0 0.0
      %6445 = vmatpush1.msra.mxu0 %v6093
      %6446 = vmatprep.subr.mxu0 0.0
      %6447 = vmatpush1.msra.mxu0 %v6092
      %6448 = vmatprep.subr.mxu0 0.0
      %6449 = vmatpush1.msra.mxu0 %v6091
      %6450 = vmatprep.subr.mxu0 0.0
      %6451 = vmatpush1.msra.mxu0 %v6090
      %6452 = vmatprep.subr.mxu0 0.0
      %6453 = vmatpush2.msra.mxu0 0.0
      %6454 = vmatprep.subr.mxu0 0.0
      %6455 = vmatpush2.msra.mxu0 0.0
      %6456 = vmatprep.subr.mxu0 0.0
      %6457 = vmatpush2.msra.mxu0 0.0
      %6458 = vmatprep.subr.mxu0 0.0
      %6459 = vmatpush2.msra.mxu0 0.0
      %6460 = vmatprep.subr.mxu0 0.0
      %6461 = vmatpush2.msra.mxu0 0.0
      %6462 = vmatprep.subr.mxu0 0.0
      %6463 = vmatpush2.msra.mxu0 0.0
      %6464 = vmatprep.subr.mxu0 0.0
      %6465 = vmatpush2.msra.mxu0 0.0
      %6466 = vmatprep.subr.mxu0 0.0
      %6467 = vmatpush2.msra.mxu0 0.0
      %6468 = vmatprep.subr.mxu0 0.0
      %6469 = vmatpush2.msra.mxu0 0.0
      %6470 = vmatprep.subr.mxu0 0.0
      %6471 = vmatpush2.msra.mxu0 0.0
      %6472 = vmatprep.subr.mxu0 0.0
      %6473 = vmatpush2.msra.mxu0 0.0
      %6474 = vmatprep.subr.mxu0 0.0
      %6475 = vmatpush2.msra.mxu0 0.0
      %6476 = vmatprep.subr.mxu0 0.0
      %6477 = vmatpush2.msra.mxu0 0.0
      %6478 = vmatprep.subr.mxu0 0.0
      %6479 = vmatpush2.msra.mxu0 0.0
      %6480 = vmatprep.subr.mxu0 0.0
      %6481 = vmatpush2.msra.mxu0 0.0
      %6482 = vmatprep.subr.mxu0 0.0
      %6483 = vmatpush2.msra.mxu0 0.0
      %6484 = vmatprep.mubr.f32.mxu0 0.0
      %6485 = vmatmul.mubr.f32.gmra.mxu0 %v4333
      %v6486 = vpop.f32.mrf.mxu0
      %v6487 = vadd.f32 %v6129, %v6486
      %v6488 = vpop.f32.mrf.mxu0
      %6489 = vdwg.mxu0
      %6490 = vmatprep.subr.mxu0 0.0
      %6491 = vmatpush1.msra.mxu0 0.0
      %6492 = vmatprep.subr.mxu0 0.0
      %6493 = vmatpush1.msra.mxu0 0.0
      %6494 = vmatprep.subr.mxu0 0.0
      %6495 = vmatpush1.msra.mxu0 0.0
      %6496 = vmatprep.subr.mxu0 0.0
      %6497 = vmatpush1.msra.mxu0 0.0
      %6498 = vmatprep.subr.mxu0 0.0
      %6499 = vmatpush1.msra.mxu0 0.0
      %6500 = vmatprep.subr.mxu0 0.0
      %6501 = vmatpush1.msra.mxu0 0.0
      %6502 = vmatprep.subr.mxu0 0.0
      %6503 = vmatpush1.msra.mxu0 0.0
      %6504 = vmatprep.subr.mxu0 0.0
      %6505 = vmatpush1.msra.mxu0 0.0
      %6506 = vmatprep.subr.mxu0 0.0
      %6507 = vmatpush1.msra.mxu0 0.0
      %6508 = vmatprep.subr.mxu0 0.0
      %6509 = vmatpush1.msra.mxu0 0.0
      %6510 = vmatprep.subr.mxu0 0.0
      %6511 = vmatpush1.msra.mxu0 0.0
      %6512 = vmatprep.subr.mxu0 0.0
      %6513 = vmatpush1.msra.mxu0 0.0
      %6514 = vmatprep.subr.mxu0 0.0
      %6515 = vmatpush1.msra.mxu0 %v6097
      %6516 = vmatprep.subr.mxu0 0.0
      %6517 = vmatpush1.msra.mxu0 %v6096
      %6518 = vmatprep.subr.mxu0 0.0
      %6519 = vmatpush1.msra.mxu0 %v6095
      %6520 = vmatprep.subr.mxu0 0.0
      %6521 = vmatpush1.msra.mxu0 %v6094
      %6522 = vmatprep.subr.mxu0 0.0
      %6523 = vmatpush2.msra.mxu0 0.0
      %6524 = vmatprep.subr.mxu0 0.0
      %6525 = vmatpush2.msra.mxu0 0.0
      %6526 = vmatprep.subr.mxu0 0.0
      %6527 = vmatpush2.msra.mxu0 0.0
      %6528 = vmatprep.subr.mxu0 0.0
      %6529 = vmatpush2.msra.mxu0 0.0
      %6530 = vmatprep.subr.mxu0 0.0
      %6531 = vmatpush2.msra.mxu0 0.0
      %6532 = vmatprep.subr.mxu0 0.0
      %6533 = vmatpush2.msra.mxu0 0.0
      %6534 = vmatprep.subr.mxu0 0.0
      %6535 = vmatpush2.msra.mxu0 0.0
      %6536 = vmatprep.subr.mxu0 0.0
      %6537 = vmatpush2.msra.mxu0 0.0
      %6538 = vmatprep.subr.mxu0 0.0
      %6539 = vmatpush2.msra.mxu0 0.0
      %6540 = vmatprep.subr.mxu0 0.0
      %6541 = vmatpush2.msra.mxu0 0.0
      %6542 = vmatprep.subr.mxu0 0.0
      %6543 = vmatpush2.msra.mxu0 0.0
      %6544 = vmatprep.subr.mxu0 0.0
      %6545 = vmatpush2.msra.mxu0 0.0
      %6546 = vmatprep.subr.mxu0 0.0
      %6547 = vmatpush2.msra.mxu0 0.0
      %6548 = vmatprep.subr.mxu0 0.0
      %6549 = vmatpush2.msra.mxu0 0.0
      %6550 = vmatprep.subr.mxu0 0.0
      %6551 = vmatpush2.msra.mxu0 0.0
      %6552 = vmatprep.subr.mxu0 0.0
      %6553 = vmatpush2.msra.mxu0 0.0
      %6554 = vmatprep.mubr.f32.mxu0 0.0
      %6555 = vmatmul.mubr.f32.gmra.mxu0 %v4406
      %v6556 = vpop.f32.mrf.mxu0
      %v6557 = vadd.f32 %v6133, %v6556
      %v6558 = vpop.f32.mrf.mxu0
      %6559 = vdwg.mxu0
      %v6560 = vmul.f32 %v4557, %v6207
      %v6561 = vmul.f32 %v4559, %v6277
      %v6562 = vmul.f32 %v4561, %v6347
      %v6563 = vmul.f32 %v4563, %v6417
      %v6564 = vmul.f32 %v4565, %v6487
      %v6565 = vmul.f32 %v4567, %v6557
      %v6566 = vadd.f32 %v5721, %v6560
      %v6567 = vadd.f32 %v5791, %v6561
      %v6568 = vadd.f32 %v5861, %v6562
      %v6569 = vadd.f32 %v5931, %v6563
      %v6570 = vadd.f32 %v6001, %v6564
      %v6571 = vadd.f32 %v6071, %v6565
      %v6572 = vtanh.pop %v6566
      %v6573 = vtanh.pop %v6567
      %v6574 = vtanh.pop %v6568
      %v6575 = vtanh.pop %v6569
      %v6576 = vtanh.pop %v6570
      %v6577 = vtanh.pop %v6571
      %v6578 = vsub.f32 1.0, %v5577
      %v6579 = vsub.f32 1.0, %v5579
      %v6580 = vsub.f32 1.0, %v5581
      %v6581 = vsub.f32 1.0, %v5583
      %v6582 = vsub.f32 1.0, %v5585
      %v6583 = vsub.f32 1.0, %v5587
      %v6584 = vmul.f32 %v6578, %v6572
      %v6585 = vmul.f32 %v6579, %v6573
      %v6586 = vmul.f32 %v6580, %v6574
      %v6587 = vmul.f32 %v6581, %v6575
      %v6588 = vmul.f32 %v6582, %v6576
      %v6589 = vmul.f32 %v6583, %v6577
      %v6590 = vmul.f32 %v5577, %v3505
      %v6591 = vmul.f32 %v5579, %v3506
      %v6592 = vmul.f32 %v5581, %v3507
      %v6593 = vmul.f32 %v5583, %v3508
      %v6594 = vmul.f32 %v5585, %v3509
      %v6595 = vmul.f32 %v5587, %v3510
      %v6596 = vadd.f32 %v6584, %v6590
      %v6597 = vadd.f32 %v6585, %v6591
      %v6598 = vadd.f32 %v6586, %v6592
      %v6599 = vadd.f32 %v6587, %v6593
      %v6600 = vadd.f32 %v6588, %v6594
      %v6601 = vadd.f32 %v6589, %v6595
      %vm6602 = vcmask 254976
      %6603 = vst.msk [vmem:[#allocation2] sm:$0x3] %vm6602, %v6596
      %6604 = vst.msk [vmem:[#allocation2 + $0x2] sm:$0x3] %vm6602, %v6597
      %6605 = vst.msk [vmem:[#allocation2 + $0x4] sm:$0x3] %vm6602, %v6598
      %6606 = vst.msk [vmem:[#allocation2 + $0x6] sm:$0x3] %vm6602, %v6599
      %6607 = vst.msk [vmem:[#allocation2 + $0x8] sm:$0x3] %vm6602, %v6600
      %6608 = vst.msk [vmem:[#allocation2 + $0xa] sm:$0x3] %vm6602, %v6601
      %v6609 = vld [vmem:[%s81] sm:$0xff]
      %v6610 = vld [vmem:[%s81 + $0x8] sm:$0xff]
      %v6611 = vld [vmem:[%s81 + $0x10] sm:$0xff]
      %v6612 = vld [vmem:[%s81 + $0x18] sm:$0xff]
      %v6613 = vld [vmem:[%s81 + $0x20] sm:$0xff]
      %v6614 = vld [vmem:[%s81 + $0x28] sm:$0xff]
      %v6615 = vld [vmem:[%s81 + $0x30] sm:$0xff]
      %v6616 = vld [vmem:[%s81 + $0x38] sm:$0xff]
      %v6617 = vld [vmem:[%s81 + $0x40] sm:$0xff]
      %v6618 = vld [vmem:[%s81 + $0x48] sm:$0xff]
      %v6619 = vld [vmem:[%s81 + $0x50] sm:$0xff]
      %v6620 = vld [vmem:[%s81 + $0x58] sm:$0xff]
      %v6621 = vld [vmem:[%s81 + $0x60] sm:$0xff]
      %v6622 = vld [vmem:[%s81 + $0x68] sm:$0xff]
      %v6623 = vld [vmem:[%s81 + $0x70] sm:$0xff]
      %v6624 = vld [vmem:[%s81 + $0x78] sm:$0xff]
      %v6625 = vld [vmem:[%s81 + $0x80] sm:$0xff]
      %v6626 = vld [vmem:[%s81 + $0x88] sm:$0xff]
      %v6627 = vld [vmem:[%s81 + $0x90] sm:$0xff]
      %v6628 = vld [vmem:[%s81 + $0x98] sm:$0xff]
      %v6629 = vld [vmem:[%s81 + $0xa0] sm:$0xff]
      %v6630 = vld [vmem:[%s81 + $0xa8] sm:$0xff]
      %v6631 = vld [vmem:[%s81 + $0xb0] sm:$0xff]
      %v6632 = vld [vmem:[%s81 + $0xb8] sm:$0xff]
      %v6633 = vld [vmem:[%s83] sm:$0x1]
      %v6634 = vld [vmem:[%s83 + $0x1] sm:$0x1]
      %v6635 = vld [vmem:[%s83 + $0x2] sm:$0x1]
      %v6636 = vld [vmem:[%s83 + $0x3] sm:$0x1]
      %v6637 = vld [vmem:[%s83 + $0x4] sm:$0x1]
      %v6638 = vld [vmem:[%s83 + $0x5] sm:$0x1]
      %v6645 = vlaneseq
      %v6646 = vshrl.u32 %v6645, 7
      %v6647 = vsub.s32 0, %v6646
      %v6648 = vrot.slane %v6633, %v6647
      %v6649 = vlaneseq
      %v6650 = vshrl.u32 %v6649, 7
      %v6651 = vsub.s32 0, %v6650
      %v6652 = vrot.slane %v6634, %v6651
      %v6653 = vlaneseq
      %v6654 = vshrl.u32 %v6653, 7
      %v6655 = vsub.s32 0, %v6654
      %v6656 = vrot.slane %v6635, %v6655
      %v6657 = vlaneseq
      %v6658 = vshrl.u32 %v6657, 7
      %v6659 = vsub.s32 0, %v6658
      %v6660 = vrot.slane %v6636, %v6659
      %v6661 = vlaneseq
      %v6662 = vshrl.u32 %v6661, 7
      %v6663 = vsub.s32 0, %v6662
      %v6664 = vrot.slane %v6637, %v6663
      %v6665 = vlaneseq
      %v6666 = vshrl.u32 %v6665, 7
      %v6667 = vsub.s32 0, %v6666
      %v6668 = vrot.slane %v6638, %v6667
      %v6676 = vsel %vm3577, %v6596, 0
      %6678 = vmatprep.subr.mxu0 0.0
      %6679 = vmatpush1.msra.mxu0 0.0
      %6680 = vmatprep.subr.mxu0 0.0
      %6681 = vmatpush1.msra.mxu0 0.0
      %6682 = vmatprep.subr.mxu0 0.0
      %6683 = vmatpush1.msra.mxu0 0.0
      %6684 = vmatprep.subr.mxu0 0.0
      %6685 = vmatpush1.msra.mxu0 0.0
      %6686 = vmatprep.subr.mxu0 0.0
      %6687 = vmatpush1.msra.mxu0 0.0
      %6688 = vmatprep.subr.mxu0 0.0
      %6689 = vmatpush1.msra.mxu0 0.0
      %6690 = vmatprep.subr.mxu0 0.0
      %6691 = vmatpush1.msra.mxu0 0.0
      %6692 = vmatprep.subr.mxu0 0.0
      %6693 = vmatpush1.msra.mxu0 0.0
      %6694 = vmatprep.subr.mxu0 0.0
      %6695 = vmatpush1.msra.mxu0 0.0
      %6696 = vmatprep.subr.mxu0 0.0
      %6697 = vmatpush1.msra.mxu0 0.0
      %6698 = vmatprep.subr.mxu0 0.0
      %6699 = vmatpush1.msra.mxu0 0.0
      %6700 = vmatprep.subr.mxu0 0.0
      %6701 = vmatpush1.msra.mxu0 0.0
      %6702 = vmatprep.subr.mxu0 0.0
      %6703 = vmatpush1.msra.mxu0 %v6612
      %6704 = vmatprep.subr.mxu0 0.0
      %6705 = vmatpush1.msra.mxu0 %v6611
      %6706 = vmatprep.subr.mxu0 0.0
      %6707 = vmatpush1.msra.mxu0 %v6610
      %6708 = vmatprep.subr.mxu0 0.0
      %6709 = vmatpush1.msra.mxu0 %v6609
      %6710 = vmatprep.subr.mxu0 0.0
      %6711 = vmatpush2.msra.mxu0 0.0
      %6712 = vmatprep.subr.mxu0 0.0
      %6713 = vmatpush2.msra.mxu0 0.0
      %6714 = vmatprep.subr.mxu0 0.0
      %6715 = vmatpush2.msra.mxu0 0.0
      %6716 = vmatprep.subr.mxu0 0.0
      %6717 = vmatpush2.msra.mxu0 0.0
      %6718 = vmatprep.subr.mxu0 0.0
      %6719 = vmatpush2.msra.mxu0 0.0
      %6720 = vmatprep.subr.mxu0 0.0
      %6721 = vmatpush2.msra.mxu0 0.0
      %6722 = vmatprep.subr.mxu0 0.0
      %6723 = vmatpush2.msra.mxu0 0.0
      %6724 = vmatprep.subr.mxu0 0.0
      %6725 = vmatpush2.msra.mxu0 0.0
      %6726 = vmatprep.subr.mxu0 0.0
      %6727 = vmatpush2.msra.mxu0 0.0
      %6728 = vmatprep.subr.mxu0 0.0
      %6729 = vmatpush2.msra.mxu0 0.0
      %6730 = vmatprep.subr.mxu0 0.0
      %6731 = vmatpush2.msra.mxu0 0.0
      %6732 = vmatprep.subr.mxu0 0.0
      %6733 = vmatpush2.msra.mxu0 0.0
      %6734 = vmatprep.subr.mxu0 0.0
      %6735 = vmatpush2.msra.mxu0 0.0
      %6736 = vmatprep.subr.mxu0 0.0
      %6737 = vmatpush2.msra.mxu0 0.0
      %6738 = vmatprep.subr.mxu0 0.0
      %6739 = vmatpush2.msra.mxu0 0.0
      %6740 = vmatprep.subr.mxu0 0.0
      %6741 = vmatpush2.msra.mxu0 0.0
      %6742 = vmatprep.mubr.f32.mxu0 0.0
      %6743 = vmatmul.mubr.f32.gmra.mxu0 %v6676
      %v6744 = vpop.f32.mrf.mxu0
      %v6745 = vadd.f32 %v6648, %v6744
      %v6746 = vpop.f32.mrf.mxu0
      %6747 = vdwg.mxu0
      %v6749 = vsel %vm3577, %v6597, 0
      %6751 = vmatprep.subr.mxu0 0.0
      %6752 = vmatpush1.msra.mxu0 0.0
      %6753 = vmatprep.subr.mxu0 0.0
      %6754 = vmatpush1.msra.mxu0 0.0
      %6755 = vmatprep.subr.mxu0 0.0
      %6756 = vmatpush1.msra.mxu0 0.0
      %6757 = vmatprep.subr.mxu0 0.0
      %6758 = vmatpush1.msra.mxu0 0.0
      %6759 = vmatprep.subr.mxu0 0.0
      %6760 = vmatpush1.msra.mxu0 0.0
      %6761 = vmatprep.subr.mxu0 0.0
      %6762 = vmatpush1.msra.mxu0 0.0
      %6763 = vmatprep.subr.mxu0 0.0
      %6764 = vmatpush1.msra.mxu0 0.0
      %6765 = vmatprep.subr.mxu0 0.0
      %6766 = vmatpush1.msra.mxu0 0.0
      %6767 = vmatprep.subr.mxu0 0.0
      %6768 = vmatpush1.msra.mxu0 0.0
      %6769 = vmatprep.subr.mxu0 0.0
      %6770 = vmatpush1.msra.mxu0 0.0
      %6771 = vmatprep.subr.mxu0 0.0
      %6772 = vmatpush1.msra.mxu0 0.0
      %6773 = vmatprep.subr.mxu0 0.0
      %6774 = vmatpush1.msra.mxu0 0.0
      %6775 = vmatprep.subr.mxu0 0.0
      %6776 = vmatpush1.msra.mxu0 %v6616
      %6777 = vmatprep.subr.mxu0 0.0
      %6778 = vmatpush1.msra.mxu0 %v6615
      %6779 = vmatprep.subr.mxu0 0.0
      %6780 = vmatpush1.msra.mxu0 %v6614
      %6781 = vmatprep.subr.mxu0 0.0
      %6782 = vmatpush1.msra.mxu0 %v6613
      %6783 = vmatprep.subr.mxu0 0.0
      %6784 = vmatpush2.msra.mxu0 0.0
      %6785 = vmatprep.subr.mxu0 0.0
      %6786 = vmatpush2.msra.mxu0 0.0
      %6787 = vmatprep.subr.mxu0 0.0
      %6788 = vmatpush2.msra.mxu0 0.0
      %6789 = vmatprep.subr.mxu0 0.0
      %6790 = vmatpush2.msra.mxu0 0.0
      %6791 = vmatprep.subr.mxu0 0.0
      %6792 = vmatpush2.msra.mxu0 0.0
      %6793 = vmatprep.subr.mxu0 0.0
      %6794 = vmatpush2.msra.mxu0 0.0
      %6795 = vmatprep.subr.mxu0 0.0
      %6796 = vmatpush2.msra.mxu0 0.0
      %6797 = vmatprep.subr.mxu0 0.0
      %6798 = vmatpush2.msra.mxu0 0.0
      %6799 = vmatprep.subr.mxu0 0.0
      %6800 = vmatpush2.msra.mxu0 0.0
      %6801 = vmatprep.subr.mxu0 0.0
      %6802 = vmatpush2.msra.mxu0 0.0
      %6803 = vmatprep.subr.mxu0 0.0
      %6804 = vmatpush2.msra.mxu0 0.0
      %6805 = vmatprep.subr.mxu0 0.0
      %6806 = vmatpush2.msra.mxu0 0.0
      %6807 = vmatprep.subr.mxu0 0.0
      %6808 = vmatpush2.msra.mxu0 0.0
      %6809 = vmatprep.subr.mxu0 0.0
      %6810 = vmatpush2.msra.mxu0 0.0
      %6811 = vmatprep.subr.mxu0 0.0
      %6812 = vmatpush2.msra.mxu0 0.0
      %6813 = vmatprep.subr.mxu0 0.0
      %6814 = vmatpush2.msra.mxu0 0.0
      %6815 = vmatprep.mubr.f32.mxu0 0.0
      %6816 = vmatmul.mubr.f32.gmra.mxu0 %v6749
      %v6817 = vpop.f32.mrf.mxu0
      %v6818 = vadd.f32 %v6652, %v6817
      %v6819 = vpop.f32.mrf.mxu0
      %6820 = vdwg.mxu0
      %v6822 = vsel %vm3577, %v6598, 0
      %6824 = vmatprep.subr.mxu0 0.0
      %6825 = vmatpush1.msra.mxu0 0.0
      %6826 = vmatprep.subr.mxu0 0.0
      %6827 = vmatpush1.msra.mxu0 0.0
      %6828 = vmatprep.subr.mxu0 0.0
      %6829 = vmatpush1.msra.mxu0 0.0
      %6830 = vmatprep.subr.mxu0 0.0
      %6831 = vmatpush1.msra.mxu0 0.0
      %6832 = vmatprep.subr.mxu0 0.0
      %6833 = vmatpush1.msra.mxu0 0.0
      %6834 = vmatprep.subr.mxu0 0.0
      %6835 = vmatpush1.msra.mxu0 0.0
      %6836 = vmatprep.subr.mxu0 0.0
      %6837 = vmatpush1.msra.mxu0 0.0
      %6838 = vmatprep.subr.mxu0 0.0
      %6839 = vmatpush1.msra.mxu0 0.0
      %6840 = vmatprep.subr.mxu0 0.0
      %6841 = vmatpush1.msra.mxu0 0.0
      %6842 = vmatprep.subr.mxu0 0.0
      %6843 = vmatpush1.msra.mxu0 0.0
      %6844 = vmatprep.subr.mxu0 0.0
      %6845 = vmatpush1.msra.mxu0 0.0
      %6846 = vmatprep.subr.mxu0 0.0
      %6847 = vmatpush1.msra.mxu0 0.0
      %6848 = vmatprep.subr.mxu0 0.0
      %6849 = vmatpush1.msra.mxu0 %v6620
      %6850 = vmatprep.subr.mxu0 0.0
      %6851 = vmatpush1.msra.mxu0 %v6619
      %6852 = vmatprep.subr.mxu0 0.0
      %6853 = vmatpush1.msra.mxu0 %v6618
      %6854 = vmatprep.subr.mxu0 0.0
      %6855 = vmatpush1.msra.mxu0 %v6617
      %6856 = vmatprep.subr.mxu0 0.0
      %6857 = vmatpush2.msra.mxu0 0.0
      %6858 = vmatprep.subr.mxu0 0.0
      %6859 = vmatpush2.msra.mxu0 0.0
      %6860 = vmatprep.subr.mxu0 0.0
      %6861 = vmatpush2.msra.mxu0 0.0
      %6862 = vmatprep.subr.mxu0 0.0
      %6863 = vmatpush2.msra.mxu0 0.0
      %6864 = vmatprep.subr.mxu0 0.0
      %6865 = vmatpush2.msra.mxu0 0.0
      %6866 = vmatprep.subr.mxu0 0.0
      %6867 = vmatpush2.msra.mxu0 0.0
      %6868 = vmatprep.subr.mxu0 0.0
      %6869 = vmatpush2.msra.mxu0 0.0
      %6870 = vmatprep.subr.mxu0 0.0
      %6871 = vmatpush2.msra.mxu0 0.0
      %6872 = vmatprep.subr.mxu0 0.0
      %6873 = vmatpush2.msra.mxu0 0.0
      %6874 = vmatprep.subr.mxu0 0.0
      %6875 = vmatpush2.msra.mxu0 0.0
      %6876 = vmatprep.subr.mxu0 0.0
      %6877 = vmatpush2.msra.mxu0 0.0
      %6878 = vmatprep.subr.mxu0 0.0
      %6879 = vmatpush2.msra.mxu0 0.0
      %6880 = vmatprep.subr.mxu0 0.0
      %6881 = vmatpush2.msra.mxu0 0.0
      %6882 = vmatprep.subr.mxu0 0.0
      %6883 = vmatpush2.msra.mxu0 0.0
      %6884 = vmatprep.subr.mxu0 0.0
      %6885 = vmatpush2.msra.mxu0 0.0
      %6886 = vmatprep.subr.mxu0 0.0
      %6887 = vmatpush2.msra.mxu0 0.0
      %6888 = vmatprep.mubr.f32.mxu0 0.0
      %6889 = vmatmul.mubr.f32.gmra.mxu0 %v6822
      %v6890 = vpop.f32.mrf.mxu0
      %v6891 = vadd.f32 %v6656, %v6890
      %v6892 = vpop.f32.mrf.mxu0
      %6893 = vdwg.mxu0
      %v6895 = vsel %vm3577, %v6599, 0
      %6897 = vmatprep.subr.mxu0 0.0
      %6898 = vmatpush1.msra.mxu0 0.0
      %6899 = vmatprep.subr.mxu0 0.0
      %6900 = vmatpush1.msra.mxu0 0.0
      %6901 = vmatprep.subr.mxu0 0.0
      %6902 = vmatpush1.msra.mxu0 0.0
      %6903 = vmatprep.subr.mxu0 0.0
      %6904 = vmatpush1.msra.mxu0 0.0
      %6905 = vmatprep.subr.mxu0 0.0
      %6906 = vmatpush1.msra.mxu0 0.0
      %6907 = vmatprep.subr.mxu0 0.0
      %6908 = vmatpush1.msra.mxu0 0.0
      %6909 = vmatprep.subr.mxu0 0.0
      %6910 = vmatpush1.msra.mxu0 0.0
      %6911 = vmatprep.subr.mxu0 0.0
      %6912 = vmatpush1.msra.mxu0 0.0
      %6913 = vmatprep.subr.mxu0 0.0
      %6914 = vmatpush1.msra.mxu0 0.0
      %6915 = vmatprep.subr.mxu0 0.0
      %6916 = vmatpush1.msra.mxu0 0.0
      %6917 = vmatprep.subr.mxu0 0.0
      %6918 = vmatpush1.msra.mxu0 0.0
      %6919 = vmatprep.subr.mxu0 0.0
      %6920 = vmatpush1.msra.mxu0 0.0
      %6921 = vmatprep.subr.mxu0 0.0
      %6922 = vmatpush1.msra.mxu0 %v6624
      %6923 = vmatprep.subr.mxu0 0.0
      %6924 = vmatpush1.msra.mxu0 %v6623
      %6925 = vmatprep.subr.mxu0 0.0
      %6926 = vmatpush1.msra.mxu0 %v6622
      %6927 = vmatprep.subr.mxu0 0.0
      %6928 = vmatpush1.msra.mxu0 %v6621
      %6929 = vmatprep.subr.mxu0 0.0
      %6930 = vmatpush2.msra.mxu0 0.0
      %6931 = vmatprep.subr.mxu0 0.0
      %6932 = vmatpush2.msra.mxu0 0.0
      %6933 = vmatprep.subr.mxu0 0.0
      %6934 = vmatpush2.msra.mxu0 0.0
      %6935 = vmatprep.subr.mxu0 0.0
      %6936 = vmatpush2.msra.mxu0 0.0
      %6937 = vmatprep.subr.mxu0 0.0
      %6938 = vmatpush2.msra.mxu0 0.0
      %6939 = vmatprep.subr.mxu0 0.0
      %6940 = vmatpush2.msra.mxu0 0.0
      %6941 = vmatprep.subr.mxu0 0.0
      %6942 = vmatpush2.msra.mxu0 0.0
      %6943 = vmatprep.subr.mxu0 0.0
      %6944 = vmatpush2.msra.mxu0 0.0
      %6945 = vmatprep.subr.mxu0 0.0
      %6946 = vmatpush2.msra.mxu0 0.0
      %6947 = vmatprep.subr.mxu0 0.0
      %6948 = vmatpush2.msra.mxu0 0.0
      %6949 = vmatprep.subr.mxu0 0.0
      %6950 = vmatpush2.msra.mxu0 0.0
      %6951 = vmatprep.subr.mxu0 0.0
      %6952 = vmatpush2.msra.mxu0 0.0
      %6953 = vmatprep.subr.mxu0 0.0
      %6954 = vmatpush2.msra.mxu0 0.0
      %6955 = vmatprep.subr.mxu0 0.0
      %6956 = vmatpush2.msra.mxu0 0.0
      %6957 = vmatprep.subr.mxu0 0.0
      %6958 = vmatpush2.msra.mxu0 0.0
      %6959 = vmatprep.subr.mxu0 0.0
      %6960 = vmatpush2.msra.mxu0 0.0
      %6961 = vmatprep.mubr.f32.mxu0 0.0
      %6962 = vmatmul.mubr.f32.gmra.mxu0 %v6895
      %v6963 = vpop.f32.mrf.mxu0
      %v6964 = vadd.f32 %v6660, %v6963
      %v6965 = vpop.f32.mrf.mxu0
      %6966 = vdwg.mxu0
      %v6968 = vsel %vm3577, %v6600, 0
      %6970 = vmatprep.subr.mxu0 0.0
      %6971 = vmatpush1.msra.mxu0 0.0
      %6972 = vmatprep.subr.mxu0 0.0
      %6973 = vmatpush1.msra.mxu0 0.0
      %6974 = vmatprep.subr.mxu0 0.0
      %6975 = vmatpush1.msra.mxu0 0.0
      %6976 = vmatprep.subr.mxu0 0.0
      %6977 = vmatpush1.msra.mxu0 0.0
      %6978 = vmatprep.subr.mxu0 0.0
      %6979 = vmatpush1.msra.mxu0 0.0
      %6980 = vmatprep.subr.mxu0 0.0
      %6981 = vmatpush1.msra.mxu0 0.0
      %6982 = vmatprep.subr.mxu0 0.0
      %6983 = vmatpush1.msra.mxu0 0.0
      %6984 = vmatprep.subr.mxu0 0.0
      %6985 = vmatpush1.msra.mxu0 0.0
      %6986 = vmatprep.subr.mxu0 0.0
      %6987 = vmatpush1.msra.mxu0 0.0
      %6988 = vmatprep.subr.mxu0 0.0
      %6989 = vmatpush1.msra.mxu0 0.0
      %6990 = vmatprep.subr.mxu0 0.0
      %6991 = vmatpush1.msra.mxu0 0.0
      %6992 = vmatprep.subr.mxu0 0.0
      %6993 = vmatpush1.msra.mxu0 0.0
      %6994 = vmatprep.subr.mxu0 0.0
      %6995 = vmatpush1.msra.mxu0 %v6628
      %6996 = vmatprep.subr.mxu0 0.0
      %6997 = vmatpush1.msra.mxu0 %v6627
      %6998 = vmatprep.subr.mxu0 0.0
      %6999 = vmatpush1.msra.mxu0 %v6626
      %7000 = vmatprep.subr.mxu0 0.0
      %7001 = vmatpush1.msra.mxu0 %v6625
      %7002 = vmatprep.subr.mxu0 0.0
      %7003 = vmatpush2.msra.mxu0 0.0
      %7004 = vmatprep.subr.mxu0 0.0
      %7005 = vmatpush2.msra.mxu0 0.0
      %7006 = vmatprep.subr.mxu0 0.0
      %7007 = vmatpush2.msra.mxu0 0.0
      %7008 = vmatprep.subr.mxu0 0.0
      %7009 = vmatpush2.msra.mxu0 0.0
      %7010 = vmatprep.subr.mxu0 0.0
      %7011 = vmatpush2.msra.mxu0 0.0
      %7012 = vmatprep.subr.mxu0 0.0
      %7013 = vmatpush2.msra.mxu0 0.0
      %7014 = vmatprep.subr.mxu0 0.0
      %7015 = vmatpush2.msra.mxu0 0.0
      %7016 = vmatprep.subr.mxu0 0.0
      %7017 = vmatpush2.msra.mxu0 0.0
      %7018 = vmatprep.subr.mxu0 0.0
      %7019 = vmatpush2.msra.mxu0 0.0
      %7020 = vmatprep.subr.mxu0 0.0
      %7021 = vmatpush2.msra.mxu0 0.0
      %7022 = vmatprep.subr.mxu0 0.0
      %7023 = vmatpush2.msra.mxu0 0.0
      %7024 = vmatprep.subr.mxu0 0.0
      %7025 = vmatpush2.msra.mxu0 0.0
      %7026 = vmatprep.subr.mxu0 0.0
      %7027 = vmatpush2.msra.mxu0 0.0
      %7028 = vmatprep.subr.mxu0 0.0
      %7029 = vmatpush2.msra.mxu0 0.0
      %7030 = vmatprep.subr.mxu0 0.0
      %7031 = vmatpush2.msra.mxu0 0.0
      %7032 = vmatprep.subr.mxu0 0.0
      %7033 = vmatpush2.msra.mxu0 0.0
      %7034 = vmatprep.mubr.f32.mxu0 0.0
      %7035 = vmatmul.mubr.f32.gmra.mxu0 %v6968
      %v7036 = vpop.f32.mrf.mxu0
      %v7037 = vadd.f32 %v6664, %v7036
      %v7038 = vpop.f32.mrf.mxu0
      %7039 = vdwg.mxu0
      %v7041 = vsel %vm3577, %v6601, 0
      %7043 = vmatprep.subr.mxu0 0.0
      %7044 = vmatpush1.msra.mxu0 0.0
      %7045 = vmatprep.subr.mxu0 0.0
      %7046 = vmatpush1.msra.mxu0 0.0
      %7047 = vmatprep.subr.mxu0 0.0
      %7048 = vmatpush1.msra.mxu0 0.0
      %7049 = vmatprep.subr.mxu0 0.0
      %7050 = vmatpush1.msra.mxu0 0.0
      %7051 = vmatprep.subr.mxu0 0.0
      %7052 = vmatpush1.msra.mxu0 0.0
      %7053 = vmatprep.subr.mxu0 0.0
      %7054 = vmatpush1.msra.mxu0 0.0
      %7055 = vmatprep.subr.mxu0 0.0
      %7056 = vmatpush1.msra.mxu0 0.0
      %7057 = vmatprep.subr.mxu0 0.0
      %7058 = vmatpush1.msra.mxu0 0.0
      %7059 = vmatprep.subr.mxu0 0.0
      %7060 = vmatpush1.msra.mxu0 0.0
      %7061 = vmatprep.subr.mxu0 0.0
      %7062 = vmatpush1.msra.mxu0 0.0
      %7063 = vmatprep.subr.mxu0 0.0
      %7064 = vmatpush1.msra.mxu0 0.0
      %7065 = vmatprep.subr.mxu0 0.0
      %7066 = vmatpush1.msra.mxu0 0.0
      %7067 = vmatprep.subr.mxu0 0.0
      %7068 = vmatpush1.msra.mxu0 %v6632
      %7069 = vmatprep.subr.mxu0 0.0
      %7070 = vmatpush1.msra.mxu0 %v6631
      %7071 = vmatprep.subr.mxu0 0.0
      %7072 = vmatpush1.msra.mxu0 %v6630
      %7073 = vmatprep.subr.mxu0 0.0
      %7074 = vmatpush1.msra.mxu0 %v6629
      %7075 = vmatprep.subr.mxu0 0.0
      %7076 = vmatpush2.msra.mxu0 0.0
      %7077 = vmatprep.subr.mxu0 0.0
      %7078 = vmatpush2.msra.mxu0 0.0
      %7079 = vmatprep.subr.mxu0 0.0
      %7080 = vmatpush2.msra.mxu0 0.0
      %7081 = vmatprep.subr.mxu0 0.0
      %7082 = vmatpush2.msra.mxu0 0.0
      %7083 = vmatprep.subr.mxu0 0.0
      %7084 = vmatpush2.msra.mxu0 0.0
      %7085 = vmatprep.subr.mxu0 0.0
      %7086 = vmatpush2.msra.mxu0 0.0
      %7087 = vmatprep.subr.mxu0 0.0
      %7088 = vmatpush2.msra.mxu0 0.0
      %7089 = vmatprep.subr.mxu0 0.0
      %7090 = vmatpush2.msra.mxu0 0.0
      %7091 = vmatprep.subr.mxu0 0.0
      %7092 = vmatpush2.msra.mxu0 0.0
      %7093 = vmatprep.subr.mxu0 0.0
      %7094 = vmatpush2.msra.mxu0 0.0
      %7095 = vmatprep.subr.mxu0 0.0
      %7096 = vmatpush2.msra.mxu0 0.0
      %7097 = vmatprep.subr.mxu0 0.0
      %7098 = vmatpush2.msra.mxu0 0.0
      %7099 = vmatprep.subr.mxu0 0.0
      %7100 = vmatpush2.msra.mxu0 0.0
      %7101 = vmatprep.subr.mxu0 0.0
      %7102 = vmatpush2.msra.mxu0 0.0
      %7103 = vmatprep.subr.mxu0 0.0
      %7104 = vmatpush2.msra.mxu0 0.0
      %7105 = vmatprep.subr.mxu0 0.0
      %7106 = vmatpush2.msra.mxu0 0.0
      %7107 = vmatprep.mubr.f32.mxu0 0.0
      %7108 = vmatmul.mubr.f32.gmra.mxu0 %v7041
      %v7109 = vpop.f32.mrf.mxu0
      %v7110 = vadd.f32 %v6668, %v7109
      %v7111 = vpop.f32.mrf.mxu0
      %7112 = vdwg.mxu0
      %v7113 = vmax.f32 %v6745, 0.0
      %v7114 = vmax.f32 %v6818, 0.0
      %v7115 = vmax.f32 %v6891, 0.0
      %v7116 = vmax.f32 %v6964, 0.0
      %v7117 = vmax.f32 %v7037, 0.0
      %v7118 = vmax.f32 %v7110, 0.0
      %vm7119 = vcmask 517120
      %v7120 = vsel %vm7119, %v7113, -inf
      %7121 = vmax.xlane.f32.xlu0 %v7120
      %v7122 = vpop.xlane.xlu0 %7121
      %v7123 = vsel %vm7119, %v7114, -inf
      %7124 = vmax.xlane.f32.xlu0 %v7123
      %v7125 = vpop.xlane.xlu0 %7124
      %v7126 = vsel %vm7119, %v7115, -inf
      %7127 = vmax.xlane.f32.xlu0 %v7126
      %v7128 = vpop.xlane.xlu0 %7127
      %v7129 = vsel %vm7119, %v7116, -inf
      %7130 = vmax.xlane.f32.xlu0 %v7129
      %v7131 = vpop.xlane.xlu0 %7130
      %v7132 = vsel %vm7119, %v7117, -inf
      %7133 = vmax.xlane.f32.xlu0 %v7132
      %v7134 = vpop.xlane.xlu0 %7133
      %v7135 = vsel %vm7119, %v7118, -inf
      %7136 = vmax.xlane.f32.xlu0 %v7135
      %v7137 = vpop.xlane.xlu0 %7136
      %v7138 = vsub.f32 %v7113, %v7122
      %v7139 = vsub.f32 %v7114, %v7125
      %v7140 = vsub.f32 %v7115, %v7128
      %v7141 = vsub.f32 %v7116, %v7131
      %v7142 = vsub.f32 %v7117, %v7134
      %v7143 = vsub.f32 %v7118, %v7137
      %v7144 = vmul.f32 %v7138, 1.442695
      %v7145 = vpow.pop %v7144
      %v7146 = vmul.f32 %v7139, 1.442695
      %v7147 = vpow.pop %v7146
      %v7148 = vmul.f32 %v7140, 1.442695
      %v7149 = vpow.pop %v7148
      %v7150 = vmul.f32 %v7141, 1.442695
      %v7151 = vpow.pop %v7150
      %v7152 = vmul.f32 %v7142, 1.442695
      %v7153 = vpow.pop %v7152
      %v7154 = vmul.f32 %v7143, 1.442695
      %v7155 = vpow.pop %v7154
      %v7156 = vsel %vm7119, %v7145, 0.0
      %7157 = vadd.xlane.f32.xlu0 %v7156
      %v7158 = vpop.xlane.xlu0 %7157
      %v7159 = vsel %vm7119, %v7147, 0.0
      %7160 = vadd.xlane.f32.xlu0 %v7159
      %v7161 = vpop.xlane.xlu0 %7160
      %v7162 = vsel %vm7119, %v7149, 0.0
      %7163 = vadd.xlane.f32.xlu0 %v7162
      %v7164 = vpop.xlane.xlu0 %7163
      %v7165 = vsel %vm7119, %v7151, 0.0
      %7166 = vadd.xlane.f32.xlu0 %v7165
      %v7167 = vpop.xlane.xlu0 %7166
      %v7168 = vsel %vm7119, %v7153, 0.0
      %7169 = vadd.xlane.f32.xlu0 %v7168
      %v7170 = vpop.xlane.xlu0 %7169
      %v7171 = vsel %vm7119, %v7155, 0.0
      %7172 = vadd.xlane.f32.xlu0 %v7171
      %v7173 = vpop.xlane.xlu0 %7172
      %v7174 = vrcp.pop %v7158
      %v7175 = vmul.f32 %v7145, %v7174
      %v7176 = vrcp.pop %v7161
      %v7177 = vmul.f32 %v7147, %v7176
      %v7178 = vrcp.pop %v7164
      %v7179 = vmul.f32 %v7149, %v7178
      %v7180 = vrcp.pop %v7167
      %v7181 = vmul.f32 %v7151, %v7180
      %v7182 = vrcp.pop %v7170
      %v7183 = vmul.f32 %v7153, %v7182
      %v7184 = vrcp.pop %v7173
      %v7185 = vmul.f32 %v7155, %v7184
      %7186 = vst.msk [vmem:[%s1280] sm:$0x3] %vm7119, %v7175
      %7187 = vst.msk [vmem:[%s1280 + $0x2] sm:$0x3] %vm7119, %v7177
      %7188 = vst.msk [vmem:[%s1280 + $0x4] sm:$0x3] %vm7119, %v7179
      %7189 = vst.msk [vmem:[%s1280 + $0x6] sm:$0x3] %vm7119, %v7181
      %7190 = vst.msk [vmem:[%s1280 + $0x8] sm:$0x3] %vm7119, %v7183
      %7191 = vst.msk [vmem:[%s1280 + $0xa] sm:$0x3] %vm7119, %v7185
      %p7192 = scmp.lt.s32.totalorder %s96, 7
      %s7193 = scalar_select %p7192, %s96, 7
      %s7194 = smul.addr %s7193, 6
      %s7195 = smul.addr %s7194, 2
      %s7196 = scalar_lea.vmem %s85, %s7195
      // Predicated region
      $region193: #{cnn_gru_net_forward.1} parent=187 // pred_check
        %p7197 = pneg %p1006
      $region194: #{cnn_gru_net_forward.1} parent=187 // pred_check_branch
        %7199 = sbr.rel (%p7197) target = $region196
      $region195: #{cnn_gru_net_forward.1} parent=187 // pred_region
        _
      $region196: #{cnn_gru_net_forward.1} parent=187 // pred_fallthru
        _
    $region188: #{cnn_gru_net_forward.1} parent=5 // pred_fallthru
      _
    %p7200 = scmp.le.s32.totalorder 2, %s91
    // Predicated region
    $region197: #{cnn_gru_net_forward.1} parent=5 // pred_check
      %p7201 = pneg %p7200
    $region198: #{cnn_gru_net_forward.1} parent=5 // pred_check_branch
      %7203 = sbr.rel (%p7201) target = $region200
    $region199: #{cnn_gru_net_forward.1} parent=5 // pred_region
      %s7204 = ssub.s32 %s91, 2
      // Predicated region
      $region201: #{cnn_gru_net_forward.1} parent=199 // pred_check
        %p7205 = pneg %p1012
      $region202: #{cnn_gru_net_forward.1} parent=199 // pred_check_branch
        %7207 = sbr.rel (%p7205) target = $region204
      $region203: #{cnn_gru_net_forward.1} parent=199 // pred_region
        %p7208 = scmp.lt.s32.totalorder %s97, 7
        %s7209 = scalar_select %p7208, %s97, 7
        %s7210 = smul.addr %s7209, 6
        %s7211 = smul.addr %s7210, 2
        %s7212 = scalar_lea.vmem %s85, %s7211
      $region204: #{cnn_gru_net_forward.1} parent=199 // pred_fallthru
        _
    $region200: #{cnn_gru_net_forward.1} parent=5 // pred_fallthru
      _
  $region6: #{cnn_gru_net_forward.1} parent=0 // loop_footer
    %s95 = sadd.s32 1, %s91
  $region7: #{cnn_gru_net_forward.1} parent=0 // loop_footer_branch
    %90 = sbr.rel target = $region3
  $region8: #{cnn_gru_net_forward.1} parent=0 // loop_exit
    _

</llo_original>
